<compile_context>
chip_gen: v7x
topology: tpu7x:2x2x1
jax: 0.10.0
libtpu: 0.0.40
codegen_flags: <defaults>
</compile_context>

<pallas_src>
import functools
import math

import jax
import jax.numpy as jnp
from jax.experimental import pallas as pl
from jax.experimental.pallas import tpu as pltpu


MATMUL_DTYPE = jnp.bfloat16            # MXU operand dtype (f32 accumulation)
_NEG_INF = -1e30                       # finite "-inf" for the causal mask


def _vmem_capacity_bytes():
    try:
        return int(pltpu.get_tpu_info().vmem_capacity_bytes)
    except Exception:
        return 64 * 1024 * 1024        # conservative (v7x-class) fallback


_VMEM_CAP = _vmem_capacity_bytes()
if _VMEM_CAP >= 128 * 1024 * 1024:     # v5e / v6e: 128 MiB physical VMEM
    VMEM_LIMIT_BYTES = 100 * 1024 * 1024
    _PREFERRED_TILES = (512, 256, 128)
else:                                  # v7x-class: 64 MiB per TensorCore
    VMEM_LIMIT_BYTES = 48 * 1024 * 1024
    _PREFERRED_TILES = (256, 128)


def _pick_tile(n, preferred=None):
    """Largest MXU-friendly tile that divides n (falls back to the full dim)."""
    # TODO(synk): non-128-multiple dims fall back to the full extent; pad
    # inputs (e.g. vocab) to a lane multiple for very large unaligned dims.
    if preferred is None:
        preferred = _PREFERRED_TILES
    for t in preferred:
        if n % t == 0:
            return t
    return n


# ---------------------------------------------------------------------------
# Tiled matmul kernel: bias + activation + (optional) residual-add + LayerNorm
# fused into the epilogue.  Used for every linear layer + tied vocab proj.
# ---------------------------------------------------------------------------

def _matmul_kernel(x_ref, w_ref, *rest, n_k, has_bias, activation,
                   fuse_ln, ln_eps):
    rest = list(rest)
    b_ref = rest.pop(0) if has_bias else None
    if fuse_ln:
        res_ref = rest.pop(0)
        g_ref = rest.pop(0)
        beta_ref = rest.pop(0)
    o_ref = rest.pop(0)
    acc_ref = rest.pop(0) if n_k > 1 else None

    def epilogue(y):
        if has_bias:
            y = y + b_ref[...].astype(jnp.float32)
        if activation == "relu":
            y = jnp.maximum(y, 0.0)
        if fuse_ln:
            # fused residual add + LayerNorm (requires tn == N, full row).
            y = y + res_ref[...].astype(jnp.float32)
            mu = jnp.mean(y, axis=-1, keepdims=True)
            yc = y - mu
            var = jnp.mean(yc * yc, axis=-1, keepdims=True)
            y = yc * jax.lax.rsqrt(var + ln_eps) * g_ref[...] + beta_ref[...]
        o_ref[...] = y.astype(o_ref.dtype)

    x = x_ref[...]
    w = w_ref[...]
    if x.dtype != MATMUL_DTYPE:
        x = x.astype(MATMUL_DTYPE)
    if w.dtype != MATMUL_DTYPE:        # no-op: weights stored in bf16
        w = w.astype(MATMUL_DTYPE)
    part = jnp.dot(x, w, preferred_element_type=jnp.float32)

    if n_k == 1:
        # Single K step: write straight through the epilogue, no scratch.
        epilogue(part)
    else:
        @pl.when(pl.program_id(2) == 0)
        def _():
            acc_ref[...] = jnp.zeros_like(acc_ref)

        acc_ref[...] += part

        @pl.when(pl.program_id(2) == n_k - 1)
        def _():
            epilogue(acc_ref[...])


def matmul(x, w, b=None, activation=None, out_dtype=jnp.float32,
           residual=None, ln_g=None, ln_b=None, ln_eps=1e-5):
    """y = act(x @ w [+ b]);  optionally y = LayerNorm(y + residual)."""
    M, K = x.shape
    K2, N = w.shape
    assert K == K2
    fuse_ln = ln_g is not None
    has_bias = b is not None

    tm = _pick_tile(M)
    tn = N if fuse_ln else _pick_tile(N)   # LN epilogue needs the full row
    tk = _pick_tile(K)
    n_k = K // tk

    if n_k == 1:
        grid = (M // tm, N // tn)
        x_spec = pl.BlockSpec((tm, K), lambda i, j: (i, 0))
        w_spec = pl.BlockSpec((K, tn), lambda i, j: (0, j))
        vec_spec = pl.BlockSpec((1, tn), lambda i, j: (0, j))
        row_spec = pl.BlockSpec((tm, tn), lambda i, j: (i, j))
        scratch = []
        dims_sem = ("parallel", "parallel")
    else:
        grid = (M // tm, N // tn, n_k)
        x_spec = pl.BlockSpec((tm, tk), lambda i, j, k: (i, k))
        w_spec = pl.BlockSpec((tk, tn), lambda i, j, k: (k, j))
        vec_spec = pl.BlockSpec((1, tn), lambda i, j, k: (0, j))
        row_spec = pl.BlockSpec((tm, tn), lambda i, j, k: (i, j))
        scratch = [pltpu.VMEM((tm, tn), jnp.float32)]
        dims_sem = ("parallel", "parallel", "arbitrary")

    args = [x, w]
    in_specs = [x_spec, w_spec]
    if has_bias:
        args.append(b.reshape(1, N))
        in_specs.append(vec_spec)
    if fuse_ln:
        args += [residual, ln_g.reshape(1, N), ln_b.reshape(1, N)]
        in_specs += [row_spec, vec_spec, vec_spec]

    kernel = functools.partial(_matmul_kernel, n_k=n_k, has_bias=has_bias,
                               activation=activation, fuse_ln=fuse_ln,
                               ln_eps=ln_eps)
    return pl.pallas_call(
        kernel,
        out_shape=jax.ShapeDtypeStruct((M, N), out_dtype),
        grid=grid,
        in_specs=in_specs,
        out_specs=row_spec,
        scratch_shapes=scratch,
        compiler_params=pltpu.CompilerParams(
            dimension_semantics=dims_sem,
            vmem_limit_bytes=VMEM_LIMIT_BYTES),
    )(*args)


# ---------------------------------------------------------------------------
# Standalone LayerNorm kernel (only the final pre-logits norm uses it)
# ---------------------------------------------------------------------------

def _layernorm_kernel(x_ref, g_ref, b_ref, o_ref, *, eps):
    x = x_ref[...].astype(jnp.float32)
    mu = jnp.mean(x, axis=-1, keepdims=True)
    xc = x - mu
    var = jnp.mean(xc * xc, axis=-1, keepdims=True)
    o_ref[...] = (xc * jax.lax.rsqrt(var + eps) * g_ref[...] + b_ref[...]
                  ).astype(o_ref.dtype)


def layernorm(x, g, b, eps=1e-5, out_dtype=jnp.float32):
    M, D = x.shape
    tm = _pick_tile(M)
    row_spec = pl.BlockSpec((tm, D), lambda i: (i, 0))
    vec_spec = pl.BlockSpec((1, D), lambda i: (0, 0))
    return pl.pallas_call(
        functools.partial(_layernorm_kernel, eps=eps),
        out_shape=jax.ShapeDtypeStruct((M, D), out_dtype),
        grid=(M // tm,),
        in_specs=[row_spec, vec_spec, vec_spec],
        out_specs=row_spec,
        compiler_params=pltpu.CompilerParams(
            dimension_semantics=("parallel",),
            vmem_limit_bytes=VMEM_LIMIT_BYTES),
    )(x, g.reshape(1, D), b.reshape(1, D))


# ---------------------------------------------------------------------------
# Fused relative attention kernel (rel-bias + skew + causal mask + softmax)
# ---------------------------------------------------------------------------

def _attention_kernel(q_ref, k_ref, v_ref, e_ref, o_ref, *,
                      heads, depth, scale, msq):
    """One batch element, one q-tile, all heads.

    q_ref: [1, tq, d]       q lanes of the fused qkv projection (bf16)
    k_ref: [1, S,  d]       k lanes (all keys)
    v_ref: [1, S,  d]       v lanes (all values)
    e_ref: [H, msq, depth]  full relative-embedding parameter (bf16)
    o_ref: [1, tq, d]       output, heads folded back into the lane dim
    """
    S = k_ref.shape[1]
    tq = q_ref.shape[1]
    d = heads * depth
    q0 = pl.program_id(1) * tq
    moff = msq - S                        # static window into E

    # Causal mask / skew rotation amounts built once (head-invariant).
    row = q0 + jax.lax.broadcasted_iota(jnp.int32, (tq, S), 0)   # global q row
    col = jax.lax.broadcasted_iota(jnp.int32, (tq, S), 1)
    causal = col <= row
    rot = (S - 1) - row                   # per-row left rotation for the skew
    stage_masks = []                      # hoisted out of the per-head loop
    step = 1
    while step < S:
        stage_masks.append(((rot & step) != 0, step))
        step *= 2

    contract_last = (((1,), (1,)), ((), ()))    # a @ b^T without explicit .T
    contract_inner = (((1,), (0,)), ((), ()))

    outs = []
    # TODO(synk): per-head q/k/v are still 32-lane sub-slices of the 128-lane
    # slab; a head-major qkv layout would move that shuffle onto the DMA.
    for h in range(heads):
        q = q_ref[0, :, h * depth:(h + 1) * depth]
        k = k_ref[0, :, h * depth:(h + 1) * depth]
        v = v_ref[0, :, h * depth:(h + 1) * depth]
        e = e_ref[h][moff:moff + S]                       # E[:, msq-S:] window

        # Fold 1/sqrt(depth) into q: scale*(qk^T + qE^T) == (q*scale)(k|E)^T.
        qs = (q.astype(jnp.float32) * scale).astype(MATMUL_DTYPE)
        # Merge QK^T and QE^T into one depth-contraction dot: [tq, 2S].
        rhs = jnp.concatenate([k.astype(MATMUL_DTYPE), e.astype(MATMUL_DTYPE)],
                              axis=0)
        wr = jax.lax.dot_general(qs, rhs, contract_last,
                                 preferred_element_type=jnp.float32)
        w = wr[:, :S]
        rel = wr[:, S:]

        # Music-transformer skew done in-register:
        #   rel[i, j] = raw[i, j + (S-1-i)]   (exact for j <= i; j > i masked)
        # Barrel shifter: per-row left rotation by (S-1-i) built from log2(S)
        # static lane rotations (left-rotate by `step` == roll by S - step).
        for sel, st in stage_masks:
            rel = jnp.where(sel, pltpu.roll(rel, shift=S - st, axis=1), rel)

        w = jnp.where(causal, w + rel, _NEG_INF)
        m = jnp.max(w, axis=-1, keepdims=True)
        p = jnp.exp(w - m)
        denom = jnp.sum(p, axis=-1, keepdims=True)
        p = p * pl.reciprocal(denom, approx=True)         # EUP, not VPU divide
        outs.append(jax.lax.dot_general(p.astype(MATMUL_DTYPE),
                                        v.astype(MATMUL_DTYPE), contract_inner,
                                        preferred_element_type=jnp.float32))
    # Single lane-dense [tq, heads*depth] store (no head-combine transpose).
    o_ref[0] = jnp.concatenate(outs, axis=-1).astype(o_ref.dtype)


def relative_attention(qkv, E, heads, depth, max_sequence):
    """qkv: [B, S, 3*d] (bf16).  E: [H, max_sequence, depth] (bf16)."""
    B, S, _ = qkv.shape
    d = heads * depth
    tq = 128 if S % 128 == 0 else S
    scale = 1.0 / math.sqrt(depth)
    kernel = functools.partial(_attention_kernel, heads=heads, depth=depth,
                               scale=scale, msq=max_sequence)
    # TODO(synk): for very long sequences add a kv grid axis with
    # online-softmax (flash) tiling; q-tiling alone keeps temporaries at
    # [tq, S] and feeds both v7x TensorCores.
    return pl.pallas_call(
        kernel,
        out_shape=jax.ShapeDtypeStruct((B, S, d), jnp.bfloat16),
        grid=(B, S // tq),
        in_specs=[
            # Same qkv array, three lane-block views: q rows tiled, k/v full.
            pl.BlockSpec((1, tq, d), lambda b, qi: (b, qi, 0)),
            pl.BlockSpec((1, S, d), lambda b, qi: (b, 0, 1)),
            pl.BlockSpec((1, S, d), lambda b, qi: (b, 0, 2)),
            # Full E parameter; the (msq - S) window is sliced in-kernel, so
            # no per-layer host-side slice copy ever hits HBM.
            pl.BlockSpec((heads, max_sequence, depth), lambda b, qi: (0, 0, 0)),
        ],
        out_specs=pl.BlockSpec((1, tq, d), lambda b, qi: (b, qi, 0)),
        compiler_params=pltpu.CompilerParams(
            dimension_semantics=("parallel", "parallel"),
            vmem_limit_bytes=VMEM_LIMIT_BYTES),
    )(qkv, qkv, qkv, E)


# ---------------------------------------------------------------------------
# Model glue (reshapes / parameter slices / embedding gather only)
# ---------------------------------------------------------------------------

def decoder_block(h2d, p, heads, max_sequence, batch, seq_len):
    """One decoder layer; h2d: [B*S, d] f32 residual-stream activations."""
    d = h2d.shape[1]
    depth = d // heads
    # RelativeAttention: fused qkv projection (bf16 out) -> fused attention.
    c = matmul(h2d, p["c_attn_w"], p["c_attn_b"], out_dtype=jnp.bfloat16)
    a = relative_attention(c.reshape(batch, seq_len, 3 * d), p["E"],
                           heads, depth, max_sequence)
    # TODO(synk): nn.Dropout is identity in eval mode; implemented as identity.
    # c_proj + residual add + LayerNorm1 fused into one kernel epilogue.
    x = matmul(a.reshape(batch * seq_len, d), p["c_proj_w"], p["c_proj_b"],
               residual=h2d, ln_g=p["ln1_g"], ln_b=p["ln1_b"])
    f = matmul(x, p["l1_w"], p["l1_b"], activation="relu",
               out_dtype=jnp.bfloat16)
    # l2 + residual add + LayerNorm2 fused.
    x = matmul(f, p["l2_w"], p["l2_b"],
               residual=x, ln_g=p["ln2_g"], ln_b=p["ln2_b"])
    return x


def relative_transformer(tokens, params, heads, max_sequence):
    B, S = tokens.shape
    emb = params["embedding"]
    V, d = emb.shape
    h = emb[tokens].reshape(B * S, d)        # embedding gather (plain-JAX glue)
    for p in params["layers"]:
        h = decoder_block(h, p, heads, max_sequence, B, S)
    # TODO(synk): the reference `Norm(d_model)` class is not provided; assumed LayerNorm.
    h = layernorm(h, params["norm_g"], params["norm_b"], out_dtype=jnp.bfloat16)
    # Tied output projection uses the one-time [d, V] bf16 transposed copy of
    # the embedding (no per-call emb.T, no per-tile transpose, no zero bias).
    logits = matmul(h, params["embedding_t_bf16"])
    return logits.reshape(B, S, V)


# ---------------------------------------------------------------------------
# Deterministic parameter construction (weights stored in bf16, LN/bias f32)
# ---------------------------------------------------------------------------

def init_params(key, n_vocab, d_model, n_layers, heads, max_sequence, proj_forward):
    depth = d_model // heads
    keys = jax.random.split(key, 1 + n_layers)
    embedding = 0.02 * jax.random.normal(keys[0], (n_vocab, d_model), jnp.float32)
    params = {
        "embedding": embedding,                                   # f32 for gather
        "embedding_t_bf16": embedding.T.astype(jnp.bfloat16),     # one-time copy
        "norm_g": jnp.ones((d_model,), jnp.float32),
        "norm_b": jnp.zeros((d_model,), jnp.float32),
        "layers": [],
    }
    # xavier_normal_ std for E ([heads, max_sequence, depth]):
    std_e = math.sqrt(2.0 / (max_sequence * depth + heads * depth))
    for l in range(n_layers):
        k = jax.random.split(keys[1 + l], 5)
        params["layers"].append(dict(
            c_attn_w=(0.02 * jax.random.normal(k[0], (d_model, 3 * d_model),
                                               jnp.float32)).astype(jnp.bfloat16),
            c_attn_b=jnp.zeros((3 * d_model,), jnp.float32),
            c_proj_w=(0.02 * jax.random.normal(k[1], (d_model, d_model),
                                               jnp.float32)).astype(jnp.bfloat16),
            c_proj_b=jnp.zeros((d_model,), jnp.float32),
            E=(std_e * jax.random.normal(k[2], (heads, max_sequence, depth),
                                         jnp.float32)).astype(jnp.bfloat16),
            l1_w=(0.02 * jax.random.normal(k[3], (d_model, proj_forward),
                                           jnp.float32)).astype(jnp.bfloat16),
            l1_b=jnp.zeros((proj_forward,), jnp.float32),
            l2_w=(0.02 * jax.random.normal(k[4], (proj_forward, d_model),
                                           jnp.float32)).astype(jnp.bfloat16),
            l2_b=jnp.zeros((d_model,), jnp.float32),
            ln1_g=jnp.ones((d_model,), jnp.float32),
            ln1_b=jnp.zeros((d_model,), jnp.float32),
            ln2_g=jnp.ones((d_model,), jnp.float32),
            ln2_b=jnp.zeros((d_model,), jnp.float32),
        ))
    return params


# ---------------------------------------------------------------------------
# Main
# ---------------------------------------------------------------------------

if __name__ == "__main__":
    # Small but TPU-shaped sizes (lane-aligned d_model / seq).
    n_vocab, d_model, n_layers, n_heads = 256, 128, 2, 4
    max_sequence, proj_forward = 256, 256
    batch, seq_len = 2, 128

    key = jax.random.PRNGKey(0)
    pkey, tkey = jax.random.split(key)
    params = init_params(pkey, n_vocab, d_model, n_layers, n_heads,
                         max_sequence, proj_forward)
    tokens = jax.random.randint(tkey, (batch, seq_len), 0, n_vocab, dtype=jnp.int32)

    fwd = jax.jit(functools.partial(relative_transformer,
                                    heads=n_heads, max_sequence=max_sequence))
    logits = fwd(tokens, params)
    jax.block_until_ready(logits)
    assert logits.shape == (batch, seq_len, n_vocab)
    assert bool(jnp.all(jnp.isfinite(logits)))
    print("KERNEL_OK")
</pallas_src>

<mosaic_0001>
module attributes {stable_mosaic.version = 11 : i64} {
  func.func @_matmul_kernel(%arg0: i32, %arg1: i32, %arg2: memref<256x128xf32, #tpu.memory_space<vmem>>, %arg3: memref<128x128xbf16, #tpu.memory_space<vmem>>, %arg4: memref<1x128xf32, #tpu.memory_space<vmem>>, %arg5: memref<256x128xbf16, #tpu.memory_space<vmem>>) attributes {dimension_semantics = [#tpu.dimension_semantics<parallel>, #tpu.dimension_semantics<parallel>], iteration_bounds = array<i64: 1, 3>, scalar_prefetch = 0 : i64, scratch_operands = 0 : i64, tpu.core_type = #tpu.core_type<tc>, window_params = [{transform_indices = @transform_0, window_bounds = array<i64: 256, 128>}, {transform_indices = @transform_1, window_bounds = array<i64: 128, 128>}, {transform_indices = @transform_2, window_bounds = array<i64: 1, 128>}, {transform_indices = @transform_3, window_bounds = array<i64: 256, 128>}]} {
    %c0 = arith.constant 0 : index
    %c0_0 = arith.constant 0 : index
    %0 = vector.load %arg2[%c0, %c0_0] : memref<256x128xf32, #tpu.memory_space<vmem>>, vector<256x128xf32>
    %c0_1 = arith.constant 0 : index
    %c0_2 = arith.constant 0 : index
    %1 = vector.load %arg3[%c0_1, %c0_2] : memref<128x128xbf16, #tpu.memory_space<vmem>>, vector<128x128xbf16>
    %2 = arith.truncf %0 : vector<256x128xf32> to vector<256x128xbf16>
    %cst = arith.constant dense<0.000000e+00> : vector<256x128xf32>
    %3 = tpu.matmul %2, %1, %cst {dimension_numbers = #tpu.dot_dimension_numbers<[1], [0], [0], [1], [0, 0, 1, 1], [], []>} : vector<256x128xbf16>, vector<128x128xbf16>, vector<256x128xf32> -> vector<256x128xf32>
    %c0_3 = arith.constant 0 : index
    %c0_4 = arith.constant 0 : index
    %4 = vector.load %arg4[%c0_3, %c0_4] : memref<1x128xf32, #tpu.memory_space<vmem>>, vector<1x128xf32>
    %5 = vector.broadcast %4 : vector<1x128xf32> to vector<256x128xf32>
    %6 = arith.addf %3, %5 : vector<256x128xf32>
    %7 = arith.truncf %6 : vector<256x128xf32> to vector<256x128xbf16>
    %c0_5 = arith.constant 0 : index
    %c0_6 = arith.constant 0 : index
    %8 = vector.load %arg5[%c0_5, %c0_6] : memref<256x128xbf16, #tpu.memory_space<vmem>>, vector<256x128xbf16>
    tpu.vector_store %arg5[%c0_5, %c0_6], %7 {strides = array<i32>} : memref<256x128xbf16, #tpu.memory_space<vmem>>, vector<256x128xbf16>,
    return
  }
  func.func @transform_0(%arg0: i32, %arg1: i32) -> (i32, i32) {
    %c0_i32 = arith.constant 0 : i32
    %c0_i32_0 = arith.constant 0 : i32
    return %arg0, %c0_i32 : i32, i32
  }
  func.func @transform_1(%arg0: i32, %arg1: i32) -> (i32, i32) {
    %c0_i32 = arith.constant 0 : i32
    %c0_i32_0 = arith.constant 0 : i32
    return %c0_i32, %arg1 : i32, i32
  }
  func.func @transform_2(%arg0: i32, %arg1: i32) -> (i32, i32) {
    %c0_i32 = arith.constant 0 : i32
    %c0_i32_0 = arith.constant 0 : i32
    return %c0_i32, %arg1 : i32, i32
  }
  func.func @transform_3(%arg0: i32, %arg1: i32) -> (i32, i32) {
    %c0_i32 = arith.constant 0 : i32
    return %arg0, %arg1 : i32, i32
  }
}

module attributes {stable_mosaic.version = 11 : i64} {
  func.func @_attention_kernel(%arg0: i32, %arg1: i32, %arg2: memref<1x128x128xbf16, #tpu.memory_space<vmem>>, %arg3: memref<1x128x128xbf16, #tpu.memory_space<vmem>>, %arg4: memref<1x128x128xbf16, #tpu.memory_space<vmem>>, %arg5: memref<4x256x32xbf16, #tpu.memory_space<vmem>>, %arg6: memref<1x128x128xbf16, #tpu.memory_space<vmem>>) attributes {dimension_semantics = [#tpu.dimension_semantics<parallel>, #tpu.dimension_semantics<parallel>], iteration_bounds = array<i64: 2, 1>, scalar_prefetch = 0 : i64, scratch_operands = 0 : i64, tpu.core_type = #tpu.core_type<tc>, window_params = [{transform_indices = @transform_0, window_bounds = array<i64: 1, 128, 128>}, {transform_indices = @transform_1, window_bounds = array<i64: 1, 128, 128>}, {transform_indices = @transform_2, window_bounds = array<i64: 1, 128, 128>}, {pipeline_mode = #tpu.pipeline_mode<synchronous>, transform_indices = @transform_3, window_bounds = array<i64: 4, 256, 32>}, {transform_indices = @transform_4, window_bounds = array<i64: 1, 128, 128>}]} {
    %c128_i32 = arith.constant 128 : i32
    %0 = arith.muli %arg1, %c128_i32 : i32
    %1 = tpu.iota {dimensions = array<i32: 0>} : vector<128x128xi32>
    %2 = vector.broadcast %0 : i32 to vector<128x128xi32>
    %3 = arith.addi %2, %1 : vector<128x128xi32>
    %4 = tpu.iota {dimensions = array<i32: 1>} : vector<128x128xi32>
    %5 = arith.cmpi sle, %4, %3 : vector<128x128xi32>
    %c127_i32 = arith.constant 127 : i32
    %6 = vector.broadcast %c127_i32 : i32 to vector<128x128xi32>
    %7 = arith.subi %6, %3 : vector<128x128xi32>
    %c1_i32 = arith.constant 1 : i32
    %8 = vector.broadcast %c1_i32 : i32 to vector<128x128xi32>
    %9 = arith.andi %7, %8 : vector<128x128xi32>
    %c0_i32 = arith.constant 0 : i32
    %10 = vector.broadcast %c0_i32 : i32 to vector<128x128xi32>
    %11 = arith.cmpi ne, %9, %10 : vector<128x128xi32>
    %c2_i32 = arith.constant 2 : i32
    %12 = vector.broadcast %c2_i32 : i32 to vector<128x128xi32>
    %13 = arith.andi %7, %12 : vector<128x128xi32>
    %c0_i32_0 = arith.constant 0 : i32
    %14 = vector.broadcast %c0_i32_0 : i32 to vector<128x128xi32>
    %15 = arith.cmpi ne, %13, %14 : vector<128x128xi32>
    %c4_i32 = arith.constant 4 : i32
    %16 = vector.broadcast %c4_i32 : i32 to vector<128x128xi32>
    %17 = arith.andi %7, %16 : vector<128x128xi32>
    %c0_i32_1 = arith.constant 0 : i32
    %18 = vector.broadcast %c0_i32_1 : i32 to vector<128x128xi32>
    %19 = arith.cmpi ne, %17, %18 : vector<128x128xi32>
    %c8_i32 = arith.constant 8 : i32
    %20 = vector.broadcast %c8_i32 : i32 to vector<128x128xi32>
    %21 = arith.andi %7, %20 : vector<128x128xi32>
    %c0_i32_2 = arith.constant 0 : i32
    %22 = vector.broadcast %c0_i32_2 : i32 to vector<128x128xi32>
    %23 = arith.cmpi ne, %21, %22 : vector<128x128xi32>
    %c16_i32 = arith.constant 16 : i32
    %24 = vector.broadcast %c16_i32 : i32 to vector<128x128xi32>
    %25 = arith.andi %7, %24 : vector<128x128xi32>
    %c0_i32_3 = arith.constant 0 : i32
    %26 = vector.broadcast %c0_i32_3 : i32 to vector<128x128xi32>
    %27 = arith.cmpi ne, %25, %26 : vector<128x128xi32>
    %c32_i32 = arith.constant 32 : i32
    %28 = vector.broadcast %c32_i32 : i32 to vector<128x128xi32>
    %29 = arith.andi %7, %28 : vector<128x128xi32>
    %c0_i32_4 = arith.constant 0 : i32
    %30 = vector.broadcast %c0_i32_4 : i32 to vector<128x128xi32>
    %31 = arith.cmpi ne, %29, %30 : vector<128x128xi32>
    %c64_i32 = arith.constant 64 : i32
    %32 = vector.broadcast %c64_i32 : i32 to vector<128x128xi32>
    %33 = arith.andi %7, %32 : vector<128x128xi32>
    %c0_i32_5 = arith.constant 0 : i32
    %34 = vector.broadcast %c0_i32_5 : i32 to vector<128x128xi32>
    %35 = arith.cmpi ne, %33, %34 : vector<128x128xi32>
    %c0 = arith.constant 0 : index
    %c0_6 = arith.constant 0 : index
    %c0_7 = arith.constant 0 : index
    %36 = vector.load %arg2[%c0, %c0_6, %c0_7] : memref<1x128x128xbf16, #tpu.memory_space<vmem>>, vector<1x128x32xbf16>
    %37 = vector.shape_cast %36 : vector<1x128x32xbf16> to vector<128x32xbf16>
    %c0_8 = arith.constant 0 : index
    %c0_9 = arith.constant 0 : index
    %c0_10 = arith.constant 0 : index
    %38 = vector.load %arg3[%c0_8, %c0_9, %c0_10] : memref<1x128x128xbf16, #tpu.memory_space<vmem>>, vector<1x128x32xbf16>
    %39 = vector.shape_cast %38 : vector<1x128x32xbf16> to vector<128x32xbf16>
    %c0_11 = arith.constant 0 : index
    %c0_12 = arith.constant 0 : index
    %c0_13 = arith.constant 0 : index
    %40 = vector.load %arg4[%c0_11, %c0_12, %c0_13] : memref<1x128x128xbf16, #tpu.memory_space<vmem>>, vector<1x128x32xbf16>
    %41 = vector.shape_cast %40 : vector<1x128x32xbf16> to vector<128x32xbf16>
    %c0_14 = arith.constant 0 : index
    %c0_15 = arith.constant 0 : index
    %c0_16 = arith.constant 0 : index
    %42 = vector.load %arg5[%c0_14, %c0_15, %c0_16] : memref<4x256x32xbf16, #tpu.memory_space<vmem>>, vector<1x256x32xbf16>
    %43 = vector.shape_cast %42 : vector<1x256x32xbf16> to vector<256x32xbf16>
    %44 = vector.extract_strided_slice %43 {offsets = [128, 0], sizes = [128, 32], strides = [1, 1]} : vector<256x32xbf16> to vector<128x32xbf16>
    %45 = arith.extf %37 : vector<128x32xbf16> to vector<128x32xf32>
    %cst = arith.constant 0.176776692 : f32
    %46 = vector.broadcast %cst : f32 to vector<128x32xf32>
    %47 = arith.mulf %45, %46 : vector<128x32xf32>
    %48 = arith.truncf %47 : vector<128x32xf32> to vector<128x32xbf16>
    %49 = tpu.concatenate %39, %44 in 0 : vector<128x32xbf16>, vector<128x32xbf16> -> vector<256x32xbf16>
    %cst_17 = arith.constant dense<0.000000e+00> : vector<128x256xf32>
    %50 = tpu.matmul %48, %49, %cst_17 {dimension_numbers = #tpu.dot_dimension_numbers<[1], [1], [0], [0], [0, 0, 1, 0], [], []>} : vector<128x32xbf16>, vector<256x32xbf16>, vector<128x256xf32> -> vector<128x256xf32>
    %51 = vector.extract_strided_slice %50 {offsets = [0, 0], sizes = [128, 128], strides = [1, 1]} : vector<128x256xf32> to vector<128x128xf32>
    %52 = vector.extract_strided_slice %50 {offsets = [0, 128], sizes = [128, 128], strides = [1, 1]} : vector<128x256xf32> to vector<128x128xf32>
    %c127_i32_18 = arith.constant 127 : i32
    %53 = tpu.dynamic_rotate %52 by %c127_i32_18 dim 1 : vector<128x128xf32>, i32 -> vector<128x128xf32>
    %54 = arith.select %11, %53, %52 : vector<128x128xi1>, vector<128x128xf32>
    %c126_i32 = arith.constant 126 : i32
    %55 = tpu.dynamic_rotate %54 by %c126_i32 dim 1 : vector<128x128xf32>, i32 -> vector<128x128xf32>
    %56 = arith.select %15, %55, %54 : vector<128x128xi1>, vector<128x128xf32>
    %c124_i32 = arith.constant 124 : i32
    %57 = tpu.dynamic_rotate %56 by %c124_i32 dim 1 : vector<128x128xf32>, i32 -> vector<128x128xf32>
    %58 = arith.select %19, %57, %56 : vector<128x128xi1>, vector<128x128xf32>
    %c120_i32 = arith.constant 120 : i32
    %59 = tpu.dynamic_rotate %58 by %c120_i32 dim 1 : vector<128x128xf32>, i32 -> vector<128x128xf32>
    %60 = arith.select %23, %59, %58 : vector<128x128xi1>, vector<128x128xf32>
    %c112_i32 = arith.constant 112 : i32
    %61 = tpu.dynamic_rotate %60 by %c112_i32 dim 1 : vector<128x128xf32>, i32 -> vector<128x128xf32>
    %62 = arith.select %27, %61, %60 : vector<128x128xi1>, vector<128x128xf32>
    %c96_i32 = arith.constant 96 : i32
    %63 = tpu.dynamic_rotate %62 by %c96_i32 dim 1 : vector<128x128xf32>, i32 -> vector<128x128xf32>
    %64 = arith.select %31, %63, %62 : vector<128x128xi1>, vector<128x128xf32>
    %c64_i32_19 = arith.constant 64 : i32
    %65 = tpu.dynamic_rotate %64 by %c64_i32_19 dim 1 : vector<128x128xf32>, i32 -> vector<128x128xf32>
    %66 = arith.select %35, %65, %64 : vector<128x128xi1>, vector<128x128xf32>
    %67 = arith.addf %51, %66 : vector<128x128xf32>
    %cst_20 = arith.constant -1.000000e+30 : f32
    %68 = vector.broadcast %cst_20 : f32 to vector<128x128xf32>
    %69 = arith.select %5, %67, %68 : vector<128x128xi1>, vector<128x128xf32>
    %cst_21 = arith.constant dense<0xFF800000> : vector<128xf32>
    %70 = vector.multi_reduction <maximumf>, %69, %cst_21 [1] : vector<128x128xf32> to vector<128xf32>
    %71 = vector.shape_cast %70 : vector<128xf32> to vector<128x1xf32>
    %72 = vector.broadcast %71 : vector<128x1xf32> to vector<128x128xf32>
    %73 = arith.subf %69, %72 : vector<128x128xf32>
    %74 = math.exp %73 : vector<128x128xf32>
    %cst_22 = arith.constant dense<0.000000e+00> : vector<128xf32>
    %75 = vector.multi_reduction <add>, %74, %cst_22 [1] : vector<128x128xf32> to vector<128xf32>
    %76 = vector.shape_cast %75 : vector<128xf32> to vector<128x1xf32>
    %77 = tpu.reciprocal %76 {approx = true} : vector<128x1xf32> -> vector<128x1xf32>
    %78 = vector.broadcast %77 : vector<128x1xf32> to vector<128x128xf32>
    %79 = arith.mulf %74, %78 : vector<128x128xf32>
    %80 = arith.truncf %79 : vector<128x128xf32> to vector<128x128xbf16>
    %cst_23 = arith.constant dense<0.000000e+00> : vector<128x32xf32>
    %81 = tpu.matmul %80, %41, %cst_23 {dimension_numbers = #tpu.dot_dimension_numbers<[1], [0], [0], [1], [0, 0, 1, 1], [], []>} : vector<128x128xbf16>, vector<128x32xbf16>, vector<128x32xf32> -> vector<128x32xf32>
    %c0_24 = arith.constant 0 : index
    %c0_25 = arith.constant 0 : index
    %c32 = arith.constant 32 : index
    %82 = vector.load %arg2[%c0_24, %c0_25, %c32] : memref<1x128x128xbf16, #tpu.memory_space<vmem>>, vector<1x128x32xbf16>
    %83 = vector.shape_cast %82 : vector<1x128x32xbf16> to vector<128x32xbf16>
    %c0_26 = arith.constant 0 : index
    %c0_27 = arith.constant 0 : index
    %c32_28 = arith.constant 32 : index
    %84 = vector.load %arg3[%c0_26, %c0_27, %c32_28] : memref<1x128x128xbf16, #tpu.memory_space<vmem>>, vector<1x128x32xbf16>
    %85 = vector.shape_cast %84 : vector<1x128x32xbf16> to vector<128x32xbf16>
    %c0_29 = arith.constant 0 : index
    %c0_30 = arith.constant 0 : index
    %c32_31 = arith.constant 32 : index
    %86 = vector.load %arg4[%c0_29, %c0_30, %c32_31] : memref<1x128x128xbf16, #tpu.memory_space<vmem>>, vector<1x128x32xbf16>
    %87 = vector.shape_cast %86 : vector<1x128x32xbf16> to vector<128x32xbf16>
    %c1 = arith.constant 1 : index
    %c0_32 = arith.constant 0 : index
    %c0_33 = arith.constant 0 : index
    %88 = vector.load %arg5[%c1, %c0_32, %c0_33] : memref<4x256x32xbf16, #tpu.memory_space<vmem>>, vector<1x256x32xbf16>
    %89 = vector.shape_cast %88 : vector<1x256x32xbf16> to vector<256x32xbf16>
    %90 = vector.extract_strided_slice %89 {offsets = [128, 0], sizes = [128, 32], strides = [1, 1]} : vector<256x32xbf16> to vector<128x32xbf16>
    %91 = arith.extf %83 : vector<128x32xbf16> to vector<128x32xf32>
    %cst_34 = arith.constant 0.176776692 : f32
    %92 = vector.broadcast %cst_34 : f32 to vector<128x32xf32>
    %93 = arith.mulf %91, %92 : vector<128x32xf32>
    %94 = arith.truncf %93 : vector<128x32xf32> to vector<128x32xbf16>
    %95 = tpu.concatenate %85, %90 in 0 : vector<128x32xbf16>, vector<128x32xbf16> -> vector<256x32xbf16>
    %cst_35 = arith.constant dense<0.000000e+00> : vector<128x256xf32>
    %96 = tpu.matmul %94, %95, %cst_35 {dimension_numbers = #tpu.dot_dimension_numbers<[1], [1], [0], [0], [0, 0, 1, 0], [], []>} : vector<128x32xbf16>, vector<256x32xbf16>, vector<128x256xf32> -> vector<128x256xf32>
    %97 = vector.extract_strided_slice %96 {offsets = [0, 0], sizes = [128, 128], strides = [1, 1]} : vector<128x256xf32> to vector<128x128xf32>
    %98 = vector.extract_strided_slice %96 {offsets = [0, 128], sizes = [128, 128], strides = [1, 1]} : vector<128x256xf32> to vector<128x128xf32>
    %c127_i32_36 = arith.constant 127 : i32
    %99 = tpu.dynamic_rotate %98 by %c127_i32_36 dim 1 : vector<128x128xf32>, i32 -> vector<128x128xf32>
    %100 = arith.select %11, %99, %98 : vector<128x128xi1>, vector<128x128xf32>
    %c126_i32_37 = arith.constant 126 : i32
    %101 = tpu.dynamic_rotate %100 by %c126_i32_37 dim 1 : vector<128x128xf32>, i32 -> vector<128x128xf32>
    %102 = arith.select %15, %101, %100 : vector<128x128xi1>, vector<128x128xf32>
    %c124_i32_38 = arith.constant 124 : i32
    %103 = tpu.dynamic_rotate %102 by %c124_i32_38 dim 1 : vector<128x128xf32>, i32 -> vector<128x128xf32>
    %104 = arith.select %19, %103, %102 : vector<128x128xi1>, vector<128x128xf32>
    %c120_i32_39 = arith.constant 120 : i32
    %105 = tpu.dynamic_rotate %104 by %c120_i32_39 dim 1 : vector<128x128xf32>, i32 -> vector<128x128xf32>
    %106 = arith.select %23, %105, %104 : vector<128x128xi1>, vector<128x128xf32>
    %c112_i32_40 = arith.constant 112 : i32
    %107 = tpu.dynamic_rotate %106 by %c112_i32_40 dim 1 : vector<128x128xf32>, i32 -> vector<128x128xf32>
    %108 = arith.select %27, %107, %106 : vector<128x128xi1>, vector<128x128xf32>
    %c96_i32_41 = arith.constant 96 : i32
    %109 = tpu.dynamic_rotate %108 by %c96_i32_41 dim 1 : vector<128x128xf32>, i32 -> vector<128x128xf32>
    %110 = arith.select %31, %109, %108 : vector<128x128xi1>, vector<128x128xf32>
    %c64_i32_42 = arith.constant 64 : i32
    %111 = tpu.dynamic_rotate %110 by %c64_i32_42 dim 1 : vector<128x128xf32>, i32 -> vector<128x128xf32>
    %112 = arith.select %35, %111, %110 : vector<128x128xi1>, vector<128x128xf32>
    %113 = arith.addf %97, %112 : vector<128x128xf32>
    %cst_43 = arith.constant -1.000000e+30 : f32
    %114 = vector.broadcast %cst_43 : f32 to vector<128x128xf32>
    %115 = arith.select %5, %113, %114 : vector<128x128xi1>, vector<128x128xf32>
    %cst_44 = arith.constant dense<0xFF800000> : vector<128xf32>
    %116 = vector.multi_reduction <maximumf>, %115, %cst_44 [1] : vector<128x128xf32> to vector<128xf32>
    %117 = vector.shape_cast %116 : vector<128xf32> to vector<128x1xf32>
    %118 = vector.broadcast %117 : vector<128x1xf32> to vector<128x128xf32>
    %119 = arith.subf %115, %118 : vector<128x128xf32>
    %120 = math.exp %119 : vector<128x128xf32>
    %cst_45 = arith.constant dense<0.000000e+00> : vector<128xf32>
    %121 = vector.multi_reduction <add>, %120, %cst_45 [1] : vector<128x128xf32> to vector<128xf32>
    %122 = vector.shape_cast %121 : vector<128xf32> to vector<128x1xf32>
    %123 = tpu.reciprocal %122 {approx = true} : vector<128x1xf32> -> vector<128x1xf32>
    %124 = vector.broadcast %123 : vector<128x1xf32> to vector<128x128xf32>
    %125 = arith.mulf %120, %124 : vector<128x128xf32>
    %126 = arith.truncf %125 : vector<128x128xf32> to vector<128x128xbf16>
    %cst_46 = arith.constant dense<0.000000e+00> : vector<128x32xf32>
    %127 = tpu.matmul %126, %87, %cst_46 {dimension_numbers = #tpu.dot_dimension_numbers<[1], [0], [0], [1], [0, 0, 1, 1], [], []>} : vector<128x128xbf16>, vector<128x32xbf16>, vector<128x32xf32> -> vector<128x32xf32>
    %c0_47 = arith.constant 0 : index
    %c0_48 = arith.constant 0 : index
    %c64 = arith.constant 64 : index
    %128 = vector.load %arg2[%c0_47, %c0_48, %c64] : memref<1x128x128xbf16, #tpu.memory_space<vmem>>, vector<1x128x32xbf16>
    %129 = vector.shape_cast %128 : vector<1x128x32xbf16> to vector<128x32xbf16>
    %c0_49 = arith.constant 0 : index
    %c0_50 = arith.constant 0 : index
    %c64_51 = arith.constant 64 : index
    %130 = vector.load %arg3[%c0_49, %c0_50, %c64_51] : memref<1x128x128xbf16, #tpu.memory_space<vmem>>, vector<1x128x32xbf16>
    %131 = vector.shape_cast %130 : vector<1x128x32xbf16> to vector<128x32xbf16>
    %c0_52 = arith.constant 0 : index
    %c0_53 = arith.constant 0 : index
    %c64_54 = arith.constant 64 : index
    %132 = vector.load %arg4[%c0_52, %c0_53, %c64_54] : memref<1x128x128xbf16, #tpu.memory_space<vmem>>, vector<1x128x32xbf16>
    %133 = vector.shape_cast %132 : vector<1x128x32xbf16> to vector<128x32xbf16>
    %c2 = arith.constant 2 : index
    %c0_55 = arith.constant 0 : index
    %c0_56 = arith.constant 0 : index
    %134 = vector.load %arg5[%c2, %c0_55, %c0_56] : memref<4x256x32xbf16, #tpu.memory_space<vmem>>, vector<1x256x32xbf16>
    %135 = vector.shape_cast %134 : vector<1x256x32xbf16> to vector<256x32xbf16>
    %136 = vector.extract_strided_slice %135 {offsets = [128, 0], sizes = [128, 32], strides = [1, 1]} : vector<256x32xbf16> to vector<128x32xbf16>
    %137 = arith.extf %129 : vector<128x32xbf16> to vector<128x32xf32>
    %cst_57 = arith.constant 0.176776692 : f32
    %138 = vector.broadcast %cst_57 : f32 to vector<128x32xf32>
    %139 = arith.mulf %137, %138 : vector<128x32xf32>
    %140 = arith.truncf %139 : vector<128x32xf32> to vector<128x32xbf16>
    %141 = tpu.concatenate %131, %136 in 0 : vector<128x32xbf16>, vector<128x32xbf16> -> vector<256x32xbf16>
    %cst_58 = arith.constant dense<0.000000e+00> : vector<128x256xf32>
    %142 = tpu.matmul %140, %141, %cst_58 {dimension_numbers = #tpu.dot_dimension_numbers<[1], [1], [0], [0], [0, 0, 1, 0], [], []>} : vector<128x32xbf16>, vector<256x32xbf16>, vector<128x256xf32> -> vector<128x256xf32>
    %143 = vector.extract_strided_slice %142 {offsets = [0, 0], sizes = [128, 128], strides = [1, 1]} : vector<128x256xf32> to vector<128x128xf32>
    %144 = vector.extract_strided_slice %142 {offsets = [0, 128], sizes = [128, 128], strides = [1, 1]} : vector<128x256xf32> to vector<128x128xf32>
    %c127_i32_59 = arith.constant 127 : i32
    %145 = tpu.dynamic_rotate %144 by %c127_i32_59 dim 1 : vector<128x128xf32>, i32 -> vector<128x128xf32>
    %146 = arith.select %11, %145, %144 : vector<128x128xi1>, vector<128x128xf32>
    %c126_i32_60 = arith.constant 126 : i32
    %147 = tpu.dynamic_rotate %146 by %c126_i32_60 dim 1 : vector<128x128xf32>, i32 -> vector<128x128xf32>
    %148 = arith.select %15, %147, %146 : vector<128x128xi1>, vector<128x128xf32>
    %c124_i32_61 = arith.constant 124 : i32
    %149 = tpu.dynamic_rotate %148 by %c124_i32_61 dim 1 : vector<128x128xf32>, i32 -> vector<128x128xf32>
    %150 = arith.select %19, %149, %148 : vector<128x128xi1>, vector<128x128xf32>
    %c120_i32_62 = arith.constant 120 : i32
    %151 = tpu.dynamic_rotate %150 by %c120_i32_62 dim 1 : vector<128x128xf32>, i32 -> vector<128x128xf32>
    %152 = arith.select %23, %151, %150 : vector<128x128xi1>, vector<128x128xf32>
    %c112_i32_63 = arith.constant 112 : i32
    %153 = tpu.dynamic_rotate %152 by %c112_i32_63 dim 1 : vector<128x128xf32>, i32 -> vector<128x128xf32>
    %154 = arith.select %27, %153, %152 : vector<128x128xi1>, vector<128x128xf32>
    %c96_i32_64 = arith.constant 96 : i32
    %155 = tpu.dynamic_rotate %154 by %c96_i32_64 dim 1 : vector<128x128xf32>, i32 -> vector<128x128xf32>
    %156 = arith.select %31, %155, %154 : vector<128x128xi1>, vector<128x128xf32>
    %c64_i32_65 = arith.constant 64 : i32
    %157 = tpu.dynamic_rotate %156 by %c64_i32_65 dim 1 : vector<128x128xf32>, i32 -> vector<128x128xf32>
    %158 = arith.select %35, %157, %156 : vector<128x128xi1>, vector<128x128xf32>
    %159 = arith.addf %143, %158 : vector<128x128xf32>
    %cst_66 = arith.constant -1.000000e+30 : f32
    %160 = vector.broadcast %cst_66 : f32 to vector<128x128xf32>
    %161 = arith.select %5, %159, %160 : vector<128x128xi1>, vector<128x128xf32>
    %cst_67 = arith.constant dense<0xFF800000> : vector<128xf32>
    %162 = vector.multi_reduction <maximumf>, %161, %cst_67 [1] : vector<128x128xf32> to vector<128xf32>
    %163 = vector.shape_cast %162 : vector<128xf32> to vector<128x1xf32>
    %164 = vector.broadcast %163 : vector<128x1xf32> to vector<128x128xf32>
    %165 = arith.subf %161, %164 : vector<128x128xf32>
    %166 = math.exp %165 : vector<128x128xf32>
    %cst_68 = arith.constant dense<0.000000e+00> : vector<128xf32>
    %167 = vector.multi_reduction <add>, %166, %cst_68 [1] : vector<128x128xf32> to vector<128xf32>
    %168 = vector.shape_cast %167 : vector<128xf32> to vector<128x1xf32>
    %169 = tpu.reciprocal %168 {approx = true} : vector<128x1xf32> -> vector<128x1xf32>
    %170 = vector.broadcast %169 : vector<128x1xf32> to vector<128x128xf32>
    %171 = arith.mulf %166, %170 : vector<128x128xf32>
    %172 = arith.truncf %171 : vector<128x128xf32> to vector<128x128xbf16>
    %cst_69 = arith.constant dense<0.000000e+00> : vector<128x32xf32>
    %173 = tpu.matmul %172, %133, %cst_69 {dimension_numbers = #tpu.dot_dimension_numbers<[1], [0], [0], [1], [0, 0, 1, 1], [], []>} : vector<128x128xbf16>, vector<128x32xbf16>, vector<128x32xf32> -> vector<128x32xf32>
    %c0_70 = arith.constant 0 : index
    %c0_71 = arith.constant 0 : index
    %c96 = arith.constant 96 : index
    %174 = vector.load %arg2[%c0_70, %c0_71, %c96] : memref<1x128x128xbf16, #tpu.memory_space<vmem>>, vector<1x128x32xbf16>
    %175 = vector.shape_cast %174 : vector<1x128x32xbf16> to vector<128x32xbf16>
    %c0_72 = arith.constant 0 : index
    %c0_73 = arith.constant 0 : index
    %c96_74 = arith.constant 96 : index
    %176 = vector.load %arg3[%c0_72, %c0_73, %c96_74] : memref<1x128x128xbf16, #tpu.memory_space<vmem>>, vector<1x128x32xbf16>
    %177 = vector.shape_cast %176 : vector<1x128x32xbf16> to vector<128x32xbf16>
    %c0_75 = arith.constant 0 : index
    %c0_76 = arith.constant 0 : index
    %c96_77 = arith.constant 96 : index
    %178 = vector.load %arg4[%c0_75, %c0_76, %c96_77] : memref<1x128x128xbf16, #tpu.memory_space<vmem>>, vector<1x128x32xbf16>
    %179 = vector.shape_cast %178 : vector<1x128x32xbf16> to vector<128x32xbf16>
    %c3 = arith.constant 3 : index
    %c0_78 = arith.constant 0 : index
    %c0_79 = arith.constant 0 : index
    %180 = vector.load %arg5[%c3, %c0_78, %c0_79] : memref<4x256x32xbf16, #tpu.memory_space<vmem>>, vector<1x256x32xbf16>
    %181 = vector.shape_cast %180 : vector<1x256x32xbf16> to vector<256x32xbf16>
    %182 = vector.extract_strided_slice %181 {offsets = [128, 0], sizes = [128, 32], strides = [1, 1]} : vector<256x32xbf16> to vector<128x32xbf16>
    %183 = arith.extf %175 : vector<128x32xbf16> to vector<128x32xf32>
    %cst_80 = arith.constant 0.176776692 : f32
    %184 = vector.broadcast %cst_80 : f32 to vector<128x32xf32>
    %185 = arith.mulf %183, %184 : vector<128x32xf32>
    %186 = arith.truncf %185 : vector<128x32xf32> to vector<128x32xbf16>
    %187 = tpu.concatenate %177, %182 in 0 : vector<128x32xbf16>, vector<128x32xbf16> -> vector<256x32xbf16>
    %cst_81 = arith.constant dense<0.000000e+00> : vector<128x256xf32>
    %188 = tpu.matmul %186, %187, %cst_81 {dimension_numbers = #tpu.dot_dimension_numbers<[1], [1], [0], [0], [0, 0, 1, 0], [], []>} : vector<128x32xbf16>, vector<256x32xbf16>, vector<128x256xf32> -> vector<128x256xf32>
    %189 = vector.extract_strided_slice %188 {offsets = [0, 0], sizes = [128, 128], strides = [1, 1]} : vector<128x256xf32> to vector<128x128xf32>
    %190 = vector.extract_strided_slice %188 {offsets = [0, 128], sizes = [128, 128], strides = [1, 1]} : vector<128x256xf32> to vector<128x128xf32>
    %c127_i32_82 = arith.constant 127 : i32
    %191 = tpu.dynamic_rotate %190 by %c127_i32_82 dim 1 : vector<128x128xf32>, i32 -> vector<128x128xf32>
    %192 = arith.select %11, %191, %190 : vector<128x128xi1>, vector<128x128xf32>
    %c126_i32_83 = arith.constant 126 : i32
    %193 = tpu.dynamic_rotate %192 by %c126_i32_83 dim 1 : vector<128x128xf32>, i32 -> vector<128x128xf32>
    %194 = arith.select %15, %193, %192 : vector<128x128xi1>, vector<128x128xf32>
    %c124_i32_84 = arith.constant 124 : i32
    %195 = tpu.dynamic_rotate %194 by %c124_i32_84 dim 1 : vector<128x128xf32>, i32 -> vector<128x128xf32>
    %196 = arith.select %19, %195, %194 : vector<128x128xi1>, vector<128x128xf32>
    %c120_i32_85 = arith.constant 120 : i32
    %197 = tpu.dynamic_rotate %196 by %c120_i32_85 dim 1 : vector<128x128xf32>, i32 -> vector<128x128xf32>
    %198 = arith.select %23, %197, %196 : vector<128x128xi1>, vector<128x128xf32>
    %c112_i32_86 = arith.constant 112 : i32
    %199 = tpu.dynamic_rotate %198 by %c112_i32_86 dim 1 : vector<128x128xf32>, i32 -> vector<128x128xf32>
    %200 = arith.select %27, %199, %198 : vector<128x128xi1>, vector<128x128xf32>
    %c96_i32_87 = arith.constant 96 : i32
    %201 = tpu.dynamic_rotate %200 by %c96_i32_87 dim 1 : vector<128x128xf32>, i32 -> vector<128x128xf32>
    %202 = arith.select %31, %201, %200 : vector<128x128xi1>, vector<128x128xf32>
    %c64_i32_88 = arith.constant 64 : i32
    %203 = tpu.dynamic_rotate %202 by %c64_i32_88 dim 1 : vector<128x128xf32>, i32 -> vector<128x128xf32>
    %204 = arith.select %35, %203, %202 : vector<128x128xi1>, vector<128x128xf32>
    %205 = arith.addf %189, %204 : vector<128x128xf32>
    %cst_89 = arith.constant -1.000000e+30 : f32
    %206 = vector.broadcast %cst_89 : f32 to vector<128x128xf32>
    %207 = arith.select %5, %205, %206 : vector<128x128xi1>, vector<128x128xf32>
    %cst_90 = arith.constant dense<0xFF800000> : vector<128xf32>
    %208 = vector.multi_reduction <maximumf>, %207, %cst_90 [1] : vector<128x128xf32> to vector<128xf32>
    %209 = vector.shape_cast %208 : vector<128xf32> to vector<128x1xf32>
    %210 = vector.broadcast %209 : vector<128x1xf32> to vector<128x128xf32>
    %211 = arith.subf %207, %210 : vector<128x128xf32>
    %212 = math.exp %211 : vector<128x128xf32>
    %cst_91 = arith.constant dense<0.000000e+00> : vector<128xf32>
    %213 = vector.multi_reduction <add>, %212, %cst_91 [1] : vector<128x128xf32> to vector<128xf32>
    %214 = vector.shape_cast %213 : vector<128xf32> to vector<128x1xf32>
    %215 = tpu.reciprocal %214 {approx = true} : vector<128x1xf32> -> vector<128x1xf32>
    %216 = vector.broadcast %215 : vector<128x1xf32> to vector<128x128xf32>
    %217 = arith.mulf %212, %216 : vector<128x128xf32>
    %218 = arith.truncf %217 : vector<128x128xf32> to vector<128x128xbf16>
    %cst_92 = arith.constant dense<0.000000e+00> : vector<128x32xf32>
    %219 = tpu.matmul %218, %179, %cst_92 {dimension_numbers = #tpu.dot_dimension_numbers<[1], [0], [0], [1], [0, 0, 1, 1], [], []>} : vector<128x128xbf16>, vector<128x32xbf16>, vector<128x32xf32> -> vector<128x32xf32>
    %220 = tpu.concatenate %81, %127, %173, %219 in 1 : vector<128x32xf32>, vector<128x32xf32>, vector<128x32xf32>, vector<128x32xf32> -> vector<128x128xf32>
    %221 = arith.truncf %220 : vector<128x128xf32> to vector<128x128xbf16>
    %c0_93 = arith.constant 0 : index
    %c0_94 = arith.constant 0 : index
    %c0_95 = arith.constant 0 : index
    %222 = vector.load %arg6[%c0_93, %c0_94, %c0_95] : memref<1x128x128xbf16, #tpu.memory_space<vmem>>, vector<1x128x128xbf16>
    %223 = vector.shape_cast %222 : vector<1x128x128xbf16> to vector<128x128xbf16>
    %224 = vector.shape_cast %221 : vector<128x128xbf16> to vector<1x128x128xbf16>
    tpu.vector_store %arg6[%c0_93, %c0_94, %c0_95], %224 {strides = array<i32>} : memref<1x128x128xbf16, #tpu.memory_space<vmem>>, vector<1x128x128xbf16>,
    return
  }
  func.func @transform_0(%arg0: i32, %arg1: i32) -> (i32, i32, i32) {
    %c0_i32 = arith.constant 0 : i32
    %c0_i32_0 = arith.constant 0 : i32
    return %arg0, %arg1, %c0_i32 : i32, i32, i32
  }
  func.func @transform_1(%arg0: i32, %arg1: i32) -> (i32, i32, i32) {
    %c0_i32 = arith.constant 0 : i32
    %c1_i32 = arith.constant 1 : i32
    %c0_i32_0 = arith.constant 0 : i32
    return %arg0, %c0_i32, %c1_i32 : i32, i32, i32
  }
  func.func @transform_2(%arg0: i32, %arg1: i32) -> (i32, i32, i32) {
    %c0_i32 = arith.constant 0 : i32
    %c2_i32 = arith.constant 2 : i32
    %c0_i32_0 = arith.constant 0 : i32
    return %arg0, %c0_i32, %c2_i32 : i32, i32, i32
  }
  func.func @transform_3(%arg0: i32, %arg1: i32) -> (i32, i32, i32) {
    %c0_i32 = arith.constant 0 : i32
    %c0_i32_0 = arith.constant 0 : i32
    %c0_i32_1 = arith.constant 0 : i32
    %c0_i32_2 = arith.constant 0 : i32
    return %c0_i32, %c0_i32_0, %c0_i32_1 : i32, i32, i32
  }
  func.func @transform_4(%arg0: i32, %arg1: i32) -> (i32, i32, i32) {
    %c0_i32 = arith.constant 0 : i32
    %c0_i32_0 = arith.constant 0 : i32
    return %arg0, %arg1, %c0_i32 : i32, i32, i32
  }
}

module attributes {stable_mosaic.version = 11 : i64} {
  func.func @_matmul_kernel(%arg0: i32, %arg1: i32, %arg2: memref<256x128xbf16, #tpu.memory_space<vmem>>, %arg3: memref<128x128xbf16, #tpu.memory_space<vmem>>, %arg4: memref<1x128xf32, #tpu.memory_space<vmem>>, %arg5: memref<256x128xf32, #tpu.memory_space<vmem>>, %arg6: memref<1x128xf32, #tpu.memory_space<vmem>>, %arg7: memref<1x128xf32, #tpu.memory_space<vmem>>, %arg8: memref<256x128xf32, #tpu.memory_space<vmem>>) attributes {dimension_semantics = [#tpu.dimension_semantics<parallel>, #tpu.dimension_semantics<parallel>], iteration_bounds = array<i64: 1, 1>, scalar_prefetch = 0 : i64, scratch_operands = 0 : i64, tpu.core_type = #tpu.core_type<tc>, window_params = [{transform_indices = @transform_0, window_bounds = array<i64: 256, 128>}, {transform_indices = @transform_1, window_bounds = array<i64: 128, 128>}, {transform_indices = @transform_2, window_bounds = array<i64: 1, 128>}, {transform_indices = @transform_3, window_bounds = array<i64: 256, 128>}, {transform_indices = @transform_4, window_bounds = array<i64: 1, 128>}, {transform_indices = @transform_5, window_bounds = array<i64: 1, 128>}, {transform_indices = @transform_6, window_bounds = array<i64: 256, 128>}]} {
    %c0 = arith.constant 0 : index
    %c0_0 = arith.constant 0 : index
    %0 = vector.load %arg2[%c0, %c0_0] : memref<256x128xbf16, #tpu.memory_space<vmem>>, vector<256x128xbf16>
    %c0_1 = arith.constant 0 : index
    %c0_2 = arith.constant 0 : index
    %1 = vector.load %arg3[%c0_1, %c0_2] : memref<128x128xbf16, #tpu.memory_space<vmem>>, vector<128x128xbf16>
    %cst = arith.constant dense<0.000000e+00> : vector<256x128xf32>
    %2 = tpu.matmul %0, %1, %cst {dimension_numbers = #tpu.dot_dimension_numbers<[1], [0], [0], [1], [0, 0, 1, 1], [], []>} : vector<256x128xbf16>, vector<128x128xbf16>, vector<256x128xf32> -> vector<256x128xf32>
    %c0_3 = arith.constant 0 : index
    %c0_4 = arith.constant 0 : index
    %3 = vector.load %arg4[%c0_3, %c0_4] : memref<1x128xf32, #tpu.memory_space<vmem>>, vector<1x128xf32>
    %4 = vector.broadcast %3 : vector<1x128xf32> to vector<256x128xf32>
    %5 = arith.addf %2, %4 : vector<256x128xf32>
    %c0_5 = arith.constant 0 : index
    %c0_6 = arith.constant 0 : index
    %6 = vector.load %arg5[%c0_5, %c0_6] : memref<256x128xf32, #tpu.memory_space<vmem>>, vector<256x128xf32>
    %7 = arith.addf %5, %6 : vector<256x128xf32>
    %cst_7 = arith.constant dense<0.000000e+00> : vector<256xf32>
    %8 = vector.multi_reduction <add>, %7, %cst_7 [1] : vector<256x128xf32> to vector<256xf32>
    %9 = vector.shape_cast %8 : vector<256xf32> to vector<256x1xf32>
    %cst_8 = arith.constant 1.280000e+02 : f32
    %10 = vector.broadcast %cst_8 : f32 to vector<256x1xf32>
    %11 = arith.divf %9, %10 : vector<256x1xf32>
    %12 = vector.broadcast %11 : vector<256x1xf32> to vector<256x128xf32>
    %13 = arith.subf %7, %12 : vector<256x128xf32>
    %14 = arith.mulf %13, %13 : vector<256x128xf32>
    %cst_9 = arith.constant dense<0.000000e+00> : vector<256xf32>
    %15 = vector.multi_reduction <add>, %14, %cst_9 [1] : vector<256x128xf32> to vector<256xf32>
    %16 = vector.shape_cast %15 : vector<256xf32> to vector<256x1xf32>
    %cst_10 = arith.constant 1.280000e+02 : f32
    %17 = vector.broadcast %cst_10 : f32 to vector<256x1xf32>
    %18 = arith.divf %16, %17 : vector<256x1xf32>
    %cst_11 = arith.constant 9.99999974E-6 : f32
    %19 = vector.broadcast %cst_11 : f32 to vector<256x1xf32>
    %20 = arith.addf %18, %19 : vector<256x1xf32>
    %21 = math.rsqrt %20 : vector<256x1xf32>
    %22 = vector.broadcast %21 : vector<256x1xf32> to vector<256x128xf32>
    %23 = arith.mulf %13, %22 : vector<256x128xf32>
    %c0_12 = arith.constant 0 : index
    %c0_13 = arith.constant 0 : index
    %24 = vector.load %arg6[%c0_12, %c0_13] : memref<1x128xf32, #tpu.memory_space<vmem>>, vector<1x128xf32>
    %25 = vector.broadcast %24 : vector<1x128xf32> to vector<256x128xf32>
    %26 = arith.mulf %23, %25 : vector<256x128xf32>
    %c0_14 = arith.constant 0 : index
    %c0_15 = arith.constant 0 : index
    %27 = vector.load %arg7[%c0_14, %c0_15] : memref<1x128xf32, #tpu.memory_space<vmem>>, vector<1x128xf32>
    %28 = vector.broadcast %27 : vector<1x128xf32> to vector<256x128xf32>
    %29 = arith.addf %26, %28 : vector<256x128xf32>
    %c0_16 = arith.constant 0 : index
    %c0_17 = arith.constant 0 : index
    %30 = vector.load %arg8[%c0_16, %c0_17] : memref<256x128xf32, #tpu.memory_space<vmem>>, vector<256x128xf32>
    tpu.vector_store %arg8[%c0_16, %c0_17], %29 {strides = array<i32>} : memref<256x128xf32, #tpu.memory_space<vmem>>, vector<256x128xf32>,
    return
  }
  func.func @transform_0(%arg0: i32, %arg1: i32) -> (i32, i32) {
    %c0_i32 = arith.constant 0 : i32
    %c0_i32_0 = arith.constant 0 : i32
    return %arg0, %c0_i32 : i32, i32
  }
  func.func @transform_1(%arg0: i32, %arg1: i32) -> (i32, i32) {
    %c0_i32 = arith.constant 0 : i32
    %c0_i32_0 = arith.constant 0 : i32
    return %c0_i32, %arg1 : i32, i32
  }
  func.func @transform_2(%arg0: i32, %arg1: i32) -> (i32, i32) {
    %c0_i32 = arith.constant 0 : i32
    %c0_i32_0 = arith.constant 0 : i32
    return %c0_i32, %arg1 : i32, i32
  }
  func.func @transform_3(%arg0: i32, %arg1: i32) -> (i32, i32) {
    %c0_i32 = arith.constant 0 : i32
    return %arg0, %arg1 : i32, i32
  }
  func.func @transform_4(%arg0: i32, %arg1: i32) -> (i32, i32) {
    %c0_i32 = arith.constant 0 : i32
    %c0_i32_0 = arith.constant 0 : i32
    return %c0_i32, %arg1 : i32, i32
  }
  func.func @transform_5(%arg0: i32, %arg1: i32) -> (i32, i32) {
    %c0_i32 = arith.constant 0 : i32
    %c0_i32_0 = arith.constant 0 : i32
    return %c0_i32, %arg1 : i32, i32
  }
  func.func @transform_6(%arg0: i32, %arg1: i32) -> (i32, i32) {
    %c0_i32 = arith.constant 0 : i32
    return %arg0, %arg1 : i32, i32
  }
}

module attributes {stable_mosaic.version = 11 : i64} {
  func.func @_matmul_kernel(%arg0: i32, %arg1: i32, %arg2: memref<256x128xf32, #tpu.memory_space<vmem>>, %arg3: memref<128x256xbf16, #tpu.memory_space<vmem>>, %arg4: memref<1x256xf32, #tpu.memory_space<vmem>>, %arg5: memref<256x256xbf16, #tpu.memory_space<vmem>>) attributes {dimension_semantics = [#tpu.dimension_semantics<parallel>, #tpu.dimension_semantics<parallel>], iteration_bounds = array<i64: 1, 1>, scalar_prefetch = 0 : i64, scratch_operands = 0 : i64, tpu.core_type = #tpu.core_type<tc>, window_params = [{transform_indices = @transform_0, window_bounds = array<i64: 256, 128>}, {transform_indices = @transform_1, window_bounds = array<i64: 128, 256>}, {transform_indices = @transform_2, window_bounds = array<i64: 1, 256>}, {transform_indices = @transform_3, window_bounds = array<i64: 256, 256>}]} {
    %c0 = arith.constant 0 : index
    %c0_0 = arith.constant 0 : index
    %0 = vector.load %arg2[%c0, %c0_0] : memref<256x128xf32, #tpu.memory_space<vmem>>, vector<256x128xf32>
    %c0_1 = arith.constant 0 : index
    %c0_2 = arith.constant 0 : index
    %1 = vector.load %arg3[%c0_1, %c0_2] : memref<128x256xbf16, #tpu.memory_space<vmem>>, vector<128x256xbf16>
    %2 = arith.truncf %0 : vector<256x128xf32> to vector<256x128xbf16>
    %cst = arith.constant dense<0.000000e+00> : vector<256x256xf32>
    %3 = tpu.matmul %2, %1, %cst {dimension_numbers = #tpu.dot_dimension_numbers<[1], [0], [0], [1], [0, 0, 1, 1], [], []>} : vector<256x128xbf16>, vector<128x256xbf16>, vector<256x256xf32> -> vector<256x256xf32>
    %c0_3 = arith.constant 0 : index
    %c0_4 = arith.constant 0 : index
    %4 = vector.load %arg4[%c0_3, %c0_4] : memref<1x256xf32, #tpu.memory_space<vmem>>, vector<1x256xf32>
    %5 = vector.broadcast %4 : vector<1x256xf32> to vector<256x256xf32>
    %6 = arith.addf %3, %5 : vector<256x256xf32>
    %cst_5 = arith.constant 0.000000e+00 : f32
    %7 = vector.broadcast %cst_5 : f32 to vector<256x256xf32>
    %8 = arith.maximumf %6, %7 : vector<256x256xf32>
    %9 = arith.truncf %8 : vector<256x256xf32> to vector<256x256xbf16>
    %c0_6 = arith.constant 0 : index
    %c0_7 = arith.constant 0 : index
    %10 = vector.load %arg5[%c0_6, %c0_7] : memref<256x256xbf16, #tpu.memory_space<vmem>>, vector<256x256xbf16>
    tpu.vector_store %arg5[%c0_6, %c0_7], %9 {strides = array<i32>} : memref<256x256xbf16, #tpu.memory_space<vmem>>, vector<256x256xbf16>,
    return
  }
  func.func @transform_0(%arg0: i32, %arg1: i32) -> (i32, i32) {
    %c0_i32 = arith.constant 0 : i32
    %c0_i32_0 = arith.constant 0 : i32
    return %arg0, %c0_i32 : i32, i32
  }
  func.func @transform_1(%arg0: i32, %arg1: i32) -> (i32, i32) {
    %c0_i32 = arith.constant 0 : i32
    %c0_i32_0 = arith.constant 0 : i32
    return %c0_i32, %arg1 : i32, i32
  }
  func.func @transform_2(%arg0: i32, %arg1: i32) -> (i32, i32) {
    %c0_i32 = arith.constant 0 : i32
    %c0_i32_0 = arith.constant 0 : i32
    return %c0_i32, %arg1 : i32, i32
  }
  func.func @transform_3(%arg0: i32, %arg1: i32) -> (i32, i32) {
    %c0_i32 = arith.constant 0 : i32
    return %arg0, %arg1 : i32, i32
  }
}

module attributes {stable_mosaic.version = 11 : i64} {
  func.func @_matmul_kernel(%arg0: i32, %arg1: i32, %arg2: memref<256x256xbf16, #tpu.memory_space<vmem>>, %arg3: memref<256x128xbf16, #tpu.memory_space<vmem>>, %arg4: memref<1x128xf32, #tpu.memory_space<vmem>>, %arg5: memref<256x128xf32, #tpu.memory_space<vmem>>, %arg6: memref<1x128xf32, #tpu.memory_space<vmem>>, %arg7: memref<1x128xf32, #tpu.memory_space<vmem>>, %arg8: memref<256x128xf32, #tpu.memory_space<vmem>>) attributes {dimension_semantics = [#tpu.dimension_semantics<parallel>, #tpu.dimension_semantics<parallel>], iteration_bounds = array<i64: 1, 1>, scalar_prefetch = 0 : i64, scratch_operands = 0 : i64, tpu.core_type = #tpu.core_type<tc>, window_params = [{transform_indices = @transform_0, window_bounds = array<i64: 256, 256>}, {transform_indices = @transform_1, window_bounds = array<i64: 256, 128>}, {transform_indices = @transform_2, window_bounds = array<i64: 1, 128>}, {transform_indices = @transform_3, window_bounds = array<i64: 256, 128>}, {transform_indices = @transform_4, window_bounds = array<i64: 1, 128>}, {transform_indices = @transform_5, window_bounds = array<i64: 1, 128>}, {transform_indices = @transform_6, window_bounds = array<i64: 256, 128>}]} {
    %c0 = arith.constant 0 : index
    %c0_0 = arith.constant 0 : index
    %0 = vector.load %arg2[%c0, %c0_0] : memref<256x256xbf16, #tpu.memory_space<vmem>>, vector<256x256xbf16>
    %c0_1 = arith.constant 0 : index
    %c0_2 = arith.constant 0 : index
    %1 = vector.load %arg3[%c0_1, %c0_2] : memref<256x128xbf16, #tpu.memory_space<vmem>>, vector<256x128xbf16>
    %cst = arith.constant dense<0.000000e+00> : vector<256x128xf32>
    %2 = tpu.matmul %0, %1, %cst {dimension_numbers = #tpu.dot_dimension_numbers<[1], [0], [0], [1], [0, 0, 1, 1], [], []>} : vector<256x256xbf16>, vector<256x128xbf16>, vector<256x128xf32> -> vector<256x128xf32>
    %c0_3 = arith.constant 0 : index
    %c0_4 = arith.constant 0 : index
    %3 = vector.load %arg4[%c0_3, %c0_4] : memref<1x128xf32, #tpu.memory_space<vmem>>, vector<1x128xf32>
    %4 = vector.broadcast %3 : vector<1x128xf32> to vector<256x128xf32>
    %5 = arith.addf %2, %4 : vector<256x128xf32>
    %c0_5 = arith.constant 0 : index
    %c0_6 = arith.constant 0 : index
    %6 = vector.load %arg5[%c0_5, %c0_6] : memref<256x128xf32, #tpu.memory_space<vmem>>, vector<256x128xf32>
    %7 = arith.addf %5, %6 : vector<256x128xf32>
    %cst_7 = arith.constant dense<0.000000e+00> : vector<256xf32>
    %8 = vector.multi_reduction <add>, %7, %cst_7 [1] : vector<256x128xf32> to vector<256xf32>
    %9 = vector.shape_cast %8 : vector<256xf32> to vector<256x1xf32>
    %cst_8 = arith.constant 1.280000e+02 : f32
    %10 = vector.broadcast %cst_8 : f32 to vector<256x1xf32>
    %11 = arith.divf %9, %10 : vector<256x1xf32>
    %12 = vector.broadcast %11 : vector<256x1xf32> to vector<256x128xf32>
    %13 = arith.subf %7, %12 : vector<256x128xf32>
    %14 = arith.mulf %13, %13 : vector<256x128xf32>
    %cst_9 = arith.constant dense<0.000000e+00> : vector<256xf32>
    %15 = vector.multi_reduction <add>, %14, %cst_9 [1] : vector<256x128xf32> to vector<256xf32>
    %16 = vector.shape_cast %15 : vector<256xf32> to vector<256x1xf32>
    %cst_10 = arith.constant 1.280000e+02 : f32
    %17 = vector.broadcast %cst_10 : f32 to vector<256x1xf32>
    %18 = arith.divf %16, %17 : vector<256x1xf32>
    %cst_11 = arith.constant 9.99999974E-6 : f32
    %19 = vector.broadcast %cst_11 : f32 to vector<256x1xf32>
    %20 = arith.addf %18, %19 : vector<256x1xf32>
    %21 = math.rsqrt %20 : vector<256x1xf32>
    %22 = vector.broadcast %21 : vector<256x1xf32> to vector<256x128xf32>
    %23 = arith.mulf %13, %22 : vector<256x128xf32>
    %c0_12 = arith.constant 0 : index
    %c0_13 = arith.constant 0 : index
    %24 = vector.load %arg6[%c0_12, %c0_13] : memref<1x128xf32, #tpu.memory_space<vmem>>, vector<1x128xf32>
    %25 = vector.broadcast %24 : vector<1x128xf32> to vector<256x128xf32>
    %26 = arith.mulf %23, %25 : vector<256x128xf32>
    %c0_14 = arith.constant 0 : index
    %c0_15 = arith.constant 0 : index
    %27 = vector.load %arg7[%c0_14, %c0_15] : memref<1x128xf32, #tpu.memory_space<vmem>>, vector<1x128xf32>
    %28 = vector.broadcast %27 : vector<1x128xf32> to vector<256x128xf32>
    %29 = arith.addf %26, %28 : vector<256x128xf32>
    %c0_16 = arith.constant 0 : index
    %c0_17 = arith.constant 0 : index
    %30 = vector.load %arg8[%c0_16, %c0_17] : memref<256x128xf32, #tpu.memory_space<vmem>>, vector<256x128xf32>
    tpu.vector_store %arg8[%c0_16, %c0_17], %29 {strides = array<i32>} : memref<256x128xf32, #tpu.memory_space<vmem>>, vector<256x128xf32>,
    return
  }
  func.func @transform_0(%arg0: i32, %arg1: i32) -> (i32, i32) {
    %c0_i32 = arith.constant 0 : i32
    %c0_i32_0 = arith.constant 0 : i32
    return %arg0, %c0_i32 : i32, i32
  }
  func.func @transform_1(%arg0: i32, %arg1: i32) -> (i32, i32) {
    %c0_i32 = arith.constant 0 : i32
    %c0_i32_0 = arith.constant 0 : i32
    return %c0_i32, %arg1 : i32, i32
  }
  func.func @transform_2(%arg0: i32, %arg1: i32) -> (i32, i32) {
    %c0_i32 = arith.constant 0 : i32
    %c0_i32_0 = arith.constant 0 : i32
    return %c0_i32, %arg1 : i32, i32
  }
  func.func @transform_3(%arg0: i32, %arg1: i32) -> (i32, i32) {
    %c0_i32 = arith.constant 0 : i32
    return %arg0, %arg1 : i32, i32
  }
  func.func @transform_4(%arg0: i32, %arg1: i32) -> (i32, i32) {
    %c0_i32 = arith.constant 0 : i32
    %c0_i32_0 = arith.constant 0 : i32
    return %c0_i32, %arg1 : i32, i32
  }
  func.func @transform_5(%arg0: i32, %arg1: i32) -> (i32, i32) {
    %c0_i32 = arith.constant 0 : i32
    %c0_i32_0 = arith.constant 0 : i32
    return %c0_i32, %arg1 : i32, i32
  }
  func.func @transform_6(%arg0: i32, %arg1: i32) -> (i32, i32) {
    %c0_i32 = arith.constant 0 : i32
    return %arg0, %arg1 : i32, i32
  }
}

module attributes {stable_mosaic.version = 11 : i64} {
  func.func @_layernorm_kernel(%arg0: i32, %arg1: memref<256x128xf32, #tpu.memory_space<vmem>>, %arg2: memref<1x128xf32, #tpu.memory_space<vmem>>, %arg3: memref<1x128xf32, #tpu.memory_space<vmem>>, %arg4: memref<256x128xbf16, #tpu.memory_space<vmem>>) attributes {dimension_semantics = [#tpu.dimension_semantics<parallel>], iteration_bounds = array<i64: 1>, scalar_prefetch = 0 : i64, scratch_operands = 0 : i64, tpu.core_type = #tpu.core_type<tc>, window_params = [{transform_indices = @transform_0, window_bounds = array<i64: 256, 128>}, {pipeline_mode = #tpu.pipeline_mode<synchronous>, transform_indices = @transform_1, window_bounds = array<i64: 1, 128>}, {pipeline_mode = #tpu.pipeline_mode<synchronous>, transform_indices = @transform_2, window_bounds = array<i64: 1, 128>}, {transform_indices = @transform_3, window_bounds = array<i64: 256, 128>}]} {
    %c0 = arith.constant 0 : index
    %c0_0 = arith.constant 0 : index
    %0 = vector.load %arg1[%c0, %c0_0] : memref<256x128xf32, #tpu.memory_space<vmem>>, vector<256x128xf32>
    %cst = arith.constant dense<0.000000e+00> : vector<256xf32>
    %1 = vector.multi_reduction <add>, %0, %cst [1] : vector<256x128xf32> to vector<256xf32>
    %2 = vector.shape_cast %1 : vector<256xf32> to vector<256x1xf32>
    %cst_1 = arith.constant 1.280000e+02 : f32
    %3 = vector.broadcast %cst_1 : f32 to vector<256x1xf32>
    %4 = arith.divf %2, %3 : vector<256x1xf32>
    %5 = vector.broadcast %4 : vector<256x1xf32> to vector<256x128xf32>
    %6 = arith.subf %0, %5 : vector<256x128xf32>
    %7 = arith.mulf %6, %6 : vector<256x128xf32>
    %cst_2 = arith.constant dense<0.000000e+00> : vector<256xf32>
    %8 = vector.multi_reduction <add>, %7, %cst_2 [1] : vector<256x128xf32> to vector<256xf32>
    %9 = vector.shape_cast %8 : vector<256xf32> to vector<256x1xf32>
    %cst_3 = arith.constant 1.280000e+02 : f32
    %10 = vector.broadcast %cst_3 : f32 to vector<256x1xf32>
    %11 = arith.divf %9, %10 : vector<256x1xf32>
    %cst_4 = arith.constant 9.99999974E-6 : f32
    %12 = vector.broadcast %cst_4 : f32 to vector<256x1xf32>
    %13 = arith.addf %11, %12 : vector<256x1xf32>
    %14 = math.rsqrt %13 : vector<256x1xf32>
    %15 = vector.broadcast %14 : vector<256x1xf32> to vector<256x128xf32>
    %16 = arith.mulf %6, %15 : vector<256x128xf32>
    %c0_5 = arith.constant 0 : index
    %c0_6 = arith.constant 0 : index
    %17 = vector.load %arg2[%c0_5, %c0_6] : memref<1x128xf32, #tpu.memory_space<vmem>>, vector<1x128xf32>
    %18 = vector.broadcast %17 : vector<1x128xf32> to vector<256x128xf32>
    %19 = arith.mulf %16, %18 : vector<256x128xf32>
    %c0_7 = arith.constant 0 : index
    %c0_8 = arith.constant 0 : index
    %20 = vector.load %arg3[%c0_7, %c0_8] : memref<1x128xf32, #tpu.memory_space<vmem>>, vector<1x128xf32>
    %21 = vector.broadcast %20 : vector<1x128xf32> to vector<256x128xf32>
    %22 = arith.addf %19, %21 : vector<256x128xf32>
    %23 = arith.truncf %22 : vector<256x128xf32> to vector<256x128xbf16>
    %c0_9 = arith.constant 0 : index
    %c0_10 = arith.constant 0 : index
    %24 = vector.load %arg4[%c0_9, %c0_10] : memref<256x128xbf16, #tpu.memory_space<vmem>>, vector<256x128xbf16>
    tpu.vector_store %arg4[%c0_9, %c0_10], %23 {strides = array<i32>} : memref<256x128xbf16, #tpu.memory_space<vmem>>, vector<256x128xbf16>,
    return
  }
  func.func @transform_0(%arg0: i32) -> (i32, i32) {
    %c0_i32 = arith.constant 0 : i32
    %c0_i32_0 = arith.constant 0 : i32
    return %arg0, %c0_i32 : i32, i32
  }
  func.func @transform_1(%arg0: i32) -> (i32, i32) {
    %c0_i32 = arith.constant 0 : i32
    %c0_i32_0 = arith.constant 0 : i32
    %c0_i32_1 = arith.constant 0 : i32
    return %c0_i32, %c0_i32_0 : i32, i32
  }
  func.func @transform_2(%arg0: i32) -> (i32, i32) {
    %c0_i32 = arith.constant 0 : i32
    %c0_i32_0 = arith.constant 0 : i32
    %c0_i32_1 = arith.constant 0 : i32
    return %c0_i32, %c0_i32_0 : i32, i32
  }
  func.func @transform_3(%arg0: i32) -> (i32, i32) {
    %c0_i32 = arith.constant 0 : i32
    %c0_i32_0 = arith.constant 0 : i32
    return %arg0, %c0_i32 : i32, i32
  }
}

module attributes {stable_mosaic.version = 11 : i64} {
  func.func @_matmul_kernel(%arg0: i32, %arg1: i32, %arg2: memref<256x128xbf16, #tpu.memory_space<vmem>>, %arg3: memref<128x256xbf16, #tpu.memory_space<vmem>>, %arg4: memref<256x256xf32, #tpu.memory_space<vmem>>) attributes {dimension_semantics = [#tpu.dimension_semantics<parallel>, #tpu.dimension_semantics<parallel>], iteration_bounds = array<i64: 1, 1>, scalar_prefetch = 0 : i64, scratch_operands = 0 : i64, tpu.core_type = #tpu.core_type<tc>, window_params = [{transform_indices = @transform_0, window_bounds = array<i64: 256, 128>}, {transform_indices = @transform_1, window_bounds = array<i64: 128, 256>}, {transform_indices = @transform_2, window_bounds = array<i64: 256, 256>}]} {
    %c0 = arith.constant 0 : index
    %c0_0 = arith.constant 0 : index
    %0 = vector.load %arg2[%c0, %c0_0] : memref<256x128xbf16, #tpu.memory_space<vmem>>, vector<256x128xbf16>
    %c0_1 = arith.constant 0 : index
    %c0_2 = arith.constant 0 : index
    %1 = vector.load %arg3[%c0_1, %c0_2] : memref<128x256xbf16, #tpu.memory_space<vmem>>, vector<128x256xbf16>
    %cst = arith.constant dense<0.000000e+00> : vector<256x256xf32>
    %2 = tpu.matmul %0, %1, %cst {dimension_numbers = #tpu.dot_dimension_numbers<[1], [0], [0], [1], [0, 0, 1, 1], [], []>} : vector<256x128xbf16>, vector<128x256xbf16>, vector<256x256xf32> -> vector<256x256xf32>
    %c0_3 = arith.constant 0 : index
    %c0_4 = arith.constant 0 : index
    %3 = vector.load %arg4[%c0_3, %c0_4] : memref<256x256xf32, #tpu.memory_space<vmem>>, vector<256x256xf32>
    tpu.vector_store %arg4[%c0_3, %c0_4], %2 {strides = array<i32>} : memref<256x256xf32, #tpu.memory_space<vmem>>, vector<256x256xf32>,
    return
  }
  func.func @transform_0(%arg0: i32, %arg1: i32) -> (i32, i32) {
    %c0_i32 = arith.constant 0 : i32
    %c0_i32_0 = arith.constant 0 : i32
    return %arg0, %c0_i32 : i32, i32
  }
  func.func @transform_1(%arg0: i32, %arg1: i32) -> (i32, i32) {
    %c0_i32 = arith.constant 0 : i32
    %c0_i32_0 = arith.constant 0 : i32
    return %c0_i32, %arg1 : i32, i32
  }
  func.func @transform_2(%arg0: i32, %arg1: i32) -> (i32, i32) {
    %c0_i32 = arith.constant 0 : i32
    return %arg0, %arg1 : i32, i32
  }
}

</mosaic_0001>

<llo_original>
// kernel: relative_transformer.12
$region0: #{relative_transformer.12}
  #allocation0 [shape = 'u32[]', space=smem, size = 0x4, offset = 0x4, fixed_abs, tag = 'smem constant byte address 0x4 - core index']
  #allocation1 [shape = 'u32[144,128]{1,0:T(1,128)}', space=vmem, size = 0x12000, scoped, tag = 'internal scratch']
  %s0 = inlined_call_operand.vmem [shape: f32[256,128], index: 0, kind: input, shape index: {}]
  %s1 = inlined_call_operand.vmem [shape: bf16[128,384], index: 1, kind: input, shape index: {}]
  %s2 = inlined_call_operand.vmem [shape: f32[1,384], index: 2, kind: input, shape index: {}]
  %s3 = inlined_call_operand.vmem [shape: bf16[256,384], index: 3, kind: output, shape index: {}]
  %s4 = sld [smem:[#allocation0]]
  $region123: #{relative_transformer.12} parent=0
    _
  %s6 = ssub.s32 1, %s4
  %s7 = scalar_select 0, %s6, %s4
  $region1: #{relative_transformer.12} parent=0
    #allocation2 [shape = 'u8[65536]{0}', space=vmem, size = 0x10000, scoped, tag = 'input window, operand 1']
    #allocation3 [shape = 'u8[131072]{0}', space=vmem, size = 0x20000, scoped, tag = 'output window, operand 0']
    loop: start=0, step=1, limit=5
    $region2: #{relative_transformer.12} parent=1 // loop_pre_header
      _
    $region3: #{relative_transformer.12} parent=1 // loop_header
      %s9 = sphi 0, %s13
      %p10 = scmp.ge.s32.totalorder %s9, 5
      %s16 = sphi 0, %s28
      %s17 = sphi 0, %s24
      %s18 = sphi 0, %s16
      %s19 = sphi 0, %s17
      %s20 = sphi 0, %s18
      %s21 = sphi 0, %s19
      %s31 = sphi 0, %s33
      %s34 = sphi 0, %s31
      %s35 = sphi 0, %s34
      %s51 = sphi 0, %s35
      %s57 = sphi 0, %s59
      %s60 = sphi 0, %s57
      %s61 = sphi 0, %s60
      %s77 = sphi 0, %s61
      %s83 = sphi 0, %s85
      %s86 = sphi 0, %s83
      %s87 = sphi 0, %s86
      %s103 = sphi 0, %s87
      %s111 = sphi 0, %s113
      %s114 = sphi 0, %s111
      %s115 = sphi 0, %s114
      %s131 = sphi 0, %s115
    $region4: #{relative_transformer.12} parent=1 // loop_header_branch
      %12 = sbr.rel (%p10) target = $region8
    $region5: #{relative_transformer.12} parent=1 // loop_body
      %s14 = ssub.s32 %s9, 1
      %s15 = ssub.s32 %s9, 2
      %s22 = sadd.s32 1, %s17
      %p23 = scmp.ge.s32.totalorder %s22, 3
      %s24 = scalar_select %p23, 0, %s22
      %s25 = sadd.s32 1, %s16
      %s26 = scalar_select %p23, %s25, %s16
      %p27 = scmp.ge.s32.totalorder %s26, 1
      %s28 = scalar_select %p27, 0, %s26
      %s29 = ssub.s32 %s16, %s28
      %p30 = scmp.eq.s32.totalorder %s29, 0
      %s32 = sadd.s32 %s31, 1
      %s33 = scalar_select %p30, %s31, %s32
      %p36 = pneg %p30
      %p37 = scmp.eq.s32.totalorder %s9, 2
      %p38 = por %p36, %p37
      %p39 = scmp.ne.s32.totalorder %s31, %s34
      %p40 = scmp.eq.s32.totalorder %s9, 0
      %p41 = por %p39, %p40
      %p42 = scmp.ne.s32.totalorder %s31, %s34
      %p43 = scmp.eq.s32.totalorder %s14, 2
      %p44 = por %p42, %p43
      %p45 = scmp.ne.s32.totalorder %s34, %s35
      %p46 = scmp.eq.s32.totalorder %s14, 0
      %p47 = por %p45, %p46
      %p48 = scmp.ne.s32.totalorder %s34, %s35
      %p49 = scmp.eq.s32.totalorder %s15, 2
      %p50 = por %p48, %p49
      %p52 = scmp.ne.s32.totalorder %s35, %s51
      %p53 = scmp.eq.s32.totalorder %s15, 0
      %p54 = por %p52, %p53
      %s55 = ssub.s32 %s17, %s24
      %p56 = scmp.eq.s32.totalorder %s55, 0
      %s58 = sadd.s32 %s57, 1
      %s59 = scalar_select %p56, %s57, %s58
      %p62 = pneg %p56
      %p63 = scmp.eq.s32.totalorder %s9, 2
      %p64 = por %p62, %p63
      %p65 = scmp.ne.s32.totalorder %s57, %s60
      %p66 = scmp.eq.s32.totalorder %s9, 0
      %p67 = por %p65, %p66
      %p68 = scmp.ne.s32.totalorder %s57, %s60
      %p69 = scmp.eq.s32.totalorder %s14, 2
      %p70 = por %p68, %p69
      %p71 = scmp.ne.s32.totalorder %s60, %s61
      %p72 = scmp.eq.s32.totalorder %s14, 0
      %p73 = por %p71, %p72
      %p74 = scmp.ne.s32.totalorder %s60, %s61
      %p75 = scmp.eq.s32.totalorder %s15, 2
      %p76 = por %p74, %p75
      %p78 = scmp.ne.s32.totalorder %s61, %s77
      %p79 = scmp.eq.s32.totalorder %s15, 0
      %p80 = por %p78, %p79
      %s81 = ssub.s32 %s17, %s24
      %p82 = scmp.eq.s32.totalorder %s81, 0
      %s84 = sadd.s32 %s83, 1
      %s85 = scalar_select %p82, %s83, %s84
      %p88 = pneg %p82
      %p89 = scmp.eq.s32.totalorder %s9, 2
      %p90 = por %p88, %p89
      %p91 = scmp.ne.s32.totalorder %s83, %s86
      %p92 = scmp.eq.s32.totalorder %s9, 0
      %p93 = por %p91, %p92
      %p94 = scmp.ne.s32.totalorder %s83, %s86
      %p95 = scmp.eq.s32.totalorder %s14, 2
      %p96 = por %p94, %p95
      %p97 = scmp.ne.s32.totalorder %s86, %s87
      %p98 = scmp.eq.s32.totalorder %s14, 0
      %p99 = por %p97, %p98
      %p100 = scmp.ne.s32.totalorder %s86, %s87
      %p101 = scmp.eq.s32.totalorder %s15, 2
      %p102 = por %p100, %p101
      %p104 = scmp.ne.s32.totalorder %s87, %s103
      %p105 = scmp.eq.s32.totalorder %s15, 0
      %p106 = por %p104, %p105
      %s107 = ssub.s32 %s16, %s28
      %s108 = ssub.s32 %s17, %s24
      %s109 = sor.u32 %s107, %s108
      %p110 = scmp.eq.s32.totalorder %s109, 0
      %s112 = sadd.s32 %s111, 1
      %s113 = scalar_select %p110, %s111, %s112
      %p116 = pneg %p110
      %p117 = scmp.eq.s32.totalorder %s9, 2
      %p118 = por %p116, %p117
      %p119 = scmp.ne.s32.totalorder %s111, %s114
      %p120 = scmp.eq.s32.totalorder %s9, 0
      %p121 = por %p119, %p120
      %p122 = scmp.ne.s32.totalorder %s111, %s114
      %p123 = scmp.eq.s32.totalorder %s14, 2
      %p124 = por %p122, %p123
      %p125 = scmp.ne.s32.totalorder %s114, %s115
      %p126 = scmp.eq.s32.totalorder %s14, 0
      %p127 = por %p125, %p126
      %p128 = scmp.ne.s32.totalorder %s114, %s115
      %p129 = scmp.eq.s32.totalorder %s15, 2
      %p130 = por %p128, %p129
      %p132 = scmp.ne.s32.totalorder %s115, %s131
      %p133 = scmp.eq.s32.totalorder %s15, 0
      %p134 = por %p132, %p133
      %p135 = scmp.le.s32.totalorder 1, %s9
      %p136 = scmp.lt.s32.totalorder %s9, 4
      %p137 = pnand %p135, %p136
      %p138 = pneg %p137
      // Predicated region
      $region9: #{relative_transformer.12} parent=5 // pred_check
        _
      $region10: #{relative_transformer.12} parent=5 // pred_check_branch
        %140 = sbr.rel (%p137) target = $region12
      $region11: #{relative_transformer.12} parent=5 // pred_region
        %s141 = ssub.s32 %s9, 1
        // Predicated region
        $region13: #{relative_transformer.12} parent=11 // pred_check
          %p142 = pneg %p47
        $region14: #{relative_transformer.12} parent=11 // pred_check_branch
          %144 = sbr.rel (%p142) target = $region16
        $region15: #{relative_transformer.12} parent=11 // pred_region
          %s145 = smul.u32 32, %s18
          %p146 = scmp.lt.s32.totalorder %s145, 31
          %s147 = scalar_select %p146, %s145, 31
          %s148 = smul.addr %s147, 8
          %s149 = scalar_lea.vmem %s0, %s148
          %s150 = smul.u32 32, %s18
        $region16: #{relative_transformer.12} parent=11 // pred_fallthru
          _
      $region12: #{relative_transformer.12} parent=5 // pred_fallthru
        _
      %p151 = scmp.lt.s32.totalorder %s9, 3
      // Predicated region
      $region17: #{relative_transformer.12} parent=5 // pred_check
        %p152 = pneg %p151
      $region18: #{relative_transformer.12} parent=5 // pred_check_branch
        %154 = sbr.rel (%p152) target = $region20
      $region19: #{relative_transformer.12} parent=5 // pred_region
        // Predicated region
        $region21: #{relative_transformer.12} parent=19 // pred_check
          %p155 = pneg %p67
        $region22: #{relative_transformer.12} parent=19 // pred_check_branch
          %157 = sbr.rel (%p155) target = $region24
        $region23: #{relative_transformer.12} parent=19 // pred_region
          %s158 = sand.u32 %s57, 1
          %s159 = sand.u32 %s57, 1
          %s160 = smul.addr %s159, 64
          %s161 = scalar_lea.vmem [#allocation2], %s160
          %s162 = smul.addr %s17, 4
          %s163 = scalar_lea.vmem %s1, %s162
          // Predicated region
          $region25: #{relative_transformer.12} parent=23 // pred_check
            _
          $region26: #{relative_transformer.12} parent=23 // pred_check_branch
            %165 = sbr.rel (0) target = $region28
          $region27: #{relative_transformer.12} parent=23 // pred_region
            // Predicated region
            $region29: #{relative_transformer.12} parent=27 // pred_check
              _
            $region30: #{relative_transformer.12} parent=27 // pred_check_branch
              %167 = sbr.rel target = $region32
            $region31: #{relative_transformer.12} parent=27 // pred_region
              // Predicated region
              $region44: #{relative_transformer.12} parent=31 // pred_check
                _
              $region45: #{relative_transformer.12} parent=31 // pred_check_branch
                %212 = sbr.rel (0) target = $region47
              $region46: #{relative_transformer.12} parent=31 // pred_region
                loop: start=0, step=1, limit=1
                $region48: #{relative_transformer.12} parent=46 // loop_pre_header
                  _
                $region49: #{relative_transformer.12} parent=46 // loop_header
                  %s214 = sphi 0, %s218
                  %p215 = scmp.ge.s32.totalorder %s214, 1
                  %s219 = sphi %s163, %s163
                  %s220 = sphi %s161, %s161
                $region50: #{relative_transformer.12} parent=46 // loop_header_branch
                  %217 = sbr.rel (%p215) target = $region54
                $region51: #{relative_transformer.12} parent=46 // loop_body
                  _
                $region52: #{relative_transformer.12} parent=46 // loop_footer
                  %s218 = sadd.s32 1, %s214
                $region53: #{relative_transformer.12} parent=46 // loop_footer_branch
                  %213 = sbr.rel target = $region49
                $region54: #{relative_transformer.12} parent=46 // loop_exit
                  _
                loop: start=0, step=1, limit=1
                $region55: #{relative_transformer.12} parent=46 // loop_pre_header
                  _
                $region56: #{relative_transformer.12} parent=46 // loop_header
                  %s223 = sphi 0, %s227
                  %p224 = scmp.ge.s32.totalorder %s223, 1
                  %s228 = sphi %s163, %s163
                  %s229 = sphi %s161, %s161
                $region57: #{relative_transformer.12} parent=46 // loop_header_branch
                  %226 = sbr.rel (%p224) target = $region61
                $region58: #{relative_transformer.12} parent=46 // loop_body
                  %v230 = vld [vmem:[%s228] sm:$0xf]
                  %231 = vst [vmem:[%s229] sm:$0xf] %v230
                  %v232 = vld [vmem:[%s228 + $0xc] sm:$0xf]
                  %233 = vst [vmem:[%s229 + $0x4] sm:$0xf] %v232
                  %v234 = vld [vmem:[%s228 + $0x18] sm:$0xf]
                  %235 = vst [vmem:[%s229 + $0x8] sm:$0xf] %v234
                  %v236 = vld [vmem:[%s228 + $0x24] sm:$0xf]
                  %237 = vst [vmem:[%s229 + $0xc] sm:$0xf] %v236
                  %v238 = vld [vmem:[%s228 + $0x30] sm:$0xf]
                  %239 = vst [vmem:[%s229 + $0x10] sm:$0xf] %v238
                  %v240 = vld [vmem:[%s228 + $0x3c] sm:$0xf]
                  %241 = vst [vmem:[%s229 + $0x14] sm:$0xf] %v240
                  %v242 = vld [vmem:[%s228 + $0x48] sm:$0xf]
                  %243 = vst [vmem:[%s229 + $0x18] sm:$0xf] %v242
                  %v244 = vld [vmem:[%s228 + $0x54] sm:$0xf]
                  %245 = vst [vmem:[%s229 + $0x1c] sm:$0xf] %v244
                  %v246 = vld [vmem:[%s228 + $0x60] sm:$0xf]
                  %247 = vst [vmem:[%s229 + $0x20] sm:$0xf] %v246
                  %v248 = vld [vmem:[%s228 + $0x6c] sm:$0xf]
                  %249 = vst [vmem:[%s229 + $0x24] sm:$0xf] %v248
                  %v250 = vld [vmem:[%s228 + $0x78] sm:$0xf]
                  %251 = vst [vmem:[%s229 + $0x28] sm:$0xf] %v250
                  %v252 = vld [vmem:[%s228 + $0x84] sm:$0xf]
                  %253 = vst [vmem:[%s229 + $0x2c] sm:$0xf] %v252
                  %v254 = vld [vmem:[%s228 + $0x90] sm:$0xf]
                  %255 = vst [vmem:[%s229 + $0x30] sm:$0xf] %v254
                  %v256 = vld [vmem:[%s228 + $0x9c] sm:$0xf]
                  %257 = vst [vmem:[%s229 + $0x34] sm:$0xf] %v256
                  %v258 = vld [vmem:[%s228 + $0xa8] sm:$0xf]
                  %259 = vst [vmem:[%s229 + $0x38] sm:$0xf] %v258
                  %v260 = vld [vmem:[%s228 + $0xb4] sm:$0xf]
                  %261 = vst [vmem:[%s229 + $0x3c] sm:$0xf] %v260
                $region59: #{relative_transformer.12} parent=46 // loop_footer
                  %s227 = sadd.s32 1, %s223
                $region60: #{relative_transformer.12} parent=46 // loop_footer_branch
                  %222 = sbr.rel target = $region56
                $region61: #{relative_transformer.12} parent=46 // loop_exit
                  _
              $region47: #{relative_transformer.12} parent=31 // pred_fallthru
                _
            $region32: #{relative_transformer.12} parent=27 // pred_fallthru
              _
            // Predicated region
            $region33: #{relative_transformer.12} parent=27 // pred_check
              _
            $region34: #{relative_transformer.12} parent=27 // pred_check_branch
              %169 = sbr.rel (0) target = $region36
            $region35: #{relative_transformer.12} parent=27 // pred_region
              loop: start=0, step=1, limit=1
              $region37: #{relative_transformer.12} parent=35 // loop_pre_header
                _
              $region38: #{relative_transformer.12} parent=35 // loop_header
                %s172 = sphi 0, %s176
                %p173 = scmp.ge.s32.totalorder %s172, 1
                %s177 = sphi %s163, %s163
                %s178 = sphi %s161, %s161
              $region39: #{relative_transformer.12} parent=35 // loop_header_branch
                %175 = sbr.rel (%p173) target = $region43
              $region40: #{relative_transformer.12} parent=35 // loop_body
                %v179 = vld [vmem:[%s177] sm:$0xf]
                %180 = vst [vmem:[%s178] sm:$0xf] %v179
                %v181 = vld [vmem:[%s177 + $0xc] sm:$0xf]
                %182 = vst [vmem:[%s178 + $0x4] sm:$0xf] %v181
                %v183 = vld [vmem:[%s177 + $0x18] sm:$0xf]
                %184 = vst [vmem:[%s178 + $0x8] sm:$0xf] %v183
                %v185 = vld [vmem:[%s177 + $0x24] sm:$0xf]
                %186 = vst [vmem:[%s178 + $0xc] sm:$0xf] %v185
                %v187 = vld [vmem:[%s177 + $0x30] sm:$0xf]
                %188 = vst [vmem:[%s178 + $0x10] sm:$0xf] %v187
                %v189 = vld [vmem:[%s177 + $0x3c] sm:$0xf]
                %190 = vst [vmem:[%s178 + $0x14] sm:$0xf] %v189
                %v191 = vld [vmem:[%s177 + $0x48] sm:$0xf]
                %192 = vst [vmem:[%s178 + $0x18] sm:$0xf] %v191
                %v193 = vld [vmem:[%s177 + $0x54] sm:$0xf]
                %194 = vst [vmem:[%s178 + $0x1c] sm:$0xf] %v193
                %v195 = vld [vmem:[%s177 + $0x60] sm:$0xf]
                %196 = vst [vmem:[%s178 + $0x20] sm:$0xf] %v195
                %v197 = vld [vmem:[%s177 + $0x6c] sm:$0xf]
                %198 = vst [vmem:[%s178 + $0x24] sm:$0xf] %v197
                %v199 = vld [vmem:[%s177 + $0x78] sm:$0xf]
                %200 = vst [vmem:[%s178 + $0x28] sm:$0xf] %v199
                %v201 = vld [vmem:[%s177 + $0x84] sm:$0xf]
                %202 = vst [vmem:[%s178 + $0x2c] sm:$0xf] %v201
                %v203 = vld [vmem:[%s177 + $0x90] sm:$0xf]
                %204 = vst [vmem:[%s178 + $0x30] sm:$0xf] %v203
                %v205 = vld [vmem:[%s177 + $0x9c] sm:$0xf]
                %206 = vst [vmem:[%s178 + $0x34] sm:$0xf] %v205
                %v207 = vld [vmem:[%s177 + $0xa8] sm:$0xf]
                %208 = vst [vmem:[%s178 + $0x38] sm:$0xf] %v207
                %v209 = vld [vmem:[%s177 + $0xb4] sm:$0xf]
                %210 = vst [vmem:[%s178 + $0x3c] sm:$0xf] %v209
              $region41: #{relative_transformer.12} parent=35 // loop_footer
                %s176 = sadd.s32 1, %s172
              $region42: #{relative_transformer.12} parent=35 // loop_footer_branch
                %171 = sbr.rel target = $region38
              $region43: #{relative_transformer.12} parent=35 // loop_exit
                _
            $region36: #{relative_transformer.12} parent=27 // pred_fallthru
              _
          $region28: #{relative_transformer.12} parent=23 // pred_fallthru
            _
          %262 = vnop
        $region24: #{relative_transformer.12} parent=19 // pred_fallthru
          _
        // Predicated region
        $region62: #{relative_transformer.12} parent=19 // pred_check
          %p263 = pneg %p93
        $region63: #{relative_transformer.12} parent=19 // pred_check_branch
          %265 = sbr.rel (%p263) target = $region65
        $region64: #{relative_transformer.12} parent=19 // pred_region
          %p266 = scmp.lt.s32.totalorder %s17, 2
          %s267 = scalar_select %p266, %s17, 2
          %s268 = scalar_lea.vmem %s2, %s267
        $region65: #{relative_transformer.12} parent=19 // pred_fallthru
          _
      $region20: #{relative_transformer.12} parent=5 // pred_fallthru
        _
      %p269 = scmp.le.s32.totalorder 1, %s9
      %p270 = scmp.lt.s32.totalorder %s9, 4
      %p271 = pnand %p269, %p270
      %p272 = pneg %p271
      // Predicated region
      $region66: #{relative_transformer.12} parent=5 // pred_check
        _
      $region67: #{relative_transformer.12} parent=5 // pred_check_branch
        %274 = sbr.rel (%p271) target = $region69
      $region68: #{relative_transformer.12} parent=5 // pred_region
        %s275 = ssub.s32 %s9, 1
        %s276 = sand.u32 %s60, 1
        %s277 = sand.u32 %s60, 1
        %s278 = smul.addr %s277, 64
        %s279 = scalar_lea.vmem [#allocation2], %s278
        // Predicated region
        $region70: #{relative_transformer.12} parent=68 // pred_check
          %p280 = pneg %p73
        $region71: #{relative_transformer.12} parent=68 // pred_check_branch
          %282 = sbr.rel (%p280) target = $region73
        $region72: #{relative_transformer.12} parent=68 // pred_region
          _
        $region73: #{relative_transformer.12} parent=68 // pred_fallthru
          _
        %s283 = smul.u32 32, %s18
        %p284 = scmp.lt.s32.totalorder %s283, 31
        %s285 = scalar_select %p284, %s283, 31
        %s286 = smul.addr %s285, 8
        %s287 = scalar_lea.vmem %s0, %s286
        %p288 = pneg %p47
        %p289 = pneg %p44
        %s290 = sand.u32 %s60, 1
        %s291 = sand.u32 %s60, 1
        %s292 = smul.addr %s291, 64
        %s293 = scalar_lea.vmem [#allocation2], %s292
        %p294 = pneg %p73
        %p295 = pneg %p70
        %p296 = scmp.lt.s32.totalorder %s19, 2
        %s297 = scalar_select %p296, %s19, 2
        %s298 = scalar_lea.vmem %s2, %s297
        %p299 = pneg %p99
        %p300 = pneg %p96
        %p301 = pneg %p127
        %p302 = pneg %p124
        %s303 = sand.u32 %s114, 1
        %s304 = sand.u32 %s114, 1
        %s305 = smul.addr %s304, 128
        %s306 = scalar_lea.vmem [#allocation3], %s305
        %s307 = smul.u32 32, %s18
        %p308 = scmp.lt.s32.totalorder %s307, 31
        %s309 = scalar_select %p308, %s307, 31
        %s310 = smul.addr %s309, 8
        %s311 = scalar_lea.vmem %s0, %s310
        %s312 = smul.u32 32, %s18
        %p313 = scmp.lt.s32.totalorder %s19, 2
        %s314 = scalar_select %p313, %s19, 2
        %s315 = scalar_lea.vmem %s2, %s314
        %s316 = smul.u32 32, %s18
        %v318 = vld [vmem:[%s311] sm:$0xff]
        %v319 = vld [vmem:[%s311 + $0x8] sm:$0xff]
        %v320 = vld [vmem:[%s311 + $0x10] sm:$0xff]
        %v321 = vld [vmem:[%s311 + $0x18] sm:$0xff]
        %v322 = vld [vmem:[%s311 + $0x20] sm:$0xff]
        %v323 = vld [vmem:[%s311 + $0x28] sm:$0xff]
        %v324 = vld [vmem:[%s311 + $0x30] sm:$0xff]
        %v325 = vld [vmem:[%s311 + $0x38] sm:$0xff]
        %v326 = vld [vmem:[%s311 + $0x40] sm:$0xff]
        %v327 = vld [vmem:[%s311 + $0x48] sm:$0xff]
        %v328 = vld [vmem:[%s311 + $0x50] sm:$0xff]
        %v329 = vld [vmem:[%s311 + $0x58] sm:$0xff]
        %v330 = vld [vmem:[%s311 + $0x60] sm:$0xff]
        %v331 = vld [vmem:[%s311 + $0x68] sm:$0xff]
        %v332 = vld [vmem:[%s311 + $0x70] sm:$0xff]
        %v333 = vld [vmem:[%s311 + $0x78] sm:$0xff]
        %v334 = vld [vmem:[%s311 + $0x80] sm:$0xff]
        %v335 = vld [vmem:[%s311 + $0x88] sm:$0xff]
        %v336 = vld [vmem:[%s311 + $0x90] sm:$0xff]
        %v337 = vld [vmem:[%s311 + $0x98] sm:$0xff]
        %v338 = vld [vmem:[%s311 + $0xa0] sm:$0xff]
        %v339 = vld [vmem:[%s311 + $0xa8] sm:$0xff]
        %v340 = vld [vmem:[%s311 + $0xb0] sm:$0xff]
        %v341 = vld [vmem:[%s311 + $0xb8] sm:$0xff]
        %v342 = vld [vmem:[%s311 + $0xc0] sm:$0xff]
        %v343 = vld [vmem:[%s311 + $0xc8] sm:$0xff]
        %v344 = vld [vmem:[%s311 + $0xd0] sm:$0xff]
        %v345 = vld [vmem:[%s311 + $0xd8] sm:$0xff]
        %v346 = vld [vmem:[%s311 + $0xe0] sm:$0xff]
        %v347 = vld [vmem:[%s311 + $0xe8] sm:$0xff]
        %v348 = vld [vmem:[%s311 + $0xf0] sm:$0xff]
        %v349 = vld [vmem:[%s311 + $0xf8] sm:$0xff]
        %v350 = vld [vmem:[%s279] sm:$0xf]
        %v351 = vld [vmem:[%s279 + $0x4] sm:$0xf]
        %v352 = vld [vmem:[%s279 + $0x8] sm:$0xf]
        %v353 = vld [vmem:[%s279 + $0xc] sm:$0xf]
        %v354 = vld [vmem:[%s279 + $0x10] sm:$0xf]
        %v355 = vld [vmem:[%s279 + $0x14] sm:$0xf]
        %v356 = vld [vmem:[%s279 + $0x18] sm:$0xf]
        %v357 = vld [vmem:[%s279 + $0x1c] sm:$0xf]
        %v358 = vld [vmem:[%s279 + $0x20] sm:$0xf]
        %v359 = vld [vmem:[%s279 + $0x24] sm:$0xf]
        %v360 = vld [vmem:[%s279 + $0x28] sm:$0xf]
        %v361 = vld [vmem:[%s279 + $0x2c] sm:$0xf]
        %v362 = vld [vmem:[%s279 + $0x30] sm:$0xf]
        %v363 = vld [vmem:[%s279 + $0x34] sm:$0xf]
        %v364 = vld [vmem:[%s279 + $0x38] sm:$0xf]
        %v365 = vld [vmem:[%s279 + $0x3c] sm:$0xf]
        %v366 = vpack.c.bf16 %v319, %v318
        %v367 = vpack.c.bf16 %v321, %v320
        %v368 = vpack.c.bf16 %v323, %v322
        %v369 = vpack.c.bf16 %v325, %v324
        %v370 = vpack.c.bf16 %v327, %v326
        %v371 = vpack.c.bf16 %v329, %v328
        %v372 = vpack.c.bf16 %v331, %v330
        %v373 = vpack.c.bf16 %v333, %v332
        %v374 = vpack.c.bf16 %v335, %v334
        %v375 = vpack.c.bf16 %v337, %v336
        %v376 = vpack.c.bf16 %v339, %v338
        %v377 = vpack.c.bf16 %v341, %v340
        %v378 = vpack.c.bf16 %v343, %v342
        %v379 = vpack.c.bf16 %v345, %v344
        %v380 = vpack.c.bf16 %v347, %v346
        %v381 = vpack.c.bf16 %v349, %v348
        %v382 = vld [vmem:[%s315] sm:$0x1]
        %v384 = vlaneseq
        %v385 = vshrl.u32 %v384, 7
        %v386 = vsub.s32 0, %v385
        %v387 = vrot.slane %v382, %v386
        %v405 = vunpack.c.l.b16 %v350
        %v406 = vunpack.c.l.b16 %v351
        %v407 = vunpack.c.l.b16 %v352
        %v408 = vunpack.c.l.b16 %v353
        %v409 = vunpack.c.l.b16 %v354
        %v410 = vunpack.c.l.b16 %v355
        %v411 = vunpack.c.l.b16 %v356
        %v412 = vunpack.c.l.b16 %v357
        %v413 = vunpack.c.l.b16 %v358
        %v414 = vunpack.c.l.b16 %v359
        %v415 = vunpack.c.l.b16 %v360
        %v416 = vunpack.c.l.b16 %v361
        %v417 = vunpack.c.l.b16 %v362
        %v418 = vunpack.c.l.b16 %v363
        %v419 = vunpack.c.l.b16 %v364
        %v420 = vunpack.c.l.b16 %v365
        %v421 = vpack.c.b16 %v406, %v405
        %v422 = vpack.c.b16 %v408, %v407
        %v423 = vpack.c.b16 %v410, %v409
        %v424 = vpack.c.b16 %v412, %v411
        %v425 = vpack.c.b16 %v414, %v413
        %v426 = vpack.c.b16 %v416, %v415
        %v427 = vpack.c.b16 %v418, %v417
        %v428 = vpack.c.b16 %v420, %v419
        %437 = vmatprep.subr.bf16.mxu0 0
        %438 = vmatpush1.bf16.msra.mxu0 %v421
        %439 = vmatprep.subr.bf16.mxu0 0
        %440 = vmatpush1.bf16.msra.mxu0 %v422
        %441 = vmatprep.subr.bf16.mxu0 0
        %442 = vmatpush1.bf16.msra.mxu0 %v423
        %443 = vmatprep.subr.bf16.mxu0 0
        %444 = vmatpush1.bf16.msra.mxu0 %v424
        %445 = vmatprep.subr.bf16.mxu0 0
        %446 = vmatpush1.bf16.msra.mxu0 %v425
        %447 = vmatprep.subr.bf16.mxu0 0
        %448 = vmatpush1.bf16.msra.mxu0 %v426
        %449 = vmatprep.subr.bf16.mxu0 0
        %450 = vmatpush1.bf16.msra.mxu0 %v427
        %451 = vmatprep.subr.bf16.mxu0 0
        %452 = vmatpush1.bf16.msra.mxu0 %v428
        %453 = vmatprep.subr.bf16.mxu0 0
        %454 = vmatpush1.bf16.msra.mxu0 0
        %455 = vmatprep.subr.bf16.mxu0 0
        %456 = vmatpush1.bf16.msra.mxu0 0
        %457 = vmatprep.subr.bf16.mxu0 0
        %458 = vmatpush1.bf16.msra.mxu0 0
        %459 = vmatprep.subr.bf16.mxu0 0
        %460 = vmatpush1.bf16.msra.mxu0 0
        %461 = vmatprep.subr.bf16.mxu0 0
        %462 = vmatpush1.bf16.msra.mxu0 0
        %463 = vmatprep.subr.bf16.mxu0 0
        %464 = vmatpush1.bf16.msra.mxu0 0
        %465 = vmatprep.subr.bf16.mxu0 0
        %466 = vmatpush1.bf16.msra.mxu0 0
        %467 = vmatprep.subr.bf16.mxu0 0
        %468 = vmatpush1.bf16.msra.mxu0 0
        %469 = vmatprep.mubr.bf16.mxu0 0
        %470 = vmatmul.mubr.bf16.gmra.mrb[0].mxu0 %v366
        %v471 = vpop.f32.mrb[0].mxu0
        %v472 = vadd.f32 %v387, %v471
        %v473 = vpop.f32.mrb[0].mxu0
        %v474 = vpop.f32.mrb[0].mxu0
        %v475 = vadd.f32 %v387, %v474
        %v476 = vpop.f32.mrb[0].mxu0
        %477 = vmatprep.mubr.bf16.mxu0 0
        %478 = vmatmul.mubr.bf16.gmra.mrb[0].mxu0 %v367
        %v479 = vpop.f32.mrb[0].mxu0
        %v480 = vadd.f32 %v387, %v479
        %v481 = vpop.f32.mrb[0].mxu0
        %v482 = vpop.f32.mrb[0].mxu0
        %v483 = vadd.f32 %v387, %v482
        %v484 = vpop.f32.mrb[0].mxu0
        %485 = vmatprep.mubr.bf16.mxu0 0
        %486 = vmatmul.mubr.bf16.gmra.mrb[0].mxu0 %v368
        %v487 = vpop.f32.mrb[0].mxu0
        %v488 = vadd.f32 %v387, %v487
        %v489 = vpop.f32.mrb[0].mxu0
        %v490 = vpop.f32.mrb[0].mxu0
        %v491 = vadd.f32 %v387, %v490
        %v492 = vpop.f32.mrb[0].mxu0
        %493 = vmatprep.mubr.bf16.mxu0 0
        %494 = vmatmul.mubr.bf16.gmra.mrb[0].mxu0 %v369
        %v495 = vpop.f32.mrb[0].mxu0
        %v496 = vadd.f32 %v387, %v495
        %v497 = vpop.f32.mrb[0].mxu0
        %v498 = vpop.f32.mrb[0].mxu0
        %v499 = vadd.f32 %v387, %v498
        %v500 = vpop.f32.mrb[0].mxu0
        %501 = vmatprep.mubr.bf16.mxu0 0
        %502 = vmatmul.mubr.bf16.gmra.mrb[0].mxu0 %v370
        %v503 = vpop.f32.mrb[0].mxu0
        %v504 = vadd.f32 %v387, %v503
        %v505 = vpop.f32.mrb[0].mxu0
        %v506 = vpop.f32.mrb[0].mxu0
        %v507 = vadd.f32 %v387, %v506
        %v508 = vpop.f32.mrb[0].mxu0
        %509 = vmatprep.mubr.bf16.mxu0 0
        %510 = vmatmul.mubr.bf16.gmra.mrb[0].mxu0 %v371
        %v511 = vpop.f32.mrb[0].mxu0
        %v512 = vadd.f32 %v387, %v511
        %v513 = vpop.f32.mrb[0].mxu0
        %v514 = vpop.f32.mrb[0].mxu0
        %v515 = vadd.f32 %v387, %v514
        %v516 = vpop.f32.mrb[0].mxu0
        %517 = vmatprep.mubr.bf16.mxu0 0
        %518 = vmatmul.mubr.bf16.gmra.mrb[0].mxu0 %v372
        %v519 = vpop.f32.mrb[0].mxu0
        %v520 = vadd.f32 %v387, %v519
        %v521 = vpop.f32.mrb[0].mxu0
        %v522 = vpop.f32.mrb[0].mxu0
        %v523 = vadd.f32 %v387, %v522
        %v524 = vpop.f32.mrb[0].mxu0
        %525 = vmatprep.mubr.bf16.mxu0 0
        %526 = vmatmul.mubr.bf16.gmra.mrb[0].mxu0 %v373
        %v527 = vpop.f32.mrb[0].mxu0
        %v528 = vadd.f32 %v387, %v527
        %v529 = vpop.f32.mrb[0].mxu0
        %v530 = vpop.f32.mrb[0].mxu0
        %v531 = vadd.f32 %v387, %v530
        %v532 = vpop.f32.mrb[0].mxu0
        %533 = vmatprep.mubr.bf16.mxu0 0
        %534 = vmatmul.mubr.bf16.gmra.mrb[0].mxu0 %v374
        %v535 = vpop.f32.mrb[0].mxu0
        %v536 = vadd.f32 %v387, %v535
        %v537 = vpop.f32.mrb[0].mxu0
        %v538 = vpop.f32.mrb[0].mxu0
        %v539 = vadd.f32 %v387, %v538
        %v540 = vpop.f32.mrb[0].mxu0
        %541 = vmatprep.mubr.bf16.mxu0 0
        %542 = vmatmul.mubr.bf16.gmra.mrb[0].mxu0 %v375
        %v543 = vpop.f32.mrb[0].mxu0
        %v544 = vadd.f32 %v387, %v543
        %v545 = vpop.f32.mrb[0].mxu0
        %v546 = vpop.f32.mrb[0].mxu0
        %v547 = vadd.f32 %v387, %v546
        %v548 = vpop.f32.mrb[0].mxu0
        %549 = vmatprep.mubr.bf16.mxu0 0
        %550 = vmatmul.mubr.bf16.gmra.mrb[0].mxu0 %v376
        %v551 = vpop.f32.mrb[0].mxu0
        %v552 = vadd.f32 %v387, %v551
        %v553 = vpop.f32.mrb[0].mxu0
        %v554 = vpop.f32.mrb[0].mxu0
        %v555 = vadd.f32 %v387, %v554
        %v556 = vpop.f32.mrb[0].mxu0
        %557 = vmatprep.mubr.bf16.mxu0 0
        %558 = vmatmul.mubr.bf16.gmra.mrb[0].mxu0 %v377
        %v559 = vpop.f32.mrb[0].mxu0
        %v560 = vadd.f32 %v387, %v559
        %v561 = vpop.f32.mrb[0].mxu0
        %v562 = vpop.f32.mrb[0].mxu0
        %v563 = vadd.f32 %v387, %v562
        %v564 = vpop.f32.mrb[0].mxu0
        %565 = vmatprep.mubr.bf16.mxu0 0
        %566 = vmatmul.mubr.bf16.gmra.mrb[0].mxu0 %v378
        %v567 = vpop.f32.mrb[0].mxu0
        %v568 = vadd.f32 %v387, %v567
        %v569 = vpop.f32.mrb[0].mxu0
        %v570 = vpop.f32.mrb[0].mxu0
        %v571 = vadd.f32 %v387, %v570
        %v572 = vpop.f32.mrb[0].mxu0
        %573 = vmatprep.mubr.bf16.mxu0 0
        %574 = vmatmul.mubr.bf16.gmra.mrb[0].mxu0 %v379
        %v575 = vpop.f32.mrb[0].mxu0
        %v576 = vadd.f32 %v387, %v575
        %v577 = vpop.f32.mrb[0].mxu0
        %v578 = vpop.f32.mrb[0].mxu0
        %v579 = vadd.f32 %v387, %v578
        %v580 = vpop.f32.mrb[0].mxu0
        %581 = vmatprep.mubr.bf16.mxu0 0
        %582 = vmatmul.mubr.bf16.gmra.mrb[0].mxu0 %v380
        %v583 = vpop.f32.mrb[0].mxu0
        %v584 = vadd.f32 %v387, %v583
        %v585 = vpop.f32.mrb[0].mxu0
        %v586 = vpop.f32.mrb[0].mxu0
        %v587 = vadd.f32 %v387, %v586
        %v588 = vpop.f32.mrb[0].mxu0
        %589 = vmatprep.mubr.bf16.mxu0 0
        %590 = vmatmul.mubr.bf16.gmra.mrb[0].mxu0 %v381
        %v591 = vpop.f32.mrb[0].mxu0
        %v592 = vadd.f32 %v387, %v591
        %v593 = vpop.f32.mrb[0].mxu0
        %v594 = vpop.f32.mrb[0].mxu0
        %v595 = vadd.f32 %v387, %v594
        %v596 = vpop.f32.mrb[0].mxu0
        %597 = vdwg.mxu0
        %v598 = vpack.c.bf16 %v475, %v472
        %v599 = vpack.c.bf16 %v483, %v480
        %v600 = vpack.c.bf16 %v491, %v488
        %v601 = vpack.c.bf16 %v499, %v496
        %v602 = vpack.c.bf16 %v507, %v504
        %v603 = vpack.c.bf16 %v515, %v512
        %v604 = vpack.c.bf16 %v523, %v520
        %v605 = vpack.c.bf16 %v531, %v528
        %v606 = vpack.c.bf16 %v539, %v536
        %v607 = vpack.c.bf16 %v547, %v544
        %v608 = vpack.c.bf16 %v555, %v552
        %v609 = vpack.c.bf16 %v563, %v560
        %v610 = vpack.c.bf16 %v571, %v568
        %v611 = vpack.c.bf16 %v579, %v576
        %v612 = vpack.c.bf16 %v587, %v584
        %v613 = vpack.c.bf16 %v595, %v592
        %v630 = vunpack.c.l.b16 %v598
        %v631 = vunpack.c.h.b16 %v598
        %v632 = vunpack.c.l.b16 %v599
        %v633 = vunpack.c.h.b16 %v599
        %v634 = vunpack.c.l.b16 %v600
        %v635 = vunpack.c.h.b16 %v600
        %v636 = vunpack.c.l.b16 %v601
        %v637 = vunpack.c.h.b16 %v601
        %v638 = vunpack.c.l.b16 %v602
        %v639 = vunpack.c.h.b16 %v602
        %v640 = vunpack.c.l.b16 %v603
        %v641 = vunpack.c.h.b16 %v603
        %v642 = vunpack.c.l.b16 %v604
        %v643 = vunpack.c.h.b16 %v604
        %v644 = vunpack.c.l.b16 %v605
        %v645 = vunpack.c.h.b16 %v605
        %v646 = vunpack.c.l.b16 %v606
        %v647 = vunpack.c.h.b16 %v606
        %v648 = vunpack.c.l.b16 %v607
        %v649 = vunpack.c.h.b16 %v607
        %v650 = vunpack.c.l.b16 %v608
        %v651 = vunpack.c.h.b16 %v608
        %v652 = vunpack.c.l.b16 %v609
        %v653 = vunpack.c.h.b16 %v609
        %v654 = vunpack.c.l.b16 %v610
        %v655 = vunpack.c.h.b16 %v610
        %v656 = vunpack.c.l.b16 %v611
        %v657 = vunpack.c.h.b16 %v611
        %v658 = vunpack.c.l.b16 %v612
        %v659 = vunpack.c.h.b16 %v612
        %v660 = vunpack.c.l.b16 %v613
        %v661 = vunpack.c.h.b16 %v613
        %v662 = vpack.c.b16 %v630, %v630
        %v663 = vpack.c.b16 %v631, %v631
        %v664 = vpack.c.b16 %v632, %v632
        %v665 = vpack.c.b16 %v633, %v633
        %v666 = vpack.c.b16 %v634, %v634
        %v667 = vpack.c.b16 %v635, %v635
        %v668 = vpack.c.b16 %v636, %v636
        %v669 = vpack.c.b16 %v637, %v637
        %v670 = vpack.c.b16 %v638, %v638
        %v671 = vpack.c.b16 %v639, %v639
        %v672 = vpack.c.b16 %v640, %v640
        %v673 = vpack.c.b16 %v641, %v641
        %v674 = vpack.c.b16 %v642, %v642
        %v675 = vpack.c.b16 %v643, %v643
        %v676 = vpack.c.b16 %v644, %v644
        %v677 = vpack.c.b16 %v645, %v645
        %v678 = vpack.c.b16 %v646, %v646
        %v679 = vpack.c.b16 %v647, %v647
        %v680 = vpack.c.b16 %v648, %v648
        %v681 = vpack.c.b16 %v649, %v649
        %v682 = vpack.c.b16 %v650, %v650
        %v683 = vpack.c.b16 %v651, %v651
        %v684 = vpack.c.b16 %v652, %v652
        %v685 = vpack.c.b16 %v653, %v653
        %v686 = vpack.c.b16 %v654, %v654
        %v687 = vpack.c.b16 %v655, %v655
        %v688 = vpack.c.b16 %v656, %v656
        %v689 = vpack.c.b16 %v657, %v657
        %v690 = vpack.c.b16 %v658, %v658
        %v691 = vpack.c.b16 %v659, %v659
        %v692 = vpack.c.b16 %v660, %v660
        %v693 = vpack.c.b16 %v661, %v661
        %726 = vst [vmem:[%s306] sm:$0xf] %v662
        %727 = vst [vmem:[%s306 + $0x4] sm:$0xf] %v663
        %728 = vst [vmem:[%s306 + $0x8] sm:$0xf] %v664
        %729 = vst [vmem:[%s306 + $0xc] sm:$0xf] %v665
        %730 = vst [vmem:[%s306 + $0x10] sm:$0xf] %v666
        %731 = vst [vmem:[%s306 + $0x14] sm:$0xf] %v667
        %732 = vst [vmem:[%s306 + $0x18] sm:$0xf] %v668
        %733 = vst [vmem:[%s306 + $0x1c] sm:$0xf] %v669
        %734 = vst [vmem:[%s306 + $0x20] sm:$0xf] %v670
        %735 = vst [vmem:[%s306 + $0x24] sm:$0xf] %v671
        %736 = vst [vmem:[%s306 + $0x28] sm:$0xf] %v672
        %737 = vst [vmem:[%s306 + $0x2c] sm:$0xf] %v673
        %738 = vst [vmem:[%s306 + $0x30] sm:$0xf] %v674
        %739 = vst [vmem:[%s306 + $0x34] sm:$0xf] %v675
        %740 = vst [vmem:[%s306 + $0x38] sm:$0xf] %v676
        %741 = vst [vmem:[%s306 + $0x3c] sm:$0xf] %v677
        %742 = vst [vmem:[%s306 + $0x40] sm:$0xf] %v678
        %743 = vst [vmem:[%s306 + $0x44] sm:$0xf] %v679
        %744 = vst [vmem:[%s306 + $0x48] sm:$0xf] %v680
        %745 = vst [vmem:[%s306 + $0x4c] sm:$0xf] %v681
        %746 = vst [vmem:[%s306 + $0x50] sm:$0xf] %v682
        %747 = vst [vmem:[%s306 + $0x54] sm:$0xf] %v683
        %748 = vst [vmem:[%s306 + $0x58] sm:$0xf] %v684
        %749 = vst [vmem:[%s306 + $0x5c] sm:$0xf] %v685
        %750 = vst [vmem:[%s306 + $0x60] sm:$0xf] %v686
        %751 = vst [vmem:[%s306 + $0x64] sm:$0xf] %v687
        %752 = vst [vmem:[%s306 + $0x68] sm:$0xf] %v688
        %753 = vst [vmem:[%s306 + $0x6c] sm:$0xf] %v689
        %754 = vst [vmem:[%s306 + $0x70] sm:$0xf] %v690
        %755 = vst [vmem:[%s306 + $0x74] sm:$0xf] %v691
        %756 = vst [vmem:[%s306 + $0x78] sm:$0xf] %v692
        %757 = vst [vmem:[%s306 + $0x7c] sm:$0xf] %v693
        %s758 = sand.u32 %s114, 1
        %s759 = sand.u32 %s114, 1
        %s760 = smul.addr %s759, 128
        %s761 = scalar_lea.vmem [#allocation3], %s760
        // Predicated region
        $region74: #{relative_transformer.12} parent=68 // pred_check
          %p762 = pneg %p124
        $region75: #{relative_transformer.12} parent=68 // pred_check_branch
          %764 = sbr.rel (%p762) target = $region77
        $region76: #{relative_transformer.12} parent=68 // pred_region
          %s765 = smul.u32 32, %s18
          %s766 = smul.addr %s765, 3
          %s767 = sadd.s32 %s19, %s766
          %s768 = smul.addr %s767, 4
          %s769 = scalar_lea.vmem %s3, %s768
          // Predicated region
          $region78: #{relative_transformer.12} parent=76 // pred_check
            _
          $region79: #{relative_transformer.12} parent=76 // pred_check_branch
            %771 = sbr.rel (0) target = $region81
          $region80: #{relative_transformer.12} parent=76 // pred_region
            // Predicated region
            $region82: #{relative_transformer.12} parent=80 // pred_check
              _
            $region83: #{relative_transformer.12} parent=80 // pred_check_branch
              %773 = sbr.rel target = $region85
            $region84: #{relative_transformer.12} parent=80 // pred_region
              // Predicated region
              $region97: #{relative_transformer.12} parent=84 // pred_check
                _
              $region98: #{relative_transformer.12} parent=84 // pred_check_branch
                %850 = sbr.rel (0) target = $region100
              $region99: #{relative_transformer.12} parent=84 // pred_region
                loop: start=0, step=1, limit=1
                $region101: #{relative_transformer.12} parent=99 // loop_pre_header
                  _
                $region102: #{relative_transformer.12} parent=99 // loop_header
                  %s852 = sphi 0, %s856
                  %p853 = scmp.ge.s32.totalorder %s852, 1
                  %s857 = sphi %s761, %s761
                  %s858 = sphi %s769, %s769
                $region103: #{relative_transformer.12} parent=99 // loop_header_branch
                  %855 = sbr.rel (%p853) target = $region107
                $region104: #{relative_transformer.12} parent=99 // loop_body
                  _
                $region105: #{relative_transformer.12} parent=99 // loop_footer
                  %s856 = sadd.s32 1, %s852
                $region106: #{relative_transformer.12} parent=99 // loop_footer_branch
                  %851 = sbr.rel target = $region102
                $region107: #{relative_transformer.12} parent=99 // loop_exit
                  _
                loop: start=0, step=1, limit=1
                $region108: #{relative_transformer.12} parent=99 // loop_pre_header
                  _
                $region109: #{relative_transformer.12} parent=99 // loop_header
                  %s861 = sphi 0, %s865
                  %p862 = scmp.ge.s32.totalorder %s861, 1
                  %s866 = sphi %s761, %s761
                  %s867 = sphi %s769, %s769
                $region110: #{relative_transformer.12} parent=99 // loop_header_branch
                  %864 = sbr.rel (%p862) target = $region114
                $region111: #{relative_transformer.12} parent=99 // loop_body
                  %v868 = vld [vmem:[%s866] sm:$0xf]
                  %869 = vst [vmem:[%s867] sm:$0xf] %v868
                  %v870 = vld [vmem:[%s866 + $0x4] sm:$0xf]
                  %871 = vst [vmem:[%s867 + $0xc] sm:$0xf] %v870
                  %v872 = vld [vmem:[%s866 + $0x8] sm:$0xf]
                  %873 = vst [vmem:[%s867 + $0x18] sm:$0xf] %v872
                  %v874 = vld [vmem:[%s866 + $0xc] sm:$0xf]
                  %875 = vst [vmem:[%s867 + $0x24] sm:$0xf] %v874
                  %v876 = vld [vmem:[%s866 + $0x10] sm:$0xf]
                  %877 = vst [vmem:[%s867 + $0x30] sm:$0xf] %v876
                  %v878 = vld [vmem:[%s866 + $0x14] sm:$0xf]
                  %879 = vst [vmem:[%s867 + $0x3c] sm:$0xf] %v878
                  %v880 = vld [vmem:[%s866 + $0x18] sm:$0xf]
                  %881 = vst [vmem:[%s867 + $0x48] sm:$0xf] %v880
                  %v882 = vld [vmem:[%s866 + $0x1c] sm:$0xf]
                  %883 = vst [vmem:[%s867 + $0x54] sm:$0xf] %v882
                  %v884 = vld [vmem:[%s866 + $0x20] sm:$0xf]
                  %885 = vst [vmem:[%s867 + $0x60] sm:$0xf] %v884
                  %v886 = vld [vmem:[%s866 + $0x24] sm:$0xf]
                  %887 = vst [vmem:[%s867 + $0x6c] sm:$0xf] %v886
                  %v888 = vld [vmem:[%s866 + $0x28] sm:$0xf]
                  %889 = vst [vmem:[%s867 + $0x78] sm:$0xf] %v888
                  %v890 = vld [vmem:[%s866 + $0x2c] sm:$0xf]
                  %891 = vst [vmem:[%s867 + $0x84] sm:$0xf] %v890
                  %v892 = vld [vmem:[%s866 + $0x30] sm:$0xf]
                  %893 = vst [vmem:[%s867 + $0x90] sm:$0xf] %v892
                  %v894 = vld [vmem:[%s866 + $0x34] sm:$0xf]
                  %895 = vst [vmem:[%s867 + $0x9c] sm:$0xf] %v894
                  %v896 = vld [vmem:[%s866 + $0x38] sm:$0xf]
                  %897 = vst [vmem:[%s867 + $0xa8] sm:$0xf] %v896
                  %v898 = vld [vmem:[%s866 + $0x3c] sm:$0xf]
                  %899 = vst [vmem:[%s867 + $0xb4] sm:$0xf] %v898
                  %v900 = vld [vmem:[%s866 + $0x40] sm:$0xf]
                  %901 = vst [vmem:[%s867 + $0xc0] sm:$0xf] %v900
                  %v902 = vld [vmem:[%s866 + $0x44] sm:$0xf]
                  %903 = vst [vmem:[%s867 + $0xcc] sm:$0xf] %v902
                  %v904 = vld [vmem:[%s866 + $0x48] sm:$0xf]
                  %905 = vst [vmem:[%s867 + $0xd8] sm:$0xf] %v904
                  %v906 = vld [vmem:[%s866 + $0x4c] sm:$0xf]
                  %907 = vst [vmem:[%s867 + $0xe4] sm:$0xf] %v906
                  %v908 = vld [vmem:[%s866 + $0x50] sm:$0xf]
                  %909 = vst [vmem:[%s867 + $0xf0] sm:$0xf] %v908
                  %v910 = vld [vmem:[%s866 + $0x54] sm:$0xf]
                  %911 = vst [vmem:[%s867 + $0xfc] sm:$0xf] %v910
                  %v912 = vld [vmem:[%s866 + $0x58] sm:$0xf]
                  %913 = vst [vmem:[%s867 + $0x108] sm:$0xf] %v912
                  %v914 = vld [vmem:[%s866 + $0x5c] sm:$0xf]
                  %915 = vst [vmem:[%s867 + $0x114] sm:$0xf] %v914
                  %v916 = vld [vmem:[%s866 + $0x60] sm:$0xf]
                  %917 = vst [vmem:[%s867 + $0x120] sm:$0xf] %v916
                  %v918 = vld [vmem:[%s866 + $0x64] sm:$0xf]
                  %919 = vst [vmem:[%s867 + $0x12c] sm:$0xf] %v918
                  %v920 = vld [vmem:[%s866 + $0x68] sm:$0xf]
                  %921 = vst [vmem:[%s867 + $0x138] sm:$0xf] %v920
                  %v922 = vld [vmem:[%s866 + $0x6c] sm:$0xf]
                  %923 = vst [vmem:[%s867 + $0x144] sm:$0xf] %v922
                  %v924 = vld [vmem:[%s866 + $0x70] sm:$0xf]
                  %925 = vst [vmem:[%s867 + $0x150] sm:$0xf] %v924
                  %v926 = vld [vmem:[%s866 + $0x74] sm:$0xf]
                  %927 = vst [vmem:[%s867 + $0x15c] sm:$0xf] %v926
                  %v928 = vld [vmem:[%s866 + $0x78] sm:$0xf]
                  %929 = vst [vmem:[%s867 + $0x168] sm:$0xf] %v928
                  %v930 = vld [vmem:[%s866 + $0x7c] sm:$0xf]
                  %931 = vst [vmem:[%s867 + $0x174] sm:$0xf] %v930
                $region112: #{relative_transformer.12} parent=99 // loop_footer
                  %s865 = sadd.s32 1, %s861
                $region113: #{relative_transformer.12} parent=99 // loop_footer_branch
                  %860 = sbr.rel target = $region109
                $region114: #{relative_transformer.12} parent=99 // loop_exit
                  _
              $region100: #{relative_transformer.12} parent=84 // pred_fallthru
                _
            $region85: #{relative_transformer.12} parent=80 // pred_fallthru
              _
            // Predicated region
            $region86: #{relative_transformer.12} parent=80 // pred_check
              _
            $region87: #{relative_transformer.12} parent=80 // pred_check_branch
              %775 = sbr.rel (0) target = $region89
            $region88: #{relative_transformer.12} parent=80 // pred_region
              loop: start=0, step=1, limit=1
              $region90: #{relative_transformer.12} parent=88 // loop_pre_header
                _
              $region91: #{relative_transformer.12} parent=88 // loop_header
                %s778 = sphi 0, %s782
                %p779 = scmp.ge.s32.totalorder %s778, 1
                %s783 = sphi %s761, %s761
                %s784 = sphi %s769, %s769
              $region92: #{relative_transformer.12} parent=88 // loop_header_branch
                %781 = sbr.rel (%p779) target = $region96
              $region93: #{relative_transformer.12} parent=88 // loop_body
                %v785 = vld [vmem:[%s783] sm:$0xf]
                %786 = vst [vmem:[%s784] sm:$0xf] %v785
                %v787 = vld [vmem:[%s783 + $0x4] sm:$0xf]
                %788 = vst [vmem:[%s784 + $0xc] sm:$0xf] %v787
                %v789 = vld [vmem:[%s783 + $0x8] sm:$0xf]
                %790 = vst [vmem:[%s784 + $0x18] sm:$0xf] %v789
                %v791 = vld [vmem:[%s783 + $0xc] sm:$0xf]
                %792 = vst [vmem:[%s784 + $0x24] sm:$0xf] %v791
                %v793 = vld [vmem:[%s783 + $0x10] sm:$0xf]
                %794 = vst [vmem:[%s784 + $0x30] sm:$0xf] %v793
                %v795 = vld [vmem:[%s783 + $0x14] sm:$0xf]
                %796 = vst [vmem:[%s784 + $0x3c] sm:$0xf] %v795
                %v797 = vld [vmem:[%s783 + $0x18] sm:$0xf]
                %798 = vst [vmem:[%s784 + $0x48] sm:$0xf] %v797
                %v799 = vld [vmem:[%s783 + $0x1c] sm:$0xf]
                %800 = vst [vmem:[%s784 + $0x54] sm:$0xf] %v799
                %v801 = vld [vmem:[%s783 + $0x20] sm:$0xf]
                %802 = vst [vmem:[%s784 + $0x60] sm:$0xf] %v801
                %v803 = vld [vmem:[%s783 + $0x24] sm:$0xf]
                %804 = vst [vmem:[%s784 + $0x6c] sm:$0xf] %v803
                %v805 = vld [vmem:[%s783 + $0x28] sm:$0xf]
                %806 = vst [vmem:[%s784 + $0x78] sm:$0xf] %v805
                %v807 = vld [vmem:[%s783 + $0x2c] sm:$0xf]
                %808 = vst [vmem:[%s784 + $0x84] sm:$0xf] %v807
                %v809 = vld [vmem:[%s783 + $0x30] sm:$0xf]
                %810 = vst [vmem:[%s784 + $0x90] sm:$0xf] %v809
                %v811 = vld [vmem:[%s783 + $0x34] sm:$0xf]
                %812 = vst [vmem:[%s784 + $0x9c] sm:$0xf] %v811
                %v813 = vld [vmem:[%s783 + $0x38] sm:$0xf]
                %814 = vst [vmem:[%s784 + $0xa8] sm:$0xf] %v813
                %v815 = vld [vmem:[%s783 + $0x3c] sm:$0xf]
                %816 = vst [vmem:[%s784 + $0xb4] sm:$0xf] %v815
                %v817 = vld [vmem:[%s783 + $0x40] sm:$0xf]
                %818 = vst [vmem:[%s784 + $0xc0] sm:$0xf] %v817
                %v819 = vld [vmem:[%s783 + $0x44] sm:$0xf]
                %820 = vst [vmem:[%s784 + $0xcc] sm:$0xf] %v819
                %v821 = vld [vmem:[%s783 + $0x48] sm:$0xf]
                %822 = vst [vmem:[%s784 + $0xd8] sm:$0xf] %v821
                %v823 = vld [vmem:[%s783 + $0x4c] sm:$0xf]
                %824 = vst [vmem:[%s784 + $0xe4] sm:$0xf] %v823
                %v825 = vld [vmem:[%s783 + $0x50] sm:$0xf]
                %826 = vst [vmem:[%s784 + $0xf0] sm:$0xf] %v825
                %v827 = vld [vmem:[%s783 + $0x54] sm:$0xf]
                %828 = vst [vmem:[%s784 + $0xfc] sm:$0xf] %v827
                %v829 = vld [vmem:[%s783 + $0x58] sm:$0xf]
                %830 = vst [vmem:[%s784 + $0x108] sm:$0xf] %v829
                %v831 = vld [vmem:[%s783 + $0x5c] sm:$0xf]
                %832 = vst [vmem:[%s784 + $0x114] sm:$0xf] %v831
                %v833 = vld [vmem:[%s783 + $0x60] sm:$0xf]
                %834 = vst [vmem:[%s784 + $0x120] sm:$0xf] %v833
                %v835 = vld [vmem:[%s783 + $0x64] sm:$0xf]
                %836 = vst [vmem:[%s784 + $0x12c] sm:$0xf] %v835
                %v837 = vld [vmem:[%s783 + $0x68] sm:$0xf]
                %838 = vst [vmem:[%s784 + $0x138] sm:$0xf] %v837
                %v839 = vld [vmem:[%s783 + $0x6c] sm:$0xf]
                %840 = vst [vmem:[%s784 + $0x144] sm:$0xf] %v839
                %v841 = vld [vmem:[%s783 + $0x70] sm:$0xf]
                %842 = vst [vmem:[%s784 + $0x150] sm:$0xf] %v841
                %v843 = vld [vmem:[%s783 + $0x74] sm:$0xf]
                %844 = vst [vmem:[%s784 + $0x15c] sm:$0xf] %v843
                %v845 = vld [vmem:[%s783 + $0x78] sm:$0xf]
                %846 = vst [vmem:[%s784 + $0x168] sm:$0xf] %v845
                %v847 = vld [vmem:[%s783 + $0x7c] sm:$0xf]
                %848 = vst [vmem:[%s784 + $0x174] sm:$0xf] %v847
              $region94: #{relative_transformer.12} parent=88 // loop_footer
                %s782 = sadd.s32 1, %s778
              $region95: #{relative_transformer.12} parent=88 // loop_footer_branch
                %777 = sbr.rel target = $region91
              $region96: #{relative_transformer.12} parent=88 // loop_exit
                _
            $region89: #{relative_transformer.12} parent=80 // pred_fallthru
              _
          $region81: #{relative_transformer.12} parent=76 // pred_fallthru
            _
          %932 = vnop
        $region77: #{relative_transformer.12} parent=68 // pred_fallthru
          _
      $region69: #{relative_transformer.12} parent=5 // pred_fallthru
        _
      %p933 = scmp.le.s32.totalorder 2, %s9
      // Predicated region
      $region115: #{relative_transformer.12} parent=5 // pred_check
        %p934 = pneg %p933
      $region116: #{relative_transformer.12} parent=5 // pred_check_branch
        %936 = sbr.rel (%p934) target = $region118
      $region117: #{relative_transformer.12} parent=5 // pred_region
        %s937 = ssub.s32 %s9, 2
        // Predicated region
        $region119: #{relative_transformer.12} parent=117 // pred_check
          %p938 = pneg %p130
        $region120: #{relative_transformer.12} parent=117 // pred_check_branch
          %940 = sbr.rel (%p938) target = $region122
        $region121: #{relative_transformer.12} parent=117 // pred_region
          %s941 = sand.u32 %s115, 1
          %s942 = sand.u32 %s115, 1
          %s943 = smul.addr %s942, 128
          %s944 = scalar_lea.vmem [#allocation3], %s943
        $region122: #{relative_transformer.12} parent=117 // pred_fallthru
          _
      $region118: #{relative_transformer.12} parent=5 // pred_fallthru
        _
    $region6: #{relative_transformer.12} parent=1 // loop_footer
      %s13 = sadd.s32 1, %s9
    $region7: #{relative_transformer.12} parent=1 // loop_footer_branch
      %8 = sbr.rel target = $region3
    $region8: #{relative_transformer.12} parent=1 // loop_exit
      _

// kernel: relative_transformer.14
$region0: #{relative_transformer.14}
  #allocation0 [shape = 'u32[]', space=smem, size = 0x4, offset = 0x4, fixed_abs, tag = 'smem constant byte address 0x4 - core index']
  #allocation1 [shape = 'u32[144,128]{1,0:T(1,128)}', space=vmem, size = 0x12000, scoped, tag = 'internal scratch']
  %s0 = inlined_call_operand.vmem [shape: bf16[256,128], index: 0, kind: input, shape index: {}]
  %s1 = inlined_call_operand.vmem [shape: bf16[128,128], index: 1, kind: input, shape index: {}]
  %s2 = inlined_call_operand.vmem [shape: f32[1,128], index: 2, kind: input, shape index: {}]
  %s3 = inlined_call_operand.vmem [shape: f32[256,128], index: 3, kind: input, shape index: {}]
  %s4 = inlined_call_operand.vmem [shape: f32[1,128], index: 4, kind: input, shape index: {}]
  %s5 = inlined_call_operand.vmem [shape: f32[1,128], index: 5, kind: input, shape index: {}]
  %s6 = inlined_call_operand.vmem [shape: f32[256,128], index: 6, kind: output, shape index: {}]
  %s7 = sld [smem:[#allocation0]]
  $region34: #{relative_transformer.14} parent=0
    _
  %s9 = ssub.s32 1, %s7
  %s10 = scalar_select 0, %s9, %s7
  // Predicated region
  $region2: #{relative_transformer.14} parent=0 // pred_check
    _
  $region3: #{relative_transformer.14} parent=0 // pred_check_branch
    %12 = sbr.rel (0) target = $region5
  $region4: #{relative_transformer.14} parent=0 // pred_region
    _
  $region5: #{relative_transformer.14} parent=0 // pred_fallthru
    _
  // Predicated region
  $region6: #{relative_transformer.14} parent=0 // pred_check
    _
  $region7: #{relative_transformer.14} parent=0 // pred_check_branch
    %14 = sbr.rel (0) target = $region9
  $region8: #{relative_transformer.14} parent=0 // pred_region
    _
  $region9: #{relative_transformer.14} parent=0 // pred_fallthru
    _
  // Predicated region
  $region10: #{relative_transformer.14} parent=0 // pred_check
    _
  $region11: #{relative_transformer.14} parent=0 // pred_check_branch
    %16 = sbr.rel (0) target = $region13
  $region12: #{relative_transformer.14} parent=0 // pred_region
    _
  $region13: #{relative_transformer.14} parent=0 // pred_fallthru
    _
  // Predicated region
  $region14: #{relative_transformer.14} parent=0 // pred_check
    _
  $region15: #{relative_transformer.14} parent=0 // pred_check_branch
    %18 = sbr.rel (0) target = $region17
  $region16: #{relative_transformer.14} parent=0 // pred_region
    _
  $region17: #{relative_transformer.14} parent=0 // pred_fallthru
    _
  // Predicated region
  $region18: #{relative_transformer.14} parent=0 // pred_check
    _
  $region19: #{relative_transformer.14} parent=0 // pred_check_branch
    %20 = sbr.rel (0) target = $region21
  $region20: #{relative_transformer.14} parent=0 // pred_region
    _
  $region21: #{relative_transformer.14} parent=0 // pred_fallthru
    _
  // Predicated region
  $region22: #{relative_transformer.14} parent=0 // pred_check
    _
  $region23: #{relative_transformer.14} parent=0 // pred_check_branch
    %22 = sbr.rel (0) target = $region25
  $region24: #{relative_transformer.14} parent=0 // pred_region
    _
  $region25: #{relative_transformer.14} parent=0 // pred_fallthru
    _
  %v24 = vld [vmem:[%s0] sm:$0xf]
  %v25 = vld [vmem:[%s0 + $0x4] sm:$0xf]
  %v26 = vld [vmem:[%s0 + $0x8] sm:$0xf]
  %v27 = vld [vmem:[%s0 + $0xc] sm:$0xf]
  %v28 = vld [vmem:[%s0 + $0x10] sm:$0xf]
  %v29 = vld [vmem:[%s0 + $0x14] sm:$0xf]
  %v30 = vld [vmem:[%s0 + $0x18] sm:$0xf]
  %v31 = vld [vmem:[%s0 + $0x1c] sm:$0xf]
  %v32 = vld [vmem:[%s0 + $0x20] sm:$0xf]
  %v33 = vld [vmem:[%s0 + $0x24] sm:$0xf]
  %v34 = vld [vmem:[%s0 + $0x28] sm:$0xf]
  %v35 = vld [vmem:[%s0 + $0x2c] sm:$0xf]
  %v36 = vld [vmem:[%s0 + $0x30] sm:$0xf]
  %v37 = vld [vmem:[%s0 + $0x34] sm:$0xf]
  %v38 = vld [vmem:[%s0 + $0x38] sm:$0xf]
  %v39 = vld [vmem:[%s0 + $0x3c] sm:$0xf]
  %v40 = vld [vmem:[%s0 + $0x40] sm:$0xf]
  %v41 = vld [vmem:[%s0 + $0x44] sm:$0xf]
  %v42 = vld [vmem:[%s0 + $0x48] sm:$0xf]
  %v43 = vld [vmem:[%s0 + $0x4c] sm:$0xf]
  %v44 = vld [vmem:[%s0 + $0x50] sm:$0xf]
  %v45 = vld [vmem:[%s0 + $0x54] sm:$0xf]
  %v46 = vld [vmem:[%s0 + $0x58] sm:$0xf]
  %v47 = vld [vmem:[%s0 + $0x5c] sm:$0xf]
  %v48 = vld [vmem:[%s0 + $0x60] sm:$0xf]
  %v49 = vld [vmem:[%s0 + $0x64] sm:$0xf]
  %v50 = vld [vmem:[%s0 + $0x68] sm:$0xf]
  %v51 = vld [vmem:[%s0 + $0x6c] sm:$0xf]
  %v52 = vld [vmem:[%s0 + $0x70] sm:$0xf]
  %v53 = vld [vmem:[%s0 + $0x74] sm:$0xf]
  %v54 = vld [vmem:[%s0 + $0x78] sm:$0xf]
  %v55 = vld [vmem:[%s0 + $0x7c] sm:$0xf]
  %v56 = vld [vmem:[%s1] sm:$0xf]
  %v57 = vld [vmem:[%s1 + $0x4] sm:$0xf]
  %v58 = vld [vmem:[%s1 + $0x8] sm:$0xf]
  %v59 = vld [vmem:[%s1 + $0xc] sm:$0xf]
  %v60 = vld [vmem:[%s1 + $0x10] sm:$0xf]
  %v61 = vld [vmem:[%s1 + $0x14] sm:$0xf]
  %v62 = vld [vmem:[%s1 + $0x18] sm:$0xf]
  %v63 = vld [vmem:[%s1 + $0x1c] sm:$0xf]
  %v64 = vld [vmem:[%s1 + $0x20] sm:$0xf]
  %v65 = vld [vmem:[%s1 + $0x24] sm:$0xf]
  %v66 = vld [vmem:[%s1 + $0x28] sm:$0xf]
  %v67 = vld [vmem:[%s1 + $0x2c] sm:$0xf]
  %v68 = vld [vmem:[%s1 + $0x30] sm:$0xf]
  %v69 = vld [vmem:[%s1 + $0x34] sm:$0xf]
  %v70 = vld [vmem:[%s1 + $0x38] sm:$0xf]
  %v71 = vld [vmem:[%s1 + $0x3c] sm:$0xf]
  %v72 = vld [vmem:[%s2] sm:$0x1]
  %v74 = vlaneseq
  %v75 = vshrl.u32 %v74, 7
  %v76 = vsub.s32 0, %v75
  %v77 = vrot.slane %v72, %v76
  %v111 = vunpack.c.l.b16 %v24
  %v112 = vunpack.c.l.b16 %v25
  %v113 = vunpack.c.l.b16 %v26
  %v114 = vunpack.c.l.b16 %v27
  %v115 = vunpack.c.l.b16 %v28
  %v116 = vunpack.c.l.b16 %v29
  %v117 = vunpack.c.l.b16 %v30
  %v118 = vunpack.c.l.b16 %v31
  %v119 = vunpack.c.l.b16 %v32
  %v120 = vunpack.c.l.b16 %v33
  %v121 = vunpack.c.l.b16 %v34
  %v122 = vunpack.c.l.b16 %v35
  %v123 = vunpack.c.l.b16 %v36
  %v124 = vunpack.c.l.b16 %v37
  %v125 = vunpack.c.l.b16 %v38
  %v126 = vunpack.c.l.b16 %v39
  %v127 = vunpack.c.l.b16 %v40
  %v128 = vunpack.c.l.b16 %v41
  %v129 = vunpack.c.l.b16 %v42
  %v130 = vunpack.c.l.b16 %v43
  %v131 = vunpack.c.l.b16 %v44
  %v132 = vunpack.c.l.b16 %v45
  %v133 = vunpack.c.l.b16 %v46
  %v134 = vunpack.c.l.b16 %v47
  %v135 = vunpack.c.l.b16 %v48
  %v136 = vunpack.c.l.b16 %v49
  %v137 = vunpack.c.l.b16 %v50
  %v138 = vunpack.c.l.b16 %v51
  %v139 = vunpack.c.l.b16 %v52
  %v140 = vunpack.c.l.b16 %v53
  %v141 = vunpack.c.l.b16 %v54
  %v142 = vunpack.c.l.b16 %v55
  %v143 = vpack.c.b16 %v112, %v111
  %v144 = vpack.c.b16 %v114, %v113
  %v145 = vpack.c.b16 %v116, %v115
  %v146 = vpack.c.b16 %v118, %v117
  %v147 = vpack.c.b16 %v120, %v119
  %v148 = vpack.c.b16 %v122, %v121
  %v149 = vpack.c.b16 %v124, %v123
  %v150 = vpack.c.b16 %v126, %v125
  %v151 = vpack.c.b16 %v128, %v127
  %v152 = vpack.c.b16 %v130, %v129
  %v153 = vpack.c.b16 %v132, %v131
  %v154 = vpack.c.b16 %v134, %v133
  %v155 = vpack.c.b16 %v136, %v135
  %v156 = vpack.c.b16 %v138, %v137
  %v157 = vpack.c.b16 %v140, %v139
  %v158 = vpack.c.b16 %v142, %v141
  %v191 = vunpack.c.l.b16 %v56
  %v192 = vunpack.c.l.b16 %v57
  %v193 = vunpack.c.l.b16 %v58
  %v194 = vunpack.c.l.b16 %v59
  %v195 = vunpack.c.l.b16 %v60
  %v196 = vunpack.c.l.b16 %v61
  %v197 = vunpack.c.l.b16 %v62
  %v198 = vunpack.c.l.b16 %v63
  %v199 = vunpack.c.l.b16 %v64
  %v200 = vunpack.c.l.b16 %v65
  %v201 = vunpack.c.l.b16 %v66
  %v202 = vunpack.c.l.b16 %v67
  %v203 = vunpack.c.l.b16 %v68
  %v204 = vunpack.c.l.b16 %v69
  %v205 = vunpack.c.l.b16 %v70
  %v206 = vunpack.c.l.b16 %v71
  %v207 = vpack.c.b16 %v192, %v191
  %v208 = vpack.c.b16 %v194, %v193
  %v209 = vpack.c.b16 %v196, %v195
  %v210 = vpack.c.b16 %v198, %v197
  %v211 = vpack.c.b16 %v200, %v199
  %v212 = vpack.c.b16 %v202, %v201
  %v213 = vpack.c.b16 %v204, %v203
  %v214 = vpack.c.b16 %v206, %v205
  %223 = vmatprep.subr.bf16.mxu0 0
  %224 = vmatpush1.bf16.msra.mxu0 %v207
  %225 = vmatprep.subr.bf16.mxu0 0
  %226 = vmatpush1.bf16.msra.mxu0 %v208
  %227 = vmatprep.subr.bf16.mxu0 0
  %228 = vmatpush1.bf16.msra.mxu0 %v209
  %229 = vmatprep.subr.bf16.mxu0 0
  %230 = vmatpush1.bf16.msra.mxu0 %v210
  %231 = vmatprep.subr.bf16.mxu0 0
  %232 = vmatpush1.bf16.msra.mxu0 %v211
  %233 = vmatprep.subr.bf16.mxu0 0
  %234 = vmatpush1.bf16.msra.mxu0 %v212
  %235 = vmatprep.subr.bf16.mxu0 0
  %236 = vmatpush1.bf16.msra.mxu0 %v213
  %237 = vmatprep.subr.bf16.mxu0 0
  %238 = vmatpush1.bf16.msra.mxu0 %v214
  %239 = vmatprep.subr.bf16.mxu0 0
  %240 = vmatpush1.bf16.msra.mxu0 0
  %241 = vmatprep.subr.bf16.mxu0 0
  %242 = vmatpush1.bf16.msra.mxu0 0
  %243 = vmatprep.subr.bf16.mxu0 0
  %244 = vmatpush1.bf16.msra.mxu0 0
  %245 = vmatprep.subr.bf16.mxu0 0
  %246 = vmatpush1.bf16.msra.mxu0 0
  %247 = vmatprep.subr.bf16.mxu0 0
  %248 = vmatpush1.bf16.msra.mxu0 0
  %249 = vmatprep.subr.bf16.mxu0 0
  %250 = vmatpush1.bf16.msra.mxu0 0
  %251 = vmatprep.subr.bf16.mxu0 0
  %252 = vmatpush1.bf16.msra.mxu0 0
  %253 = vmatprep.subr.bf16.mxu0 0
  %254 = vmatpush1.bf16.msra.mxu0 0
  %255 = vmatprep.mubr.bf16.mxu0 0
  %256 = vmatmul.mubr.bf16.gmra.mrb[0].mxu0 %v143
  %v257 = vpop.f32.mrb[0].mxu0
  %v258 = vadd.f32 %v77, %v257
  %v259 = vpop.f32.mrb[0].mxu0
  %v260 = vpop.f32.mrb[0].mxu0
  %v261 = vadd.f32 %v77, %v260
  %v262 = vpop.f32.mrb[0].mxu0
  %263 = vmatprep.mubr.bf16.mxu0 0
  %264 = vmatmul.mubr.bf16.gmra.mrb[0].mxu0 %v144
  %v265 = vpop.f32.mrb[0].mxu0
  %v266 = vadd.f32 %v77, %v265
  %v267 = vpop.f32.mrb[0].mxu0
  %v268 = vpop.f32.mrb[0].mxu0
  %v269 = vadd.f32 %v77, %v268
  %v270 = vpop.f32.mrb[0].mxu0
  %271 = vmatprep.mubr.bf16.mxu0 0
  %272 = vmatmul.mubr.bf16.gmra.mrb[0].mxu0 %v145
  %v273 = vpop.f32.mrb[0].mxu0
  %v274 = vadd.f32 %v77, %v273
  %v275 = vpop.f32.mrb[0].mxu0
  %v276 = vpop.f32.mrb[0].mxu0
  %v277 = vadd.f32 %v77, %v276
  %v278 = vpop.f32.mrb[0].mxu0
  %279 = vmatprep.mubr.bf16.mxu0 0
  %280 = vmatmul.mubr.bf16.gmra.mrb[0].mxu0 %v146
  %v281 = vpop.f32.mrb[0].mxu0
  %v282 = vadd.f32 %v77, %v281
  %v283 = vpop.f32.mrb[0].mxu0
  %v284 = vpop.f32.mrb[0].mxu0
  %v285 = vadd.f32 %v77, %v284
  %v286 = vpop.f32.mrb[0].mxu0
  %287 = vmatprep.mubr.bf16.mxu0 0
  %288 = vmatmul.mubr.bf16.gmra.mrb[0].mxu0 %v147
  %v289 = vpop.f32.mrb[0].mxu0
  %v290 = vadd.f32 %v77, %v289
  %v291 = vpop.f32.mrb[0].mxu0
  %v292 = vpop.f32.mrb[0].mxu0
  %v293 = vadd.f32 %v77, %v292
  %v294 = vpop.f32.mrb[0].mxu0
  %295 = vmatprep.mubr.bf16.mxu0 0
  %296 = vmatmul.mubr.bf16.gmra.mrb[0].mxu0 %v148
  %v297 = vpop.f32.mrb[0].mxu0
  %v298 = vadd.f32 %v77, %v297
  %v299 = vpop.f32.mrb[0].mxu0
  %v300 = vpop.f32.mrb[0].mxu0
  %v301 = vadd.f32 %v77, %v300
  %v302 = vpop.f32.mrb[0].mxu0
  %303 = vmatprep.mubr.bf16.mxu0 0
  %304 = vmatmul.mubr.bf16.gmra.mrb[0].mxu0 %v149
  %v305 = vpop.f32.mrb[0].mxu0
  %v306 = vadd.f32 %v77, %v305
  %v307 = vpop.f32.mrb[0].mxu0
  %v308 = vpop.f32.mrb[0].mxu0
  %v309 = vadd.f32 %v77, %v308
  %v310 = vpop.f32.mrb[0].mxu0
  %311 = vmatprep.mubr.bf16.mxu0 0
  %312 = vmatmul.mubr.bf16.gmra.mrb[0].mxu0 %v150
  %v313 = vpop.f32.mrb[0].mxu0
  %v314 = vadd.f32 %v77, %v313
  %v315 = vpop.f32.mrb[0].mxu0
  %v316 = vpop.f32.mrb[0].mxu0
  %v317 = vadd.f32 %v77, %v316
  %v318 = vpop.f32.mrb[0].mxu0
  %319 = vmatprep.mubr.bf16.mxu0 0
  %320 = vmatmul.mubr.bf16.gmra.mrb[0].mxu0 %v151
  %v321 = vpop.f32.mrb[0].mxu0
  %v322 = vadd.f32 %v77, %v321
  %v323 = vpop.f32.mrb[0].mxu0
  %v324 = vpop.f32.mrb[0].mxu0
  %v325 = vadd.f32 %v77, %v324
  %v326 = vpop.f32.mrb[0].mxu0
  %327 = vmatprep.mubr.bf16.mxu0 0
  %328 = vmatmul.mubr.bf16.gmra.mrb[0].mxu0 %v152
  %v329 = vpop.f32.mrb[0].mxu0
  %v330 = vadd.f32 %v77, %v329
  %v331 = vpop.f32.mrb[0].mxu0
  %v332 = vpop.f32.mrb[0].mxu0
  %v333 = vadd.f32 %v77, %v332
  %v334 = vpop.f32.mrb[0].mxu0
  %335 = vmatprep.mubr.bf16.mxu0 0
  %336 = vmatmul.mubr.bf16.gmra.mrb[0].mxu0 %v153
  %v337 = vpop.f32.mrb[0].mxu0
  %v338 = vadd.f32 %v77, %v337
  %v339 = vpop.f32.mrb[0].mxu0
  %v340 = vpop.f32.mrb[0].mxu0
  %v341 = vadd.f32 %v77, %v340
  %v342 = vpop.f32.mrb[0].mxu0
  %343 = vmatprep.mubr.bf16.mxu0 0
  %344 = vmatmul.mubr.bf16.gmra.mrb[0].mxu0 %v154
  %v345 = vpop.f32.mrb[0].mxu0
  %v346 = vadd.f32 %v77, %v345
  %v347 = vpop.f32.mrb[0].mxu0
  %v348 = vpop.f32.mrb[0].mxu0
  %v349 = vadd.f32 %v77, %v348
  %v350 = vpop.f32.mrb[0].mxu0
  %351 = vmatprep.mubr.bf16.mxu0 0
  %352 = vmatmul.mubr.bf16.gmra.mrb[0].mxu0 %v155
  %v353 = vpop.f32.mrb[0].mxu0
  %v354 = vadd.f32 %v77, %v353
  %v355 = vpop.f32.mrb[0].mxu0
  %v356 = vpop.f32.mrb[0].mxu0
  %v357 = vadd.f32 %v77, %v356
  %v358 = vpop.f32.mrb[0].mxu0
  %359 = vmatprep.mubr.bf16.mxu0 0
  %360 = vmatmul.mubr.bf16.gmra.mrb[0].mxu0 %v156
  %v361 = vpop.f32.mrb[0].mxu0
  %v362 = vadd.f32 %v77, %v361
  %v363 = vpop.f32.mrb[0].mxu0
  %v364 = vpop.f32.mrb[0].mxu0
  %v365 = vadd.f32 %v77, %v364
  %v366 = vpop.f32.mrb[0].mxu0
  %367 = vmatprep.mubr.bf16.mxu0 0
  %368 = vmatmul.mubr.bf16.gmra.mrb[0].mxu0 %v157
  %v369 = vpop.f32.mrb[0].mxu0
  %v370 = vadd.f32 %v77, %v369
  %v371 = vpop.f32.mrb[0].mxu0
  %v372 = vpop.f32.mrb[0].mxu0
  %v373 = vadd.f32 %v77, %v372
  %v374 = vpop.f32.mrb[0].mxu0
  %375 = vmatprep.mubr.bf16.mxu0 0
  %376 = vmatmul.mubr.bf16.gmra.mrb[0].mxu0 %v158
  %v377 = vpop.f32.mrb[0].mxu0
  %v378 = vadd.f32 %v77, %v377
  %v379 = vpop.f32.mrb[0].mxu0
  %v380 = vpop.f32.mrb[0].mxu0
  %v381 = vadd.f32 %v77, %v380
  %v382 = vpop.f32.mrb[0].mxu0
  %383 = vdwg.mxu0
  %v384 = vld [vmem:[%s3] sm:$0xff]
  %v385 = vld [vmem:[%s3 + $0x8] sm:$0xff]
  %v386 = vld [vmem:[%s3 + $0x10] sm:$0xff]
  %v387 = vld [vmem:[%s3 + $0x18] sm:$0xff]
  %v388 = vld [vmem:[%s3 + $0x20] sm:$0xff]
  %v389 = vld [vmem:[%s3 + $0x28] sm:$0xff]
  %v390 = vld [vmem:[%s3 + $0x30] sm:$0xff]
  %v391 = vld [vmem:[%s3 + $0x38] sm:$0xff]
  %v392 = vld [vmem:[%s3 + $0x40] sm:$0xff]
  %v393 = vld [vmem:[%s3 + $0x48] sm:$0xff]
  %v394 = vld [vmem:[%s3 + $0x50] sm:$0xff]
  %v395 = vld [vmem:[%s3 + $0x58] sm:$0xff]
  %v396 = vld [vmem:[%s3 + $0x60] sm:$0xff]
  %v397 = vld [vmem:[%s3 + $0x68] sm:$0xff]
  %v398 = vld [vmem:[%s3 + $0x70] sm:$0xff]
  %v399 = vld [vmem:[%s3 + $0x78] sm:$0xff]
  %v400 = vld [vmem:[%s3 + $0x80] sm:$0xff]
  %v401 = vld [vmem:[%s3 + $0x88] sm:$0xff]
  %v402 = vld [vmem:[%s3 + $0x90] sm:$0xff]
  %v403 = vld [vmem:[%s3 + $0x98] sm:$0xff]
  %v404 = vld [vmem:[%s3 + $0xa0] sm:$0xff]
  %v405 = vld [vmem:[%s3 + $0xa8] sm:$0xff]
  %v406 = vld [vmem:[%s3 + $0xb0] sm:$0xff]
  %v407 = vld [vmem:[%s3 + $0xb8] sm:$0xff]
  %v408 = vld [vmem:[%s3 + $0xc0] sm:$0xff]
  %v409 = vld [vmem:[%s3 + $0xc8] sm:$0xff]
  %v410 = vld [vmem:[%s3 + $0xd0] sm:$0xff]
  %v411 = vld [vmem:[%s3 + $0xd8] sm:$0xff]
  %v412 = vld [vmem:[%s3 + $0xe0] sm:$0xff]
  %v413 = vld [vmem:[%s3 + $0xe8] sm:$0xff]
  %v414 = vld [vmem:[%s3 + $0xf0] sm:$0xff]
  %v415 = vld [vmem:[%s3 + $0xf8] sm:$0xff]
  %v416 = vadd.f32 %v258, %v384
  %v417 = vadd.f32 %v261, %v385
  %v418 = vadd.f32 %v266, %v386
  %v419 = vadd.f32 %v269, %v387
  %v420 = vadd.f32 %v274, %v388
  %v421 = vadd.f32 %v277, %v389
  %v422 = vadd.f32 %v282, %v390
  %v423 = vadd.f32 %v285, %v391
  %v424 = vadd.f32 %v290, %v392
  %v425 = vadd.f32 %v293, %v393
  %v426 = vadd.f32 %v298, %v394
  %v427 = vadd.f32 %v301, %v395
  %v428 = vadd.f32 %v306, %v396
  %v429 = vadd.f32 %v309, %v397
  %v430 = vadd.f32 %v314, %v398
  %v431 = vadd.f32 %v317, %v399
  %v432 = vadd.f32 %v322, %v400
  %v433 = vadd.f32 %v325, %v401
  %v434 = vadd.f32 %v330, %v402
  %v435 = vadd.f32 %v333, %v403
  %v436 = vadd.f32 %v338, %v404
  %v437 = vadd.f32 %v341, %v405
  %v438 = vadd.f32 %v346, %v406
  %v439 = vadd.f32 %v349, %v407
  %v440 = vadd.f32 %v354, %v408
  %v441 = vadd.f32 %v357, %v409
  %v442 = vadd.f32 %v362, %v410
  %v443 = vadd.f32 %v365, %v411
  %v444 = vadd.f32 %v370, %v412
  %v445 = vadd.f32 %v373, %v413
  %v446 = vadd.f32 %v378, %v414
  %v447 = vadd.f32 %v381, %v415
  %448 = vadd.xlane.f32.xlu0 %v416
  %v449 = vpop.xlane.xlu0 %448
  %450 = vadd.xlane.f32.xlu0 %v417
  %v451 = vpop.xlane.xlu0 %450
  %452 = vadd.xlane.f32.xlu0 %v418
  %v453 = vpop.xlane.xlu0 %452
  %454 = vadd.xlane.f32.xlu0 %v419
  %v455 = vpop.xlane.xlu0 %454
  %456 = vadd.xlane.f32.xlu0 %v420
  %v457 = vpop.xlane.xlu0 %456
  %458 = vadd.xlane.f32.xlu0 %v421
  %v459 = vpop.xlane.xlu0 %458
  %460 = vadd.xlane.f32.xlu0 %v422
  %v461 = vpop.xlane.xlu0 %460
  %462 = vadd.xlane.f32.xlu0 %v423
  %v463 = vpop.xlane.xlu0 %462
  %464 = vadd.xlane.f32.xlu0 %v424
  %v465 = vpop.xlane.xlu0 %464
  %466 = vadd.xlane.f32.xlu0 %v425
  %v467 = vpop.xlane.xlu0 %466
  %468 = vadd.xlane.f32.xlu0 %v426
  %v469 = vpop.xlane.xlu0 %468
  %470 = vadd.xlane.f32.xlu0 %v427
  %v471 = vpop.xlane.xlu0 %470
  %472 = vadd.xlane.f32.xlu0 %v428
  %v473 = vpop.xlane.xlu0 %472
  %474 = vadd.xlane.f32.xlu0 %v429
  %v475 = vpop.xlane.xlu0 %474
  %476 = vadd.xlane.f32.xlu0 %v430
  %v477 = vpop.xlane.xlu0 %476
  %478 = vadd.xlane.f32.xlu0 %v431
  %v479 = vpop.xlane.xlu0 %478
  %480 = vadd.xlane.f32.xlu0 %v432
  %v481 = vpop.xlane.xlu0 %480
  %482 = vadd.xlane.f32.xlu0 %v433
  %v483 = vpop.xlane.xlu0 %482
  %484 = vadd.xlane.f32.xlu0 %v434
  %v485 = vpop.xlane.xlu0 %484
  %486 = vadd.xlane.f32.xlu0 %v435
  %v487 = vpop.xlane.xlu0 %486
  %488 = vadd.xlane.f32.xlu0 %v436
  %v489 = vpop.xlane.xlu0 %488
  %490 = vadd.xlane.f32.xlu0 %v437
  %v491 = vpop.xlane.xlu0 %490
  %492 = vadd.xlane.f32.xlu0 %v438
  %v493 = vpop.xlane.xlu0 %492
  %494 = vadd.xlane.f32.xlu0 %v439
  %v495 = vpop.xlane.xlu0 %494
  %496 = vadd.xlane.f32.xlu0 %v440
  %v497 = vpop.xlane.xlu0 %496
  %498 = vadd.xlane.f32.xlu0 %v441
  %v499 = vpop.xlane.xlu0 %498
  %500 = vadd.xlane.f32.xlu0 %v442
  %v501 = vpop.xlane.xlu0 %500
  %502 = vadd.xlane.f32.xlu0 %v443
  %v503 = vpop.xlane.xlu0 %502
  %504 = vadd.xlane.f32.xlu0 %v444
  %v505 = vpop.xlane.xlu0 %504
  %506 = vadd.xlane.f32.xlu0 %v445
  %v507 = vpop.xlane.xlu0 %506
  %508 = vadd.xlane.f32.xlu0 %v446
  %v509 = vpop.xlane.xlu0 %508
  %510 = vadd.xlane.f32.xlu0 %v447
  %v511 = vpop.xlane.xlu0 %510
  %v512 = vrcp.pop 128.0
  %v513 = vmul.f32 %v449, %v512
  %v514 = vmul.f32 %v451, %v512
  %v515 = vmul.f32 %v453, %v512
  %v516 = vmul.f32 %v455, %v512
  %v517 = vmul.f32 %v457, %v512
  %v518 = vmul.f32 %v459, %v512
  %v519 = vmul.f32 %v461, %v512
  %v520 = vmul.f32 %v463, %v512
  %v521 = vmul.f32 %v465, %v512
  %v522 = vmul.f32 %v467, %v512
  %v523 = vmul.f32 %v469, %v512
  %v524 = vmul.f32 %v471, %v512
  %v525 = vmul.f32 %v473, %v512
  %v526 = vmul.f32 %v475, %v512
  %v527 = vmul.f32 %v477, %v512
  %v528 = vmul.f32 %v479, %v512
  %v529 = vmul.f32 %v481, %v512
  %v530 = vmul.f32 %v483, %v512
  %v531 = vmul.f32 %v485, %v512
  %v532 = vmul.f32 %v487, %v512
  %v533 = vmul.f32 %v489, %v512
  %v534 = vmul.f32 %v491, %v512
  %v535 = vmul.f32 %v493, %v512
  %v536 = vmul.f32 %v495, %v512
  %v537 = vmul.f32 %v497, %v512
  %v538 = vmul.f32 %v499, %v512
  %v539 = vmul.f32 %v501, %v512
  %v540 = vmul.f32 %v503, %v512
  %v541 = vmul.f32 %v505, %v512
  %v542 = vmul.f32 %v507, %v512
  %v543 = vmul.f32 %v509, %v512
  %v544 = vmul.f32 %v511, %v512
  %v545 = vsub.f32 %v416, %v513
  %v546 = vsub.f32 %v417, %v514
  %v547 = vsub.f32 %v418, %v515
  %v548 = vsub.f32 %v419, %v516
  %v549 = vsub.f32 %v420, %v517
  %v550 = vsub.f32 %v421, %v518
  %v551 = vsub.f32 %v422, %v519
  %v552 = vsub.f32 %v423, %v520
  %v553 = vsub.f32 %v424, %v521
  %v554 = vsub.f32 %v425, %v522
  %v555 = vsub.f32 %v426, %v523
  %v556 = vsub.f32 %v427, %v524
  %v557 = vsub.f32 %v428, %v525
  %v558 = vsub.f32 %v429, %v526
  %v559 = vsub.f32 %v430, %v527
  %v560 = vsub.f32 %v431, %v528
  %v561 = vsub.f32 %v432, %v529
  %v562 = vsub.f32 %v433, %v530
  %v563 = vsub.f32 %v434, %v531
  %v564 = vsub.f32 %v435, %v532
  %v565 = vsub.f32 %v436, %v533
  %v566 = vsub.f32 %v437, %v534
  %v567 = vsub.f32 %v438, %v535
  %v568 = vsub.f32 %v439, %v536
  %v569 = vsub.f32 %v440, %v537
  %v570 = vsub.f32 %v441, %v538
  %v571 = vsub.f32 %v442, %v539
  %v572 = vsub.f32 %v443, %v540
  %v573 = vsub.f32 %v444, %v541
  %v574 = vsub.f32 %v445, %v542
  %v575 = vsub.f32 %v446, %v543
  %v576 = vsub.f32 %v447, %v544
  %v577 = vmul.f32 %v545, %v545
  %v578 = vmul.f32 %v546, %v546
  %v579 = vmul.f32 %v547, %v547
  %v580 = vmul.f32 %v548, %v548
  %v581 = vmul.f32 %v549, %v549
  %v582 = vmul.f32 %v550, %v550
  %v583 = vmul.f32 %v551, %v551
  %v584 = vmul.f32 %v552, %v552
  %v585 = vmul.f32 %v553, %v553
  %v586 = vmul.f32 %v554, %v554
  %v587 = vmul.f32 %v555, %v555
  %v588 = vmul.f32 %v556, %v556
  %v589 = vmul.f32 %v557, %v557
  %v590 = vmul.f32 %v558, %v558
  %v591 = vmul.f32 %v559, %v559
  %v592 = vmul.f32 %v560, %v560
  %v593 = vmul.f32 %v561, %v561
  %v594 = vmul.f32 %v562, %v562
  %v595 = vmul.f32 %v563, %v563
  %v596 = vmul.f32 %v564, %v564
  %v597 = vmul.f32 %v565, %v565
  %v598 = vmul.f32 %v566, %v566
  %v599 = vmul.f32 %v567, %v567
  %v600 = vmul.f32 %v568, %v568
  %v601 = vmul.f32 %v569, %v569
  %v602 = vmul.f32 %v570, %v570
  %v603 = vmul.f32 %v571, %v571
  %v604 = vmul.f32 %v572, %v572
  %v605 = vmul.f32 %v573, %v573
  %v606 = vmul.f32 %v574, %v574
  %v607 = vmul.f32 %v575, %v575
  %v608 = vmul.f32 %v576, %v576
  %609 = vadd.xlane.f32.xlu0 %v577
  %v610 = vpop.xlane.xlu0 %609
  %611 = vadd.xlane.f32.xlu0 %v578
  %v612 = vpop.xlane.xlu0 %611
  %613 = vadd.xlane.f32.xlu0 %v579
  %v614 = vpop.xlane.xlu0 %613
  %615 = vadd.xlane.f32.xlu0 %v580
  %v616 = vpop.xlane.xlu0 %615
  %617 = vadd.xlane.f32.xlu0 %v581
  %v618 = vpop.xlane.xlu0 %617
  %619 = vadd.xlane.f32.xlu0 %v582
  %v620 = vpop.xlane.xlu0 %619
  %621 = vadd.xlane.f32.xlu0 %v583
  %v622 = vpop.xlane.xlu0 %621
  %623 = vadd.xlane.f32.xlu0 %v584
  %v624 = vpop.xlane.xlu0 %623
  %625 = vadd.xlane.f32.xlu0 %v585
  %v626 = vpop.xlane.xlu0 %625
  %627 = vadd.xlane.f32.xlu0 %v586
  %v628 = vpop.xlane.xlu0 %627
  %629 = vadd.xlane.f32.xlu0 %v587
  %v630 = vpop.xlane.xlu0 %629
  %631 = vadd.xlane.f32.xlu0 %v588
  %v632 = vpop.xlane.xlu0 %631
  %633 = vadd.xlane.f32.xlu0 %v589
  %v634 = vpop.xlane.xlu0 %633
  %635 = vadd.xlane.f32.xlu0 %v590
  %v636 = vpop.xlane.xlu0 %635
  %637 = vadd.xlane.f32.xlu0 %v591
  %v638 = vpop.xlane.xlu0 %637
  %639 = vadd.xlane.f32.xlu0 %v592
  %v640 = vpop.xlane.xlu0 %639
  %641 = vadd.xlane.f32.xlu0 %v593
  %v642 = vpop.xlane.xlu0 %641
  %643 = vadd.xlane.f32.xlu0 %v594
  %v644 = vpop.xlane.xlu0 %643
  %645 = vadd.xlane.f32.xlu0 %v595
  %v646 = vpop.xlane.xlu0 %645
  %647 = vadd.xlane.f32.xlu0 %v596
  %v648 = vpop.xlane.xlu0 %647
  %649 = vadd.xlane.f32.xlu0 %v597
  %v650 = vpop.xlane.xlu0 %649
  %651 = vadd.xlane.f32.xlu0 %v598
  %v652 = vpop.xlane.xlu0 %651
  %653 = vadd.xlane.f32.xlu0 %v599
  %v654 = vpop.xlane.xlu0 %653
  %655 = vadd.xlane.f32.xlu0 %v600
  %v656 = vpop.xlane.xlu0 %655
  %657 = vadd.xlane.f32.xlu0 %v601
  %v658 = vpop.xlane.xlu0 %657
  %659 = vadd.xlane.f32.xlu0 %v602
  %v660 = vpop.xlane.xlu0 %659
  %661 = vadd.xlane.f32.xlu0 %v603
  %v662 = vpop.xlane.xlu0 %661
  %663 = vadd.xlane.f32.xlu0 %v604
  %v664 = vpop.xlane.xlu0 %663
  %665 = vadd.xlane.f32.xlu0 %v605
  %v666 = vpop.xlane.xlu0 %665
  %667 = vadd.xlane.f32.xlu0 %v606
  %v668 = vpop.xlane.xlu0 %667
  %669 = vadd.xlane.f32.xlu0 %v607
  %v670 = vpop.xlane.xlu0 %669
  %671 = vadd.xlane.f32.xlu0 %v608
  %v672 = vpop.xlane.xlu0 %671
  %v673 = vmul.f32 %v610, %v512
  %v674 = vmul.f32 %v612, %v512
  %v675 = vmul.f32 %v614, %v512
  %v676 = vmul.f32 %v616, %v512
  %v677 = vmul.f32 %v618, %v512
  %v678 = vmul.f32 %v620, %v512
  %v679 = vmul.f32 %v622, %v512
  %v680 = vmul.f32 %v624, %v512
  %v681 = vmul.f32 %v626, %v512
  %v682 = vmul.f32 %v628, %v512
  %v683 = vmul.f32 %v630, %v512
  %v684 = vmul.f32 %v632, %v512
  %v685 = vmul.f32 %v634, %v512
  %v686 = vmul.f32 %v636, %v512
  %v687 = vmul.f32 %v638, %v512
  %v688 = vmul.f32 %v640, %v512
  %v689 = vmul.f32 %v642, %v512
  %v690 = vmul.f32 %v644, %v512
  %v691 = vmul.f32 %v646, %v512
  %v692 = vmul.f32 %v648, %v512
  %v693 = vmul.f32 %v650, %v512
  %v694 = vmul.f32 %v652, %v512
  %v695 = vmul.f32 %v654, %v512
  %v696 = vmul.f32 %v656, %v512
  %v697 = vmul.f32 %v658, %v512
  %v698 = vmul.f32 %v660, %v512
  %v699 = vmul.f32 %v662, %v512
  %v700 = vmul.f32 %v664, %v512
  %v701 = vmul.f32 %v666, %v512
  %v702 = vmul.f32 %v668, %v512
  %v703 = vmul.f32 %v670, %v512
  %v704 = vmul.f32 %v672, %v512
  %v705 = vadd.f32 %v673, 1e-05
  %v706 = vadd.f32 %v674, 1e-05
  %v707 = vadd.f32 %v675, 1e-05
  %v708 = vadd.f32 %v676, 1e-05
  %v709 = vadd.f32 %v677, 1e-05
  %v710 = vadd.f32 %v678, 1e-05
  %v711 = vadd.f32 %v679, 1e-05
  %v712 = vadd.f32 %v680, 1e-05
  %v713 = vadd.f32 %v681, 1e-05
  %v714 = vadd.f32 %v682, 1e-05
  %v715 = vadd.f32 %v683, 1e-05
  %v716 = vadd.f32 %v684, 1e-05
  %v717 = vadd.f32 %v685, 1e-05
  %v718 = vadd.f32 %v686, 1e-05
  %v719 = vadd.f32 %v687, 1e-05
  %v720 = vadd.f32 %v688, 1e-05
  %v721 = vadd.f32 %v689, 1e-05
  %v722 = vadd.f32 %v690, 1e-05
  %v723 = vadd.f32 %v691, 1e-05
  %v724 = vadd.f32 %v692, 1e-05
  %v725 = vadd.f32 %v693, 1e-05
  %v726 = vadd.f32 %v694, 1e-05
  %v727 = vadd.f32 %v695, 1e-05
  %v728 = vadd.f32 %v696, 1e-05
  %v729 = vadd.f32 %v697, 1e-05
  %v730 = vadd.f32 %v698, 1e-05
  %v731 = vadd.f32 %v699, 1e-05
  %v732 = vadd.f32 %v700, 1e-05
  %v733 = vadd.f32 %v701, 1e-05
  %v734 = vadd.f32 %v702, 1e-05
  %v735 = vadd.f32 %v703, 1e-05
  %v736 = vadd.f32 %v704, 1e-05
  %v737 = vrsqrt.pop %v705
  %v738 = vrsqrt.pop %v706
  %v739 = vrsqrt.pop %v707
  %v740 = vrsqrt.pop %v708
  %v741 = vrsqrt.pop %v709
  %v742 = vrsqrt.pop %v710
  %v743 = vrsqrt.pop %v711
  %v744 = vrsqrt.pop %v712
  %v745 = vrsqrt.pop %v713
  %v746 = vrsqrt.pop %v714
  %v747 = vrsqrt.pop %v715
  %v748 = vrsqrt.pop %v716
  %v749 = vrsqrt.pop %v717
  %v750 = vrsqrt.pop %v718
  %v751 = vrsqrt.pop %v719
  %v752 = vrsqrt.pop %v720
  %v753 = vrsqrt.pop %v721
  %v754 = vrsqrt.pop %v722
  %v755 = vrsqrt.pop %v723
  %v756 = vrsqrt.pop %v724
  %v757 = vrsqrt.pop %v725
  %v758 = vrsqrt.pop %v726
  %v759 = vrsqrt.pop %v727
  %v760 = vrsqrt.pop %v728
  %v761 = vrsqrt.pop %v729
  %v762 = vrsqrt.pop %v730
  %v763 = vrsqrt.pop %v731
  %v764 = vrsqrt.pop %v732
  %v765 = vrsqrt.pop %v733
  %v766 = vrsqrt.pop %v734
  %v767 = vrsqrt.pop %v735
  %v768 = vrsqrt.pop %v736
  %v769 = vmul.f32 %v545, %v737
  %v770 = vmul.f32 %v546, %v738
  %v771 = vmul.f32 %v547, %v739
  %v772 = vmul.f32 %v548, %v740
  %v773 = vmul.f32 %v549, %v741
  %v774 = vmul.f32 %v550, %v742
  %v775 = vmul.f32 %v551, %v743
  %v776 = vmul.f32 %v552, %v744
  %v777 = vmul.f32 %v553, %v745
  %v778 = vmul.f32 %v554, %v746
  %v779 = vmul.f32 %v555, %v747
  %v780 = vmul.f32 %v556, %v748
  %v781 = vmul.f32 %v557, %v749
  %v782 = vmul.f32 %v558, %v750
  %v783 = vmul.f32 %v559, %v751
  %v784 = vmul.f32 %v560, %v752
  %v785 = vmul.f32 %v561, %v753
  %v786 = vmul.f32 %v562, %v754
  %v787 = vmul.f32 %v563, %v755
  %v788 = vmul.f32 %v564, %v756
  %v789 = vmul.f32 %v565, %v757
  %v790 = vmul.f32 %v566, %v758
  %v791 = vmul.f32 %v567, %v759
  %v792 = vmul.f32 %v568, %v760
  %v793 = vmul.f32 %v569, %v761
  %v794 = vmul.f32 %v570, %v762
  %v795 = vmul.f32 %v571, %v763
  %v796 = vmul.f32 %v572, %v764
  %v797 = vmul.f32 %v573, %v765
  %v798 = vmul.f32 %v574, %v766
  %v799 = vmul.f32 %v575, %v767
  %v800 = vmul.f32 %v576, %v768
  %v801 = vld [vmem:[%s4] sm:$0x1]
  %v803 = vlaneseq
  %v804 = vshrl.u32 %v803, 7
  %v805 = vsub.s32 0, %v804
  %v806 = vrot.slane %v801, %v805
  %v808 = vmul.f32 %v769, %v806
  %v809 = vmul.f32 %v770, %v806
  %v810 = vmul.f32 %v771, %v806
  %v811 = vmul.f32 %v772, %v806
  %v812 = vmul.f32 %v773, %v806
  %v813 = vmul.f32 %v774, %v806
  %v814 = vmul.f32 %v775, %v806
  %v815 = vmul.f32 %v776, %v806
  %v816 = vmul.f32 %v777, %v806
  %v817 = vmul.f32 %v778, %v806
  %v818 = vmul.f32 %v779, %v806
  %v819 = vmul.f32 %v780, %v806
  %v820 = vmul.f32 %v781, %v806
  %v821 = vmul.f32 %v782, %v806
  %v822 = vmul.f32 %v783, %v806
  %v823 = vmul.f32 %v784, %v806
  %v824 = vmul.f32 %v785, %v806
  %v825 = vmul.f32 %v786, %v806
  %v826 = vmul.f32 %v787, %v806
  %v827 = vmul.f32 %v788, %v806
  %v828 = vmul.f32 %v789, %v806
  %v829 = vmul.f32 %v790, %v806
  %v830 = vmul.f32 %v791, %v806
  %v831 = vmul.f32 %v792, %v806
  %v832 = vmul.f32 %v793, %v806
  %v833 = vmul.f32 %v794, %v806
  %v834 = vmul.f32 %v795, %v806
  %v835 = vmul.f32 %v796, %v806
  %v836 = vmul.f32 %v797, %v806
  %v837 = vmul.f32 %v798, %v806
  %v838 = vmul.f32 %v799, %v806
  %v839 = vmul.f32 %v800, %v806
  %v840 = vld [vmem:[%s5] sm:$0x1]
  %v842 = vlaneseq
  %v843 = vshrl.u32 %v842, 7
  %v844 = vsub.s32 0, %v843
  %v845 = vrot.slane %v840, %v844
  %v847 = vadd.f32 %v808, %v845
  %v848 = vadd.f32 %v809, %v845
  %v849 = vadd.f32 %v810, %v845
  %v850 = vadd.f32 %v811, %v845
  %v851 = vadd.f32 %v812, %v845
  %v852 = vadd.f32 %v813, %v845
  %v853 = vadd.f32 %v814, %v845
  %v854 = vadd.f32 %v815, %v845
  %v855 = vadd.f32 %v816, %v845
  %v856 = vadd.f32 %v817, %v845
  %v857 = vadd.f32 %v818, %v845
  %v858 = vadd.f32 %v819, %v845
  %v859 = vadd.f32 %v820, %v845
  %v860 = vadd.f32 %v821, %v845
  %v861 = vadd.f32 %v822, %v845
  %v862 = vadd.f32 %v823, %v845
  %v863 = vadd.f32 %v824, %v845
  %v864 = vadd.f32 %v825, %v845
  %v865 = vadd.f32 %v826, %v845
  %v866 = vadd.f32 %v827, %v845
  %v867 = vadd.f32 %v828, %v845
  %v868 = vadd.f32 %v829, %v845
  %v869 = vadd.f32 %v830, %v845
  %v870 = vadd.f32 %v831, %v845
  %v871 = vadd.f32 %v832, %v845
  %v872 = vadd.f32 %v833, %v845
  %v873 = vadd.f32 %v834, %v845
  %v874 = vadd.f32 %v835, %v845
  %v875 = vadd.f32 %v836, %v845
  %v876 = vadd.f32 %v837, %v845
  %v877 = vadd.f32 %v838, %v845
  %v878 = vadd.f32 %v839, %v845
  %879 = vst [vmem:[%s6] sm:$0xff] %v847
  %880 = vst [vmem:[%s6 + $0x8] sm:$0xff] %v848
  %881 = vst [vmem:[%s6 + $0x10] sm:$0xff] %v849
  %882 = vst [vmem:[%s6 + $0x18] sm:$0xff] %v850
  %883 = vst [vmem:[%s6 + $0x20] sm:$0xff] %v851
  %884 = vst [vmem:[%s6 + $0x28] sm:$0xff] %v852
  %885 = vst [vmem:[%s6 + $0x30] sm:$0xff] %v853
  %886 = vst [vmem:[%s6 + $0x38] sm:$0xff] %v854
  %887 = vst [vmem:[%s6 + $0x40] sm:$0xff] %v855
  %888 = vst [vmem:[%s6 + $0x48] sm:$0xff] %v856
  %889 = vst [vmem:[%s6 + $0x50] sm:$0xff] %v857
  %890 = vst [vmem:[%s6 + $0x58] sm:$0xff] %v858
  %891 = vst [vmem:[%s6 + $0x60] sm:$0xff] %v859
  %892 = vst [vmem:[%s6 + $0x68] sm:$0xff] %v860
  %893 = vst [vmem:[%s6 + $0x70] sm:$0xff] %v861
  %894 = vst [vmem:[%s6 + $0x78] sm:$0xff] %v862
  %895 = vst [vmem:[%s6 + $0x80] sm:$0xff] %v863
  %896 = vst [vmem:[%s6 + $0x88] sm:$0xff] %v864
  %897 = vst [vmem:[%s6 + $0x90] sm:$0xff] %v865
  %898 = vst [vmem:[%s6 + $0x98] sm:$0xff] %v866
  %899 = vst [vmem:[%s6 + $0xa0] sm:$0xff] %v867
  %900 = vst [vmem:[%s6 + $0xa8] sm:$0xff] %v868
  %901 = vst [vmem:[%s6 + $0xb0] sm:$0xff] %v869
  %902 = vst [vmem:[%s6 + $0xb8] sm:$0xff] %v870
  %903 = vst [vmem:[%s6 + $0xc0] sm:$0xff] %v871
  %904 = vst [vmem:[%s6 + $0xc8] sm:$0xff] %v872
  %905 = vst [vmem:[%s6 + $0xd0] sm:$0xff] %v873
  %906 = vst [vmem:[%s6 + $0xd8] sm:$0xff] %v874
  %907 = vst [vmem:[%s6 + $0xe0] sm:$0xff] %v875
  %908 = vst [vmem:[%s6 + $0xe8] sm:$0xff] %v876
  %909 = vst [vmem:[%s6 + $0xf0] sm:$0xff] %v877
  %910 = vst [vmem:[%s6 + $0xf8] sm:$0xff] %v878
  // Predicated region
  $region26: #{relative_transformer.14} parent=0 // pred_check
    _
  $region27: #{relative_transformer.14} parent=0 // pred_check_branch
    %912 = sbr.rel (0) target = $region29
  $region28: #{relative_transformer.14} parent=0 // pred_region
    _
  $region29: #{relative_transformer.14} parent=0 // pred_fallthru
    _
  // Predicated region
  $region30: #{relative_transformer.14} parent=0 // pred_check
    _
  $region31: #{relative_transformer.14} parent=0 // pred_check_branch
    %914 = sbr.rel (0) target = $region33
  $region32: #{relative_transformer.14} parent=0 // pred_region
    _
  $region33: #{relative_transformer.14} parent=0 // pred_fallthru
    _

// kernel: relative_transformer.15
$region0: #{relative_transformer.15}
  #allocation0 [shape = 'u32[]', space=smem, size = 0x4, offset = 0x4, fixed_abs, tag = 'smem constant byte address 0x4 - core index']
  #allocation1 [shape = 'u32[144,128]{1,0:T(1,128)}', space=vmem, size = 0x12000, scoped, tag = 'internal scratch']
  %s0 = inlined_call_operand.vmem [shape: f32[256,128], index: 0, kind: input, shape index: {}]
  %s1 = inlined_call_operand.vmem [shape: bf16[128,256], index: 1, kind: input, shape index: {}]
  %s2 = inlined_call_operand.vmem [shape: f32[1,256], index: 2, kind: input, shape index: {}]
  %s3 = inlined_call_operand.vmem [shape: bf16[256,256], index: 3, kind: output, shape index: {}]
  %s4 = sld [smem:[#allocation0]]
  $region22: #{relative_transformer.15} parent=0
    _
  %s6 = ssub.s32 1, %s4
  %s7 = scalar_select 0, %s6, %s4
  // Predicated region
  $region2: #{relative_transformer.15} parent=0 // pred_check
    _
  $region3: #{relative_transformer.15} parent=0 // pred_check_branch
    %9 = sbr.rel (0) target = $region5
  $region4: #{relative_transformer.15} parent=0 // pred_region
    _
  $region5: #{relative_transformer.15} parent=0 // pred_fallthru
    _
  // Predicated region
  $region6: #{relative_transformer.15} parent=0 // pred_check
    _
  $region7: #{relative_transformer.15} parent=0 // pred_check_branch
    %11 = sbr.rel (0) target = $region9
  $region8: #{relative_transformer.15} parent=0 // pred_region
    _
  $region9: #{relative_transformer.15} parent=0 // pred_fallthru
    _
  // Predicated region
  $region10: #{relative_transformer.15} parent=0 // pred_check
    _
  $region11: #{relative_transformer.15} parent=0 // pred_check_branch
    %13 = sbr.rel (0) target = $region13
  $region12: #{relative_transformer.15} parent=0 // pred_region
    _
  $region13: #{relative_transformer.15} parent=0 // pred_fallthru
    _
  %v15 = vld [vmem:[%s0] sm:$0xff]
  %v16 = vld [vmem:[%s0 + $0x8] sm:$0xff]
  %v17 = vld [vmem:[%s0 + $0x10] sm:$0xff]
  %v18 = vld [vmem:[%s0 + $0x18] sm:$0xff]
  %v19 = vld [vmem:[%s0 + $0x20] sm:$0xff]
  %v20 = vld [vmem:[%s0 + $0x28] sm:$0xff]
  %v21 = vld [vmem:[%s0 + $0x30] sm:$0xff]
  %v22 = vld [vmem:[%s0 + $0x38] sm:$0xff]
  %v23 = vld [vmem:[%s0 + $0x40] sm:$0xff]
  %v24 = vld [vmem:[%s0 + $0x48] sm:$0xff]
  %v25 = vld [vmem:[%s0 + $0x50] sm:$0xff]
  %v26 = vld [vmem:[%s0 + $0x58] sm:$0xff]
  %v27 = vld [vmem:[%s0 + $0x60] sm:$0xff]
  %v28 = vld [vmem:[%s0 + $0x68] sm:$0xff]
  %v29 = vld [vmem:[%s0 + $0x70] sm:$0xff]
  %v30 = vld [vmem:[%s0 + $0x78] sm:$0xff]
  %v31 = vld [vmem:[%s0 + $0x80] sm:$0xff]
  %v32 = vld [vmem:[%s0 + $0x88] sm:$0xff]
  %v33 = vld [vmem:[%s0 + $0x90] sm:$0xff]
  %v34 = vld [vmem:[%s0 + $0x98] sm:$0xff]
  %v35 = vld [vmem:[%s0 + $0xa0] sm:$0xff]
  %v36 = vld [vmem:[%s0 + $0xa8] sm:$0xff]
  %v37 = vld [vmem:[%s0 + $0xb0] sm:$0xff]
  %v38 = vld [vmem:[%s0 + $0xb8] sm:$0xff]
  %v39 = vld [vmem:[%s0 + $0xc0] sm:$0xff]
  %v40 = vld [vmem:[%s0 + $0xc8] sm:$0xff]
  %v41 = vld [vmem:[%s0 + $0xd0] sm:$0xff]
  %v42 = vld [vmem:[%s0 + $0xd8] sm:$0xff]
  %v43 = vld [vmem:[%s0 + $0xe0] sm:$0xff]
  %v44 = vld [vmem:[%s0 + $0xe8] sm:$0xff]
  %v45 = vld [vmem:[%s0 + $0xf0] sm:$0xff]
  %v46 = vld [vmem:[%s0 + $0xf8] sm:$0xff]
  %v47 = vld [vmem:[%s1] sm:$0xff]
  %v48 = vld [vmem:[%s1 + $0x8] sm:$0xff]
  %v49 = vld [vmem:[%s1 + $0x10] sm:$0xff]
  %v50 = vld [vmem:[%s1 + $0x18] sm:$0xff]
  %v51 = vld [vmem:[%s1 + $0x20] sm:$0xff]
  %v52 = vld [vmem:[%s1 + $0x28] sm:$0xff]
  %v53 = vld [vmem:[%s1 + $0x30] sm:$0xff]
  %v54 = vld [vmem:[%s1 + $0x38] sm:$0xff]
  %v55 = vld [vmem:[%s1 + $0x40] sm:$0xff]
  %v56 = vld [vmem:[%s1 + $0x48] sm:$0xff]
  %v57 = vld [vmem:[%s1 + $0x50] sm:$0xff]
  %v58 = vld [vmem:[%s1 + $0x58] sm:$0xff]
  %v59 = vld [vmem:[%s1 + $0x60] sm:$0xff]
  %v60 = vld [vmem:[%s1 + $0x68] sm:$0xff]
  %v61 = vld [vmem:[%s1 + $0x70] sm:$0xff]
  %v62 = vld [vmem:[%s1 + $0x78] sm:$0xff]
  %v63 = vpack.c.bf16 %v16, %v15
  %v64 = vpack.c.bf16 %v18, %v17
  %v65 = vpack.c.bf16 %v20, %v19
  %v66 = vpack.c.bf16 %v22, %v21
  %v67 = vpack.c.bf16 %v24, %v23
  %v68 = vpack.c.bf16 %v26, %v25
  %v69 = vpack.c.bf16 %v28, %v27
  %v70 = vpack.c.bf16 %v30, %v29
  %v71 = vpack.c.bf16 %v32, %v31
  %v72 = vpack.c.bf16 %v34, %v33
  %v73 = vpack.c.bf16 %v36, %v35
  %v74 = vpack.c.bf16 %v38, %v37
  %v75 = vpack.c.bf16 %v40, %v39
  %v76 = vpack.c.bf16 %v42, %v41
  %v77 = vpack.c.bf16 %v44, %v43
  %v78 = vpack.c.bf16 %v46, %v45
  %v79 = vld [vmem:[%s2] sm:$0x3]
  %v81 = vlaneseq
  %v82 = vshrl.u32 %v81, 7
  %v83 = vsub.s32 0, %v82
  %v84 = vrot.slane %v79, %v83
  %v85 = vlaneseq
  %v86 = vshrl.u32 %v85, 7
  %v87 = vsub.s32 1, %v86
  %v88 = vrot.slane %v79, %v87
  %v107 = vunpack.c.l.b16 %v47
  %v108 = vunpack.c.h.b16 %v47
  %v109 = vunpack.c.l.b16 %v48
  %v110 = vunpack.c.h.b16 %v48
  %v111 = vunpack.c.l.b16 %v49
  %v112 = vunpack.c.h.b16 %v49
  %v113 = vunpack.c.l.b16 %v50
  %v114 = vunpack.c.h.b16 %v50
  %v115 = vunpack.c.l.b16 %v51
  %v116 = vunpack.c.h.b16 %v51
  %v117 = vunpack.c.l.b16 %v52
  %v118 = vunpack.c.h.b16 %v52
  %v119 = vunpack.c.l.b16 %v53
  %v120 = vunpack.c.h.b16 %v53
  %v121 = vunpack.c.l.b16 %v54
  %v122 = vunpack.c.h.b16 %v54
  %v123 = vunpack.c.l.b16 %v55
  %v124 = vunpack.c.h.b16 %v55
  %v125 = vunpack.c.l.b16 %v56
  %v126 = vunpack.c.h.b16 %v56
  %v127 = vunpack.c.l.b16 %v57
  %v128 = vunpack.c.h.b16 %v57
  %v129 = vunpack.c.l.b16 %v58
  %v130 = vunpack.c.h.b16 %v58
  %v131 = vunpack.c.l.b16 %v59
  %v132 = vunpack.c.h.b16 %v59
  %v133 = vunpack.c.l.b16 %v60
  %v134 = vunpack.c.h.b16 %v60
  %v135 = vunpack.c.l.b16 %v61
  %v136 = vunpack.c.h.b16 %v61
  %v137 = vunpack.c.l.b16 %v62
  %v138 = vunpack.c.h.b16 %v62
  %v139 = vpack.c.b16 %v109, %v107
  %v140 = vpack.c.b16 %v110, %v108
  %v141 = vpack.c.b16 %v113, %v111
  %v142 = vpack.c.b16 %v114, %v112
  %v143 = vpack.c.b16 %v117, %v115
  %v144 = vpack.c.b16 %v118, %v116
  %v145 = vpack.c.b16 %v121, %v119
  %v146 = vpack.c.b16 %v122, %v120
  %v147 = vpack.c.b16 %v125, %v123
  %v148 = vpack.c.b16 %v126, %v124
  %v149 = vpack.c.b16 %v129, %v127
  %v150 = vpack.c.b16 %v130, %v128
  %v151 = vpack.c.b16 %v133, %v131
  %v152 = vpack.c.b16 %v134, %v132
  %v153 = vpack.c.b16 %v137, %v135
  %v154 = vpack.c.b16 %v138, %v136
  %171 = vmatprep.subr.bf16.mxu0 %v140
  %172 = vmatpush1.bf16.msra.mxu0 %v139
  %173 = vmatprep.subr.bf16.mxu0 %v142
  %174 = vmatpush1.bf16.msra.mxu0 %v141
  %175 = vmatprep.subr.bf16.mxu0 %v144
  %176 = vmatpush1.bf16.msra.mxu0 %v143
  %177 = vmatprep.subr.bf16.mxu0 %v146
  %178 = vmatpush1.bf16.msra.mxu0 %v145
  %179 = vmatprep.subr.bf16.mxu0 %v148
  %180 = vmatpush1.bf16.msra.mxu0 %v147
  %181 = vmatprep.subr.bf16.mxu0 %v150
  %182 = vmatpush1.bf16.msra.mxu0 %v149
  %183 = vmatprep.subr.bf16.mxu0 %v152
  %184 = vmatpush1.bf16.msra.mxu0 %v151
  %185 = vmatprep.subr.bf16.mxu0 %v154
  %186 = vmatpush1.bf16.msra.mxu0 %v153
  %187 = vmatprep.subr.bf16.mxu0 0
  %188 = vmatpush1.bf16.msra.mxu0 0
  %189 = vmatprep.subr.bf16.mxu0 0
  %190 = vmatpush1.bf16.msra.mxu0 0
  %191 = vmatprep.subr.bf16.mxu0 0
  %192 = vmatpush1.bf16.msra.mxu0 0
  %193 = vmatprep.subr.bf16.mxu0 0
  %194 = vmatpush1.bf16.msra.mxu0 0
  %195 = vmatprep.subr.bf16.mxu0 0
  %196 = vmatpush1.bf16.msra.mxu0 0
  %197 = vmatprep.subr.bf16.mxu0 0
  %198 = vmatpush1.bf16.msra.mxu0 0
  %199 = vmatprep.subr.bf16.mxu0 0
  %200 = vmatpush1.bf16.msra.mxu0 0
  %201 = vmatprep.subr.bf16.mxu0 0
  %202 = vmatpush1.bf16.msra.mxu0 0
  %203 = vmatprep.mubr.bf16.mxu0 0
  %204 = vmatmul.mubr.bf16.gmra.mrb[0].mxu0 %v63
  %v205 = vpop.f32.mrb[0].mxu0
  %v206 = vadd.f32 %v84, %v205
  %v207 = vpop.f32.mrb[0].mxu0
  %v208 = vadd.f32 %v88, %v207
  %v209 = vpop.f32.mrb[0].mxu0
  %v210 = vadd.f32 %v84, %v209
  %v211 = vpop.f32.mrb[0].mxu0
  %v212 = vadd.f32 %v88, %v211
  %213 = vmatprep.mubr.bf16.mxu0 0
  %214 = vmatmul.mubr.bf16.gmra.mrb[0].mxu0 %v64
  %v215 = vpop.f32.mrb[0].mxu0
  %v216 = vadd.f32 %v84, %v215
  %v217 = vpop.f32.mrb[0].mxu0
  %v218 = vadd.f32 %v88, %v217
  %v219 = vpop.f32.mrb[0].mxu0
  %v220 = vadd.f32 %v84, %v219
  %v221 = vpop.f32.mrb[0].mxu0
  %v222 = vadd.f32 %v88, %v221
  %223 = vmatprep.mubr.bf16.mxu0 0
  %224 = vmatmul.mubr.bf16.gmra.mrb[0].mxu0 %v65
  %v225 = vpop.f32.mrb[0].mxu0
  %v226 = vadd.f32 %v84, %v225
  %v227 = vpop.f32.mrb[0].mxu0
  %v228 = vadd.f32 %v88, %v227
  %v229 = vpop.f32.mrb[0].mxu0
  %v230 = vadd.f32 %v84, %v229
  %v231 = vpop.f32.mrb[0].mxu0
  %v232 = vadd.f32 %v88, %v231
  %233 = vmatprep.mubr.bf16.mxu0 0
  %234 = vmatmul.mubr.bf16.gmra.mrb[0].mxu0 %v66
  %v235 = vpop.f32.mrb[0].mxu0
  %v236 = vadd.f32 %v84, %v235
  %v237 = vpop.f32.mrb[0].mxu0
  %v238 = vadd.f32 %v88, %v237
  %v239 = vpop.f32.mrb[0].mxu0
  %v240 = vadd.f32 %v84, %v239
  %v241 = vpop.f32.mrb[0].mxu0
  %v242 = vadd.f32 %v88, %v241
  %243 = vmatprep.mubr.bf16.mxu0 0
  %244 = vmatmul.mubr.bf16.gmra.mrb[0].mxu0 %v67
  %v245 = vpop.f32.mrb[0].mxu0
  %v246 = vadd.f32 %v84, %v245
  %v247 = vpop.f32.mrb[0].mxu0
  %v248 = vadd.f32 %v88, %v247
  %v249 = vpop.f32.mrb[0].mxu0
  %v250 = vadd.f32 %v84, %v249
  %v251 = vpop.f32.mrb[0].mxu0
  %v252 = vadd.f32 %v88, %v251
  %253 = vmatprep.mubr.bf16.mxu0 0
  %254 = vmatmul.mubr.bf16.gmra.mrb[0].mxu0 %v68
  %v255 = vpop.f32.mrb[0].mxu0
  %v256 = vadd.f32 %v84, %v255
  %v257 = vpop.f32.mrb[0].mxu0
  %v258 = vadd.f32 %v88, %v257
  %v259 = vpop.f32.mrb[0].mxu0
  %v260 = vadd.f32 %v84, %v259
  %v261 = vpop.f32.mrb[0].mxu0
  %v262 = vadd.f32 %v88, %v261
  %263 = vmatprep.mubr.bf16.mxu0 0
  %264 = vmatmul.mubr.bf16.gmra.mrb[0].mxu0 %v69
  %v265 = vpop.f32.mrb[0].mxu0
  %v266 = vadd.f32 %v84, %v265
  %v267 = vpop.f32.mrb[0].mxu0
  %v268 = vadd.f32 %v88, %v267
  %v269 = vpop.f32.mrb[0].mxu0
  %v270 = vadd.f32 %v84, %v269
  %v271 = vpop.f32.mrb[0].mxu0
  %v272 = vadd.f32 %v88, %v271
  %273 = vmatprep.mubr.bf16.mxu0 0
  %274 = vmatmul.mubr.bf16.gmra.mrb[0].mxu0 %v70
  %v275 = vpop.f32.mrb[0].mxu0
  %v276 = vadd.f32 %v84, %v275
  %v277 = vpop.f32.mrb[0].mxu0
  %v278 = vadd.f32 %v88, %v277
  %v279 = vpop.f32.mrb[0].mxu0
  %v280 = vadd.f32 %v84, %v279
  %v281 = vpop.f32.mrb[0].mxu0
  %v282 = vadd.f32 %v88, %v281
  %283 = vmatprep.mubr.bf16.mxu0 0
  %284 = vmatmul.mubr.bf16.gmra.mrb[0].mxu0 %v71
  %v285 = vpop.f32.mrb[0].mxu0
  %v286 = vadd.f32 %v84, %v285
  %v287 = vpop.f32.mrb[0].mxu0
  %v288 = vadd.f32 %v88, %v287
  %v289 = vpop.f32.mrb[0].mxu0
  %v290 = vadd.f32 %v84, %v289
  %v291 = vpop.f32.mrb[0].mxu0
  %v292 = vadd.f32 %v88, %v291
  %293 = vmatprep.mubr.bf16.mxu0 0
  %294 = vmatmul.mubr.bf16.gmra.mrb[0].mxu0 %v72
  %v295 = vpop.f32.mrb[0].mxu0
  %v296 = vadd.f32 %v84, %v295
  %v297 = vpop.f32.mrb[0].mxu0
  %v298 = vadd.f32 %v88, %v297
  %v299 = vpop.f32.mrb[0].mxu0
  %v300 = vadd.f32 %v84, %v299
  %v301 = vpop.f32.mrb[0].mxu0
  %v302 = vadd.f32 %v88, %v301
  %303 = vmatprep.mubr.bf16.mxu0 0
  %304 = vmatmul.mubr.bf16.gmra.mrb[0].mxu0 %v73
  %v305 = vpop.f32.mrb[0].mxu0
  %v306 = vadd.f32 %v84, %v305
  %v307 = vpop.f32.mrb[0].mxu0
  %v308 = vadd.f32 %v88, %v307
  %v309 = vpop.f32.mrb[0].mxu0
  %v310 = vadd.f32 %v84, %v309
  %v311 = vpop.f32.mrb[0].mxu0
  %v312 = vadd.f32 %v88, %v311
  %313 = vmatprep.mubr.bf16.mxu0 0
  %314 = vmatmul.mubr.bf16.gmra.mrb[0].mxu0 %v74
  %v315 = vpop.f32.mrb[0].mxu0
  %v316 = vadd.f32 %v84, %v315
  %v317 = vpop.f32.mrb[0].mxu0
  %v318 = vadd.f32 %v88, %v317
  %v319 = vpop.f32.mrb[0].mxu0
  %v320 = vadd.f32 %v84, %v319
  %v321 = vpop.f32.mrb[0].mxu0
  %v322 = vadd.f32 %v88, %v321
  %323 = vmatprep.mubr.bf16.mxu0 0
  %324 = vmatmul.mubr.bf16.gmra.mrb[0].mxu0 %v75
  %v325 = vpop.f32.mrb[0].mxu0
  %v326 = vadd.f32 %v84, %v325
  %v327 = vpop.f32.mrb[0].mxu0
  %v328 = vadd.f32 %v88, %v327
  %v329 = vpop.f32.mrb[0].mxu0
  %v330 = vadd.f32 %v84, %v329
  %v331 = vpop.f32.mrb[0].mxu0
  %v332 = vadd.f32 %v88, %v331
  %333 = vmatprep.mubr.bf16.mxu0 0
  %334 = vmatmul.mubr.bf16.gmra.mrb[0].mxu0 %v76
  %v335 = vpop.f32.mrb[0].mxu0
  %v336 = vadd.f32 %v84, %v335
  %v337 = vpop.f32.mrb[0].mxu0
  %v338 = vadd.f32 %v88, %v337
  %v339 = vpop.f32.mrb[0].mxu0
  %v340 = vadd.f32 %v84, %v339
  %v341 = vpop.f32.mrb[0].mxu0
  %v342 = vadd.f32 %v88, %v341
  %343 = vmatprep.mubr.bf16.mxu0 0
  %344 = vmatmul.mubr.bf16.gmra.mrb[0].mxu0 %v77
  %v345 = vpop.f32.mrb[0].mxu0
  %v346 = vadd.f32 %v84, %v345
  %v347 = vpop.f32.mrb[0].mxu0
  %v348 = vadd.f32 %v88, %v347
  %v349 = vpop.f32.mrb[0].mxu0
  %v350 = vadd.f32 %v84, %v349
  %v351 = vpop.f32.mrb[0].mxu0
  %v352 = vadd.f32 %v88, %v351
  %353 = vmatprep.mubr.bf16.mxu0 0
  %354 = vmatmul.mubr.bf16.gmra.mrb[0].mxu0 %v78
  %v355 = vpop.f32.mrb[0].mxu0
  %v356 = vadd.f32 %v84, %v355
  %v357 = vpop.f32.mrb[0].mxu0
  %v358 = vadd.f32 %v88, %v357
  %v359 = vpop.f32.mrb[0].mxu0
  %v360 = vadd.f32 %v84, %v359
  %v361 = vpop.f32.mrb[0].mxu0
  %v362 = vadd.f32 %v88, %v361
  %363 = vdwg.mxu0
  %v364 = vmax.f32 %v206, 0.0
  %v365 = vmax.f32 %v208, 0.0
  %v366 = vmax.f32 %v210, 0.0
  %v367 = vmax.f32 %v212, 0.0
  %v368 = vmax.f32 %v216, 0.0
  %v369 = vmax.f32 %v218, 0.0
  %v370 = vmax.f32 %v220, 0.0
  %v371 = vmax.f32 %v222, 0.0
  %v372 = vmax.f32 %v226, 0.0
  %v373 = vmax.f32 %v228, 0.0
  %v374 = vmax.f32 %v230, 0.0
  %v375 = vmax.f32 %v232, 0.0
  %v376 = vmax.f32 %v236, 0.0
  %v377 = vmax.f32 %v238, 0.0
  %v378 = vmax.f32 %v240, 0.0
  %v379 = vmax.f32 %v242, 0.0
  %v380 = vmax.f32 %v246, 0.0
  %v381 = vmax.f32 %v248, 0.0
  %v382 = vmax.f32 %v250, 0.0
  %v383 = vmax.f32 %v252, 0.0
  %v384 = vmax.f32 %v256, 0.0
  %v385 = vmax.f32 %v258, 0.0
  %v386 = vmax.f32 %v260, 0.0
  %v387 = vmax.f32 %v262, 0.0
  %v388 = vmax.f32 %v266, 0.0
  %v389 = vmax.f32 %v268, 0.0
  %v390 = vmax.f32 %v270, 0.0
  %v391 = vmax.f32 %v272, 0.0
  %v392 = vmax.f32 %v276, 0.0
  %v393 = vmax.f32 %v278, 0.0
  %v394 = vmax.f32 %v280, 0.0
  %v395 = vmax.f32 %v282, 0.0
  %v396 = vmax.f32 %v286, 0.0
  %v397 = vmax.f32 %v288, 0.0
  %v398 = vmax.f32 %v290, 0.0
  %v399 = vmax.f32 %v292, 0.0
  %v400 = vmax.f32 %v296, 0.0
  %v401 = vmax.f32 %v298, 0.0
  %v402 = vmax.f32 %v300, 0.0
  %v403 = vmax.f32 %v302, 0.0
  %v404 = vmax.f32 %v306, 0.0
  %v405 = vmax.f32 %v308, 0.0
  %v406 = vmax.f32 %v310, 0.0
  %v407 = vmax.f32 %v312, 0.0
  %v408 = vmax.f32 %v316, 0.0
  %v409 = vmax.f32 %v318, 0.0
  %v410 = vmax.f32 %v320, 0.0
  %v411 = vmax.f32 %v322, 0.0
  %v412 = vmax.f32 %v326, 0.0
  %v413 = vmax.f32 %v328, 0.0
  %v414 = vmax.f32 %v330, 0.0
  %v415 = vmax.f32 %v332, 0.0
  %v416 = vmax.f32 %v336, 0.0
  %v417 = vmax.f32 %v338, 0.0
  %v418 = vmax.f32 %v340, 0.0
  %v419 = vmax.f32 %v342, 0.0
  %v420 = vmax.f32 %v346, 0.0
  %v421 = vmax.f32 %v348, 0.0
  %v422 = vmax.f32 %v350, 0.0
  %v423 = vmax.f32 %v352, 0.0
  %v424 = vmax.f32 %v356, 0.0
  %v425 = vmax.f32 %v358, 0.0
  %v426 = vmax.f32 %v360, 0.0
  %v427 = vmax.f32 %v362, 0.0
  %v428 = vpack.c.bf16 %v366, %v364
  %v429 = vpack.c.bf16 %v367, %v365
  %v430 = vpack.c.bf16 %v370, %v368
  %v431 = vpack.c.bf16 %v371, %v369
  %v432 = vpack.c.bf16 %v374, %v372
  %v433 = vpack.c.bf16 %v375, %v373
  %v434 = vpack.c.bf16 %v378, %v376
  %v435 = vpack.c.bf16 %v379, %v377
  %v436 = vpack.c.bf16 %v382, %v380
  %v437 = vpack.c.bf16 %v383, %v381
  %v438 = vpack.c.bf16 %v386, %v384
  %v439 = vpack.c.bf16 %v387, %v385
  %v440 = vpack.c.bf16 %v390, %v388
  %v441 = vpack.c.bf16 %v391, %v389
  %v442 = vpack.c.bf16 %v394, %v392
  %v443 = vpack.c.bf16 %v395, %v393
  %v444 = vpack.c.bf16 %v398, %v396
  %v445 = vpack.c.bf16 %v399, %v397
  %v446 = vpack.c.bf16 %v402, %v400
  %v447 = vpack.c.bf16 %v403, %v401
  %v448 = vpack.c.bf16 %v406, %v404
  %v449 = vpack.c.bf16 %v407, %v405
  %v450 = vpack.c.bf16 %v410, %v408
  %v451 = vpack.c.bf16 %v411, %v409
  %v452 = vpack.c.bf16 %v414, %v412
  %v453 = vpack.c.bf16 %v415, %v413
  %v454 = vpack.c.bf16 %v418, %v416
  %v455 = vpack.c.bf16 %v419, %v417
  %v456 = vpack.c.bf16 %v422, %v420
  %v457 = vpack.c.bf16 %v423, %v421
  %v458 = vpack.c.bf16 %v426, %v424
  %v459 = vpack.c.bf16 %v427, %v425
  %v492 = vunpack.c.l.b16 %v428
  %v493 = vunpack.c.l.b16 %v429
  %v494 = vunpack.c.h.b16 %v428
  %v495 = vunpack.c.h.b16 %v429
  %v496 = vunpack.c.l.b16 %v430
  %v497 = vunpack.c.l.b16 %v431
  %v498 = vunpack.c.h.b16 %v430
  %v499 = vunpack.c.h.b16 %v431
  %v500 = vunpack.c.l.b16 %v432
  %v501 = vunpack.c.l.b16 %v433
  %v502 = vunpack.c.h.b16 %v432
  %v503 = vunpack.c.h.b16 %v433
  %v504 = vunpack.c.l.b16 %v434
  %v505 = vunpack.c.l.b16 %v435
  %v506 = vunpack.c.h.b16 %v434
  %v507 = vunpack.c.h.b16 %v435
  %v508 = vunpack.c.l.b16 %v436
  %v509 = vunpack.c.l.b16 %v437
  %v510 = vunpack.c.h.b16 %v436
  %v511 = vunpack.c.h.b16 %v437
  %v512 = vunpack.c.l.b16 %v438
  %v513 = vunpack.c.l.b16 %v439
  %v514 = vunpack.c.h.b16 %v438
  %v515 = vunpack.c.h.b16 %v439
  %v516 = vunpack.c.l.b16 %v440
  %v517 = vunpack.c.l.b16 %v441
  %v518 = vunpack.c.h.b16 %v440
  %v519 = vunpack.c.h.b16 %v441
  %v520 = vunpack.c.l.b16 %v442
  %v521 = vunpack.c.l.b16 %v443
  %v522 = vunpack.c.h.b16 %v442
  %v523 = vunpack.c.h.b16 %v443
  %v524 = vunpack.c.l.b16 %v444
  %v525 = vunpack.c.l.b16 %v445
  %v526 = vunpack.c.h.b16 %v444
  %v527 = vunpack.c.h.b16 %v445
  %v528 = vunpack.c.l.b16 %v446
  %v529 = vunpack.c.l.b16 %v447
  %v530 = vunpack.c.h.b16 %v446
  %v531 = vunpack.c.h.b16 %v447
  %v532 = vunpack.c.l.b16 %v448
  %v533 = vunpack.c.l.b16 %v449
  %v534 = vunpack.c.h.b16 %v448
  %v535 = vunpack.c.h.b16 %v449
  %v536 = vunpack.c.l.b16 %v450
  %v537 = vunpack.c.l.b16 %v451
  %v538 = vunpack.c.h.b16 %v450
  %v539 = vunpack.c.h.b16 %v451
  %v540 = vunpack.c.l.b16 %v452
  %v541 = vunpack.c.l.b16 %v453
  %v542 = vunpack.c.h.b16 %v452
  %v543 = vunpack.c.h.b16 %v453
  %v544 = vunpack.c.l.b16 %v454
  %v545 = vunpack.c.l.b16 %v455
  %v546 = vunpack.c.h.b16 %v454
  %v547 = vunpack.c.h.b16 %v455
  %v548 = vunpack.c.l.b16 %v456
  %v549 = vunpack.c.l.b16 %v457
  %v550 = vunpack.c.h.b16 %v456
  %v551 = vunpack.c.h.b16 %v457
  %v552 = vunpack.c.l.b16 %v458
  %v553 = vunpack.c.l.b16 %v459
  %v554 = vunpack.c.h.b16 %v458
  %v555 = vunpack.c.h.b16 %v459
  %v556 = vpack.c.b16 %v493, %v492
  %v557 = vpack.c.b16 %v495, %v494
  %v558 = vpack.c.b16 %v497, %v496
  %v559 = vpack.c.b16 %v499, %v498
  %v560 = vpack.c.b16 %v501, %v500
  %v561 = vpack.c.b16 %v503, %v502
  %v562 = vpack.c.b16 %v505, %v504
  %v563 = vpack.c.b16 %v507, %v506
  %v564 = vpack.c.b16 %v509, %v508
  %v565 = vpack.c.b16 %v511, %v510
  %v566 = vpack.c.b16 %v513, %v512
  %v567 = vpack.c.b16 %v515, %v514
  %v568 = vpack.c.b16 %v517, %v516
  %v569 = vpack.c.b16 %v519, %v518
  %v570 = vpack.c.b16 %v521, %v520
  %v571 = vpack.c.b16 %v523, %v522
  %v572 = vpack.c.b16 %v525, %v524
  %v573 = vpack.c.b16 %v527, %v526
  %v574 = vpack.c.b16 %v529, %v528
  %v575 = vpack.c.b16 %v531, %v530
  %v576 = vpack.c.b16 %v533, %v532
  %v577 = vpack.c.b16 %v535, %v534
  %v578 = vpack.c.b16 %v537, %v536
  %v579 = vpack.c.b16 %v539, %v538
  %v580 = vpack.c.b16 %v541, %v540
  %v581 = vpack.c.b16 %v543, %v542
  %v582 = vpack.c.b16 %v545, %v544
  %v583 = vpack.c.b16 %v547, %v546
  %v584 = vpack.c.b16 %v549, %v548
  %v585 = vpack.c.b16 %v551, %v550
  %v586 = vpack.c.b16 %v553, %v552
  %v587 = vpack.c.b16 %v555, %v554
  %620 = vst [vmem:[%s3] sm:$0xff] %v556
  %621 = vst [vmem:[%s3 + $0x8] sm:$0xff] %v557
  %622 = vst [vmem:[%s3 + $0x10] sm:$0xff] %v558
  %623 = vst [vmem:[%s3 + $0x18] sm:$0xff] %v559
  %624 = vst [vmem:[%s3 + $0x20] sm:$0xff] %v560
  %625 = vst [vmem:[%s3 + $0x28] sm:$0xff] %v561
  %626 = vst [vmem:[%s3 + $0x30] sm:$0xff] %v562
  %627 = vst [vmem:[%s3 + $0x38] sm:$0xff] %v563
  %628 = vst [vmem:[%s3 + $0x40] sm:$0xff] %v564
  %629 = vst [vmem:[%s3 + $0x48] sm:$0xff] %v565
  %630 = vst [vmem:[%s3 + $0x50] sm:$0xff] %v566
  %631 = vst [vmem:[%s3 + $0x58] sm:$0xff] %v567
  %632 = vst [vmem:[%s3 + $0x60] sm:$0xff] %v568
  %633 = vst [vmem:[%s3 + $0x68] sm:$0xff] %v569
  %634 = vst [vmem:[%s3 + $0x70] sm:$0xff] %v570
  %635 = vst [vmem:[%s3 + $0x78] sm:$0xff] %v571
  %636 = vst [vmem:[%s3 + $0x80] sm:$0xff] %v572
  %637 = vst [vmem:[%s3 + $0x88] sm:$0xff] %v573
  %638 = vst [vmem:[%s3 + $0x90] sm:$0xff] %v574
  %639 = vst [vmem:[%s3 + $0x98] sm:$0xff] %v575
  %640 = vst [vmem:[%s3 + $0xa0] sm:$0xff] %v576
  %641 = vst [vmem:[%s3 + $0xa8] sm:$0xff] %v577
  %642 = vst [vmem:[%s3 + $0xb0] sm:$0xff] %v578
  %643 = vst [vmem:[%s3 + $0xb8] sm:$0xff] %v579
  %644 = vst [vmem:[%s3 + $0xc0] sm:$0xff] %v580
  %645 = vst [vmem:[%s3 + $0xc8] sm:$0xff] %v581
  %646 = vst [vmem:[%s3 + $0xd0] sm:$0xff] %v582
  %647 = vst [vmem:[%s3 + $0xd8] sm:$0xff] %v583
  %648 = vst [vmem:[%s3 + $0xe0] sm:$0xff] %v584
  %649 = vst [vmem:[%s3 + $0xe8] sm:$0xff] %v585
  %650 = vst [vmem:[%s3 + $0xf0] sm:$0xff] %v586
  %651 = vst [vmem:[%s3 + $0xf8] sm:$0xff] %v587
  // Predicated region
  $region14: #{relative_transformer.15} parent=0 // pred_check
    _
  $region15: #{relative_transformer.15} parent=0 // pred_check_branch
    %653 = sbr.rel (0) target = $region17
  $region16: #{relative_transformer.15} parent=0 // pred_region
    _
  $region17: #{relative_transformer.15} parent=0 // pred_fallthru
    _
  // Predicated region
  $region18: #{relative_transformer.15} parent=0 // pred_check
    _
  $region19: #{relative_transformer.15} parent=0 // pred_check_branch
    %655 = sbr.rel (0) target = $region21
  $region20: #{relative_transformer.15} parent=0 // pred_region
    _
  $region21: #{relative_transformer.15} parent=0 // pred_fallthru
    _

// kernel: relative_transformer.16
$region0: #{relative_transformer.16}
  #allocation0 [shape = 'u32[]', space=smem, size = 0x4, offset = 0x4, fixed_abs, tag = 'smem constant byte address 0x4 - core index']
  #allocation1 [shape = 'u32[144,128]{1,0:T(1,128)}', space=vmem, size = 0x12000, scoped, tag = 'internal scratch']
  %s0 = inlined_call_operand.vmem [shape: bf16[256,256], index: 0, kind: input, shape index: {}]
  %s1 = inlined_call_operand.vmem [shape: bf16[256,128], index: 1, kind: input, shape index: {}]
  %s2 = inlined_call_operand.vmem [shape: f32[1,128], index: 2, kind: input, shape index: {}]
  %s3 = inlined_call_operand.vmem [shape: f32[256,128], index: 3, kind: input, shape index: {}]
  %s4 = inlined_call_operand.vmem [shape: f32[1,128], index: 4, kind: input, shape index: {}]
  %s5 = inlined_call_operand.vmem [shape: f32[1,128], index: 5, kind: input, shape index: {}]
  %s6 = inlined_call_operand.vmem [shape: f32[256,128], index: 6, kind: output, shape index: {}]
  %s7 = sld [smem:[#allocation0]]
  $region34: #{relative_transformer.16} parent=0
    _
  %s9 = ssub.s32 1, %s7
  %s10 = scalar_select 0, %s9, %s7
  // Predicated region
  $region2: #{relative_transformer.16} parent=0 // pred_check
    _
  $region3: #{relative_transformer.16} parent=0 // pred_check_branch
    %12 = sbr.rel (0) target = $region5
  $region4: #{relative_transformer.16} parent=0 // pred_region
    _
  $region5: #{relative_transformer.16} parent=0 // pred_fallthru
    _
  // Predicated region
  $region6: #{relative_transformer.16} parent=0 // pred_check
    _
  $region7: #{relative_transformer.16} parent=0 // pred_check_branch
    %14 = sbr.rel (0) target = $region9
  $region8: #{relative_transformer.16} parent=0 // pred_region
    _
  $region9: #{relative_transformer.16} parent=0 // pred_fallthru
    _
  // Predicated region
  $region10: #{relative_transformer.16} parent=0 // pred_check
    _
  $region11: #{relative_transformer.16} parent=0 // pred_check_branch
    %16 = sbr.rel (0) target = $region13
  $region12: #{relative_transformer.16} parent=0 // pred_region
    _
  $region13: #{relative_transformer.16} parent=0 // pred_fallthru
    _
  // Predicated region
  $region14: #{relative_transformer.16} parent=0 // pred_check
    _
  $region15: #{relative_transformer.16} parent=0 // pred_check_branch
    %18 = sbr.rel (0) target = $region17
  $region16: #{relative_transformer.16} parent=0 // pred_region
    _
  $region17: #{relative_transformer.16} parent=0 // pred_fallthru
    _
  // Predicated region
  $region18: #{relative_transformer.16} parent=0 // pred_check
    _
  $region19: #{relative_transformer.16} parent=0 // pred_check_branch
    %20 = sbr.rel (0) target = $region21
  $region20: #{relative_transformer.16} parent=0 // pred_region
    _
  $region21: #{relative_transformer.16} parent=0 // pred_fallthru
    _
  // Predicated region
  $region22: #{relative_transformer.16} parent=0 // pred_check
    _
  $region23: #{relative_transformer.16} parent=0 // pred_check_branch
    %22 = sbr.rel (0) target = $region25
  $region24: #{relative_transformer.16} parent=0 // pred_region
    _
  $region25: #{relative_transformer.16} parent=0 // pred_fallthru
    _
  %v24 = vld [vmem:[%s0] sm:$0xff]
  %v25 = vld [vmem:[%s0 + $0x8] sm:$0xff]
  %v26 = vld [vmem:[%s0 + $0x10] sm:$0xff]
  %v27 = vld [vmem:[%s0 + $0x18] sm:$0xff]
  %v28 = vld [vmem:[%s0 + $0x20] sm:$0xff]
  %v29 = vld [vmem:[%s0 + $0x28] sm:$0xff]
  %v30 = vld [vmem:[%s0 + $0x30] sm:$0xff]
  %v31 = vld [vmem:[%s0 + $0x38] sm:$0xff]
  %v32 = vld [vmem:[%s0 + $0x40] sm:$0xff]
  %v33 = vld [vmem:[%s0 + $0x48] sm:$0xff]
  %v34 = vld [vmem:[%s0 + $0x50] sm:$0xff]
  %v35 = vld [vmem:[%s0 + $0x58] sm:$0xff]
  %v36 = vld [vmem:[%s0 + $0x60] sm:$0xff]
  %v37 = vld [vmem:[%s0 + $0x68] sm:$0xff]
  %v38 = vld [vmem:[%s0 + $0x70] sm:$0xff]
  %v39 = vld [vmem:[%s0 + $0x78] sm:$0xff]
  %v40 = vld [vmem:[%s0 + $0x80] sm:$0xff]
  %v41 = vld [vmem:[%s0 + $0x88] sm:$0xff]
  %v42 = vld [vmem:[%s0 + $0x90] sm:$0xff]
  %v43 = vld [vmem:[%s0 + $0x98] sm:$0xff]
  %v44 = vld [vmem:[%s0 + $0xa0] sm:$0xff]
  %v45 = vld [vmem:[%s0 + $0xa8] sm:$0xff]
  %v46 = vld [vmem:[%s0 + $0xb0] sm:$0xff]
  %v47 = vld [vmem:[%s0 + $0xb8] sm:$0xff]
  %v48 = vld [vmem:[%s0 + $0xc0] sm:$0xff]
  %v49 = vld [vmem:[%s0 + $0xc8] sm:$0xff]
  %v50 = vld [vmem:[%s0 + $0xd0] sm:$0xff]
  %v51 = vld [vmem:[%s0 + $0xd8] sm:$0xff]
  %v52 = vld [vmem:[%s0 + $0xe0] sm:$0xff]
  %v53 = vld [vmem:[%s0 + $0xe8] sm:$0xff]
  %v54 = vld [vmem:[%s0 + $0xf0] sm:$0xff]
  %v55 = vld [vmem:[%s0 + $0xf8] sm:$0xff]
  %v56 = vld [vmem:[%s1] sm:$0xf]
  %v57 = vld [vmem:[%s1 + $0x4] sm:$0xf]
  %v58 = vld [vmem:[%s1 + $0x8] sm:$0xf]
  %v59 = vld [vmem:[%s1 + $0xc] sm:$0xf]
  %v60 = vld [vmem:[%s1 + $0x10] sm:$0xf]
  %v61 = vld [vmem:[%s1 + $0x14] sm:$0xf]
  %v62 = vld [vmem:[%s1 + $0x18] sm:$0xf]
  %v63 = vld [vmem:[%s1 + $0x1c] sm:$0xf]
  %v64 = vld [vmem:[%s1 + $0x20] sm:$0xf]
  %v65 = vld [vmem:[%s1 + $0x24] sm:$0xf]
  %v66 = vld [vmem:[%s1 + $0x28] sm:$0xf]
  %v67 = vld [vmem:[%s1 + $0x2c] sm:$0xf]
  %v68 = vld [vmem:[%s1 + $0x30] sm:$0xf]
  %v69 = vld [vmem:[%s1 + $0x34] sm:$0xf]
  %v70 = vld [vmem:[%s1 + $0x38] sm:$0xf]
  %v71 = vld [vmem:[%s1 + $0x3c] sm:$0xf]
  %v72 = vld [vmem:[%s1 + $0x40] sm:$0xf]
  %v73 = vld [vmem:[%s1 + $0x44] sm:$0xf]
  %v74 = vld [vmem:[%s1 + $0x48] sm:$0xf]
  %v75 = vld [vmem:[%s1 + $0x4c] sm:$0xf]
  %v76 = vld [vmem:[%s1 + $0x50] sm:$0xf]
  %v77 = vld [vmem:[%s1 + $0x54] sm:$0xf]
  %v78 = vld [vmem:[%s1 + $0x58] sm:$0xf]
  %v79 = vld [vmem:[%s1 + $0x5c] sm:$0xf]
  %v80 = vld [vmem:[%s1 + $0x60] sm:$0xf]
  %v81 = vld [vmem:[%s1 + $0x64] sm:$0xf]
  %v82 = vld [vmem:[%s1 + $0x68] sm:$0xf]
  %v83 = vld [vmem:[%s1 + $0x6c] sm:$0xf]
  %v84 = vld [vmem:[%s1 + $0x70] sm:$0xf]
  %v85 = vld [vmem:[%s1 + $0x74] sm:$0xf]
  %v86 = vld [vmem:[%s1 + $0x78] sm:$0xf]
  %v87 = vld [vmem:[%s1 + $0x7c] sm:$0xf]
  %v88 = vld [vmem:[%s2] sm:$0x1]
  %v90 = vlaneseq
  %v91 = vshrl.u32 %v90, 7
  %v92 = vsub.s32 0, %v91
  %v93 = vrot.slane %v88, %v92
  %v127 = vunpack.c.l.b16 %v24
  %v128 = vunpack.c.h.b16 %v24
  %v129 = vunpack.c.l.b16 %v25
  %v130 = vunpack.c.h.b16 %v25
  %v131 = vunpack.c.l.b16 %v26
  %v132 = vunpack.c.h.b16 %v26
  %v133 = vunpack.c.l.b16 %v27
  %v134 = vunpack.c.h.b16 %v27
  %v135 = vunpack.c.l.b16 %v28
  %v136 = vunpack.c.h.b16 %v28
  %v137 = vunpack.c.l.b16 %v29
  %v138 = vunpack.c.h.b16 %v29
  %v139 = vunpack.c.l.b16 %v30
  %v140 = vunpack.c.h.b16 %v30
  %v141 = vunpack.c.l.b16 %v31
  %v142 = vunpack.c.h.b16 %v31
  %v143 = vunpack.c.l.b16 %v32
  %v144 = vunpack.c.h.b16 %v32
  %v145 = vunpack.c.l.b16 %v33
  %v146 = vunpack.c.h.b16 %v33
  %v147 = vunpack.c.l.b16 %v34
  %v148 = vunpack.c.h.b16 %v34
  %v149 = vunpack.c.l.b16 %v35
  %v150 = vunpack.c.h.b16 %v35
  %v151 = vunpack.c.l.b16 %v36
  %v152 = vunpack.c.h.b16 %v36
  %v153 = vunpack.c.l.b16 %v37
  %v154 = vunpack.c.h.b16 %v37
  %v155 = vunpack.c.l.b16 %v38
  %v156 = vunpack.c.h.b16 %v38
  %v157 = vunpack.c.l.b16 %v39
  %v158 = vunpack.c.h.b16 %v39
  %v159 = vunpack.c.l.b16 %v40
  %v160 = vunpack.c.h.b16 %v40
  %v161 = vunpack.c.l.b16 %v41
  %v162 = vunpack.c.h.b16 %v41
  %v163 = vunpack.c.l.b16 %v42
  %v164 = vunpack.c.h.b16 %v42
  %v165 = vunpack.c.l.b16 %v43
  %v166 = vunpack.c.h.b16 %v43
  %v167 = vunpack.c.l.b16 %v44
  %v168 = vunpack.c.h.b16 %v44
  %v169 = vunpack.c.l.b16 %v45
  %v170 = vunpack.c.h.b16 %v45
  %v171 = vunpack.c.l.b16 %v46
  %v172 = vunpack.c.h.b16 %v46
  %v173 = vunpack.c.l.b16 %v47
  %v174 = vunpack.c.h.b16 %v47
  %v175 = vunpack.c.l.b16 %v48
  %v176 = vunpack.c.h.b16 %v48
  %v177 = vunpack.c.l.b16 %v49
  %v178 = vunpack.c.h.b16 %v49
  %v179 = vunpack.c.l.b16 %v50
  %v180 = vunpack.c.h.b16 %v50
  %v181 = vunpack.c.l.b16 %v51
  %v182 = vunpack.c.h.b16 %v51
  %v183 = vunpack.c.l.b16 %v52
  %v184 = vunpack.c.h.b16 %v52
  %v185 = vunpack.c.l.b16 %v53
  %v186 = vunpack.c.h.b16 %v53
  %v187 = vunpack.c.l.b16 %v54
  %v188 = vunpack.c.h.b16 %v54
  %v189 = vunpack.c.l.b16 %v55
  %v190 = vunpack.c.h.b16 %v55
  %v191 = vpack.c.b16 %v129, %v127
  %v192 = vpack.c.b16 %v130, %v128
  %v193 = vpack.c.b16 %v133, %v131
  %v194 = vpack.c.b16 %v134, %v132
  %v195 = vpack.c.b16 %v137, %v135
  %v196 = vpack.c.b16 %v138, %v136
  %v197 = vpack.c.b16 %v141, %v139
  %v198 = vpack.c.b16 %v142, %v140
  %v199 = vpack.c.b16 %v145, %v143
  %v200 = vpack.c.b16 %v146, %v144
  %v201 = vpack.c.b16 %v149, %v147
  %v202 = vpack.c.b16 %v150, %v148
  %v203 = vpack.c.b16 %v153, %v151
  %v204 = vpack.c.b16 %v154, %v152
  %v205 = vpack.c.b16 %v157, %v155
  %v206 = vpack.c.b16 %v158, %v156
  %v207 = vpack.c.b16 %v161, %v159
  %v208 = vpack.c.b16 %v162, %v160
  %v209 = vpack.c.b16 %v165, %v163
  %v210 = vpack.c.b16 %v166, %v164
  %v211 = vpack.c.b16 %v169, %v167
  %v212 = vpack.c.b16 %v170, %v168
  %v213 = vpack.c.b16 %v173, %v171
  %v214 = vpack.c.b16 %v174, %v172
  %v215 = vpack.c.b16 %v177, %v175
  %v216 = vpack.c.b16 %v178, %v176
  %v217 = vpack.c.b16 %v181, %v179
  %v218 = vpack.c.b16 %v182, %v180
  %v219 = vpack.c.b16 %v185, %v183
  %v220 = vpack.c.b16 %v186, %v184
  %v221 = vpack.c.b16 %v189, %v187
  %v222 = vpack.c.b16 %v190, %v188
  %v287 = vunpack.c.l.b16 %v56
  %v288 = vunpack.c.l.b16 %v57
  %v289 = vunpack.c.l.b16 %v58
  %v290 = vunpack.c.l.b16 %v59
  %v291 = vunpack.c.l.b16 %v60
  %v292 = vunpack.c.l.b16 %v61
  %v293 = vunpack.c.l.b16 %v62
  %v294 = vunpack.c.l.b16 %v63
  %v295 = vunpack.c.l.b16 %v64
  %v296 = vunpack.c.l.b16 %v65
  %v297 = vunpack.c.l.b16 %v66
  %v298 = vunpack.c.l.b16 %v67
  %v299 = vunpack.c.l.b16 %v68
  %v300 = vunpack.c.l.b16 %v69
  %v301 = vunpack.c.l.b16 %v70
  %v302 = vunpack.c.l.b16 %v71
  %v303 = vunpack.c.l.b16 %v72
  %v304 = vunpack.c.l.b16 %v73
  %v305 = vunpack.c.l.b16 %v74
  %v306 = vunpack.c.l.b16 %v75
  %v307 = vunpack.c.l.b16 %v76
  %v308 = vunpack.c.l.b16 %v77
  %v309 = vunpack.c.l.b16 %v78
  %v310 = vunpack.c.l.b16 %v79
  %v311 = vunpack.c.l.b16 %v80
  %v312 = vunpack.c.l.b16 %v81
  %v313 = vunpack.c.l.b16 %v82
  %v314 = vunpack.c.l.b16 %v83
  %v315 = vunpack.c.l.b16 %v84
  %v316 = vunpack.c.l.b16 %v85
  %v317 = vunpack.c.l.b16 %v86
  %v318 = vunpack.c.l.b16 %v87
  %v319 = vpack.c.b16 %v288, %v287
  %v320 = vpack.c.b16 %v290, %v289
  %v321 = vpack.c.b16 %v292, %v291
  %v322 = vpack.c.b16 %v294, %v293
  %v323 = vpack.c.b16 %v296, %v295
  %v324 = vpack.c.b16 %v298, %v297
  %v325 = vpack.c.b16 %v300, %v299
  %v326 = vpack.c.b16 %v302, %v301
  %v327 = vpack.c.b16 %v304, %v303
  %v328 = vpack.c.b16 %v306, %v305
  %v329 = vpack.c.b16 %v308, %v307
  %v330 = vpack.c.b16 %v310, %v309
  %v331 = vpack.c.b16 %v312, %v311
  %v332 = vpack.c.b16 %v314, %v313
  %v333 = vpack.c.b16 %v316, %v315
  %v334 = vpack.c.b16 %v318, %v317
  %351 = vmatprep.subr.bf16.mxu0 0
  %352 = vmatpush1.bf16.msra.mxu0 %v319
  %353 = vmatprep.subr.bf16.mxu0 0
  %354 = vmatpush1.bf16.msra.mxu0 %v320
  %355 = vmatprep.subr.bf16.mxu0 0
  %356 = vmatpush1.bf16.msra.mxu0 %v321
  %357 = vmatprep.subr.bf16.mxu0 0
  %358 = vmatpush1.bf16.msra.mxu0 %v322
  %359 = vmatprep.subr.bf16.mxu0 0
  %360 = vmatpush1.bf16.msra.mxu0 %v323
  %361 = vmatprep.subr.bf16.mxu0 0
  %362 = vmatpush1.bf16.msra.mxu0 %v324
  %363 = vmatprep.subr.bf16.mxu0 0
  %364 = vmatpush1.bf16.msra.mxu0 %v325
  %365 = vmatprep.subr.bf16.mxu0 0
  %366 = vmatpush1.bf16.msra.mxu0 %v326
  %367 = vmatprep.subr.bf16.mxu0 0
  %368 = vmatpush1.bf16.msra.mxu0 %v327
  %369 = vmatprep.subr.bf16.mxu0 0
  %370 = vmatpush1.bf16.msra.mxu0 %v328
  %371 = vmatprep.subr.bf16.mxu0 0
  %372 = vmatpush1.bf16.msra.mxu0 %v329
  %373 = vmatprep.subr.bf16.mxu0 0
  %374 = vmatpush1.bf16.msra.mxu0 %v330
  %375 = vmatprep.subr.bf16.mxu0 0
  %376 = vmatpush1.bf16.msra.mxu0 %v331
  %377 = vmatprep.subr.bf16.mxu0 0
  %378 = vmatpush1.bf16.msra.mxu0 %v332
  %379 = vmatprep.subr.bf16.mxu0 0
  %380 = vmatpush1.bf16.msra.mxu0 %v333
  %381 = vmatprep.subr.bf16.mxu0 0
  %382 = vmatpush1.bf16.msra.mxu0 %v334
  %383 = vmatprep.mubr.bf16.mxu0 %v192
  %384 = vmatmul.mubr.bf16.gmra.mrb[0].mxu0 %v191
  %v385 = vpop.f32.mrb[0].mxu0
  %v386 = vadd.f32 %v93, %v385
  %v387 = vpop.f32.mrb[0].mxu0
  %v388 = vpop.f32.mrb[0].mxu0
  %v389 = vadd.f32 %v93, %v388
  %v390 = vpop.f32.mrb[0].mxu0
  %391 = vmatprep.mubr.bf16.mxu0 %v194
  %392 = vmatmul.mubr.bf16.gmra.mrb[0].mxu0 %v193
  %v393 = vpop.f32.mrb[0].mxu0
  %v394 = vadd.f32 %v93, %v393
  %v395 = vpop.f32.mrb[0].mxu0
  %v396 = vpop.f32.mrb[0].mxu0
  %v397 = vadd.f32 %v93, %v396
  %v398 = vpop.f32.mrb[0].mxu0
  %399 = vmatprep.mubr.bf16.mxu0 %v196
  %400 = vmatmul.mubr.bf16.gmra.mrb[0].mxu0 %v195
  %v401 = vpop.f32.mrb[0].mxu0
  %v402 = vadd.f32 %v93, %v401
  %v403 = vpop.f32.mrb[0].mxu0
  %v404 = vpop.f32.mrb[0].mxu0
  %v405 = vadd.f32 %v93, %v404
  %v406 = vpop.f32.mrb[0].mxu0
  %407 = vmatprep.mubr.bf16.mxu0 %v198
  %408 = vmatmul.mubr.bf16.gmra.mrb[0].mxu0 %v197
  %v409 = vpop.f32.mrb[0].mxu0
  %v410 = vadd.f32 %v93, %v409
  %v411 = vpop.f32.mrb[0].mxu0
  %v412 = vpop.f32.mrb[0].mxu0
  %v413 = vadd.f32 %v93, %v412
  %v414 = vpop.f32.mrb[0].mxu0
  %415 = vmatprep.mubr.bf16.mxu0 %v200
  %416 = vmatmul.mubr.bf16.gmra.mrb[0].mxu0 %v199
  %v417 = vpop.f32.mrb[0].mxu0
  %v418 = vadd.f32 %v93, %v417
  %v419 = vpop.f32.mrb[0].mxu0
  %v420 = vpop.f32.mrb[0].mxu0
  %v421 = vadd.f32 %v93, %v420
  %v422 = vpop.f32.mrb[0].mxu0
  %423 = vmatprep.mubr.bf16.mxu0 %v202
  %424 = vmatmul.mubr.bf16.gmra.mrb[0].mxu0 %v201
  %v425 = vpop.f32.mrb[0].mxu0
  %v426 = vadd.f32 %v93, %v425
  %v427 = vpop.f32.mrb[0].mxu0
  %v428 = vpop.f32.mrb[0].mxu0
  %v429 = vadd.f32 %v93, %v428
  %v430 = vpop.f32.mrb[0].mxu0
  %431 = vmatprep.mubr.bf16.mxu0 %v204
  %432 = vmatmul.mubr.bf16.gmra.mrb[0].mxu0 %v203
  %v433 = vpop.f32.mrb[0].mxu0
  %v434 = vadd.f32 %v93, %v433
  %v435 = vpop.f32.mrb[0].mxu0
  %v436 = vpop.f32.mrb[0].mxu0
  %v437 = vadd.f32 %v93, %v436
  %v438 = vpop.f32.mrb[0].mxu0
  %439 = vmatprep.mubr.bf16.mxu0 %v206
  %440 = vmatmul.mubr.bf16.gmra.mrb[0].mxu0 %v205
  %v441 = vpop.f32.mrb[0].mxu0
  %v442 = vadd.f32 %v93, %v441
  %v443 = vpop.f32.mrb[0].mxu0
  %v444 = vpop.f32.mrb[0].mxu0
  %v445 = vadd.f32 %v93, %v444
  %v446 = vpop.f32.mrb[0].mxu0
  %447 = vmatprep.mubr.bf16.mxu0 %v208
  %448 = vmatmul.mubr.bf16.gmra.mrb[0].mxu0 %v207
  %v449 = vpop.f32.mrb[0].mxu0
  %v450 = vadd.f32 %v93, %v449
  %v451 = vpop.f32.mrb[0].mxu0
  %v452 = vpop.f32.mrb[0].mxu0
  %v453 = vadd.f32 %v93, %v452
  %v454 = vpop.f32.mrb[0].mxu0
  %455 = vmatprep.mubr.bf16.mxu0 %v210
  %456 = vmatmul.mubr.bf16.gmra.mrb[0].mxu0 %v209
  %v457 = vpop.f32.mrb[0].mxu0
  %v458 = vadd.f32 %v93, %v457
  %v459 = vpop.f32.mrb[0].mxu0
  %v460 = vpop.f32.mrb[0].mxu0
  %v461 = vadd.f32 %v93, %v460
  %v462 = vpop.f32.mrb[0].mxu0
  %463 = vmatprep.mubr.bf16.mxu0 %v212
  %464 = vmatmul.mubr.bf16.gmra.mrb[0].mxu0 %v211
  %v465 = vpop.f32.mrb[0].mxu0
  %v466 = vadd.f32 %v93, %v465
  %v467 = vpop.f32.mrb[0].mxu0
  %v468 = vpop.f32.mrb[0].mxu0
  %v469 = vadd.f32 %v93, %v468
  %v470 = vpop.f32.mrb[0].mxu0
  %471 = vmatprep.mubr.bf16.mxu0 %v214
  %472 = vmatmul.mubr.bf16.gmra.mrb[0].mxu0 %v213
  %v473 = vpop.f32.mrb[0].mxu0
  %v474 = vadd.f32 %v93, %v473
  %v475 = vpop.f32.mrb[0].mxu0
  %v476 = vpop.f32.mrb[0].mxu0
  %v477 = vadd.f32 %v93, %v476
  %v478 = vpop.f32.mrb[0].mxu0
  %479 = vmatprep.mubr.bf16.mxu0 %v216
  %480 = vmatmul.mubr.bf16.gmra.mrb[0].mxu0 %v215
  %v481 = vpop.f32.mrb[0].mxu0
  %v482 = vadd.f32 %v93, %v481
  %v483 = vpop.f32.mrb[0].mxu0
  %v484 = vpop.f32.mrb[0].mxu0
  %v485 = vadd.f32 %v93, %v484
  %v486 = vpop.f32.mrb[0].mxu0
  %487 = vmatprep.mubr.bf16.mxu0 %v218
  %488 = vmatmul.mubr.bf16.gmra.mrb[0].mxu0 %v217
  %v489 = vpop.f32.mrb[0].mxu0
  %v490 = vadd.f32 %v93, %v489
  %v491 = vpop.f32.mrb[0].mxu0
  %v492 = vpop.f32.mrb[0].mxu0
  %v493 = vadd.f32 %v93, %v492
  %v494 = vpop.f32.mrb[0].mxu0
  %495 = vmatprep.mubr.bf16.mxu0 %v220
  %496 = vmatmul.mubr.bf16.gmra.mrb[0].mxu0 %v219
  %v497 = vpop.f32.mrb[0].mxu0
  %v498 = vadd.f32 %v93, %v497
  %v499 = vpop.f32.mrb[0].mxu0
  %v500 = vpop.f32.mrb[0].mxu0
  %v501 = vadd.f32 %v93, %v500
  %v502 = vpop.f32.mrb[0].mxu0
  %503 = vmatprep.mubr.bf16.mxu0 %v222
  %504 = vmatmul.mubr.bf16.gmra.mrb[0].mxu0 %v221
  %v505 = vpop.f32.mrb[0].mxu0
  %v506 = vadd.f32 %v93, %v505
  %v507 = vpop.f32.mrb[0].mxu0
  %v508 = vpop.f32.mrb[0].mxu0
  %v509 = vadd.f32 %v93, %v508
  %v510 = vpop.f32.mrb[0].mxu0
  %511 = vdwg.mxu0
  %v512 = vld [vmem:[%s3] sm:$0xff]
  %v513 = vld [vmem:[%s3 + $0x8] sm:$0xff]
  %v514 = vld [vmem:[%s3 + $0x10] sm:$0xff]
  %v515 = vld [vmem:[%s3 + $0x18] sm:$0xff]
  %v516 = vld [vmem:[%s3 + $0x20] sm:$0xff]
  %v517 = vld [vmem:[%s3 + $0x28] sm:$0xff]
  %v518 = vld [vmem:[%s3 + $0x30] sm:$0xff]
  %v519 = vld [vmem:[%s3 + $0x38] sm:$0xff]
  %v520 = vld [vmem:[%s3 + $0x40] sm:$0xff]
  %v521 = vld [vmem:[%s3 + $0x48] sm:$0xff]
  %v522 = vld [vmem:[%s3 + $0x50] sm:$0xff]
  %v523 = vld [vmem:[%s3 + $0x58] sm:$0xff]
  %v524 = vld [vmem:[%s3 + $0x60] sm:$0xff]
  %v525 = vld [vmem:[%s3 + $0x68] sm:$0xff]
  %v526 = vld [vmem:[%s3 + $0x70] sm:$0xff]
  %v527 = vld [vmem:[%s3 + $0x78] sm:$0xff]
  %v528 = vld [vmem:[%s3 + $0x80] sm:$0xff]
  %v529 = vld [vmem:[%s3 + $0x88] sm:$0xff]
  %v530 = vld [vmem:[%s3 + $0x90] sm:$0xff]
  %v531 = vld [vmem:[%s3 + $0x98] sm:$0xff]
  %v532 = vld [vmem:[%s3 + $0xa0] sm:$0xff]
  %v533 = vld [vmem:[%s3 + $0xa8] sm:$0xff]
  %v534 = vld [vmem:[%s3 + $0xb0] sm:$0xff]
  %v535 = vld [vmem:[%s3 + $0xb8] sm:$0xff]
  %v536 = vld [vmem:[%s3 + $0xc0] sm:$0xff]
  %v537 = vld [vmem:[%s3 + $0xc8] sm:$0xff]
  %v538 = vld [vmem:[%s3 + $0xd0] sm:$0xff]
  %v539 = vld [vmem:[%s3 + $0xd8] sm:$0xff]
  %v540 = vld [vmem:[%s3 + $0xe0] sm:$0xff]
  %v541 = vld [vmem:[%s3 + $0xe8] sm:$0xff]
  %v542 = vld [vmem:[%s3 + $0xf0] sm:$0xff]
  %v543 = vld [vmem:[%s3 + $0xf8] sm:$0xff]
  %v544 = vadd.f32 %v386, %v512
  %v545 = vadd.f32 %v389, %v513
  %v546 = vadd.f32 %v394, %v514
  %v547 = vadd.f32 %v397, %v515
  %v548 = vadd.f32 %v402, %v516
  %v549 = vadd.f32 %v405, %v517
  %v550 = vadd.f32 %v410, %v518
  %v551 = vadd.f32 %v413, %v519
  %v552 = vadd.f32 %v418, %v520
  %v553 = vadd.f32 %v421, %v521
  %v554 = vadd.f32 %v426, %v522
  %v555 = vadd.f32 %v429, %v523
  %v556 = vadd.f32 %v434, %v524
  %v557 = vadd.f32 %v437, %v525
  %v558 = vadd.f32 %v442, %v526
  %v559 = vadd.f32 %v445, %v527
  %v560 = vadd.f32 %v450, %v528
  %v561 = vadd.f32 %v453, %v529
  %v562 = vadd.f32 %v458, %v530
  %v563 = vadd.f32 %v461, %v531
  %v564 = vadd.f32 %v466, %v532
  %v565 = vadd.f32 %v469, %v533
  %v566 = vadd.f32 %v474, %v534
  %v567 = vadd.f32 %v477, %v535
  %v568 = vadd.f32 %v482, %v536
  %v569 = vadd.f32 %v485, %v537
  %v570 = vadd.f32 %v490, %v538
  %v571 = vadd.f32 %v493, %v539
  %v572 = vadd.f32 %v498, %v540
  %v573 = vadd.f32 %v501, %v541
  %v574 = vadd.f32 %v506, %v542
  %v575 = vadd.f32 %v509, %v543
  %576 = vadd.xlane.f32.xlu0 %v544
  %v577 = vpop.xlane.xlu0 %576
  %578 = vadd.xlane.f32.xlu0 %v545
  %v579 = vpop.xlane.xlu0 %578
  %580 = vadd.xlane.f32.xlu0 %v546
  %v581 = vpop.xlane.xlu0 %580
  %582 = vadd.xlane.f32.xlu0 %v547
  %v583 = vpop.xlane.xlu0 %582
  %584 = vadd.xlane.f32.xlu0 %v548
  %v585 = vpop.xlane.xlu0 %584
  %586 = vadd.xlane.f32.xlu0 %v549
  %v587 = vpop.xlane.xlu0 %586
  %588 = vadd.xlane.f32.xlu0 %v550
  %v589 = vpop.xlane.xlu0 %588
  %590 = vadd.xlane.f32.xlu0 %v551
  %v591 = vpop.xlane.xlu0 %590
  %592 = vadd.xlane.f32.xlu0 %v552
  %v593 = vpop.xlane.xlu0 %592
  %594 = vadd.xlane.f32.xlu0 %v553
  %v595 = vpop.xlane.xlu0 %594
  %596 = vadd.xlane.f32.xlu0 %v554
  %v597 = vpop.xlane.xlu0 %596
  %598 = vadd.xlane.f32.xlu0 %v555
  %v599 = vpop.xlane.xlu0 %598
  %600 = vadd.xlane.f32.xlu0 %v556
  %v601 = vpop.xlane.xlu0 %600
  %602 = vadd.xlane.f32.xlu0 %v557
  %v603 = vpop.xlane.xlu0 %602
  %604 = vadd.xlane.f32.xlu0 %v558
  %v605 = vpop.xlane.xlu0 %604
  %606 = vadd.xlane.f32.xlu0 %v559
  %v607 = vpop.xlane.xlu0 %606
  %608 = vadd.xlane.f32.xlu0 %v560
  %v609 = vpop.xlane.xlu0 %608
  %610 = vadd.xlane.f32.xlu0 %v561
  %v611 = vpop.xlane.xlu0 %610
  %612 = vadd.xlane.f32.xlu0 %v562
  %v613 = vpop.xlane.xlu0 %612
  %614 = vadd.xlane.f32.xlu0 %v563
  %v615 = vpop.xlane.xlu0 %614
  %616 = vadd.xlane.f32.xlu0 %v564
  %v617 = vpop.xlane.xlu0 %616
  %618 = vadd.xlane.f32.xlu0 %v565
  %v619 = vpop.xlane.xlu0 %618
  %620 = vadd.xlane.f32.xlu0 %v566
  %v621 = vpop.xlane.xlu0 %620
  %622 = vadd.xlane.f32.xlu0 %v567
  %v623 = vpop.xlane.xlu0 %622
  %624 = vadd.xlane.f32.xlu0 %v568
  %v625 = vpop.xlane.xlu0 %624
  %626 = vadd.xlane.f32.xlu0 %v569
  %v627 = vpop.xlane.xlu0 %626
  %628 = vadd.xlane.f32.xlu0 %v570
  %v629 = vpop.xlane.xlu0 %628
  %630 = vadd.xlane.f32.xlu0 %v571
  %v631 = vpop.xlane.xlu0 %630
  %632 = vadd.xlane.f32.xlu0 %v572
  %v633 = vpop.xlane.xlu0 %632
  %634 = vadd.xlane.f32.xlu0 %v573
  %v635 = vpop.xlane.xlu0 %634
  %636 = vadd.xlane.f32.xlu0 %v574
  %v637 = vpop.xlane.xlu0 %636
  %638 = vadd.xlane.f32.xlu0 %v575
  %v639 = vpop.xlane.xlu0 %638
  %v640 = vrcp.pop 128.0
  %v641 = vmul.f32 %v577, %v640
  %v642 = vmul.f32 %v579, %v640
  %v643 = vmul.f32 %v581, %v640
  %v644 = vmul.f32 %v583, %v640
  %v645 = vmul.f32 %v585, %v640
  %v646 = vmul.f32 %v587, %v640
  %v647 = vmul.f32 %v589, %v640
  %v648 = vmul.f32 %v591, %v640
  %v649 = vmul.f32 %v593, %v640
  %v650 = vmul.f32 %v595, %v640
  %v651 = vmul.f32 %v597, %v640
  %v652 = vmul.f32 %v599, %v640
  %v653 = vmul.f32 %v601, %v640
  %v654 = vmul.f32 %v603, %v640
  %v655 = vmul.f32 %v605, %v640
  %v656 = vmul.f32 %v607, %v640
  %v657 = vmul.f32 %v609, %v640
  %v658 = vmul.f32 %v611, %v640
  %v659 = vmul.f32 %v613, %v640
  %v660 = vmul.f32 %v615, %v640
  %v661 = vmul.f32 %v617, %v640
  %v662 = vmul.f32 %v619, %v640
  %v663 = vmul.f32 %v621, %v640
  %v664 = vmul.f32 %v623, %v640
  %v665 = vmul.f32 %v625, %v640
  %v666 = vmul.f32 %v627, %v640
  %v667 = vmul.f32 %v629, %v640
  %v668 = vmul.f32 %v631, %v640
  %v669 = vmul.f32 %v633, %v640
  %v670 = vmul.f32 %v635, %v640
  %v671 = vmul.f32 %v637, %v640
  %v672 = vmul.f32 %v639, %v640
  %v673 = vsub.f32 %v544, %v641
  %v674 = vsub.f32 %v545, %v642
  %v675 = vsub.f32 %v546, %v643
  %v676 = vsub.f32 %v547, %v644
  %v677 = vsub.f32 %v548, %v645
  %v678 = vsub.f32 %v549, %v646
  %v679 = vsub.f32 %v550, %v647
  %v680 = vsub.f32 %v551, %v648
  %v681 = vsub.f32 %v552, %v649
  %v682 = vsub.f32 %v553, %v650
  %v683 = vsub.f32 %v554, %v651
  %v684 = vsub.f32 %v555, %v652
  %v685 = vsub.f32 %v556, %v653
  %v686 = vsub.f32 %v557, %v654
  %v687 = vsub.f32 %v558, %v655
  %v688 = vsub.f32 %v559, %v656
  %v689 = vsub.f32 %v560, %v657
  %v690 = vsub.f32 %v561, %v658
  %v691 = vsub.f32 %v562, %v659
  %v692 = vsub.f32 %v563, %v660
  %v693 = vsub.f32 %v564, %v661
  %v694 = vsub.f32 %v565, %v662
  %v695 = vsub.f32 %v566, %v663
  %v696 = vsub.f32 %v567, %v664
  %v697 = vsub.f32 %v568, %v665
  %v698 = vsub.f32 %v569, %v666
  %v699 = vsub.f32 %v570, %v667
  %v700 = vsub.f32 %v571, %v668
  %v701 = vsub.f32 %v572, %v669
  %v702 = vsub.f32 %v573, %v670
  %v703 = vsub.f32 %v574, %v671
  %v704 = vsub.f32 %v575, %v672
  %v705 = vmul.f32 %v673, %v673
  %v706 = vmul.f32 %v674, %v674
  %v707 = vmul.f32 %v675, %v675
  %v708 = vmul.f32 %v676, %v676
  %v709 = vmul.f32 %v677, %v677
  %v710 = vmul.f32 %v678, %v678
  %v711 = vmul.f32 %v679, %v679
  %v712 = vmul.f32 %v680, %v680
  %v713 = vmul.f32 %v681, %v681
  %v714 = vmul.f32 %v682, %v682
  %v715 = vmul.f32 %v683, %v683
  %v716 = vmul.f32 %v684, %v684
  %v717 = vmul.f32 %v685, %v685
  %v718 = vmul.f32 %v686, %v686
  %v719 = vmul.f32 %v687, %v687
  %v720 = vmul.f32 %v688, %v688
  %v721 = vmul.f32 %v689, %v689
  %v722 = vmul.f32 %v690, %v690
  %v723 = vmul.f32 %v691, %v691
  %v724 = vmul.f32 %v692, %v692
  %v725 = vmul.f32 %v693, %v693
  %v726 = vmul.f32 %v694, %v694
  %v727 = vmul.f32 %v695, %v695
  %v728 = vmul.f32 %v696, %v696
  %v729 = vmul.f32 %v697, %v697
  %v730 = vmul.f32 %v698, %v698
  %v731 = vmul.f32 %v699, %v699
  %v732 = vmul.f32 %v700, %v700
  %v733 = vmul.f32 %v701, %v701
  %v734 = vmul.f32 %v702, %v702
  %v735 = vmul.f32 %v703, %v703
  %v736 = vmul.f32 %v704, %v704
  %737 = vadd.xlane.f32.xlu0 %v705
  %v738 = vpop.xlane.xlu0 %737
  %739 = vadd.xlane.f32.xlu0 %v706
  %v740 = vpop.xlane.xlu0 %739
  %741 = vadd.xlane.f32.xlu0 %v707
  %v742 = vpop.xlane.xlu0 %741
  %743 = vadd.xlane.f32.xlu0 %v708
  %v744 = vpop.xlane.xlu0 %743
  %745 = vadd.xlane.f32.xlu0 %v709
  %v746 = vpop.xlane.xlu0 %745
  %747 = vadd.xlane.f32.xlu0 %v710
  %v748 = vpop.xlane.xlu0 %747
  %749 = vadd.xlane.f32.xlu0 %v711
  %v750 = vpop.xlane.xlu0 %749
  %751 = vadd.xlane.f32.xlu0 %v712
  %v752 = vpop.xlane.xlu0 %751
  %753 = vadd.xlane.f32.xlu0 %v713
  %v754 = vpop.xlane.xlu0 %753
  %755 = vadd.xlane.f32.xlu0 %v714
  %v756 = vpop.xlane.xlu0 %755
  %757 = vadd.xlane.f32.xlu0 %v715
  %v758 = vpop.xlane.xlu0 %757
  %759 = vadd.xlane.f32.xlu0 %v716
  %v760 = vpop.xlane.xlu0 %759
  %761 = vadd.xlane.f32.xlu0 %v717
  %v762 = vpop.xlane.xlu0 %761
  %763 = vadd.xlane.f32.xlu0 %v718
  %v764 = vpop.xlane.xlu0 %763
  %765 = vadd.xlane.f32.xlu0 %v719
  %v766 = vpop.xlane.xlu0 %765
  %767 = vadd.xlane.f32.xlu0 %v720
  %v768 = vpop.xlane.xlu0 %767
  %769 = vadd.xlane.f32.xlu0 %v721
  %v770 = vpop.xlane.xlu0 %769
  %771 = vadd.xlane.f32.xlu0 %v722
  %v772 = vpop.xlane.xlu0 %771
  %773 = vadd.xlane.f32.xlu0 %v723
  %v774 = vpop.xlane.xlu0 %773
  %775 = vadd.xlane.f32.xlu0 %v724
  %v776 = vpop.xlane.xlu0 %775
  %777 = vadd.xlane.f32.xlu0 %v725
  %v778 = vpop.xlane.xlu0 %777
  %779 = vadd.xlane.f32.xlu0 %v726
  %v780 = vpop.xlane.xlu0 %779
  %781 = vadd.xlane.f32.xlu0 %v727
  %v782 = vpop.xlane.xlu0 %781
  %783 = vadd.xlane.f32.xlu0 %v728
  %v784 = vpop.xlane.xlu0 %783
  %785 = vadd.xlane.f32.xlu0 %v729
  %v786 = vpop.xlane.xlu0 %785
  %787 = vadd.xlane.f32.xlu0 %v730
  %v788 = vpop.xlane.xlu0 %787
  %789 = vadd.xlane.f32.xlu0 %v731
  %v790 = vpop.xlane.xlu0 %789
  %791 = vadd.xlane.f32.xlu0 %v732
  %v792 = vpop.xlane.xlu0 %791
  %793 = vadd.xlane.f32.xlu0 %v733
  %v794 = vpop.xlane.xlu0 %793
  %795 = vadd.xlane.f32.xlu0 %v734
  %v796 = vpop.xlane.xlu0 %795
  %797 = vadd.xlane.f32.xlu0 %v735
  %v798 = vpop.xlane.xlu0 %797
  %799 = vadd.xlane.f32.xlu0 %v736
  %v800 = vpop.xlane.xlu0 %799
  %v801 = vmul.f32 %v738, %v640
  %v802 = vmul.f32 %v740, %v640
  %v803 = vmul.f32 %v742, %v640
  %v804 = vmul.f32 %v744, %v640
  %v805 = vmul.f32 %v746, %v640
  %v806 = vmul.f32 %v748, %v640
  %v807 = vmul.f32 %v750, %v640
  %v808 = vmul.f32 %v752, %v640
  %v809 = vmul.f32 %v754, %v640
  %v810 = vmul.f32 %v756, %v640
  %v811 = vmul.f32 %v758, %v640
  %v812 = vmul.f32 %v760, %v640
  %v813 = vmul.f32 %v762, %v640
  %v814 = vmul.f32 %v764, %v640
  %v815 = vmul.f32 %v766, %v640
  %v816 = vmul.f32 %v768, %v640
  %v817 = vmul.f32 %v770, %v640
  %v818 = vmul.f32 %v772, %v640
  %v819 = vmul.f32 %v774, %v640
  %v820 = vmul.f32 %v776, %v640
  %v821 = vmul.f32 %v778, %v640
  %v822 = vmul.f32 %v780, %v640
  %v823 = vmul.f32 %v782, %v640
  %v824 = vmul.f32 %v784, %v640
  %v825 = vmul.f32 %v786, %v640
  %v826 = vmul.f32 %v788, %v640
  %v827 = vmul.f32 %v790, %v640
  %v828 = vmul.f32 %v792, %v640
  %v829 = vmul.f32 %v794, %v640
  %v830 = vmul.f32 %v796, %v640
  %v831 = vmul.f32 %v798, %v640
  %v832 = vmul.f32 %v800, %v640
  %v833 = vadd.f32 %v801, 1e-05
  %v834 = vadd.f32 %v802, 1e-05
  %v835 = vadd.f32 %v803, 1e-05
  %v836 = vadd.f32 %v804, 1e-05
  %v837 = vadd.f32 %v805, 1e-05
  %v838 = vadd.f32 %v806, 1e-05
  %v839 = vadd.f32 %v807, 1e-05
  %v840 = vadd.f32 %v808, 1e-05
  %v841 = vadd.f32 %v809, 1e-05
  %v842 = vadd.f32 %v810, 1e-05
  %v843 = vadd.f32 %v811, 1e-05
  %v844 = vadd.f32 %v812, 1e-05
  %v845 = vadd.f32 %v813, 1e-05
  %v846 = vadd.f32 %v814, 1e-05
  %v847 = vadd.f32 %v815, 1e-05
  %v848 = vadd.f32 %v816, 1e-05
  %v849 = vadd.f32 %v817, 1e-05
  %v850 = vadd.f32 %v818, 1e-05
  %v851 = vadd.f32 %v819, 1e-05
  %v852 = vadd.f32 %v820, 1e-05
  %v853 = vadd.f32 %v821, 1e-05
  %v854 = vadd.f32 %v822, 1e-05
  %v855 = vadd.f32 %v823, 1e-05
  %v856 = vadd.f32 %v824, 1e-05
  %v857 = vadd.f32 %v825, 1e-05
  %v858 = vadd.f32 %v826, 1e-05
  %v859 = vadd.f32 %v827, 1e-05
  %v860 = vadd.f32 %v828, 1e-05
  %v861 = vadd.f32 %v829, 1e-05
  %v862 = vadd.f32 %v830, 1e-05
  %v863 = vadd.f32 %v831, 1e-05
  %v864 = vadd.f32 %v832, 1e-05
  %v865 = vrsqrt.pop %v833
  %v866 = vrsqrt.pop %v834
  %v867 = vrsqrt.pop %v835
  %v868 = vrsqrt.pop %v836
  %v869 = vrsqrt.pop %v837
  %v870 = vrsqrt.pop %v838
  %v871 = vrsqrt.pop %v839
  %v872 = vrsqrt.pop %v840
  %v873 = vrsqrt.pop %v841
  %v874 = vrsqrt.pop %v842
  %v875 = vrsqrt.pop %v843
  %v876 = vrsqrt.pop %v844
  %v877 = vrsqrt.pop %v845
  %v878 = vrsqrt.pop %v846
  %v879 = vrsqrt.pop %v847
  %v880 = vrsqrt.pop %v848
  %v881 = vrsqrt.pop %v849
  %v882 = vrsqrt.pop %v850
  %v883 = vrsqrt.pop %v851
  %v884 = vrsqrt.pop %v852
  %v885 = vrsqrt.pop %v853
  %v886 = vrsqrt.pop %v854
  %v887 = vrsqrt.pop %v855
  %v888 = vrsqrt.pop %v856
  %v889 = vrsqrt.pop %v857
  %v890 = vrsqrt.pop %v858
  %v891 = vrsqrt.pop %v859
  %v892 = vrsqrt.pop %v860
  %v893 = vrsqrt.pop %v861
  %v894 = vrsqrt.pop %v862
  %v895 = vrsqrt.pop %v863
  %v896 = vrsqrt.pop %v864
  %v897 = vmul.f32 %v673, %v865
  %v898 = vmul.f32 %v674, %v866
  %v899 = vmul.f32 %v675, %v867
  %v900 = vmul.f32 %v676, %v868
  %v901 = vmul.f32 %v677, %v869
  %v902 = vmul.f32 %v678, %v870
  %v903 = vmul.f32 %v679, %v871
  %v904 = vmul.f32 %v680, %v872
  %v905 = vmul.f32 %v681, %v873
  %v906 = vmul.f32 %v682, %v874
  %v907 = vmul.f32 %v683, %v875
  %v908 = vmul.f32 %v684, %v876
  %v909 = vmul.f32 %v685, %v877
  %v910 = vmul.f32 %v686, %v878
  %v911 = vmul.f32 %v687, %v879
  %v912 = vmul.f32 %v688, %v880
  %v913 = vmul.f32 %v689, %v881
  %v914 = vmul.f32 %v690, %v882
  %v915 = vmul.f32 %v691, %v883
  %v916 = vmul.f32 %v692, %v884
  %v917 = vmul.f32 %v693, %v885
  %v918 = vmul.f32 %v694, %v886
  %v919 = vmul.f32 %v695, %v887
  %v920 = vmul.f32 %v696, %v888
  %v921 = vmul.f32 %v697, %v889
  %v922 = vmul.f32 %v698, %v890
  %v923 = vmul.f32 %v699, %v891
  %v924 = vmul.f32 %v700, %v892
  %v925 = vmul.f32 %v701, %v893
  %v926 = vmul.f32 %v702, %v894
  %v927 = vmul.f32 %v703, %v895
  %v928 = vmul.f32 %v704, %v896
  %v929 = vld [vmem:[%s4] sm:$0x1]
  %v931 = vlaneseq
  %v932 = vshrl.u32 %v931, 7
  %v933 = vsub.s32 0, %v932
  %v934 = vrot.slane %v929, %v933
  %v936 = vmul.f32 %v897, %v934
  %v937 = vmul.f32 %v898, %v934
  %v938 = vmul.f32 %v899, %v934
  %v939 = vmul.f32 %v900, %v934
  %v940 = vmul.f32 %v901, %v934
  %v941 = vmul.f32 %v902, %v934
  %v942 = vmul.f32 %v903, %v934
  %v943 = vmul.f32 %v904, %v934
  %v944 = vmul.f32 %v905, %v934
  %v945 = vmul.f32 %v906, %v934
  %v946 = vmul.f32 %v907, %v934
  %v947 = vmul.f32 %v908, %v934
  %v948 = vmul.f32 %v909, %v934
  %v949 = vmul.f32 %v910, %v934
  %v950 = vmul.f32 %v911, %v934
  %v951 = vmul.f32 %v912, %v934
  %v952 = vmul.f32 %v913, %v934
  %v953 = vmul.f32 %v914, %v934
  %v954 = vmul.f32 %v915, %v934
  %v955 = vmul.f32 %v916, %v934
  %v956 = vmul.f32 %v917, %v934
  %v957 = vmul.f32 %v918, %v934
  %v958 = vmul.f32 %v919, %v934
  %v959 = vmul.f32 %v920, %v934
  %v960 = vmul.f32 %v921, %v934
  %v961 = vmul.f32 %v922, %v934
  %v962 = vmul.f32 %v923, %v934
  %v963 = vmul.f32 %v924, %v934
  %v964 = vmul.f32 %v925, %v934
  %v965 = vmul.f32 %v926, %v934
  %v966 = vmul.f32 %v927, %v934
  %v967 = vmul.f32 %v928, %v934
  %v968 = vld [vmem:[%s5] sm:$0x1]
  %v970 = vlaneseq
  %v971 = vshrl.u32 %v970, 7
  %v972 = vsub.s32 0, %v971
  %v973 = vrot.slane %v968, %v972
  %v975 = vadd.f32 %v936, %v973
  %v976 = vadd.f32 %v937, %v973
  %v977 = vadd.f32 %v938, %v973
  %v978 = vadd.f32 %v939, %v973
  %v979 = vadd.f32 %v940, %v973
  %v980 = vadd.f32 %v941, %v973
  %v981 = vadd.f32 %v942, %v973
  %v982 = vadd.f32 %v943, %v973
  %v983 = vadd.f32 %v944, %v973
  %v984 = vadd.f32 %v945, %v973
  %v985 = vadd.f32 %v946, %v973
  %v986 = vadd.f32 %v947, %v973
  %v987 = vadd.f32 %v948, %v973
  %v988 = vadd.f32 %v949, %v973
  %v989 = vadd.f32 %v950, %v973
  %v990 = vadd.f32 %v951, %v973
  %v991 = vadd.f32 %v952, %v973
  %v992 = vadd.f32 %v953, %v973
  %v993 = vadd.f32 %v954, %v973
  %v994 = vadd.f32 %v955, %v973
  %v995 = vadd.f32 %v956, %v973
  %v996 = vadd.f32 %v957, %v973
  %v997 = vadd.f32 %v958, %v973
  %v998 = vadd.f32 %v959, %v973
  %v999 = vadd.f32 %v960, %v973
  %v1000 = vadd.f32 %v961, %v973
  %v1001 = vadd.f32 %v962, %v973
  %v1002 = vadd.f32 %v963, %v973
  %v1003 = vadd.f32 %v964, %v973
  %v1004 = vadd.f32 %v965, %v973
  %v1005 = vadd.f32 %v966, %v973
  %v1006 = vadd.f32 %v967, %v973
  %1007 = vst [vmem:[%s6] sm:$0xff] %v975
  %1008 = vst [vmem:[%s6 + $0x8] sm:$0xff] %v976
  %1009 = vst [vmem:[%s6 + $0x10] sm:$0xff] %v977
  %1010 = vst [vmem:[%s6 + $0x18] sm:$0xff] %v978
  %1011 = vst [vmem:[%s6 + $0x20] sm:$0xff] %v979
  %1012 = vst [vmem:[%s6 + $0x28] sm:$0xff] %v980
  %1013 = vst [vmem:[%s6 + $0x30] sm:$0xff] %v981
  %1014 = vst [vmem:[%s6 + $0x38] sm:$0xff] %v982
  %1015 = vst [vmem:[%s6 + $0x40] sm:$0xff] %v983
  %1016 = vst [vmem:[%s6 + $0x48] sm:$0xff] %v984
  %1017 = vst [vmem:[%s6 + $0x50] sm:$0xff] %v985
  %1018 = vst [vmem:[%s6 + $0x58] sm:$0xff] %v986
  %1019 = vst [vmem:[%s6 + $0x60] sm:$0xff] %v987
  %1020 = vst [vmem:[%s6 + $0x68] sm:$0xff] %v988
  %1021 = vst [vmem:[%s6 + $0x70] sm:$0xff] %v989
  %1022 = vst [vmem:[%s6 + $0x78] sm:$0xff] %v990
  %1023 = vst [vmem:[%s6 + $0x80] sm:$0xff] %v991
  %1024 = vst [vmem:[%s6 + $0x88] sm:$0xff] %v992
  %1025 = vst [vmem:[%s6 + $0x90] sm:$0xff] %v993
  %1026 = vst [vmem:[%s6 + $0x98] sm:$0xff] %v994
  %1027 = vst [vmem:[%s6 + $0xa0] sm:$0xff] %v995
  %1028 = vst [vmem:[%s6 + $0xa8] sm:$0xff] %v996
  %1029 = vst [vmem:[%s6 + $0xb0] sm:$0xff] %v997
  %1030 = vst [vmem:[%s6 + $0xb8] sm:$0xff] %v998
  %1031 = vst [vmem:[%s6 + $0xc0] sm:$0xff] %v999
  %1032 = vst [vmem:[%s6 + $0xc8] sm:$0xff] %v1000
  %1033 = vst [vmem:[%s6 + $0xd0] sm:$0xff] %v1001
  %1034 = vst [vmem:[%s6 + $0xd8] sm:$0xff] %v1002
  %1035 = vst [vmem:[%s6 + $0xe0] sm:$0xff] %v1003
  %1036 = vst [vmem:[%s6 + $0xe8] sm:$0xff] %v1004
  %1037 = vst [vmem:[%s6 + $0xf0] sm:$0xff] %v1005
  %1038 = vst [vmem:[%s6 + $0xf8] sm:$0xff] %v1006
  // Predicated region
  $region26: #{relative_transformer.16} parent=0 // pred_check
    _
  $region27: #{relative_transformer.16} parent=0 // pred_check_branch
    %1040 = sbr.rel (0) target = $region29
  $region28: #{relative_transformer.16} parent=0 // pred_region
    _
  $region29: #{relative_transformer.16} parent=0 // pred_fallthru
    _
  // Predicated region
  $region30: #{relative_transformer.16} parent=0 // pred_check
    _
  $region31: #{relative_transformer.16} parent=0 // pred_check_branch
    %1042 = sbr.rel (0) target = $region33
  $region32: #{relative_transformer.16} parent=0 // pred_region
    _
  $region33: #{relative_transformer.16} parent=0 // pred_fallthru
    _

// kernel: relative_transformer.22
$region0: #{relative_transformer.22}
  #allocation0 [shape = 'u32[]', space=smem, size = 0x4, offset = 0x4, fixed_abs, tag = 'smem constant byte address 0x4 - core index']
  #allocation1 [shape = 'u32[144,128]{1,0:T(1,128)}', space=vmem, size = 0x12000, scoped, tag = 'internal scratch']
  %s0 = inlined_call_operand.vmem [shape: f32[256,128], index: 0, kind: input, shape index: {}]
  %s1 = inlined_call_operand.vmem [shape: f32[1,128], index: 1, kind: input, shape index: {}]
  %s2 = inlined_call_operand.vmem [shape: f32[1,128], index: 2, kind: input, shape index: {}]
  %s3 = inlined_call_operand.vmem [shape: bf16[256,128], index: 3, kind: output, shape index: {}]
  %s4 = sld [smem:[#allocation0]]
  $region22: #{relative_transformer.22} parent=0
    _
  %s6 = ssub.s32 1, %s4
  %s7 = scalar_select 0, %s6, %s4
  // Predicated region
  $region2: #{relative_transformer.22} parent=0 // pred_check
    _
  $region3: #{relative_transformer.22} parent=0 // pred_check_branch
    %9 = sbr.rel (0) target = $region5
  $region4: #{relative_transformer.22} parent=0 // pred_region
    _
  $region5: #{relative_transformer.22} parent=0 // pred_fallthru
    _
  // Predicated region
  $region6: #{relative_transformer.22} parent=0 // pred_check
    _
  $region7: #{relative_transformer.22} parent=0 // pred_check_branch
    %11 = sbr.rel (0) target = $region9
  $region8: #{relative_transformer.22} parent=0 // pred_region
    _
  $region9: #{relative_transformer.22} parent=0 // pred_fallthru
    _
  // Predicated region
  $region10: #{relative_transformer.22} parent=0 // pred_check
    _
  $region11: #{relative_transformer.22} parent=0 // pred_check_branch
    %13 = sbr.rel (0) target = $region13
  $region12: #{relative_transformer.22} parent=0 // pred_region
    _
  $region13: #{relative_transformer.22} parent=0 // pred_fallthru
    _
  %v14 = vld [vmem:[%s0] sm:$0xff]
  %v15 = vld [vmem:[%s0 + $0x8] sm:$0xff]
  %v16 = vld [vmem:[%s0 + $0x10] sm:$0xff]
  %v17 = vld [vmem:[%s0 + $0x18] sm:$0xff]
  %v18 = vld [vmem:[%s0 + $0x20] sm:$0xff]
  %v19 = vld [vmem:[%s0 + $0x28] sm:$0xff]
  %v20 = vld [vmem:[%s0 + $0x30] sm:$0xff]
  %v21 = vld [vmem:[%s0 + $0x38] sm:$0xff]
  %v22 = vld [vmem:[%s0 + $0x40] sm:$0xff]
  %v23 = vld [vmem:[%s0 + $0x48] sm:$0xff]
  %v24 = vld [vmem:[%s0 + $0x50] sm:$0xff]
  %v25 = vld [vmem:[%s0 + $0x58] sm:$0xff]
  %v26 = vld [vmem:[%s0 + $0x60] sm:$0xff]
  %v27 = vld [vmem:[%s0 + $0x68] sm:$0xff]
  %v28 = vld [vmem:[%s0 + $0x70] sm:$0xff]
  %v29 = vld [vmem:[%s0 + $0x78] sm:$0xff]
  %v30 = vld [vmem:[%s0 + $0x80] sm:$0xff]
  %v31 = vld [vmem:[%s0 + $0x88] sm:$0xff]
  %v32 = vld [vmem:[%s0 + $0x90] sm:$0xff]
  %v33 = vld [vmem:[%s0 + $0x98] sm:$0xff]
  %v34 = vld [vmem:[%s0 + $0xa0] sm:$0xff]
  %v35 = vld [vmem:[%s0 + $0xa8] sm:$0xff]
  %v36 = vld [vmem:[%s0 + $0xb0] sm:$0xff]
  %v37 = vld [vmem:[%s0 + $0xb8] sm:$0xff]
  %v38 = vld [vmem:[%s0 + $0xc0] sm:$0xff]
  %v39 = vld [vmem:[%s0 + $0xc8] sm:$0xff]
  %v40 = vld [vmem:[%s0 + $0xd0] sm:$0xff]
  %v41 = vld [vmem:[%s0 + $0xd8] sm:$0xff]
  %v42 = vld [vmem:[%s0 + $0xe0] sm:$0xff]
  %v43 = vld [vmem:[%s0 + $0xe8] sm:$0xff]
  %v44 = vld [vmem:[%s0 + $0xf0] sm:$0xff]
  %v45 = vld [vmem:[%s0 + $0xf8] sm:$0xff]
  %46 = vadd.xlane.f32.xlu0 %v14
  %v47 = vpop.xlane.xlu0 %46
  %48 = vadd.xlane.f32.xlu0 %v15
  %v49 = vpop.xlane.xlu0 %48
  %50 = vadd.xlane.f32.xlu0 %v16
  %v51 = vpop.xlane.xlu0 %50
  %52 = vadd.xlane.f32.xlu0 %v17
  %v53 = vpop.xlane.xlu0 %52
  %54 = vadd.xlane.f32.xlu0 %v18
  %v55 = vpop.xlane.xlu0 %54
  %56 = vadd.xlane.f32.xlu0 %v19
  %v57 = vpop.xlane.xlu0 %56
  %58 = vadd.xlane.f32.xlu0 %v20
  %v59 = vpop.xlane.xlu0 %58
  %60 = vadd.xlane.f32.xlu0 %v21
  %v61 = vpop.xlane.xlu0 %60
  %62 = vadd.xlane.f32.xlu0 %v22
  %v63 = vpop.xlane.xlu0 %62
  %64 = vadd.xlane.f32.xlu0 %v23
  %v65 = vpop.xlane.xlu0 %64
  %66 = vadd.xlane.f32.xlu0 %v24
  %v67 = vpop.xlane.xlu0 %66
  %68 = vadd.xlane.f32.xlu0 %v25
  %v69 = vpop.xlane.xlu0 %68
  %70 = vadd.xlane.f32.xlu0 %v26
  %v71 = vpop.xlane.xlu0 %70
  %72 = vadd.xlane.f32.xlu0 %v27
  %v73 = vpop.xlane.xlu0 %72
  %74 = vadd.xlane.f32.xlu0 %v28
  %v75 = vpop.xlane.xlu0 %74
  %76 = vadd.xlane.f32.xlu0 %v29
  %v77 = vpop.xlane.xlu0 %76
  %78 = vadd.xlane.f32.xlu0 %v30
  %v79 = vpop.xlane.xlu0 %78
  %80 = vadd.xlane.f32.xlu0 %v31
  %v81 = vpop.xlane.xlu0 %80
  %82 = vadd.xlane.f32.xlu0 %v32
  %v83 = vpop.xlane.xlu0 %82
  %84 = vadd.xlane.f32.xlu0 %v33
  %v85 = vpop.xlane.xlu0 %84
  %86 = vadd.xlane.f32.xlu0 %v34
  %v87 = vpop.xlane.xlu0 %86
  %88 = vadd.xlane.f32.xlu0 %v35
  %v89 = vpop.xlane.xlu0 %88
  %90 = vadd.xlane.f32.xlu0 %v36
  %v91 = vpop.xlane.xlu0 %90
  %92 = vadd.xlane.f32.xlu0 %v37
  %v93 = vpop.xlane.xlu0 %92
  %94 = vadd.xlane.f32.xlu0 %v38
  %v95 = vpop.xlane.xlu0 %94
  %96 = vadd.xlane.f32.xlu0 %v39
  %v97 = vpop.xlane.xlu0 %96
  %98 = vadd.xlane.f32.xlu0 %v40
  %v99 = vpop.xlane.xlu0 %98
  %100 = vadd.xlane.f32.xlu0 %v41
  %v101 = vpop.xlane.xlu0 %100
  %102 = vadd.xlane.f32.xlu0 %v42
  %v103 = vpop.xlane.xlu0 %102
  %104 = vadd.xlane.f32.xlu0 %v43
  %v105 = vpop.xlane.xlu0 %104
  %106 = vadd.xlane.f32.xlu0 %v44
  %v107 = vpop.xlane.xlu0 %106
  %108 = vadd.xlane.f32.xlu0 %v45
  %v109 = vpop.xlane.xlu0 %108
  %v110 = vrcp.pop 128.0
  %v111 = vmul.f32 %v47, %v110
  %v112 = vmul.f32 %v49, %v110
  %v113 = vmul.f32 %v51, %v110
  %v114 = vmul.f32 %v53, %v110
  %v115 = vmul.f32 %v55, %v110
  %v116 = vmul.f32 %v57, %v110
  %v117 = vmul.f32 %v59, %v110
  %v118 = vmul.f32 %v61, %v110
  %v119 = vmul.f32 %v63, %v110
  %v120 = vmul.f32 %v65, %v110
  %v121 = vmul.f32 %v67, %v110
  %v122 = vmul.f32 %v69, %v110
  %v123 = vmul.f32 %v71, %v110
  %v124 = vmul.f32 %v73, %v110
  %v125 = vmul.f32 %v75, %v110
  %v126 = vmul.f32 %v77, %v110
  %v127 = vmul.f32 %v79, %v110
  %v128 = vmul.f32 %v81, %v110
  %v129 = vmul.f32 %v83, %v110
  %v130 = vmul.f32 %v85, %v110
  %v131 = vmul.f32 %v87, %v110
  %v132 = vmul.f32 %v89, %v110
  %v133 = vmul.f32 %v91, %v110
  %v134 = vmul.f32 %v93, %v110
  %v135 = vmul.f32 %v95, %v110
  %v136 = vmul.f32 %v97, %v110
  %v137 = vmul.f32 %v99, %v110
  %v138 = vmul.f32 %v101, %v110
  %v139 = vmul.f32 %v103, %v110
  %v140 = vmul.f32 %v105, %v110
  %v141 = vmul.f32 %v107, %v110
  %v142 = vmul.f32 %v109, %v110
  %v143 = vsub.f32 %v14, %v111
  %v144 = vsub.f32 %v15, %v112
  %v145 = vsub.f32 %v16, %v113
  %v146 = vsub.f32 %v17, %v114
  %v147 = vsub.f32 %v18, %v115
  %v148 = vsub.f32 %v19, %v116
  %v149 = vsub.f32 %v20, %v117
  %v150 = vsub.f32 %v21, %v118
  %v151 = vsub.f32 %v22, %v119
  %v152 = vsub.f32 %v23, %v120
  %v153 = vsub.f32 %v24, %v121
  %v154 = vsub.f32 %v25, %v122
  %v155 = vsub.f32 %v26, %v123
  %v156 = vsub.f32 %v27, %v124
  %v157 = vsub.f32 %v28, %v125
  %v158 = vsub.f32 %v29, %v126
  %v159 = vsub.f32 %v30, %v127
  %v160 = vsub.f32 %v31, %v128
  %v161 = vsub.f32 %v32, %v129
  %v162 = vsub.f32 %v33, %v130
  %v163 = vsub.f32 %v34, %v131
  %v164 = vsub.f32 %v35, %v132
  %v165 = vsub.f32 %v36, %v133
  %v166 = vsub.f32 %v37, %v134
  %v167 = vsub.f32 %v38, %v135
  %v168 = vsub.f32 %v39, %v136
  %v169 = vsub.f32 %v40, %v137
  %v170 = vsub.f32 %v41, %v138
  %v171 = vsub.f32 %v42, %v139
  %v172 = vsub.f32 %v43, %v140
  %v173 = vsub.f32 %v44, %v141
  %v174 = vsub.f32 %v45, %v142
  %v175 = vmul.f32 %v143, %v143
  %v176 = vmul.f32 %v144, %v144
  %v177 = vmul.f32 %v145, %v145
  %v178 = vmul.f32 %v146, %v146
  %v179 = vmul.f32 %v147, %v147
  %v180 = vmul.f32 %v148, %v148
  %v181 = vmul.f32 %v149, %v149
  %v182 = vmul.f32 %v150, %v150
  %v183 = vmul.f32 %v151, %v151
  %v184 = vmul.f32 %v152, %v152
  %v185 = vmul.f32 %v153, %v153
  %v186 = vmul.f32 %v154, %v154
  %v187 = vmul.f32 %v155, %v155
  %v188 = vmul.f32 %v156, %v156
  %v189 = vmul.f32 %v157, %v157
  %v190 = vmul.f32 %v158, %v158
  %v191 = vmul.f32 %v159, %v159
  %v192 = vmul.f32 %v160, %v160
  %v193 = vmul.f32 %v161, %v161
  %v194 = vmul.f32 %v162, %v162
  %v195 = vmul.f32 %v163, %v163
  %v196 = vmul.f32 %v164, %v164
  %v197 = vmul.f32 %v165, %v165
  %v198 = vmul.f32 %v166, %v166
  %v199 = vmul.f32 %v167, %v167
  %v200 = vmul.f32 %v168, %v168
  %v201 = vmul.f32 %v169, %v169
  %v202 = vmul.f32 %v170, %v170
  %v203 = vmul.f32 %v171, %v171
  %v204 = vmul.f32 %v172, %v172
  %v205 = vmul.f32 %v173, %v173
  %v206 = vmul.f32 %v174, %v174
  %207 = vadd.xlane.f32.xlu0 %v175
  %v208 = vpop.xlane.xlu0 %207
  %209 = vadd.xlane.f32.xlu0 %v176
  %v210 = vpop.xlane.xlu0 %209
  %211 = vadd.xlane.f32.xlu0 %v177
  %v212 = vpop.xlane.xlu0 %211
  %213 = vadd.xlane.f32.xlu0 %v178
  %v214 = vpop.xlane.xlu0 %213
  %215 = vadd.xlane.f32.xlu0 %v179
  %v216 = vpop.xlane.xlu0 %215
  %217 = vadd.xlane.f32.xlu0 %v180
  %v218 = vpop.xlane.xlu0 %217
  %219 = vadd.xlane.f32.xlu0 %v181
  %v220 = vpop.xlane.xlu0 %219
  %221 = vadd.xlane.f32.xlu0 %v182
  %v222 = vpop.xlane.xlu0 %221
  %223 = vadd.xlane.f32.xlu0 %v183
  %v224 = vpop.xlane.xlu0 %223
  %225 = vadd.xlane.f32.xlu0 %v184
  %v226 = vpop.xlane.xlu0 %225
  %227 = vadd.xlane.f32.xlu0 %v185
  %v228 = vpop.xlane.xlu0 %227
  %229 = vadd.xlane.f32.xlu0 %v186
  %v230 = vpop.xlane.xlu0 %229
  %231 = vadd.xlane.f32.xlu0 %v187
  %v232 = vpop.xlane.xlu0 %231
  %233 = vadd.xlane.f32.xlu0 %v188
  %v234 = vpop.xlane.xlu0 %233
  %235 = vadd.xlane.f32.xlu0 %v189
  %v236 = vpop.xlane.xlu0 %235
  %237 = vadd.xlane.f32.xlu0 %v190
  %v238 = vpop.xlane.xlu0 %237
  %239 = vadd.xlane.f32.xlu0 %v191
  %v240 = vpop.xlane.xlu0 %239
  %241 = vadd.xlane.f32.xlu0 %v192
  %v242 = vpop.xlane.xlu0 %241
  %243 = vadd.xlane.f32.xlu0 %v193
  %v244 = vpop.xlane.xlu0 %243
  %245 = vadd.xlane.f32.xlu0 %v194
  %v246 = vpop.xlane.xlu0 %245
  %247 = vadd.xlane.f32.xlu0 %v195
  %v248 = vpop.xlane.xlu0 %247
  %249 = vadd.xlane.f32.xlu0 %v196
  %v250 = vpop.xlane.xlu0 %249
  %251 = vadd.xlane.f32.xlu0 %v197
  %v252 = vpop.xlane.xlu0 %251
  %253 = vadd.xlane.f32.xlu0 %v198
  %v254 = vpop.xlane.xlu0 %253
  %255 = vadd.xlane.f32.xlu0 %v199
  %v256 = vpop.xlane.xlu0 %255
  %257 = vadd.xlane.f32.xlu0 %v200
  %v258 = vpop.xlane.xlu0 %257
  %259 = vadd.xlane.f32.xlu0 %v201
  %v260 = vpop.xlane.xlu0 %259
  %261 = vadd.xlane.f32.xlu0 %v202
  %v262 = vpop.xlane.xlu0 %261
  %263 = vadd.xlane.f32.xlu0 %v203
  %v264 = vpop.xlane.xlu0 %263
  %265 = vadd.xlane.f32.xlu0 %v204
  %v266 = vpop.xlane.xlu0 %265
  %267 = vadd.xlane.f32.xlu0 %v205
  %v268 = vpop.xlane.xlu0 %267
  %269 = vadd.xlane.f32.xlu0 %v206
  %v270 = vpop.xlane.xlu0 %269
  %v271 = vmul.f32 %v208, %v110
  %v272 = vmul.f32 %v210, %v110
  %v273 = vmul.f32 %v212, %v110
  %v274 = vmul.f32 %v214, %v110
  %v275 = vmul.f32 %v216, %v110
  %v276 = vmul.f32 %v218, %v110
  %v277 = vmul.f32 %v220, %v110
  %v278 = vmul.f32 %v222, %v110
  %v279 = vmul.f32 %v224, %v110
  %v280 = vmul.f32 %v226, %v110
  %v281 = vmul.f32 %v228, %v110
  %v282 = vmul.f32 %v230, %v110
  %v283 = vmul.f32 %v232, %v110
  %v284 = vmul.f32 %v234, %v110
  %v285 = vmul.f32 %v236, %v110
  %v286 = vmul.f32 %v238, %v110
  %v287 = vmul.f32 %v240, %v110
  %v288 = vmul.f32 %v242, %v110
  %v289 = vmul.f32 %v244, %v110
  %v290 = vmul.f32 %v246, %v110
  %v291 = vmul.f32 %v248, %v110
  %v292 = vmul.f32 %v250, %v110
  %v293 = vmul.f32 %v252, %v110
  %v294 = vmul.f32 %v254, %v110
  %v295 = vmul.f32 %v256, %v110
  %v296 = vmul.f32 %v258, %v110
  %v297 = vmul.f32 %v260, %v110
  %v298 = vmul.f32 %v262, %v110
  %v299 = vmul.f32 %v264, %v110
  %v300 = vmul.f32 %v266, %v110
  %v301 = vmul.f32 %v268, %v110
  %v302 = vmul.f32 %v270, %v110
  %v303 = vadd.f32 %v271, 1e-05
  %v304 = vadd.f32 %v272, 1e-05
  %v305 = vadd.f32 %v273, 1e-05
  %v306 = vadd.f32 %v274, 1e-05
  %v307 = vadd.f32 %v275, 1e-05
  %v308 = vadd.f32 %v276, 1e-05
  %v309 = vadd.f32 %v277, 1e-05
  %v310 = vadd.f32 %v278, 1e-05
  %v311 = vadd.f32 %v279, 1e-05
  %v312 = vadd.f32 %v280, 1e-05
  %v313 = vadd.f32 %v281, 1e-05
  %v314 = vadd.f32 %v282, 1e-05
  %v315 = vadd.f32 %v283, 1e-05
  %v316 = vadd.f32 %v284, 1e-05
  %v317 = vadd.f32 %v285, 1e-05
  %v318 = vadd.f32 %v286, 1e-05
  %v319 = vadd.f32 %v287, 1e-05
  %v320 = vadd.f32 %v288, 1e-05
  %v321 = vadd.f32 %v289, 1e-05
  %v322 = vadd.f32 %v290, 1e-05
  %v323 = vadd.f32 %v291, 1e-05
  %v324 = vadd.f32 %v292, 1e-05
  %v325 = vadd.f32 %v293, 1e-05
  %v326 = vadd.f32 %v294, 1e-05
  %v327 = vadd.f32 %v295, 1e-05
  %v328 = vadd.f32 %v296, 1e-05
  %v329 = vadd.f32 %v297, 1e-05
  %v330 = vadd.f32 %v298, 1e-05
  %v331 = vadd.f32 %v299, 1e-05
  %v332 = vadd.f32 %v300, 1e-05
  %v333 = vadd.f32 %v301, 1e-05
  %v334 = vadd.f32 %v302, 1e-05
  %v335 = vrsqrt.pop %v303
  %v336 = vrsqrt.pop %v304
  %v337 = vrsqrt.pop %v305
  %v338 = vrsqrt.pop %v306
  %v339 = vrsqrt.pop %v307
  %v340 = vrsqrt.pop %v308
  %v341 = vrsqrt.pop %v309
  %v342 = vrsqrt.pop %v310
  %v343 = vrsqrt.pop %v311
  %v344 = vrsqrt.pop %v312
  %v345 = vrsqrt.pop %v313
  %v346 = vrsqrt.pop %v314
  %v347 = vrsqrt.pop %v315
  %v348 = vrsqrt.pop %v316
  %v349 = vrsqrt.pop %v317
  %v350 = vrsqrt.pop %v318
  %v351 = vrsqrt.pop %v319
  %v352 = vrsqrt.pop %v320
  %v353 = vrsqrt.pop %v321
  %v354 = vrsqrt.pop %v322
  %v355 = vrsqrt.pop %v323
  %v356 = vrsqrt.pop %v324
  %v357 = vrsqrt.pop %v325
  %v358 = vrsqrt.pop %v326
  %v359 = vrsqrt.pop %v327
  %v360 = vrsqrt.pop %v328
  %v361 = vrsqrt.pop %v329
  %v362 = vrsqrt.pop %v330
  %v363 = vrsqrt.pop %v331
  %v364 = vrsqrt.pop %v332
  %v365 = vrsqrt.pop %v333
  %v366 = vrsqrt.pop %v334
  %v367 = vmul.f32 %v143, %v335
  %v368 = vmul.f32 %v144, %v336
  %v369 = vmul.f32 %v145, %v337
  %v370 = vmul.f32 %v146, %v338
  %v371 = vmul.f32 %v147, %v339
  %v372 = vmul.f32 %v148, %v340
  %v373 = vmul.f32 %v149, %v341
  %v374 = vmul.f32 %v150, %v342
  %v375 = vmul.f32 %v151, %v343
  %v376 = vmul.f32 %v152, %v344
  %v377 = vmul.f32 %v153, %v345
  %v378 = vmul.f32 %v154, %v346
  %v379 = vmul.f32 %v155, %v347
  %v380 = vmul.f32 %v156, %v348
  %v381 = vmul.f32 %v157, %v349
  %v382 = vmul.f32 %v158, %v350
  %v383 = vmul.f32 %v159, %v351
  %v384 = vmul.f32 %v160, %v352
  %v385 = vmul.f32 %v161, %v353
  %v386 = vmul.f32 %v162, %v354
  %v387 = vmul.f32 %v163, %v355
  %v388 = vmul.f32 %v164, %v356
  %v389 = vmul.f32 %v165, %v357
  %v390 = vmul.f32 %v166, %v358
  %v391 = vmul.f32 %v167, %v359
  %v392 = vmul.f32 %v168, %v360
  %v393 = vmul.f32 %v169, %v361
  %v394 = vmul.f32 %v170, %v362
  %v395 = vmul.f32 %v171, %v363
  %v396 = vmul.f32 %v172, %v364
  %v397 = vmul.f32 %v173, %v365
  %v398 = vmul.f32 %v174, %v366
  %v399 = vld [vmem:[%s1] sm:$0x1]
  %v401 = vlaneseq
  %v402 = vshrl.u32 %v401, 7
  %v403 = vsub.s32 0, %v402
  %v404 = vrot.slane %v399, %v403
  %v406 = vmul.f32 %v367, %v404
  %v407 = vmul.f32 %v368, %v404
  %v408 = vmul.f32 %v369, %v404
  %v409 = vmul.f32 %v370, %v404
  %v410 = vmul.f32 %v371, %v404
  %v411 = vmul.f32 %v372, %v404
  %v412 = vmul.f32 %v373, %v404
  %v413 = vmul.f32 %v374, %v404
  %v414 = vmul.f32 %v375, %v404
  %v415 = vmul.f32 %v376, %v404
  %v416 = vmul.f32 %v377, %v404
  %v417 = vmul.f32 %v378, %v404
  %v418 = vmul.f32 %v379, %v404
  %v419 = vmul.f32 %v380, %v404
  %v420 = vmul.f32 %v381, %v404
  %v421 = vmul.f32 %v382, %v404
  %v422 = vmul.f32 %v383, %v404
  %v423 = vmul.f32 %v384, %v404
  %v424 = vmul.f32 %v385, %v404
  %v425 = vmul.f32 %v386, %v404
  %v426 = vmul.f32 %v387, %v404
  %v427 = vmul.f32 %v388, %v404
  %v428 = vmul.f32 %v389, %v404
  %v429 = vmul.f32 %v390, %v404
  %v430 = vmul.f32 %v391, %v404
  %v431 = vmul.f32 %v392, %v404
  %v432 = vmul.f32 %v393, %v404
  %v433 = vmul.f32 %v394, %v404
  %v434 = vmul.f32 %v395, %v404
  %v435 = vmul.f32 %v396, %v404
  %v436 = vmul.f32 %v397, %v404
  %v437 = vmul.f32 %v398, %v404
  %v438 = vld [vmem:[%s2] sm:$0x1]
  %v440 = vlaneseq
  %v441 = vshrl.u32 %v440, 7
  %v442 = vsub.s32 0, %v441
  %v443 = vrot.slane %v438, %v442
  %v445 = vadd.f32 %v406, %v443
  %v446 = vadd.f32 %v407, %v443
  %v447 = vadd.f32 %v408, %v443
  %v448 = vadd.f32 %v409, %v443
  %v449 = vadd.f32 %v410, %v443
  %v450 = vadd.f32 %v411, %v443
  %v451 = vadd.f32 %v412, %v443
  %v452 = vadd.f32 %v413, %v443
  %v453 = vadd.f32 %v414, %v443
  %v454 = vadd.f32 %v415, %v443
  %v455 = vadd.f32 %v416, %v443
  %v456 = vadd.f32 %v417, %v443
  %v457 = vadd.f32 %v418, %v443
  %v458 = vadd.f32 %v419, %v443
  %v459 = vadd.f32 %v420, %v443
  %v460 = vadd.f32 %v421, %v443
  %v461 = vadd.f32 %v422, %v443
  %v462 = vadd.f32 %v423, %v443
  %v463 = vadd.f32 %v424, %v443
  %v464 = vadd.f32 %v425, %v443
  %v465 = vadd.f32 %v426, %v443
  %v466 = vadd.f32 %v427, %v443
  %v467 = vadd.f32 %v428, %v443
  %v468 = vadd.f32 %v429, %v443
  %v469 = vadd.f32 %v430, %v443
  %v470 = vadd.f32 %v431, %v443
  %v471 = vadd.f32 %v432, %v443
  %v472 = vadd.f32 %v433, %v443
  %v473 = vadd.f32 %v434, %v443
  %v474 = vadd.f32 %v435, %v443
  %v475 = vadd.f32 %v436, %v443
  %v476 = vadd.f32 %v437, %v443
  %v477 = vpack.c.bf16 %v446, %v445
  %v478 = vpack.c.bf16 %v448, %v447
  %v479 = vpack.c.bf16 %v450, %v449
  %v480 = vpack.c.bf16 %v452, %v451
  %v481 = vpack.c.bf16 %v454, %v453
  %v482 = vpack.c.bf16 %v456, %v455
  %v483 = vpack.c.bf16 %v458, %v457
  %v484 = vpack.c.bf16 %v460, %v459
  %v485 = vpack.c.bf16 %v462, %v461
  %v486 = vpack.c.bf16 %v464, %v463
  %v487 = vpack.c.bf16 %v466, %v465
  %v488 = vpack.c.bf16 %v468, %v467
  %v489 = vpack.c.bf16 %v470, %v469
  %v490 = vpack.c.bf16 %v472, %v471
  %v491 = vpack.c.bf16 %v474, %v473
  %v492 = vpack.c.bf16 %v476, %v475
  %v509 = vunpack.c.l.b16 %v477
  %v510 = vunpack.c.h.b16 %v477
  %v511 = vunpack.c.l.b16 %v478
  %v512 = vunpack.c.h.b16 %v478
  %v513 = vunpack.c.l.b16 %v479
  %v514 = vunpack.c.h.b16 %v479
  %v515 = vunpack.c.l.b16 %v480
  %v516 = vunpack.c.h.b16 %v480
  %v517 = vunpack.c.l.b16 %v481
  %v518 = vunpack.c.h.b16 %v481
  %v519 = vunpack.c.l.b16 %v482
  %v520 = vunpack.c.h.b16 %v482
  %v521 = vunpack.c.l.b16 %v483
  %v522 = vunpack.c.h.b16 %v483
  %v523 = vunpack.c.l.b16 %v484
  %v524 = vunpack.c.h.b16 %v484
  %v525 = vunpack.c.l.b16 %v485
  %v526 = vunpack.c.h.b16 %v485
  %v527 = vunpack.c.l.b16 %v486
  %v528 = vunpack.c.h.b16 %v486
  %v529 = vunpack.c.l.b16 %v487
  %v530 = vunpack.c.h.b16 %v487
  %v531 = vunpack.c.l.b16 %v488
  %v532 = vunpack.c.h.b16 %v488
  %v533 = vunpack.c.l.b16 %v489
  %v534 = vunpack.c.h.b16 %v489
  %v535 = vunpack.c.l.b16 %v490
  %v536 = vunpack.c.h.b16 %v490
  %v537 = vunpack.c.l.b16 %v491
  %v538 = vunpack.c.h.b16 %v491
  %v539 = vunpack.c.l.b16 %v492
  %v540 = vunpack.c.h.b16 %v492
  %v541 = vpack.c.b16 %v509, %v509
  %v542 = vpack.c.b16 %v510, %v510
  %v543 = vpack.c.b16 %v511, %v511
  %v544 = vpack.c.b16 %v512, %v512
  %v545 = vpack.c.b16 %v513, %v513
  %v546 = vpack.c.b16 %v514, %v514
  %v547 = vpack.c.b16 %v515, %v515
  %v548 = vpack.c.b16 %v516, %v516
  %v549 = vpack.c.b16 %v517, %v517
  %v550 = vpack.c.b16 %v518, %v518
  %v551 = vpack.c.b16 %v519, %v519
  %v552 = vpack.c.b16 %v520, %v520
  %v553 = vpack.c.b16 %v521, %v521
  %v554 = vpack.c.b16 %v522, %v522
  %v555 = vpack.c.b16 %v523, %v523
  %v556 = vpack.c.b16 %v524, %v524
  %v557 = vpack.c.b16 %v525, %v525
  %v558 = vpack.c.b16 %v526, %v526
  %v559 = vpack.c.b16 %v527, %v527
  %v560 = vpack.c.b16 %v528, %v528
  %v561 = vpack.c.b16 %v529, %v529
  %v562 = vpack.c.b16 %v530, %v530
  %v563 = vpack.c.b16 %v531, %v531
  %v564 = vpack.c.b16 %v532, %v532
  %v565 = vpack.c.b16 %v533, %v533
  %v566 = vpack.c.b16 %v534, %v534
  %v567 = vpack.c.b16 %v535, %v535
  %v568 = vpack.c.b16 %v536, %v536
  %v569 = vpack.c.b16 %v537, %v537
  %v570 = vpack.c.b16 %v538, %v538
  %v571 = vpack.c.b16 %v539, %v539
  %v572 = vpack.c.b16 %v540, %v540
  %605 = vst [vmem:[%s3] sm:$0xf] %v541
  %606 = vst [vmem:[%s3 + $0x4] sm:$0xf] %v542
  %607 = vst [vmem:[%s3 + $0x8] sm:$0xf] %v543
  %608 = vst [vmem:[%s3 + $0xc] sm:$0xf] %v544
  %609 = vst [vmem:[%s3 + $0x10] sm:$0xf] %v545
  %610 = vst [vmem:[%s3 + $0x14] sm:$0xf] %v546
  %611 = vst [vmem:[%s3 + $0x18] sm:$0xf] %v547
  %612 = vst [vmem:[%s3 + $0x1c] sm:$0xf] %v548
  %613 = vst [vmem:[%s3 + $0x20] sm:$0xf] %v549
  %614 = vst [vmem:[%s3 + $0x24] sm:$0xf] %v550
  %615 = vst [vmem:[%s3 + $0x28] sm:$0xf] %v551
  %616 = vst [vmem:[%s3 + $0x2c] sm:$0xf] %v552
  %617 = vst [vmem:[%s3 + $0x30] sm:$0xf] %v553
  %618 = vst [vmem:[%s3 + $0x34] sm:$0xf] %v554
  %619 = vst [vmem:[%s3 + $0x38] sm:$0xf] %v555
  %620 = vst [vmem:[%s3 + $0x3c] sm:$0xf] %v556
  %621 = vst [vmem:[%s3 + $0x40] sm:$0xf] %v557
  %622 = vst [vmem:[%s3 + $0x44] sm:$0xf] %v558
  %623 = vst [vmem:[%s3 + $0x48] sm:$0xf] %v559
  %624 = vst [vmem:[%s3 + $0x4c] sm:$0xf] %v560
  %625 = vst [vmem:[%s3 + $0x50] sm:$0xf] %v561
  %626 = vst [vmem:[%s3 + $0x54] sm:$0xf] %v562
  %627 = vst [vmem:[%s3 + $0x58] sm:$0xf] %v563
  %628 = vst [vmem:[%s3 + $0x5c] sm:$0xf] %v564
  %629 = vst [vmem:[%s3 + $0x60] sm:$0xf] %v565
  %630 = vst [vmem:[%s3 + $0x64] sm:$0xf] %v566
  %631 = vst [vmem:[%s3 + $0x68] sm:$0xf] %v567
  %632 = vst [vmem:[%s3 + $0x6c] sm:$0xf] %v568
  %633 = vst [vmem:[%s3 + $0x70] sm:$0xf] %v569
  %634 = vst [vmem:[%s3 + $0x74] sm:$0xf] %v570
  %635 = vst [vmem:[%s3 + $0x78] sm:$0xf] %v571
  %636 = vst [vmem:[%s3 + $0x7c] sm:$0xf] %v572
  // Predicated region
  $region14: #{relative_transformer.22} parent=0 // pred_check
    _
  $region15: #{relative_transformer.22} parent=0 // pred_check_branch
    %638 = sbr.rel (0) target = $region17
  $region16: #{relative_transformer.22} parent=0 // pred_region
    _
  $region17: #{relative_transformer.22} parent=0 // pred_fallthru
    _
  // Predicated region
  $region18: #{relative_transformer.22} parent=0 // pred_check
    _
  $region19: #{relative_transformer.22} parent=0 // pred_check_branch
    %640 = sbr.rel (0) target = $region21
  $region20: #{relative_transformer.22} parent=0 // pred_region
    _
  $region21: #{relative_transformer.22} parent=0 // pred_fallthru
    _

// kernel: relative_transformer.13
$region0: #{relative_transformer.13}
  #allocation0 [shape = 'u32[]', space=smem, size = 0x4, offset = 0x4, fixed_abs, tag = 'smem constant byte address 0x4 - core index']
  #allocation1 [shape = 'u32[144,128]{1,0:T(1,128)}', space=vmem, size = 0x12000, scoped, tag = 'internal scratch']
  %s0 = inlined_call_operand.vmem [shape: bf16[2,128,384], index: 0, kind: input, shape index: {}, may-alias: {0,1,2}]
  %s1 = inlined_call_operand.vmem [shape: bf16[2,128,384], index: 1, kind: input, shape index: {}, may-alias: {0,1,2}]
  %s2 = inlined_call_operand.vmem [shape: bf16[2,128,384], index: 2, kind: input, shape index: {}, may-alias: {0,1,2}]
  %s3 = inlined_call_operand.vmem [shape: bf16[4,256,32], index: 3, kind: input, shape index: {}]
  %s4 = inlined_call_operand.vmem [shape: bf16[2,128,128], index: 4, kind: output, shape index: {}]
  %s5 = sld [smem:[#allocation0]]
  $region172: #{relative_transformer.13} parent=0
    _
  %s7 = ssub.s32 1, %s5
  %s8 = scalar_select 0, %s7, %s5
  $region1: #{relative_transformer.13} parent=0
    #allocation2 [shape = 'u8[65536]{0}', space=vmem, size = 0x10000, scoped, tag = 'input window, operand 0']
    #allocation3 [shape = 'u8[65536]{0}', space=vmem, size = 0x10000, scoped, tag = 'input window, operand 1']
    #allocation4 [shape = 'u8[65536]{0}', space=vmem, size = 0x10000, scoped, tag = 'input window, operand 2']
    loop: start=0, step=1, limit=4
    $region2: #{relative_transformer.13} parent=1 // loop_pre_header
      _
    $region3: #{relative_transformer.13} parent=1 // loop_header
      %s10 = sphi 0, %s14
      %p11 = scmp.ge.s32.totalorder %s10, 4
      %s17 = sphi 0, %s29
      %s18 = sphi 0, %s25
      %s19 = sphi 0, %s17
      %s20 = sphi 0, %s18
      %s21 = sphi 0, %s19
      %s22 = sphi 0, %s20
      %s34 = sphi 0, %s36
      %s37 = sphi 0, %s34
      %s38 = sphi 0, %s37
      %s54 = sphi 0, %s38
      %s60 = sphi 0, %s62
      %s63 = sphi 0, %s60
      %s64 = sphi 0, %s63
      %s80 = sphi 0, %s64
      %s86 = sphi 0, %s88
      %s89 = sphi 0, %s86
      %s90 = sphi 0, %s89
      %s106 = sphi 0, %s90
      %s110 = sphi 0, %s110
      %s112 = sphi 0, %s110
      %s113 = sphi 0, %s112
      %s127 = sphi 0, %s113
      %s135 = sphi 0, %s137
      %s138 = sphi 0, %s135
      %s139 = sphi 0, %s138
      %s155 = sphi 0, %s139
    $region4: #{relative_transformer.13} parent=1 // loop_header_branch
      %13 = sbr.rel (%p11) target = $region8
    $region5: #{relative_transformer.13} parent=1 // loop_body
      %s15 = ssub.s32 %s10, 1
      %s16 = ssub.s32 %s10, 2
      %s23 = sadd.s32 1, %s18
      %p24 = scmp.ge.s32.totalorder %s23, 1
      %s25 = scalar_select %p24, 0, %s23
      %s26 = sadd.s32 1, %s17
      %s27 = scalar_select %p24, %s26, %s17
      %p28 = scmp.ge.s32.totalorder %s27, 2
      %s29 = scalar_select %p28, 0, %s27
      %s30 = ssub.s32 %s17, %s29
      %s31 = ssub.s32 %s18, %s25
      %s32 = sor.u32 %s30, %s31
      %p33 = scmp.eq.s32.totalorder %s32, 0
      %s35 = sadd.s32 %s34, 1
      %s36 = scalar_select %p33, %s34, %s35
      %p39 = pneg %p33
      %p40 = scmp.eq.s32.totalorder %s10, 1
      %p41 = por %p39, %p40
      %p42 = scmp.ne.s32.totalorder %s34, %s37
      %p43 = scmp.eq.s32.totalorder %s10, 0
      %p44 = por %p42, %p43
      %p45 = scmp.ne.s32.totalorder %s34, %s37
      %p46 = scmp.eq.s32.totalorder %s15, 1
      %p47 = por %p45, %p46
      %p48 = scmp.ne.s32.totalorder %s37, %s38
      %p49 = scmp.eq.s32.totalorder %s15, 0
      %p50 = por %p48, %p49
      %p51 = scmp.ne.s32.totalorder %s37, %s38
      %p52 = scmp.eq.s32.totalorder %s16, 1
      %p53 = por %p51, %p52
      %p55 = scmp.ne.s32.totalorder %s38, %s54
      %p56 = scmp.eq.s32.totalorder %s16, 0
      %p57 = por %p55, %p56
      %s58 = ssub.s32 %s17, %s29
      %p59 = scmp.eq.s32.totalorder %s58, 0
      %s61 = sadd.s32 %s60, 1
      %s62 = scalar_select %p59, %s60, %s61
      %p65 = pneg %p59
      %p66 = scmp.eq.s32.totalorder %s10, 1
      %p67 = por %p65, %p66
      %p68 = scmp.ne.s32.totalorder %s60, %s63
      %p69 = scmp.eq.s32.totalorder %s10, 0
      %p70 = por %p68, %p69
      %p71 = scmp.ne.s32.totalorder %s60, %s63
      %p72 = scmp.eq.s32.totalorder %s15, 1
      %p73 = por %p71, %p72
      %p74 = scmp.ne.s32.totalorder %s63, %s64
      %p75 = scmp.eq.s32.totalorder %s15, 0
      %p76 = por %p74, %p75
      %p77 = scmp.ne.s32.totalorder %s63, %s64
      %p78 = scmp.eq.s32.totalorder %s16, 1
      %p79 = por %p77, %p78
      %p81 = scmp.ne.s32.totalorder %s64, %s80
      %p82 = scmp.eq.s32.totalorder %s16, 0
      %p83 = por %p81, %p82
      %s84 = ssub.s32 %s17, %s29
      %p85 = scmp.eq.s32.totalorder %s84, 0
      %s87 = sadd.s32 %s86, 1
      %s88 = scalar_select %p85, %s86, %s87
      %p91 = pneg %p85
      %p92 = scmp.eq.s32.totalorder %s10, 1
      %p93 = por %p91, %p92
      %p94 = scmp.ne.s32.totalorder %s86, %s89
      %p95 = scmp.eq.s32.totalorder %s10, 0
      %p96 = por %p94, %p95
      %p97 = scmp.ne.s32.totalorder %s86, %s89
      %p98 = scmp.eq.s32.totalorder %s15, 1
      %p99 = por %p97, %p98
      %p100 = scmp.ne.s32.totalorder %s89, %s90
      %p101 = scmp.eq.s32.totalorder %s15, 0
      %p102 = por %p100, %p101
      %p103 = scmp.ne.s32.totalorder %s89, %s90
      %p104 = scmp.eq.s32.totalorder %s16, 1
      %p105 = por %p103, %p104
      %p107 = scmp.ne.s32.totalorder %s90, %s106
      %p108 = scmp.eq.s32.totalorder %s16, 0
      %p109 = por %p107, %p108
      %s111 = sadd.s32 %s110, 1
      %p114 = scmp.eq.s32.totalorder %s10, 1
      %p115 = scmp.ne.s32.totalorder %s110, %s112
      %p116 = scmp.eq.s32.totalorder %s10, 0
      %p117 = por %p115, %p116
      %p118 = scmp.ne.s32.totalorder %s110, %s112
      %p119 = scmp.eq.s32.totalorder %s15, 1
      %p120 = por %p118, %p119
      %p121 = scmp.ne.s32.totalorder %s112, %s113
      %p122 = scmp.eq.s32.totalorder %s15, 0
      %p123 = por %p121, %p122
      %p124 = scmp.ne.s32.totalorder %s112, %s113
      %p125 = scmp.eq.s32.totalorder %s16, 1
      %p126 = por %p124, %p125
      %p128 = scmp.ne.s32.totalorder %s113, %s127
      %p129 = scmp.eq.s32.totalorder %s16, 0
      %p130 = por %p128, %p129
      %s131 = ssub.s32 %s17, %s29
      %s132 = ssub.s32 %s18, %s25
      %s133 = sor.u32 %s131, %s132
      %p134 = scmp.eq.s32.totalorder %s133, 0
      %s136 = sadd.s32 %s135, 1
      %s137 = scalar_select %p134, %s135, %s136
      %p140 = pneg %p134
      %p141 = scmp.eq.s32.totalorder %s10, 1
      %p142 = por %p140, %p141
      %p143 = scmp.ne.s32.totalorder %s135, %s138
      %p144 = scmp.eq.s32.totalorder %s10, 0
      %p145 = por %p143, %p144
      %p146 = scmp.ne.s32.totalorder %s135, %s138
      %p147 = scmp.eq.s32.totalorder %s15, 1
      %p148 = por %p146, %p147
      %p149 = scmp.ne.s32.totalorder %s138, %s139
      %p150 = scmp.eq.s32.totalorder %s15, 0
      %p151 = por %p149, %p150
      %p152 = scmp.ne.s32.totalorder %s138, %s139
      %p153 = scmp.eq.s32.totalorder %s16, 1
      %p154 = por %p152, %p153
      %p156 = scmp.ne.s32.totalorder %s139, %s155
      %p157 = scmp.eq.s32.totalorder %s16, 0
      %p158 = por %p156, %p157
      %p159 = scmp.le.s32.totalorder 1, %s10
      %p160 = scmp.lt.s32.totalorder %s10, 3
      %p161 = pnand %p159, %p160
      %p162 = pneg %p161
      // Predicated region
      $region9: #{relative_transformer.13} parent=5 // pred_check
        _
      $region10: #{relative_transformer.13} parent=5 // pred_check_branch
        %164 = sbr.rel (%p161) target = $region12
      $region11: #{relative_transformer.13} parent=5 // pred_region
        %s165 = ssub.s32 %s10, 1
        // Predicated region
        $region13: #{relative_transformer.13} parent=11 // pred_check
          %p166 = pneg %p123
        $region14: #{relative_transformer.13} parent=11 // pred_check_branch
          %168 = sbr.rel (%p166) target = $region16
        $region15: #{relative_transformer.13} parent=11 // pred_region
          _
        $region16: #{relative_transformer.13} parent=11 // pred_fallthru
          _
      $region12: #{relative_transformer.13} parent=5 // pred_fallthru
        _
      %p169 = scmp.lt.s32.totalorder %s10, 2
      // Predicated region
      $region17: #{relative_transformer.13} parent=5 // pred_check
        %p170 = pneg %p169
      $region18: #{relative_transformer.13} parent=5 // pred_check_branch
        %172 = sbr.rel (%p170) target = $region20
      $region19: #{relative_transformer.13} parent=5 // pred_region
        // Predicated region
        $region21: #{relative_transformer.13} parent=19 // pred_check
          %p173 = pneg %p44
        $region22: #{relative_transformer.13} parent=19 // pred_check_branch
          %175 = sbr.rel (%p173) target = $region24
        $region23: #{relative_transformer.13} parent=19 // pred_region
          %s176 = sand.u32 %s34, 1
          %s177 = sand.u32 %s34, 1
          %s178 = smul.addr %s177, 64
          %s179 = scalar_lea.vmem [#allocation2], %s178
          %s180 = smul.u32 16, %s18
          %s181 = smul.addr %s180, 3
          %s182 = smul.addr %s17, 48
          %s183 = sadd.s32 %s181, %s182
          %s184 = smul.addr %s183, 4
          %s185 = scalar_lea.vmem %s0, %s184
          // Predicated region
          $region25: #{relative_transformer.13} parent=23 // pred_check
            _
          $region26: #{relative_transformer.13} parent=23 // pred_check_branch
            %187 = sbr.rel (0) target = $region28
          $region27: #{relative_transformer.13} parent=23 // pred_region
            // Predicated region
            $region29: #{relative_transformer.13} parent=27 // pred_check
              _
            $region30: #{relative_transformer.13} parent=27 // pred_check_branch
              %189 = sbr.rel target = $region32
            $region31: #{relative_transformer.13} parent=27 // pred_region
              // Predicated region
              $region44: #{relative_transformer.13} parent=31 // pred_check
                _
              $region45: #{relative_transformer.13} parent=31 // pred_check_branch
                %234 = sbr.rel (0) target = $region47
              $region46: #{relative_transformer.13} parent=31 // pred_region
                loop: start=0, step=1, limit=1
                $region48: #{relative_transformer.13} parent=46 // loop_pre_header
                  _
                $region49: #{relative_transformer.13} parent=46 // loop_header
                  %s236 = sphi 0, %s240
                  %p237 = scmp.ge.s32.totalorder %s236, 1
                  %s241 = sphi %s185, %s185
                  %s242 = sphi %s179, %s179
                $region50: #{relative_transformer.13} parent=46 // loop_header_branch
                  %239 = sbr.rel (%p237) target = $region54
                $region51: #{relative_transformer.13} parent=46 // loop_body
                  _
                $region52: #{relative_transformer.13} parent=46 // loop_footer
                  %s240 = sadd.s32 1, %s236
                $region53: #{relative_transformer.13} parent=46 // loop_footer_branch
                  %235 = sbr.rel target = $region49
                $region54: #{relative_transformer.13} parent=46 // loop_exit
                  _
                loop: start=0, step=1, limit=1
                $region55: #{relative_transformer.13} parent=46 // loop_pre_header
                  _
                $region56: #{relative_transformer.13} parent=46 // loop_header
                  %s245 = sphi 0, %s249
                  %p246 = scmp.ge.s32.totalorder %s245, 1
                  %s250 = sphi %s185, %s185
                  %s251 = sphi %s179, %s179
                $region57: #{relative_transformer.13} parent=46 // loop_header_branch
                  %248 = sbr.rel (%p246) target = $region61
                $region58: #{relative_transformer.13} parent=46 // loop_body
                  %v252 = vld [vmem:[%s250] sm:$0xf]
                  %253 = vst [vmem:[%s251] sm:$0xf] %v252
                  %v254 = vld [vmem:[%s250 + $0xc] sm:$0xf]
                  %255 = vst [vmem:[%s251 + $0x4] sm:$0xf] %v254
                  %v256 = vld [vmem:[%s250 + $0x18] sm:$0xf]
                  %257 = vst [vmem:[%s251 + $0x8] sm:$0xf] %v256
                  %v258 = vld [vmem:[%s250 + $0x24] sm:$0xf]
                  %259 = vst [vmem:[%s251 + $0xc] sm:$0xf] %v258
                  %v260 = vld [vmem:[%s250 + $0x30] sm:$0xf]
                  %261 = vst [vmem:[%s251 + $0x10] sm:$0xf] %v260
                  %v262 = vld [vmem:[%s250 + $0x3c] sm:$0xf]
                  %263 = vst [vmem:[%s251 + $0x14] sm:$0xf] %v262
                  %v264 = vld [vmem:[%s250 + $0x48] sm:$0xf]
                  %265 = vst [vmem:[%s251 + $0x18] sm:$0xf] %v264
                  %v266 = vld [vmem:[%s250 + $0x54] sm:$0xf]
                  %267 = vst [vmem:[%s251 + $0x1c] sm:$0xf] %v266
                  %v268 = vld [vmem:[%s250 + $0x60] sm:$0xf]
                  %269 = vst [vmem:[%s251 + $0x20] sm:$0xf] %v268
                  %v270 = vld [vmem:[%s250 + $0x6c] sm:$0xf]
                  %271 = vst [vmem:[%s251 + $0x24] sm:$0xf] %v270
                  %v272 = vld [vmem:[%s250 + $0x78] sm:$0xf]
                  %273 = vst [vmem:[%s251 + $0x28] sm:$0xf] %v272
                  %v274 = vld [vmem:[%s250 + $0x84] sm:$0xf]
                  %275 = vst [vmem:[%s251 + $0x2c] sm:$0xf] %v274
                  %v276 = vld [vmem:[%s250 + $0x90] sm:$0xf]
                  %277 = vst [vmem:[%s251 + $0x30] sm:$0xf] %v276
                  %v278 = vld [vmem:[%s250 + $0x9c] sm:$0xf]
                  %279 = vst [vmem:[%s251 + $0x34] sm:$0xf] %v278
                  %v280 = vld [vmem:[%s250 + $0xa8] sm:$0xf]
                  %281 = vst [vmem:[%s251 + $0x38] sm:$0xf] %v280
                  %v282 = vld [vmem:[%s250 + $0xb4] sm:$0xf]
                  %283 = vst [vmem:[%s251 + $0x3c] sm:$0xf] %v282
                $region59: #{relative_transformer.13} parent=46 // loop_footer
                  %s249 = sadd.s32 1, %s245
                $region60: #{relative_transformer.13} parent=46 // loop_footer_branch
                  %244 = sbr.rel target = $region56
                $region61: #{relative_transformer.13} parent=46 // loop_exit
                  _
              $region47: #{relative_transformer.13} parent=31 // pred_fallthru
                _
            $region32: #{relative_transformer.13} parent=27 // pred_fallthru
              _
            // Predicated region
            $region33: #{relative_transformer.13} parent=27 // pred_check
              _
            $region34: #{relative_transformer.13} parent=27 // pred_check_branch
              %191 = sbr.rel (0) target = $region36
            $region35: #{relative_transformer.13} parent=27 // pred_region
              loop: start=0, step=1, limit=1
              $region37: #{relative_transformer.13} parent=35 // loop_pre_header
                _
              $region38: #{relative_transformer.13} parent=35 // loop_header
                %s194 = sphi 0, %s198
                %p195 = scmp.ge.s32.totalorder %s194, 1
                %s199 = sphi %s185, %s185
                %s200 = sphi %s179, %s179
              $region39: #{relative_transformer.13} parent=35 // loop_header_branch
                %197 = sbr.rel (%p195) target = $region43
              $region40: #{relative_transformer.13} parent=35 // loop_body
                %v201 = vld [vmem:[%s199] sm:$0xf]
                %202 = vst [vmem:[%s200] sm:$0xf] %v201
                %v203 = vld [vmem:[%s199 + $0xc] sm:$0xf]
                %204 = vst [vmem:[%s200 + $0x4] sm:$0xf] %v203
                %v205 = vld [vmem:[%s199 + $0x18] sm:$0xf]
                %206 = vst [vmem:[%s200 + $0x8] sm:$0xf] %v205
                %v207 = vld [vmem:[%s199 + $0x24] sm:$0xf]
                %208 = vst [vmem:[%s200 + $0xc] sm:$0xf] %v207
                %v209 = vld [vmem:[%s199 + $0x30] sm:$0xf]
                %210 = vst [vmem:[%s200 + $0x10] sm:$0xf] %v209
                %v211 = vld [vmem:[%s199 + $0x3c] sm:$0xf]
                %212 = vst [vmem:[%s200 + $0x14] sm:$0xf] %v211
                %v213 = vld [vmem:[%s199 + $0x48] sm:$0xf]
                %214 = vst [vmem:[%s200 + $0x18] sm:$0xf] %v213
                %v215 = vld [vmem:[%s199 + $0x54] sm:$0xf]
                %216 = vst [vmem:[%s200 + $0x1c] sm:$0xf] %v215
                %v217 = vld [vmem:[%s199 + $0x60] sm:$0xf]
                %218 = vst [vmem:[%s200 + $0x20] sm:$0xf] %v217
                %v219 = vld [vmem:[%s199 + $0x6c] sm:$0xf]
                %220 = vst [vmem:[%s200 + $0x24] sm:$0xf] %v219
                %v221 = vld [vmem:[%s199 + $0x78] sm:$0xf]
                %222 = vst [vmem:[%s200 + $0x28] sm:$0xf] %v221
                %v223 = vld [vmem:[%s199 + $0x84] sm:$0xf]
                %224 = vst [vmem:[%s200 + $0x2c] sm:$0xf] %v223
                %v225 = vld [vmem:[%s199 + $0x90] sm:$0xf]
                %226 = vst [vmem:[%s200 + $0x30] sm:$0xf] %v225
                %v227 = vld [vmem:[%s199 + $0x9c] sm:$0xf]
                %228 = vst [vmem:[%s200 + $0x34] sm:$0xf] %v227
                %v229 = vld [vmem:[%s199 + $0xa8] sm:$0xf]
                %230 = vst [vmem:[%s200 + $0x38] sm:$0xf] %v229
                %v231 = vld [vmem:[%s199 + $0xb4] sm:$0xf]
                %232 = vst [vmem:[%s200 + $0x3c] sm:$0xf] %v231
              $region41: #{relative_transformer.13} parent=35 // loop_footer
                %s198 = sadd.s32 1, %s194
              $region42: #{relative_transformer.13} parent=35 // loop_footer_branch
                %193 = sbr.rel target = $region38
              $region43: #{relative_transformer.13} parent=35 // loop_exit
                _
            $region36: #{relative_transformer.13} parent=27 // pred_fallthru
              _
          $region28: #{relative_transformer.13} parent=23 // pred_fallthru
            _
          %284 = vnop
        $region24: #{relative_transformer.13} parent=19 // pred_fallthru
          _
        // Predicated region
        $region62: #{relative_transformer.13} parent=19 // pred_check
          %p285 = pneg %p70
        $region63: #{relative_transformer.13} parent=19 // pred_check_branch
          %287 = sbr.rel (%p285) target = $region65
        $region64: #{relative_transformer.13} parent=19 // pred_region
          %s288 = sand.u32 %s60, 1
          %s289 = sand.u32 %s60, 1
          %s290 = smul.addr %s289, 64
          %s291 = scalar_lea.vmem [#allocation3], %s290
          %s292 = smul.addr %s17, 48
          %s293 = sadd.s32 1, %s292
          %s294 = smul.addr %s293, 4
          %s295 = scalar_lea.vmem %s1, %s294
          // Predicated region
          $region66: #{relative_transformer.13} parent=64 // pred_check
            _
          $region67: #{relative_transformer.13} parent=64 // pred_check_branch
            %297 = sbr.rel (0) target = $region69
          $region68: #{relative_transformer.13} parent=64 // pred_region
            // Predicated region
            $region70: #{relative_transformer.13} parent=68 // pred_check
              _
            $region71: #{relative_transformer.13} parent=68 // pred_check_branch
              %299 = sbr.rel target = $region73
            $region72: #{relative_transformer.13} parent=68 // pred_region
              // Predicated region
              $region85: #{relative_transformer.13} parent=72 // pred_check
                _
              $region86: #{relative_transformer.13} parent=72 // pred_check_branch
                %344 = sbr.rel (0) target = $region88
              $region87: #{relative_transformer.13} parent=72 // pred_region
                loop: start=0, step=1, limit=1
                $region89: #{relative_transformer.13} parent=87 // loop_pre_header
                  _
                $region90: #{relative_transformer.13} parent=87 // loop_header
                  %s346 = sphi 0, %s350
                  %p347 = scmp.ge.s32.totalorder %s346, 1
                  %s351 = sphi %s295, %s295
                  %s352 = sphi %s291, %s291
                $region91: #{relative_transformer.13} parent=87 // loop_header_branch
                  %349 = sbr.rel (%p347) target = $region95
                $region92: #{relative_transformer.13} parent=87 // loop_body
                  _
                $region93: #{relative_transformer.13} parent=87 // loop_footer
                  %s350 = sadd.s32 1, %s346
                $region94: #{relative_transformer.13} parent=87 // loop_footer_branch
                  %345 = sbr.rel target = $region90
                $region95: #{relative_transformer.13} parent=87 // loop_exit
                  _
                loop: start=0, step=1, limit=1
                $region96: #{relative_transformer.13} parent=87 // loop_pre_header
                  _
                $region97: #{relative_transformer.13} parent=87 // loop_header
                  %s355 = sphi 0, %s359
                  %p356 = scmp.ge.s32.totalorder %s355, 1
                  %s360 = sphi %s295, %s295
                  %s361 = sphi %s291, %s291
                $region98: #{relative_transformer.13} parent=87 // loop_header_branch
                  %358 = sbr.rel (%p356) target = $region102
                $region99: #{relative_transformer.13} parent=87 // loop_body
                  %v362 = vld [vmem:[%s360] sm:$0xf]
                  %363 = vst [vmem:[%s361] sm:$0xf] %v362
                  %v364 = vld [vmem:[%s360 + $0xc] sm:$0xf]
                  %365 = vst [vmem:[%s361 + $0x4] sm:$0xf] %v364
                  %v366 = vld [vmem:[%s360 + $0x18] sm:$0xf]
                  %367 = vst [vmem:[%s361 + $0x8] sm:$0xf] %v366
                  %v368 = vld [vmem:[%s360 + $0x24] sm:$0xf]
                  %369 = vst [vmem:[%s361 + $0xc] sm:$0xf] %v368
                  %v370 = vld [vmem:[%s360 + $0x30] sm:$0xf]
                  %371 = vst [vmem:[%s361 + $0x10] sm:$0xf] %v370
                  %v372 = vld [vmem:[%s360 + $0x3c] sm:$0xf]
                  %373 = vst [vmem:[%s361 + $0x14] sm:$0xf] %v372
                  %v374 = vld [vmem:[%s360 + $0x48] sm:$0xf]
                  %375 = vst [vmem:[%s361 + $0x18] sm:$0xf] %v374
                  %v376 = vld [vmem:[%s360 + $0x54] sm:$0xf]
                  %377 = vst [vmem:[%s361 + $0x1c] sm:$0xf] %v376
                  %v378 = vld [vmem:[%s360 + $0x60] sm:$0xf]
                  %379 = vst [vmem:[%s361 + $0x20] sm:$0xf] %v378
                  %v380 = vld [vmem:[%s360 + $0x6c] sm:$0xf]
                  %381 = vst [vmem:[%s361 + $0x24] sm:$0xf] %v380
                  %v382 = vld [vmem:[%s360 + $0x78] sm:$0xf]
                  %383 = vst [vmem:[%s361 + $0x28] sm:$0xf] %v382
                  %v384 = vld [vmem:[%s360 + $0x84] sm:$0xf]
                  %385 = vst [vmem:[%s361 + $0x2c] sm:$0xf] %v384
                  %v386 = vld [vmem:[%s360 + $0x90] sm:$0xf]
                  %387 = vst [vmem:[%s361 + $0x30] sm:$0xf] %v386
                  %v388 = vld [vmem:[%s360 + $0x9c] sm:$0xf]
                  %389 = vst [vmem:[%s361 + $0x34] sm:$0xf] %v388
                  %v390 = vld [vmem:[%s360 + $0xa8] sm:$0xf]
                  %391 = vst [vmem:[%s361 + $0x38] sm:$0xf] %v390
                  %v392 = vld [vmem:[%s360 + $0xb4] sm:$0xf]
                  %393 = vst [vmem:[%s361 + $0x3c] sm:$0xf] %v392
                $region100: #{relative_transformer.13} parent=87 // loop_footer
                  %s359 = sadd.s32 1, %s355
                $region101: #{relative_transformer.13} parent=87 // loop_footer_branch
                  %354 = sbr.rel target = $region97
                $region102: #{relative_transformer.13} parent=87 // loop_exit
                  _
              $region88: #{relative_transformer.13} parent=72 // pred_fallthru
                _
            $region73: #{relative_transformer.13} parent=68 // pred_fallthru
              _
            // Predicated region
            $region74: #{relative_transformer.13} parent=68 // pred_check
              _
            $region75: #{relative_transformer.13} parent=68 // pred_check_branch
              %301 = sbr.rel (0) target = $region77
            $region76: #{relative_transformer.13} parent=68 // pred_region
              loop: start=0, step=1, limit=1
              $region78: #{relative_transformer.13} parent=76 // loop_pre_header
                _
              $region79: #{relative_transformer.13} parent=76 // loop_header
                %s304 = sphi 0, %s308
                %p305 = scmp.ge.s32.totalorder %s304, 1
                %s309 = sphi %s295, %s295
                %s310 = sphi %s291, %s291
              $region80: #{relative_transformer.13} parent=76 // loop_header_branch
                %307 = sbr.rel (%p305) target = $region84
              $region81: #{relative_transformer.13} parent=76 // loop_body
                %v311 = vld [vmem:[%s309] sm:$0xf]
                %312 = vst [vmem:[%s310] sm:$0xf] %v311
                %v313 = vld [vmem:[%s309 + $0xc] sm:$0xf]
                %314 = vst [vmem:[%s310 + $0x4] sm:$0xf] %v313
                %v315 = vld [vmem:[%s309 + $0x18] sm:$0xf]
                %316 = vst [vmem:[%s310 + $0x8] sm:$0xf] %v315
                %v317 = vld [vmem:[%s309 + $0x24] sm:$0xf]
                %318 = vst [vmem:[%s310 + $0xc] sm:$0xf] %v317
                %v319 = vld [vmem:[%s309 + $0x30] sm:$0xf]
                %320 = vst [vmem:[%s310 + $0x10] sm:$0xf] %v319
                %v321 = vld [vmem:[%s309 + $0x3c] sm:$0xf]
                %322 = vst [vmem:[%s310 + $0x14] sm:$0xf] %v321
                %v323 = vld [vmem:[%s309 + $0x48] sm:$0xf]
                %324 = vst [vmem:[%s310 + $0x18] sm:$0xf] %v323
                %v325 = vld [vmem:[%s309 + $0x54] sm:$0xf]
                %326 = vst [vmem:[%s310 + $0x1c] sm:$0xf] %v325
                %v327 = vld [vmem:[%s309 + $0x60] sm:$0xf]
                %328 = vst [vmem:[%s310 + $0x20] sm:$0xf] %v327
                %v329 = vld [vmem:[%s309 + $0x6c] sm:$0xf]
                %330 = vst [vmem:[%s310 + $0x24] sm:$0xf] %v329
                %v331 = vld [vmem:[%s309 + $0x78] sm:$0xf]
                %332 = vst [vmem:[%s310 + $0x28] sm:$0xf] %v331
                %v333 = vld [vmem:[%s309 + $0x84] sm:$0xf]
                %334 = vst [vmem:[%s310 + $0x2c] sm:$0xf] %v333
                %v335 = vld [vmem:[%s309 + $0x90] sm:$0xf]
                %336 = vst [vmem:[%s310 + $0x30] sm:$0xf] %v335
                %v337 = vld [vmem:[%s309 + $0x9c] sm:$0xf]
                %338 = vst [vmem:[%s310 + $0x34] sm:$0xf] %v337
                %v339 = vld [vmem:[%s309 + $0xa8] sm:$0xf]
                %340 = vst [vmem:[%s310 + $0x38] sm:$0xf] %v339
                %v341 = vld [vmem:[%s309 + $0xb4] sm:$0xf]
                %342 = vst [vmem:[%s310 + $0x3c] sm:$0xf] %v341
              $region82: #{relative_transformer.13} parent=76 // loop_footer
                %s308 = sadd.s32 1, %s304
              $region83: #{relative_transformer.13} parent=76 // loop_footer_branch
                %303 = sbr.rel target = $region79
              $region84: #{relative_transformer.13} parent=76 // loop_exit
                _
            $region77: #{relative_transformer.13} parent=68 // pred_fallthru
              _
          $region69: #{relative_transformer.13} parent=64 // pred_fallthru
            _
          %394 = vnop
        $region65: #{relative_transformer.13} parent=19 // pred_fallthru
          _
        // Predicated region
        $region103: #{relative_transformer.13} parent=19 // pred_check
          %p395 = pneg %p96
        $region104: #{relative_transformer.13} parent=19 // pred_check_branch
          %397 = sbr.rel (%p395) target = $region106
        $region105: #{relative_transformer.13} parent=19 // pred_region
          %s398 = sand.u32 %s86, 1
          %s399 = sand.u32 %s86, 1
          %s400 = smul.addr %s399, 64
          %s401 = scalar_lea.vmem [#allocation4], %s400
          %s402 = smul.addr %s17, 48
          %s403 = sadd.s32 2, %s402
          %s404 = smul.addr %s403, 4
          %s405 = scalar_lea.vmem %s2, %s404
          // Predicated region
          $region107: #{relative_transformer.13} parent=105 // pred_check
            _
          $region108: #{relative_transformer.13} parent=105 // pred_check_branch
            %407 = sbr.rel (0) target = $region110
          $region109: #{relative_transformer.13} parent=105 // pred_region
            // Predicated region
            $region111: #{relative_transformer.13} parent=109 // pred_check
              _
            $region112: #{relative_transformer.13} parent=109 // pred_check_branch
              %409 = sbr.rel target = $region114
            $region113: #{relative_transformer.13} parent=109 // pred_region
              // Predicated region
              $region126: #{relative_transformer.13} parent=113 // pred_check
                _
              $region127: #{relative_transformer.13} parent=113 // pred_check_branch
                %454 = sbr.rel (0) target = $region129
              $region128: #{relative_transformer.13} parent=113 // pred_region
                loop: start=0, step=1, limit=1
                $region130: #{relative_transformer.13} parent=128 // loop_pre_header
                  _
                $region131: #{relative_transformer.13} parent=128 // loop_header
                  %s456 = sphi 0, %s460
                  %p457 = scmp.ge.s32.totalorder %s456, 1
                  %s461 = sphi %s405, %s405
                  %s462 = sphi %s401, %s401
                $region132: #{relative_transformer.13} parent=128 // loop_header_branch
                  %459 = sbr.rel (%p457) target = $region136
                $region133: #{relative_transformer.13} parent=128 // loop_body
                  _
                $region134: #{relative_transformer.13} parent=128 // loop_footer
                  %s460 = sadd.s32 1, %s456
                $region135: #{relative_transformer.13} parent=128 // loop_footer_branch
                  %455 = sbr.rel target = $region131
                $region136: #{relative_transformer.13} parent=128 // loop_exit
                  _
                loop: start=0, step=1, limit=1
                $region137: #{relative_transformer.13} parent=128 // loop_pre_header
                  _
                $region138: #{relative_transformer.13} parent=128 // loop_header
                  %s465 = sphi 0, %s469
                  %p466 = scmp.ge.s32.totalorder %s465, 1
                  %s470 = sphi %s405, %s405
                  %s471 = sphi %s401, %s401
                $region139: #{relative_transformer.13} parent=128 // loop_header_branch
                  %468 = sbr.rel (%p466) target = $region143
                $region140: #{relative_transformer.13} parent=128 // loop_body
                  %v472 = vld [vmem:[%s470] sm:$0xf]
                  %473 = vst [vmem:[%s471] sm:$0xf] %v472
                  %v474 = vld [vmem:[%s470 + $0xc] sm:$0xf]
                  %475 = vst [vmem:[%s471 + $0x4] sm:$0xf] %v474
                  %v476 = vld [vmem:[%s470 + $0x18] sm:$0xf]
                  %477 = vst [vmem:[%s471 + $0x8] sm:$0xf] %v476
                  %v478 = vld [vmem:[%s470 + $0x24] sm:$0xf]
                  %479 = vst [vmem:[%s471 + $0xc] sm:$0xf] %v478
                  %v480 = vld [vmem:[%s470 + $0x30] sm:$0xf]
                  %481 = vst [vmem:[%s471 + $0x10] sm:$0xf] %v480
                  %v482 = vld [vmem:[%s470 + $0x3c] sm:$0xf]
                  %483 = vst [vmem:[%s471 + $0x14] sm:$0xf] %v482
                  %v484 = vld [vmem:[%s470 + $0x48] sm:$0xf]
                  %485 = vst [vmem:[%s471 + $0x18] sm:$0xf] %v484
                  %v486 = vld [vmem:[%s470 + $0x54] sm:$0xf]
                  %487 = vst [vmem:[%s471 + $0x1c] sm:$0xf] %v486
                  %v488 = vld [vmem:[%s470 + $0x60] sm:$0xf]
                  %489 = vst [vmem:[%s471 + $0x20] sm:$0xf] %v488
                  %v490 = vld [vmem:[%s470 + $0x6c] sm:$0xf]
                  %491 = vst [vmem:[%s471 + $0x24] sm:$0xf] %v490
                  %v492 = vld [vmem:[%s470 + $0x78] sm:$0xf]
                  %493 = vst [vmem:[%s471 + $0x28] sm:$0xf] %v492
                  %v494 = vld [vmem:[%s470 + $0x84] sm:$0xf]
                  %495 = vst [vmem:[%s471 + $0x2c] sm:$0xf] %v494
                  %v496 = vld [vmem:[%s470 + $0x90] sm:$0xf]
                  %497 = vst [vmem:[%s471 + $0x30] sm:$0xf] %v496
                  %v498 = vld [vmem:[%s470 + $0x9c] sm:$0xf]
                  %499 = vst [vmem:[%s471 + $0x34] sm:$0xf] %v498
                  %v500 = vld [vmem:[%s470 + $0xa8] sm:$0xf]
                  %501 = vst [vmem:[%s471 + $0x38] sm:$0xf] %v500
                  %v502 = vld [vmem:[%s470 + $0xb4] sm:$0xf]
                  %503 = vst [vmem:[%s471 + $0x3c] sm:$0xf] %v502
                $region141: #{relative_transformer.13} parent=128 // loop_footer
                  %s469 = sadd.s32 1, %s465
                $region142: #{relative_transformer.13} parent=128 // loop_footer_branch
                  %464 = sbr.rel target = $region138
                $region143: #{relative_transformer.13} parent=128 // loop_exit
                  _
              $region129: #{relative_transformer.13} parent=113 // pred_fallthru
                _
            $region114: #{relative_transformer.13} parent=109 // pred_fallthru
              _
            // Predicated region
            $region115: #{relative_transformer.13} parent=109 // pred_check
              _
            $region116: #{relative_transformer.13} parent=109 // pred_check_branch
              %411 = sbr.rel (0) target = $region118
            $region117: #{relative_transformer.13} parent=109 // pred_region
              loop: start=0, step=1, limit=1
              $region119: #{relative_transformer.13} parent=117 // loop_pre_header
                _
              $region120: #{relative_transformer.13} parent=117 // loop_header
                %s414 = sphi 0, %s418
                %p415 = scmp.ge.s32.totalorder %s414, 1
                %s419 = sphi %s405, %s405
                %s420 = sphi %s401, %s401
              $region121: #{relative_transformer.13} parent=117 // loop_header_branch
                %417 = sbr.rel (%p415) target = $region125
              $region122: #{relative_transformer.13} parent=117 // loop_body
                %v421 = vld [vmem:[%s419] sm:$0xf]
                %422 = vst [vmem:[%s420] sm:$0xf] %v421
                %v423 = vld [vmem:[%s419 + $0xc] sm:$0xf]
                %424 = vst [vmem:[%s420 + $0x4] sm:$0xf] %v423
                %v425 = vld [vmem:[%s419 + $0x18] sm:$0xf]
                %426 = vst [vmem:[%s420 + $0x8] sm:$0xf] %v425
                %v427 = vld [vmem:[%s419 + $0x24] sm:$0xf]
                %428 = vst [vmem:[%s420 + $0xc] sm:$0xf] %v427
                %v429 = vld [vmem:[%s419 + $0x30] sm:$0xf]
                %430 = vst [vmem:[%s420 + $0x10] sm:$0xf] %v429
                %v431 = vld [vmem:[%s419 + $0x3c] sm:$0xf]
                %432 = vst [vmem:[%s420 + $0x14] sm:$0xf] %v431
                %v433 = vld [vmem:[%s419 + $0x48] sm:$0xf]
                %434 = vst [vmem:[%s420 + $0x18] sm:$0xf] %v433
                %v435 = vld [vmem:[%s419 + $0x54] sm:$0xf]
                %436 = vst [vmem:[%s420 + $0x1c] sm:$0xf] %v435
                %v437 = vld [vmem:[%s419 + $0x60] sm:$0xf]
                %438 = vst [vmem:[%s420 + $0x20] sm:$0xf] %v437
                %v439 = vld [vmem:[%s419 + $0x6c] sm:$0xf]
                %440 = vst [vmem:[%s420 + $0x24] sm:$0xf] %v439
                %v441 = vld [vmem:[%s419 + $0x78] sm:$0xf]
                %442 = vst [vmem:[%s420 + $0x28] sm:$0xf] %v441
                %v443 = vld [vmem:[%s419 + $0x84] sm:$0xf]
                %444 = vst [vmem:[%s420 + $0x2c] sm:$0xf] %v443
                %v445 = vld [vmem:[%s419 + $0x90] sm:$0xf]
                %446 = vst [vmem:[%s420 + $0x30] sm:$0xf] %v445
                %v447 = vld [vmem:[%s419 + $0x9c] sm:$0xf]
                %448 = vst [vmem:[%s420 + $0x34] sm:$0xf] %v447
                %v449 = vld [vmem:[%s419 + $0xa8] sm:$0xf]
                %450 = vst [vmem:[%s420 + $0x38] sm:$0xf] %v449
                %v451 = vld [vmem:[%s419 + $0xb4] sm:$0xf]
                %452 = vst [vmem:[%s420 + $0x3c] sm:$0xf] %v451
              $region123: #{relative_transformer.13} parent=117 // loop_footer
                %s418 = sadd.s32 1, %s414
              $region124: #{relative_transformer.13} parent=117 // loop_footer_branch
                %413 = sbr.rel target = $region120
              $region125: #{relative_transformer.13} parent=117 // loop_exit
                _
            $region118: #{relative_transformer.13} parent=109 // pred_fallthru
              _
          $region110: #{relative_transformer.13} parent=105 // pred_fallthru
            _
          %504 = vnop
        $region106: #{relative_transformer.13} parent=19 // pred_fallthru
          _
      $region20: #{relative_transformer.13} parent=5 // pred_fallthru
        _
      %p505 = scmp.le.s32.totalorder 1, %s10
      %p506 = scmp.lt.s32.totalorder %s10, 3
      %p507 = pnand %p505, %p506
      %p508 = pneg %p507
      // Predicated region
      $region144: #{relative_transformer.13} parent=5 // pred_check
        _
      $region145: #{relative_transformer.13} parent=5 // pred_check_branch
        %510 = sbr.rel (%p507) target = $region147
      $region146: #{relative_transformer.13} parent=5 // pred_region
        %s511 = ssub.s32 %s10, 1
        %s512 = sand.u32 %s37, 1
        %s513 = sand.u32 %s37, 1
        %s514 = smul.addr %s513, 64
        %s515 = scalar_lea.vmem [#allocation2], %s514
        // Predicated region
        $region148: #{relative_transformer.13} parent=146 // pred_check
          %p516 = pneg %p50
        $region149: #{relative_transformer.13} parent=146 // pred_check_branch
          %518 = sbr.rel (%p516) target = $region151
        $region150: #{relative_transformer.13} parent=146 // pred_region
          _
        $region151: #{relative_transformer.13} parent=146 // pred_fallthru
          _
        %s519 = sand.u32 %s63, 1
        %s520 = sand.u32 %s63, 1
        %s521 = smul.addr %s520, 64
        %s522 = scalar_lea.vmem [#allocation3], %s521
        // Predicated region
        $region152: #{relative_transformer.13} parent=146 // pred_check
          %p523 = pneg %p76
        $region153: #{relative_transformer.13} parent=146 // pred_check_branch
          %525 = sbr.rel (%p523) target = $region155
        $region154: #{relative_transformer.13} parent=146 // pred_region
          _
        $region155: #{relative_transformer.13} parent=146 // pred_fallthru
          _
        %s526 = sand.u32 %s89, 1
        %s527 = sand.u32 %s89, 1
        %s528 = smul.addr %s527, 64
        %s529 = scalar_lea.vmem [#allocation4], %s528
        // Predicated region
        $region156: #{relative_transformer.13} parent=146 // pred_check
          %p530 = pneg %p102
        $region157: #{relative_transformer.13} parent=146 // pred_check_branch
          %532 = sbr.rel (%p530) target = $region159
        $region158: #{relative_transformer.13} parent=146 // pred_region
          _
        $region159: #{relative_transformer.13} parent=146 // pred_fallthru
          _
        %s533 = sand.u32 %s37, 1
        %s534 = sand.u32 %s37, 1
        %s535 = smul.addr %s534, 64
        %s536 = scalar_lea.vmem [#allocation2], %s535
        %p537 = pneg %p50
        %p538 = pneg %p47
        %s539 = sand.u32 %s63, 1
        %s540 = sand.u32 %s63, 1
        %s541 = smul.addr %s540, 64
        %s542 = scalar_lea.vmem [#allocation3], %s541
        %p543 = pneg %p76
        %p544 = pneg %p73
        %s545 = sand.u32 %s89, 1
        %s546 = sand.u32 %s89, 1
        %s547 = smul.addr %s546, 64
        %s548 = scalar_lea.vmem [#allocation4], %s547
        %p549 = pneg %p102
        %p550 = pneg %p99
        %p551 = pneg %p123
        %p552 = pneg %p120
        %p553 = pneg %p151
        %p554 = pneg %p148
        %s555 = smul.u32 16, %s20
        %p556 = scmp.lt.s32.totalorder %s19, 1
        %s557 = scalar_select %p556, %s19, 1
        %p558 = scmp.lt.s32.totalorder %s555, 15
        %s559 = scalar_select %p558, %s555, 15
        %s560 = smul.addr %s557, 16
        %s561 = sadd.s32 %s559, %s560
        %s562 = smul.addr %s561, 4
        %s563 = scalar_lea.vmem %s4, %s562
        %s564 = smul.u32 16, %s20
        %s565 = smul.u32 16, %s20
        %p566 = scmp.lt.s32.totalorder %s19, 1
        %s567 = scalar_select %p566, %s19, 1
        %p568 = scmp.lt.s32.totalorder %s565, 15
        %s569 = scalar_select %p568, %s565, 15
        %s570 = smul.addr %s567, 16
        %s571 = sadd.s32 %s569, %s570
        %s572 = smul.addr %s571, 4
        %s573 = scalar_lea.vmem %s4, %s572
        %s574 = smul.u32 16, %s20
        %s576 = smul.u32 %s20, 128
        %v577 = vlaneseq
        %v578 = vshrl.u32 %v577, 7
        %v579 = vadd.s32 %v578, 8
        %v580 = vadd.s32 %v578, 16
        %v581 = vadd.s32 %v578, 24
        %v582 = vadd.s32 %v578, 32
        %v583 = vadd.s32 %v578, 40
        %v584 = vadd.s32 %v578, 48
        %v585 = vadd.s32 %v578, 56
        %v586 = vadd.s32 %v578, 64
        %v587 = vadd.s32 %v578, 72
        %v588 = vadd.s32 %v578, 80
        %v589 = vadd.s32 %v578, 88
        %v590 = vadd.s32 %v578, 96
        %v591 = vadd.s32 %v578, 104
        %v592 = vadd.s32 %v578, 112
        %v593 = vadd.s32 %v578, 120
        %v594 = vstv %s576
        %v595 = vadd.s32 %v594, %v578
        %v596 = vadd.s32 %v594, %v579
        %v597 = vadd.s32 %v594, %v580
        %v598 = vadd.s32 %v594, %v581
        %v599 = vadd.s32 %v594, %v582
        %v600 = vadd.s32 %v594, %v583
        %v601 = vadd.s32 %v594, %v584
        %v602 = vadd.s32 %v594, %v585
        %v603 = vadd.s32 %v594, %v586
        %v604 = vadd.s32 %v594, %v587
        %v605 = vadd.s32 %v594, %v588
        %v606 = vadd.s32 %v594, %v589
        %v607 = vadd.s32 %v594, %v590
        %v608 = vadd.s32 %v594, %v591
        %v609 = vadd.s32 %v594, %v592
        %v610 = vadd.s32 %v594, %v593
        %v611 = vlaneseq
        %v612 = vand.u32 %v611, 127
        %vm613 = vcmp.le.s32.totalorder %v612, %v595
        %vm614 = vcmp.le.s32.totalorder %v612, %v596
        %vm615 = vcmp.le.s32.totalorder %v612, %v597
        %vm616 = vcmp.le.s32.totalorder %v612, %v598
        %vm617 = vcmp.le.s32.totalorder %v612, %v599
        %vm618 = vcmp.le.s32.totalorder %v612, %v600
        %vm619 = vcmp.le.s32.totalorder %v612, %v601
        %vm620 = vcmp.le.s32.totalorder %v612, %v602
        %vm621 = vcmp.le.s32.totalorder %v612, %v603
        %vm622 = vcmp.le.s32.totalorder %v612, %v604
        %vm623 = vcmp.le.s32.totalorder %v612, %v605
        %vm624 = vcmp.le.s32.totalorder %v612, %v606
        %vm625 = vcmp.le.s32.totalorder %v612, %v607
        %vm626 = vcmp.le.s32.totalorder %v612, %v608
        %vm627 = vcmp.le.s32.totalorder %v612, %v609
        %vm628 = vcmp.le.s32.totalorder %v612, %v610
        %v629 = vsub.s32 127, %v595
        %v630 = vsub.s32 127, %v596
        %v631 = vsub.s32 127, %v597
        %v632 = vsub.s32 127, %v598
        %v633 = vsub.s32 127, %v599
        %v634 = vsub.s32 127, %v600
        %v635 = vsub.s32 127, %v601
        %v636 = vsub.s32 127, %v602
        %v637 = vsub.s32 127, %v603
        %v638 = vsub.s32 127, %v604
        %v639 = vsub.s32 127, %v605
        %v640 = vsub.s32 127, %v606
        %v641 = vsub.s32 127, %v607
        %v642 = vsub.s32 127, %v608
        %v643 = vsub.s32 127, %v609
        %v644 = vsub.s32 127, %v610
        %v645 = vand.u32 %v629, 1
        %v646 = vand.u32 %v630, 1
        %v647 = vand.u32 %v631, 1
        %v648 = vand.u32 %v632, 1
        %v649 = vand.u32 %v633, 1
        %v650 = vand.u32 %v634, 1
        %v651 = vand.u32 %v635, 1
        %v652 = vand.u32 %v636, 1
        %v653 = vand.u32 %v637, 1
        %v654 = vand.u32 %v638, 1
        %v655 = vand.u32 %v639, 1
        %v656 = vand.u32 %v640, 1
        %v657 = vand.u32 %v641, 1
        %v658 = vand.u32 %v642, 1
        %v659 = vand.u32 %v643, 1
        %v660 = vand.u32 %v644, 1
        %vm661 = vcmp.ne.s32.totalorder %v645, 0
        %vm662 = vcmp.ne.s32.totalorder %v646, 0
        %vm663 = vcmp.ne.s32.totalorder %v647, 0
        %vm664 = vcmp.ne.s32.totalorder %v648, 0
        %vm665 = vcmp.ne.s32.totalorder %v649, 0
        %vm666 = vcmp.ne.s32.totalorder %v650, 0
        %vm667 = vcmp.ne.s32.totalorder %v651, 0
        %vm668 = vcmp.ne.s32.totalorder %v652, 0
        %vm669 = vcmp.ne.s32.totalorder %v653, 0
        %vm670 = vcmp.ne.s32.totalorder %v654, 0
        %vm671 = vcmp.ne.s32.totalorder %v655, 0
        %vm672 = vcmp.ne.s32.totalorder %v656, 0
        %vm673 = vcmp.ne.s32.totalorder %v657, 0
        %vm674 = vcmp.ne.s32.totalorder %v658, 0
        %vm675 = vcmp.ne.s32.totalorder %v659, 0
        %vm676 = vcmp.ne.s32.totalorder %v660, 0
        %v677 = vand.u32 %v629, 2
        %v678 = vand.u32 %v630, 2
        %v679 = vand.u32 %v631, 2
        %v680 = vand.u32 %v632, 2
        %v681 = vand.u32 %v633, 2
        %v682 = vand.u32 %v634, 2
        %v683 = vand.u32 %v635, 2
        %v684 = vand.u32 %v636, 2
        %v685 = vand.u32 %v637, 2
        %v686 = vand.u32 %v638, 2
        %v687 = vand.u32 %v639, 2
        %v688 = vand.u32 %v640, 2
        %v689 = vand.u32 %v641, 2
        %v690 = vand.u32 %v642, 2
        %v691 = vand.u32 %v643, 2
        %v692 = vand.u32 %v644, 2
        %vm693 = vcmp.ne.s32.totalorder %v677, 0
        %vm694 = vcmp.ne.s32.totalorder %v678, 0
        %vm695 = vcmp.ne.s32.totalorder %v679, 0
        %vm696 = vcmp.ne.s32.totalorder %v680, 0
        %vm697 = vcmp.ne.s32.totalorder %v681, 0
        %vm698 = vcmp.ne.s32.totalorder %v682, 0
        %vm699 = vcmp.ne.s32.totalorder %v683, 0
        %vm700 = vcmp.ne.s32.totalorder %v684, 0
        %vm701 = vcmp.ne.s32.totalorder %v685, 0
        %vm702 = vcmp.ne.s32.totalorder %v686, 0
        %vm703 = vcmp.ne.s32.totalorder %v687, 0
        %vm704 = vcmp.ne.s32.totalorder %v688, 0
        %vm705 = vcmp.ne.s32.totalorder %v689, 0
        %vm706 = vcmp.ne.s32.totalorder %v690, 0
        %vm707 = vcmp.ne.s32.totalorder %v691, 0
        %vm708 = vcmp.ne.s32.totalorder %v692, 0
        %v709 = vand.u32 %v629, 4
        %v710 = vand.u32 %v630, 4
        %v711 = vand.u32 %v631, 4
        %v712 = vand.u32 %v632, 4
        %v713 = vand.u32 %v633, 4
        %v714 = vand.u32 %v634, 4
        %v715 = vand.u32 %v635, 4
        %v716 = vand.u32 %v636, 4
        %v717 = vand.u32 %v637, 4
        %v718 = vand.u32 %v638, 4
        %v719 = vand.u32 %v639, 4
        %v720 = vand.u32 %v640, 4
        %v721 = vand.u32 %v641, 4
        %v722 = vand.u32 %v642, 4
        %v723 = vand.u32 %v643, 4
        %v724 = vand.u32 %v644, 4
        %vm725 = vcmp.ne.s32.totalorder %v709, 0
        %vm726 = vcmp.ne.s32.totalorder %v710, 0
        %vm727 = vcmp.ne.s32.totalorder %v711, 0
        %vm728 = vcmp.ne.s32.totalorder %v712, 0
        %vm729 = vcmp.ne.s32.totalorder %v713, 0
        %vm730 = vcmp.ne.s32.totalorder %v714, 0
        %vm731 = vcmp.ne.s32.totalorder %v715, 0
        %vm732 = vcmp.ne.s32.totalorder %v716, 0
        %vm733 = vcmp.ne.s32.totalorder %v717, 0
        %vm734 = vcmp.ne.s32.totalorder %v718, 0
        %vm735 = vcmp.ne.s32.totalorder %v719, 0
        %vm736 = vcmp.ne.s32.totalorder %v720, 0
        %vm737 = vcmp.ne.s32.totalorder %v721, 0
        %vm738 = vcmp.ne.s32.totalorder %v722, 0
        %vm739 = vcmp.ne.s32.totalorder %v723, 0
        %vm740 = vcmp.ne.s32.totalorder %v724, 0
        %v741 = vand.u32 %v629, 8
        %v742 = vand.u32 %v630, 8
        %v743 = vand.u32 %v631, 8
        %v744 = vand.u32 %v632, 8
        %v745 = vand.u32 %v633, 8
        %v746 = vand.u32 %v634, 8
        %v747 = vand.u32 %v635, 8
        %v748 = vand.u32 %v636, 8
        %v749 = vand.u32 %v637, 8
        %v750 = vand.u32 %v638, 8
        %v751 = vand.u32 %v639, 8
        %v752 = vand.u32 %v640, 8
        %v753 = vand.u32 %v641, 8
        %v754 = vand.u32 %v642, 8
        %v755 = vand.u32 %v643, 8
        %v756 = vand.u32 %v644, 8
        %vm757 = vcmp.ne.s32.totalorder %v741, 0
        %vm758 = vcmp.ne.s32.totalorder %v742, 0
        %vm759 = vcmp.ne.s32.totalorder %v743, 0
        %vm760 = vcmp.ne.s32.totalorder %v744, 0
        %vm761 = vcmp.ne.s32.totalorder %v745, 0
        %vm762 = vcmp.ne.s32.totalorder %v746, 0
        %vm763 = vcmp.ne.s32.totalorder %v747, 0
        %vm764 = vcmp.ne.s32.totalorder %v748, 0
        %vm765 = vcmp.ne.s32.totalorder %v749, 0
        %vm766 = vcmp.ne.s32.totalorder %v750, 0
        %vm767 = vcmp.ne.s32.totalorder %v751, 0
        %vm768 = vcmp.ne.s32.totalorder %v752, 0
        %vm769 = vcmp.ne.s32.totalorder %v753, 0
        %vm770 = vcmp.ne.s32.totalorder %v754, 0
        %vm771 = vcmp.ne.s32.totalorder %v755, 0
        %vm772 = vcmp.ne.s32.totalorder %v756, 0
        %v773 = vand.u32 %v629, 16
        %v774 = vand.u32 %v630, 16
        %v775 = vand.u32 %v631, 16
        %v776 = vand.u32 %v632, 16
        %v777 = vand.u32 %v633, 16
        %v778 = vand.u32 %v634, 16
        %v779 = vand.u32 %v635, 16
        %v780 = vand.u32 %v636, 16
        %v781 = vand.u32 %v637, 16
        %v782 = vand.u32 %v638, 16
        %v783 = vand.u32 %v639, 16
        %v784 = vand.u32 %v640, 16
        %v785 = vand.u32 %v641, 16
        %v786 = vand.u32 %v642, 16
        %v787 = vand.u32 %v643, 16
        %v788 = vand.u32 %v644, 16
        %vm789 = vcmp.ne.s32.totalorder %v773, 0
        %vm790 = vcmp.ne.s32.totalorder %v774, 0
        %vm791 = vcmp.ne.s32.totalorder %v775, 0
        %vm792 = vcmp.ne.s32.totalorder %v776, 0
        %vm793 = vcmp.ne.s32.totalorder %v777, 0
        %vm794 = vcmp.ne.s32.totalorder %v778, 0
        %vm795 = vcmp.ne.s32.totalorder %v779, 0
        %vm796 = vcmp.ne.s32.totalorder %v780, 0
        %vm797 = vcmp.ne.s32.totalorder %v781, 0
        %vm798 = vcmp.ne.s32.totalorder %v782, 0
        %vm799 = vcmp.ne.s32.totalorder %v783, 0
        %vm800 = vcmp.ne.s32.totalorder %v784, 0
        %vm801 = vcmp.ne.s32.totalorder %v785, 0
        %vm802 = vcmp.ne.s32.totalorder %v786, 0
        %vm803 = vcmp.ne.s32.totalorder %v787, 0
        %vm804 = vcmp.ne.s32.totalorder %v788, 0
        %v805 = vand.u32 %v629, 32
        %v806 = vand.u32 %v630, 32
        %v807 = vand.u32 %v631, 32
        %v808 = vand.u32 %v632, 32
        %v809 = vand.u32 %v633, 32
        %v810 = vand.u32 %v634, 32
        %v811 = vand.u32 %v635, 32
        %v812 = vand.u32 %v636, 32
        %v813 = vand.u32 %v637, 32
        %v814 = vand.u32 %v638, 32
        %v815 = vand.u32 %v639, 32
        %v816 = vand.u32 %v640, 32
        %v817 = vand.u32 %v641, 32
        %v818 = vand.u32 %v642, 32
        %v819 = vand.u32 %v643, 32
        %v820 = vand.u32 %v644, 32
        %vm821 = vcmp.ne.s32.totalorder %v805, 0
        %vm822 = vcmp.ne.s32.totalorder %v806, 0
        %vm823 = vcmp.ne.s32.totalorder %v807, 0
        %vm824 = vcmp.ne.s32.totalorder %v808, 0
        %vm825 = vcmp.ne.s32.totalorder %v809, 0
        %vm826 = vcmp.ne.s32.totalorder %v810, 0
        %vm827 = vcmp.ne.s32.totalorder %v811, 0
        %vm828 = vcmp.ne.s32.totalorder %v812, 0
        %vm829 = vcmp.ne.s32.totalorder %v813, 0
        %vm830 = vcmp.ne.s32.totalorder %v814, 0
        %vm831 = vcmp.ne.s32.totalorder %v815, 0
        %vm832 = vcmp.ne.s32.totalorder %v816, 0
        %vm833 = vcmp.ne.s32.totalorder %v817, 0
        %vm834 = vcmp.ne.s32.totalorder %v818, 0
        %vm835 = vcmp.ne.s32.totalorder %v819, 0
        %vm836 = vcmp.ne.s32.totalorder %v820, 0
        %v837 = vand.u32 %v629, 64
        %v838 = vand.u32 %v630, 64
        %v839 = vand.u32 %v631, 64
        %v840 = vand.u32 %v632, 64
        %v841 = vand.u32 %v633, 64
        %v842 = vand.u32 %v634, 64
        %v843 = vand.u32 %v635, 64
        %v844 = vand.u32 %v636, 64
        %v845 = vand.u32 %v637, 64
        %v846 = vand.u32 %v638, 64
        %v847 = vand.u32 %v639, 64
        %v848 = vand.u32 %v640, 64
        %v849 = vand.u32 %v641, 64
        %v850 = vand.u32 %v642, 64
        %v851 = vand.u32 %v643, 64
        %v852 = vand.u32 %v644, 64
        %vm853 = vcmp.ne.s32.totalorder %v837, 0
        %vm854 = vcmp.ne.s32.totalorder %v838, 0
        %vm855 = vcmp.ne.s32.totalorder %v839, 0
        %vm856 = vcmp.ne.s32.totalorder %v840, 0
        %vm857 = vcmp.ne.s32.totalorder %v841, 0
        %vm858 = vcmp.ne.s32.totalorder %v842, 0
        %vm859 = vcmp.ne.s32.totalorder %v843, 0
        %vm860 = vcmp.ne.s32.totalorder %v844, 0
        %vm861 = vcmp.ne.s32.totalorder %v845, 0
        %vm862 = vcmp.ne.s32.totalorder %v846, 0
        %vm863 = vcmp.ne.s32.totalorder %v847, 0
        %vm864 = vcmp.ne.s32.totalorder %v848, 0
        %vm865 = vcmp.ne.s32.totalorder %v849, 0
        %vm866 = vcmp.ne.s32.totalorder %v850, 0
        %vm867 = vcmp.ne.s32.totalorder %v851, 0
        %vm868 = vcmp.ne.s32.totalorder %v852, 0
        %v869 = vld [vmem:[%s515] sm:$0xf]
        %v870 = vld [vmem:[%s515 + $0x4] sm:$0xf]
        %v871 = vld [vmem:[%s515 + $0x8] sm:$0xf]
        %v872 = vld [vmem:[%s515 + $0xc] sm:$0xf]
        %v873 = vld [vmem:[%s515 + $0x10] sm:$0xf]
        %v874 = vld [vmem:[%s515 + $0x14] sm:$0xf]
        %v875 = vld [vmem:[%s515 + $0x18] sm:$0xf]
        %v876 = vld [vmem:[%s515 + $0x1c] sm:$0xf]
        %v877 = vld [vmem:[%s515 + $0x20] sm:$0xf]
        %v878 = vld [vmem:[%s515 + $0x24] sm:$0xf]
        %v879 = vld [vmem:[%s515 + $0x28] sm:$0xf]
        %v880 = vld [vmem:[%s515 + $0x2c] sm:$0xf]
        %v881 = vld [vmem:[%s515 + $0x30] sm:$0xf]
        %v882 = vld [vmem:[%s515 + $0x34] sm:$0xf]
        %v883 = vld [vmem:[%s515 + $0x38] sm:$0xf]
        %v884 = vld [vmem:[%s515 + $0x3c] sm:$0xf]
        %v885 = vld [vmem:[%s522] sm:$0xf]
        %v886 = vld [vmem:[%s522 + $0x4] sm:$0xf]
        %v887 = vld [vmem:[%s522 + $0x8] sm:$0xf]
        %v888 = vld [vmem:[%s522 + $0xc] sm:$0xf]
        %v889 = vld [vmem:[%s522 + $0x10] sm:$0xf]
        %v890 = vld [vmem:[%s522 + $0x14] sm:$0xf]
        %v891 = vld [vmem:[%s522 + $0x18] sm:$0xf]
        %v892 = vld [vmem:[%s522 + $0x1c] sm:$0xf]
        %v893 = vld [vmem:[%s522 + $0x20] sm:$0xf]
        %v894 = vld [vmem:[%s522 + $0x24] sm:$0xf]
        %v895 = vld [vmem:[%s522 + $0x28] sm:$0xf]
        %v896 = vld [vmem:[%s522 + $0x2c] sm:$0xf]
        %v897 = vld [vmem:[%s522 + $0x30] sm:$0xf]
        %v898 = vld [vmem:[%s522 + $0x34] sm:$0xf]
        %v899 = vld [vmem:[%s522 + $0x38] sm:$0xf]
        %v900 = vld [vmem:[%s522 + $0x3c] sm:$0xf]
        %v901 = vld [vmem:[%s529] sm:$0xf]
        %v902 = vld [vmem:[%s529 + $0x4] sm:$0xf]
        %v903 = vld [vmem:[%s529 + $0x8] sm:$0xf]
        %v904 = vld [vmem:[%s529 + $0xc] sm:$0xf]
        %v905 = vld [vmem:[%s529 + $0x10] sm:$0xf]
        %v906 = vld [vmem:[%s529 + $0x14] sm:$0xf]
        %v907 = vld [vmem:[%s529 + $0x18] sm:$0xf]
        %v908 = vld [vmem:[%s529 + $0x1c] sm:$0xf]
        %v909 = vld [vmem:[%s529 + $0x20] sm:$0xf]
        %v910 = vld [vmem:[%s529 + $0x24] sm:$0xf]
        %v911 = vld [vmem:[%s529 + $0x28] sm:$0xf]
        %v912 = vld [vmem:[%s529 + $0x2c] sm:$0xf]
        %v913 = vld [vmem:[%s529 + $0x30] sm:$0xf]
        %v914 = vld [vmem:[%s529 + $0x34] sm:$0xf]
        %v915 = vld [vmem:[%s529 + $0x38] sm:$0xf]
        %v916 = vld [vmem:[%s529 + $0x3c] sm:$0xf]
        %v917 = vld [vmem:[%s3 + $0x40] sm:$0xf]
        %v918 = vld [vmem:[%s3 + $0x44] sm:$0xf]
        %v919 = vld [vmem:[%s3 + $0x48] sm:$0xf]
        %v920 = vld [vmem:[%s3 + $0x4c] sm:$0xf]
        %v921 = vld [vmem:[%s3 + $0x50] sm:$0xf]
        %v922 = vld [vmem:[%s3 + $0x54] sm:$0xf]
        %v923 = vld [vmem:[%s3 + $0x58] sm:$0xf]
        %v924 = vld [vmem:[%s3 + $0x5c] sm:$0xf]
        %v925 = vld [vmem:[%s3 + $0x60] sm:$0xf]
        %v926 = vld [vmem:[%s3 + $0x64] sm:$0xf]
        %v927 = vld [vmem:[%s3 + $0x68] sm:$0xf]
        %v928 = vld [vmem:[%s3 + $0x6c] sm:$0xf]
        %v929 = vld [vmem:[%s3 + $0x70] sm:$0xf]
        %v930 = vld [vmem:[%s3 + $0x74] sm:$0xf]
        %v931 = vld [vmem:[%s3 + $0x78] sm:$0xf]
        %v932 = vld [vmem:[%s3 + $0x7c] sm:$0xf]
        %v933 = vunpack.c.l.bf16 %v869
        %v934 = vunpack.c.l.bf16 %v870
        %v935 = vunpack.c.l.bf16 %v871
        %v936 = vunpack.c.l.bf16 %v872
        %v937 = vunpack.c.l.bf16 %v873
        %v938 = vunpack.c.l.bf16 %v874
        %v939 = vunpack.c.l.bf16 %v875
        %v940 = vunpack.c.l.bf16 %v876
        %v941 = vunpack.c.l.bf16 %v877
        %v942 = vunpack.c.l.bf16 %v878
        %v943 = vunpack.c.l.bf16 %v879
        %v944 = vunpack.c.l.bf16 %v880
        %v945 = vunpack.c.l.bf16 %v881
        %v946 = vunpack.c.l.bf16 %v882
        %v947 = vunpack.c.l.bf16 %v883
        %v948 = vunpack.c.l.bf16 %v884
        %v949 = vmul.f32 %v933, 0.17677669
        %v950 = vmul.f32 %v934, 0.17677669
        %v951 = vmul.f32 %v935, 0.17677669
        %v952 = vmul.f32 %v936, 0.17677669
        %v953 = vmul.f32 %v937, 0.17677669
        %v954 = vmul.f32 %v938, 0.17677669
        %v955 = vmul.f32 %v939, 0.17677669
        %v956 = vmul.f32 %v940, 0.17677669
        %v957 = vmul.f32 %v941, 0.17677669
        %v958 = vmul.f32 %v942, 0.17677669
        %v959 = vmul.f32 %v943, 0.17677669
        %v960 = vmul.f32 %v944, 0.17677669
        %v961 = vmul.f32 %v945, 0.17677669
        %v962 = vmul.f32 %v946, 0.17677669
        %v963 = vmul.f32 %v947, 0.17677669
        %v964 = vmul.f32 %v948, 0.17677669
        %v965 = vpack.c.bf16 %v950, %v949
        %v966 = vpack.c.bf16 %v952, %v951
        %v967 = vpack.c.bf16 %v954, %v953
        %v968 = vpack.c.bf16 %v956, %v955
        %v969 = vpack.c.bf16 %v958, %v957
        %v970 = vpack.c.bf16 %v960, %v959
        %v971 = vpack.c.bf16 %v962, %v961
        %v972 = vpack.c.bf16 %v964, %v963
        %v989 = vunpack.c.l.b16 %v885
        %v990 = vunpack.c.l.b16 %v886
        %v991 = vunpack.c.l.b16 %v887
        %v992 = vunpack.c.l.b16 %v888
        %v993 = vunpack.c.l.b16 %v889
        %v994 = vunpack.c.l.b16 %v890
        %v995 = vunpack.c.l.b16 %v891
        %v996 = vunpack.c.l.b16 %v892
        %v997 = vunpack.c.l.b16 %v893
        %v998 = vunpack.c.l.b16 %v894
        %v999 = vunpack.c.l.b16 %v895
        %v1000 = vunpack.c.l.b16 %v896
        %v1001 = vunpack.c.l.b16 %v897
        %v1002 = vunpack.c.l.b16 %v898
        %v1003 = vunpack.c.l.b16 %v899
        %v1004 = vunpack.c.l.b16 %v900
        %v1005 = vpack.c.b16 %v990, %v989
        %v1006 = vpack.c.b16 %v992, %v991
        %v1007 = vpack.c.b16 %v994, %v993
        %v1008 = vpack.c.b16 %v996, %v995
        %v1009 = vpack.c.b16 %v998, %v997
        %v1010 = vpack.c.b16 %v1000, %v999
        %v1011 = vpack.c.b16 %v1002, %v1001
        %v1012 = vpack.c.b16 %v1004, %v1003
        %v1029 = vunpack.c.l.b16 %v917
        %v1030 = vunpack.c.l.b16 %v918
        %v1031 = vunpack.c.l.b16 %v919
        %v1032 = vunpack.c.l.b16 %v920
        %v1033 = vunpack.c.l.b16 %v921
        %v1034 = vunpack.c.l.b16 %v922
        %v1035 = vunpack.c.l.b16 %v923
        %v1036 = vunpack.c.l.b16 %v924
        %v1037 = vunpack.c.l.b16 %v925
        %v1038 = vunpack.c.l.b16 %v926
        %v1039 = vunpack.c.l.b16 %v927
        %v1040 = vunpack.c.l.b16 %v928
        %v1041 = vunpack.c.l.b16 %v929
        %v1042 = vunpack.c.l.b16 %v930
        %v1043 = vunpack.c.l.b16 %v931
        %v1044 = vunpack.c.l.b16 %v932
        %v1045 = vpack.c.b16 %v1030, %v1029
        %v1046 = vpack.c.b16 %v1032, %v1031
        %v1047 = vpack.c.b16 %v1034, %v1033
        %v1048 = vpack.c.b16 %v1036, %v1035
        %v1049 = vpack.c.b16 %v1038, %v1037
        %v1050 = vpack.c.b16 %v1040, %v1039
        %v1051 = vpack.c.b16 %v1042, %v1041
        %v1052 = vpack.c.b16 %v1044, %v1043
        %vm1053 = vcmask 261120
        %v1055 = vsel %vm1053, %v965, 0
        %v1058 = vsel %vm1053, %v966, 0
        %v1061 = vsel %vm1053, %v967, 0
        %v1064 = vsel %vm1053, %v968, 0
        %v1067 = vsel %vm1053, %v969, 0
        %v1070 = vsel %vm1053, %v970, 0
        %v1073 = vsel %vm1053, %v971, 0
        %v1076 = vsel %vm1053, %v972, 0
        %v1079 = vsel %vm1053, %v1005, 0
        %v1082 = vsel %vm1053, %v1006, 0
        %v1085 = vsel %vm1053, %v1007, 0
        %v1088 = vsel %vm1053, %v1008, 0
        %v1091 = vsel %vm1053, %v1009, 0
        %v1094 = vsel %vm1053, %v1010, 0
        %v1097 = vsel %vm1053, %v1011, 0
        %v1100 = vsel %vm1053, %v1012, 0
        %v1103 = vsel %vm1053, %v1045, 0
        %v1106 = vsel %vm1053, %v1046, 0
        %v1109 = vsel %vm1053, %v1047, 0
        %v1112 = vsel %vm1053, %v1048, 0
        %v1115 = vsel %vm1053, %v1049, 0
        %v1118 = vsel %vm1053, %v1050, 0
        %v1121 = vsel %vm1053, %v1051, 0
        %v1124 = vsel %vm1053, %v1052, 0
        %1126 = vmatprep.subr.bf16.mxu0 0
        %1127 = vmatpush1.bf16.xpose.msra.mxu0 %v1079
        %1128 = vmatprep.subr.bf16.mxu0 0
        %1129 = vmatpush1.bf16.xpose.msra.mxu0 %v1082
        %1130 = vmatprep.subr.bf16.mxu0 0
        %1131 = vmatpush1.bf16.xpose.msra.mxu0 %v1085
        %1132 = vmatprep.subr.bf16.mxu0 0
        %1133 = vmatpush1.bf16.xpose.msra.mxu0 %v1088
        %1134 = vmatprep.subr.bf16.mxu0 0
        %1135 = vmatpush1.bf16.xpose.msra.mxu0 %v1091
        %1136 = vmatprep.subr.bf16.mxu0 0
        %1137 = vmatpush1.bf16.xpose.msra.mxu0 %v1094
        %1138 = vmatprep.subr.bf16.mxu0 0
        %1139 = vmatpush1.bf16.xpose.msra.mxu0 %v1097
        %1140 = vmatprep.subr.bf16.mxu0 0
        %1141 = vmatpush1.bf16.xpose.msra.mxu0 %v1100
        %1142 = vmatprep.subr.bf16.mxu0 0
        %1143 = vmatpush1.bf16.xpose.msra.mxu0 %v1103
        %1144 = vmatprep.subr.bf16.mxu0 0
        %1145 = vmatpush1.bf16.xpose.msra.mxu0 %v1106
        %1146 = vmatprep.subr.bf16.mxu0 0
        %1147 = vmatpush1.bf16.xpose.msra.mxu0 %v1109
        %1148 = vmatprep.subr.bf16.mxu0 0
        %1149 = vmatpush1.bf16.xpose.msra.mxu0 %v1112
        %1150 = vmatprep.subr.bf16.mxu0 0
        %1151 = vmatpush1.bf16.xpose.msra.mxu0 %v1115
        %1152 = vmatprep.subr.bf16.mxu0 0
        %1153 = vmatpush1.bf16.xpose.msra.mxu0 %v1118
        %1154 = vmatprep.subr.bf16.mxu0 0
        %1155 = vmatpush1.bf16.xpose.msra.mxu0 %v1121
        %1156 = vmatprep.subr.bf16.mxu0 0
        %1157 = vmatpush1.bf16.xpose.msra.mxu0 %v1124
        %1158 = vmatprep.mubr.bf16.mxu0 0
        %1159 = vmatmul.mubr.bf16.gmra.mrb[0].mxu0 %v1055
        %v1160 = vpop.f32.mrb[0].mxu0
        %v1161 = vadd.f32 0.0, %v1160
        %v1162 = vpop.f32.mrb[0].mxu0
        %v1163 = vadd.f32 0.0, %v1162
        %v1164 = vpop.f32.mrb[0].mxu0
        %v1165 = vadd.f32 0.0, %v1164
        %v1166 = vpop.f32.mrb[0].mxu0
        %v1167 = vadd.f32 0.0, %v1166
        %1168 = vmatprep.mubr.bf16.mxu0 0
        %1169 = vmatmul.mubr.bf16.gmra.mrb[0].mxu0 %v1058
        %v1170 = vpop.f32.mrb[0].mxu0
        %v1171 = vadd.f32 0.0, %v1170
        %v1172 = vpop.f32.mrb[0].mxu0
        %v1173 = vadd.f32 0.0, %v1172
        %v1174 = vpop.f32.mrb[0].mxu0
        %v1175 = vadd.f32 0.0, %v1174
        %v1176 = vpop.f32.mrb[0].mxu0
        %v1177 = vadd.f32 0.0, %v1176
        %1178 = vmatprep.mubr.bf16.mxu0 0
        %1179 = vmatmul.mubr.bf16.gmra.mrb[0].mxu0 %v1061
        %v1180 = vpop.f32.mrb[0].mxu0
        %v1181 = vadd.f32 0.0, %v1180
        %v1182 = vpop.f32.mrb[0].mxu0
        %v1183 = vadd.f32 0.0, %v1182
        %v1184 = vpop.f32.mrb[0].mxu0
        %v1185 = vadd.f32 0.0, %v1184
        %v1186 = vpop.f32.mrb[0].mxu0
        %v1187 = vadd.f32 0.0, %v1186
        %1188 = vmatprep.mubr.bf16.mxu0 0
        %1189 = vmatmul.mubr.bf16.gmra.mrb[0].mxu0 %v1064
        %v1190 = vpop.f32.mrb[0].mxu0
        %v1191 = vadd.f32 0.0, %v1190
        %v1192 = vpop.f32.mrb[0].mxu0
        %v1193 = vadd.f32 0.0, %v1192
        %v1194 = vpop.f32.mrb[0].mxu0
        %v1195 = vadd.f32 0.0, %v1194
        %v1196 = vpop.f32.mrb[0].mxu0
        %v1197 = vadd.f32 0.0, %v1196
        %1198 = vmatprep.mubr.bf16.mxu0 0
        %1199 = vmatmul.mubr.bf16.gmra.mrb[0].mxu0 %v1067
        %v1200 = vpop.f32.mrb[0].mxu0
        %v1201 = vadd.f32 0.0, %v1200
        %v1202 = vpop.f32.mrb[0].mxu0
        %v1203 = vadd.f32 0.0, %v1202
        %v1204 = vpop.f32.mrb[0].mxu0
        %v1205 = vadd.f32 0.0, %v1204
        %v1206 = vpop.f32.mrb[0].mxu0
        %v1207 = vadd.f32 0.0, %v1206
        %1208 = vmatprep.mubr.bf16.mxu0 0
        %1209 = vmatmul.mubr.bf16.gmra.mrb[0].mxu0 %v1070
        %v1210 = vpop.f32.mrb[0].mxu0
        %v1211 = vadd.f32 0.0, %v1210
        %v1212 = vpop.f32.mrb[0].mxu0
        %v1213 = vadd.f32 0.0, %v1212
        %v1214 = vpop.f32.mrb[0].mxu0
        %v1215 = vadd.f32 0.0, %v1214
        %v1216 = vpop.f32.mrb[0].mxu0
        %v1217 = vadd.f32 0.0, %v1216
        %1218 = vmatprep.mubr.bf16.mxu0 0
        %1219 = vmatmul.mubr.bf16.gmra.mrb[0].mxu0 %v1073
        %v1220 = vpop.f32.mrb[0].mxu0
        %v1221 = vadd.f32 0.0, %v1220
        %v1222 = vpop.f32.mrb[0].mxu0
        %v1223 = vadd.f32 0.0, %v1222
        %v1224 = vpop.f32.mrb[0].mxu0
        %v1225 = vadd.f32 0.0, %v1224
        %v1226 = vpop.f32.mrb[0].mxu0
        %v1227 = vadd.f32 0.0, %v1226
        %1228 = vmatprep.mubr.bf16.mxu0 0
        %1229 = vmatmul.mubr.bf16.gmra.mrb[0].mxu0 %v1076
        %v1230 = vpop.f32.mrb[0].mxu0
        %v1231 = vadd.f32 0.0, %v1230
        %v1232 = vpop.f32.mrb[0].mxu0
        %v1233 = vadd.f32 0.0, %v1232
        %v1234 = vpop.f32.mrb[0].mxu0
        %v1235 = vadd.f32 0.0, %v1234
        %v1236 = vpop.f32.mrb[0].mxu0
        %v1237 = vadd.f32 0.0, %v1236
        %1238 = vdwg.mxu0
        %1239 = vrot.lane.b32.xlu0 %v1163, 127
        %v1240 = vpop.permute.xlu0 %1239
        %1241 = vrot.lane.b32.xlu0 %v1167, 127
        %v1242 = vpop.permute.xlu0 %1241
        %1243 = vrot.lane.b32.xlu0 %v1173, 127
        %v1244 = vpop.permute.xlu0 %1243
        %1245 = vrot.lane.b32.xlu0 %v1177, 127
        %v1246 = vpop.permute.xlu0 %1245
        %1247 = vrot.lane.b32.xlu0 %v1183, 127
        %v1248 = vpop.permute.xlu0 %1247
        %1249 = vrot.lane.b32.xlu0 %v1187, 127
        %v1250 = vpop.permute.xlu0 %1249
        %1251 = vrot.lane.b32.xlu0 %v1193, 127
        %v1252 = vpop.permute.xlu0 %1251
        %1253 = vrot.lane.b32.xlu0 %v1197, 127
        %v1254 = vpop.permute.xlu0 %1253
        %1255 = vrot.lane.b32.xlu0 %v1203, 127
        %v1256 = vpop.permute.xlu0 %1255
        %1257 = vrot.lane.b32.xlu0 %v1207, 127
        %v1258 = vpop.permute.xlu0 %1257
        %1259 = vrot.lane.b32.xlu0 %v1213, 127
        %v1260 = vpop.permute.xlu0 %1259
        %1261 = vrot.lane.b32.xlu0 %v1217, 127
        %v1262 = vpop.permute.xlu0 %1261
        %1263 = vrot.lane.b32.xlu0 %v1223, 127
        %v1264 = vpop.permute.xlu0 %1263
        %1265 = vrot.lane.b32.xlu0 %v1227, 127
        %v1266 = vpop.permute.xlu0 %1265
        %1267 = vrot.lane.b32.xlu0 %v1233, 127
        %v1268 = vpop.permute.xlu0 %1267
        %1269 = vrot.lane.b32.xlu0 %v1237, 127
        %v1270 = vpop.permute.xlu0 %1269
        %v1271 = vsel %vm661, %v1240, %v1163
        %v1272 = vsel %vm662, %v1242, %v1167
        %v1273 = vsel %vm663, %v1244, %v1173
        %v1274 = vsel %vm664, %v1246, %v1177
        %v1275 = vsel %vm665, %v1248, %v1183
        %v1276 = vsel %vm666, %v1250, %v1187
        %v1277 = vsel %vm667, %v1252, %v1193
        %v1278 = vsel %vm668, %v1254, %v1197
        %v1279 = vsel %vm669, %v1256, %v1203
        %v1280 = vsel %vm670, %v1258, %v1207
        %v1281 = vsel %vm671, %v1260, %v1213
        %v1282 = vsel %vm672, %v1262, %v1217
        %v1283 = vsel %vm673, %v1264, %v1223
        %v1284 = vsel %vm674, %v1266, %v1227
        %v1285 = vsel %vm675, %v1268, %v1233
        %v1286 = vsel %vm676, %v1270, %v1237
        %1287 = vrot.lane.b32.xlu0 %v1271, 126
        %v1288 = vpop.permute.xlu0 %1287
        %1289 = vrot.lane.b32.xlu0 %v1272, 126
        %v1290 = vpop.permute.xlu0 %1289
        %1291 = vrot.lane.b32.xlu0 %v1273, 126
        %v1292 = vpop.permute.xlu0 %1291
        %1293 = vrot.lane.b32.xlu0 %v1274, 126
        %v1294 = vpop.permute.xlu0 %1293
        %1295 = vrot.lane.b32.xlu0 %v1275, 126
        %v1296 = vpop.permute.xlu0 %1295
        %1297 = vrot.lane.b32.xlu0 %v1276, 126
        %v1298 = vpop.permute.xlu0 %1297
        %1299 = vrot.lane.b32.xlu0 %v1277, 126
        %v1300 = vpop.permute.xlu0 %1299
        %1301 = vrot.lane.b32.xlu0 %v1278, 126
        %v1302 = vpop.permute.xlu0 %1301
        %1303 = vrot.lane.b32.xlu0 %v1279, 126
        %v1304 = vpop.permute.xlu0 %1303
        %1305 = vrot.lane.b32.xlu0 %v1280, 126
        %v1306 = vpop.permute.xlu0 %1305
        %1307 = vrot.lane.b32.xlu0 %v1281, 126
        %v1308 = vpop.permute.xlu0 %1307
        %1309 = vrot.lane.b32.xlu0 %v1282, 126
        %v1310 = vpop.permute.xlu0 %1309
        %1311 = vrot.lane.b32.xlu0 %v1283, 126
        %v1312 = vpop.permute.xlu0 %1311
        %1313 = vrot.lane.b32.xlu0 %v1284, 126
        %v1314 = vpop.permute.xlu0 %1313
        %1315 = vrot.lane.b32.xlu0 %v1285, 126
        %v1316 = vpop.permute.xlu0 %1315
        %1317 = vrot.lane.b32.xlu0 %v1286, 126
        %v1318 = vpop.permute.xlu0 %1317
        %v1319 = vsel %vm693, %v1288, %v1271
        %v1320 = vsel %vm694, %v1290, %v1272
        %v1321 = vsel %vm695, %v1292, %v1273
        %v1322 = vsel %vm696, %v1294, %v1274
        %v1323 = vsel %vm697, %v1296, %v1275
        %v1324 = vsel %vm698, %v1298, %v1276
        %v1325 = vsel %vm699, %v1300, %v1277
        %v1326 = vsel %vm700, %v1302, %v1278
        %v1327 = vsel %vm701, %v1304, %v1279
        %v1328 = vsel %vm702, %v1306, %v1280
        %v1329 = vsel %vm703, %v1308, %v1281
        %v1330 = vsel %vm704, %v1310, %v1282
        %v1331 = vsel %vm705, %v1312, %v1283
        %v1332 = vsel %vm706, %v1314, %v1284
        %v1333 = vsel %vm707, %v1316, %v1285
        %v1334 = vsel %vm708, %v1318, %v1286
        %1335 = vrot.lane.b32.xlu0 %v1319, 124
        %v1336 = vpop.permute.xlu0 %1335
        %1337 = vrot.lane.b32.xlu0 %v1320, 124
        %v1338 = vpop.permute.xlu0 %1337
        %1339 = vrot.lane.b32.xlu0 %v1321, 124
        %v1340 = vpop.permute.xlu0 %1339
        %1341 = vrot.lane.b32.xlu0 %v1322, 124
        %v1342 = vpop.permute.xlu0 %1341
        %1343 = vrot.lane.b32.xlu0 %v1323, 124
        %v1344 = vpop.permute.xlu0 %1343
        %1345 = vrot.lane.b32.xlu0 %v1324, 124
        %v1346 = vpop.permute.xlu0 %1345
        %1347 = vrot.lane.b32.xlu0 %v1325, 124
        %v1348 = vpop.permute.xlu0 %1347
        %1349 = vrot.lane.b32.xlu0 %v1326, 124
        %v1350 = vpop.permute.xlu0 %1349
        %1351 = vrot.lane.b32.xlu0 %v1327, 124
        %v1352 = vpop.permute.xlu0 %1351
        %1353 = vrot.lane.b32.xlu0 %v1328, 124
        %v1354 = vpop.permute.xlu0 %1353
        %1355 = vrot.lane.b32.xlu0 %v1329, 124
        %v1356 = vpop.permute.xlu0 %1355
        %1357 = vrot.lane.b32.xlu0 %v1330, 124
        %v1358 = vpop.permute.xlu0 %1357
        %1359 = vrot.lane.b32.xlu0 %v1331, 124
        %v1360 = vpop.permute.xlu0 %1359
        %1361 = vrot.lane.b32.xlu0 %v1332, 124
        %v1362 = vpop.permute.xlu0 %1361
        %1363 = vrot.lane.b32.xlu0 %v1333, 124
        %v1364 = vpop.permute.xlu0 %1363
        %1365 = vrot.lane.b32.xlu0 %v1334, 124
        %v1366 = vpop.permute.xlu0 %1365
        %v1367 = vsel %vm725, %v1336, %v1319
        %v1368 = vsel %vm726, %v1338, %v1320
        %v1369 = vsel %vm727, %v1340, %v1321
        %v1370 = vsel %vm728, %v1342, %v1322
        %v1371 = vsel %vm729, %v1344, %v1323
        %v1372 = vsel %vm730, %v1346, %v1324
        %v1373 = vsel %vm731, %v1348, %v1325
        %v1374 = vsel %vm732, %v1350, %v1326
        %v1375 = vsel %vm733, %v1352, %v1327
        %v1376 = vsel %vm734, %v1354, %v1328
        %v1377 = vsel %vm735, %v1356, %v1329
        %v1378 = vsel %vm736, %v1358, %v1330
        %v1379 = vsel %vm737, %v1360, %v1331
        %v1380 = vsel %vm738, %v1362, %v1332
        %v1381 = vsel %vm739, %v1364, %v1333
        %v1382 = vsel %vm740, %v1366, %v1334
        %1383 = vrot.lane.b32.xlu0 %v1367, 120
        %v1384 = vpop.permute.xlu0 %1383
        %1385 = vrot.lane.b32.xlu0 %v1368, 120
        %v1386 = vpop.permute.xlu0 %1385
        %1387 = vrot.lane.b32.xlu0 %v1369, 120
        %v1388 = vpop.permute.xlu0 %1387
        %1389 = vrot.lane.b32.xlu0 %v1370, 120
        %v1390 = vpop.permute.xlu0 %1389
        %1391 = vrot.lane.b32.xlu0 %v1371, 120
        %v1392 = vpop.permute.xlu0 %1391
        %1393 = vrot.lane.b32.xlu0 %v1372, 120
        %v1394 = vpop.permute.xlu0 %1393
        %1395 = vrot.lane.b32.xlu0 %v1373, 120
        %v1396 = vpop.permute.xlu0 %1395
        %1397 = vrot.lane.b32.xlu0 %v1374, 120
        %v1398 = vpop.permute.xlu0 %1397
        %1399 = vrot.lane.b32.xlu0 %v1375, 120
        %v1400 = vpop.permute.xlu0 %1399
        %1401 = vrot.lane.b32.xlu0 %v1376, 120
        %v1402 = vpop.permute.xlu0 %1401
        %1403 = vrot.lane.b32.xlu0 %v1377, 120
        %v1404 = vpop.permute.xlu0 %1403
        %1405 = vrot.lane.b32.xlu0 %v1378, 120
        %v1406 = vpop.permute.xlu0 %1405
        %1407 = vrot.lane.b32.xlu0 %v1379, 120
        %v1408 = vpop.permute.xlu0 %1407
        %1409 = vrot.lane.b32.xlu0 %v1380, 120
        %v1410 = vpop.permute.xlu0 %1409
        %1411 = vrot.lane.b32.xlu0 %v1381, 120
        %v1412 = vpop.permute.xlu0 %1411
        %1413 = vrot.lane.b32.xlu0 %v1382, 120
        %v1414 = vpop.permute.xlu0 %1413
        %v1415 = vsel %vm757, %v1384, %v1367
        %v1416 = vsel %vm758, %v1386, %v1368
        %v1417 = vsel %vm759, %v1388, %v1369
        %v1418 = vsel %vm760, %v1390, %v1370
        %v1419 = vsel %vm761, %v1392, %v1371
        %v1420 = vsel %vm762, %v1394, %v1372
        %v1421 = vsel %vm763, %v1396, %v1373
        %v1422 = vsel %vm764, %v1398, %v1374
        %v1423 = vsel %vm765, %v1400, %v1375
        %v1424 = vsel %vm766, %v1402, %v1376
        %v1425 = vsel %vm767, %v1404, %v1377
        %v1426 = vsel %vm768, %v1406, %v1378
        %v1427 = vsel %vm769, %v1408, %v1379
        %v1428 = vsel %vm770, %v1410, %v1380
        %v1429 = vsel %vm771, %v1412, %v1381
        %v1430 = vsel %vm772, %v1414, %v1382
        %1431 = vrot.lane.b32.xlu0 %v1415, 112
        %v1432 = vpop.permute.xlu0 %1431
        %1433 = vrot.lane.b32.xlu0 %v1416, 112
        %v1434 = vpop.permute.xlu0 %1433
        %1435 = vrot.lane.b32.xlu0 %v1417, 112
        %v1436 = vpop.permute.xlu0 %1435
        %1437 = vrot.lane.b32.xlu0 %v1418, 112
        %v1438 = vpop.permute.xlu0 %1437
        %1439 = vrot.lane.b32.xlu0 %v1419, 112
        %v1440 = vpop.permute.xlu0 %1439
        %1441 = vrot.lane.b32.xlu0 %v1420, 112
        %v1442 = vpop.permute.xlu0 %1441
        %1443 = vrot.lane.b32.xlu0 %v1421, 112
        %v1444 = vpop.permute.xlu0 %1443
        %1445 = vrot.lane.b32.xlu0 %v1422, 112
        %v1446 = vpop.permute.xlu0 %1445
        %1447 = vrot.lane.b32.xlu0 %v1423, 112
        %v1448 = vpop.permute.xlu0 %1447
        %1449 = vrot.lane.b32.xlu0 %v1424, 112
        %v1450 = vpop.permute.xlu0 %1449
        %1451 = vrot.lane.b32.xlu0 %v1425, 112
        %v1452 = vpop.permute.xlu0 %1451
        %1453 = vrot.lane.b32.xlu0 %v1426, 112
        %v1454 = vpop.permute.xlu0 %1453
        %1455 = vrot.lane.b32.xlu0 %v1427, 112
        %v1456 = vpop.permute.xlu0 %1455
        %1457 = vrot.lane.b32.xlu0 %v1428, 112
        %v1458 = vpop.permute.xlu0 %1457
        %1459 = vrot.lane.b32.xlu0 %v1429, 112
        %v1460 = vpop.permute.xlu0 %1459
        %1461 = vrot.lane.b32.xlu0 %v1430, 112
        %v1462 = vpop.permute.xlu0 %1461
        %v1463 = vsel %vm789, %v1432, %v1415
        %v1464 = vsel %vm790, %v1434, %v1416
        %v1465 = vsel %vm791, %v1436, %v1417
        %v1466 = vsel %vm792, %v1438, %v1418
        %v1467 = vsel %vm793, %v1440, %v1419
        %v1468 = vsel %vm794, %v1442, %v1420
        %v1469 = vsel %vm795, %v1444, %v1421
        %v1470 = vsel %vm796, %v1446, %v1422
        %v1471 = vsel %vm797, %v1448, %v1423
        %v1472 = vsel %vm798, %v1450, %v1424
        %v1473 = vsel %vm799, %v1452, %v1425
        %v1474 = vsel %vm800, %v1454, %v1426
        %v1475 = vsel %vm801, %v1456, %v1427
        %v1476 = vsel %vm802, %v1458, %v1428
        %v1477 = vsel %vm803, %v1460, %v1429
        %v1478 = vsel %vm804, %v1462, %v1430
        %1479 = vrot.lane.b32.xlu0 %v1463, 96
        %v1480 = vpop.permute.xlu0 %1479
        %1481 = vrot.lane.b32.xlu0 %v1464, 96
        %v1482 = vpop.permute.xlu0 %1481
        %1483 = vrot.lane.b32.xlu0 %v1465, 96
        %v1484 = vpop.permute.xlu0 %1483
        %1485 = vrot.lane.b32.xlu0 %v1466, 96
        %v1486 = vpop.permute.xlu0 %1485
        %1487 = vrot.lane.b32.xlu0 %v1467, 96
        %v1488 = vpop.permute.xlu0 %1487
        %1489 = vrot.lane.b32.xlu0 %v1468, 96
        %v1490 = vpop.permute.xlu0 %1489
        %1491 = vrot.lane.b32.xlu0 %v1469, 96
        %v1492 = vpop.permute.xlu0 %1491
        %1493 = vrot.lane.b32.xlu0 %v1470, 96
        %v1494 = vpop.permute.xlu0 %1493
        %1495 = vrot.lane.b32.xlu0 %v1471, 96
        %v1496 = vpop.permute.xlu0 %1495
        %1497 = vrot.lane.b32.xlu0 %v1472, 96
        %v1498 = vpop.permute.xlu0 %1497
        %1499 = vrot.lane.b32.xlu0 %v1473, 96
        %v1500 = vpop.permute.xlu0 %1499
        %1501 = vrot.lane.b32.xlu0 %v1474, 96
        %v1502 = vpop.permute.xlu0 %1501
        %1503 = vrot.lane.b32.xlu0 %v1475, 96
        %v1504 = vpop.permute.xlu0 %1503
        %1505 = vrot.lane.b32.xlu0 %v1476, 96
        %v1506 = vpop.permute.xlu0 %1505
        %1507 = vrot.lane.b32.xlu0 %v1477, 96
        %v1508 = vpop.permute.xlu0 %1507
        %1509 = vrot.lane.b32.xlu0 %v1478, 96
        %v1510 = vpop.permute.xlu0 %1509
        %v1511 = vsel %vm821, %v1480, %v1463
        %v1512 = vsel %vm822, %v1482, %v1464
        %v1513 = vsel %vm823, %v1484, %v1465
        %v1514 = vsel %vm824, %v1486, %v1466
        %v1515 = vsel %vm825, %v1488, %v1467
        %v1516 = vsel %vm826, %v1490, %v1468
        %v1517 = vsel %vm827, %v1492, %v1469
        %v1518 = vsel %vm828, %v1494, %v1470
        %v1519 = vsel %vm829, %v1496, %v1471
        %v1520 = vsel %vm830, %v1498, %v1472
        %v1521 = vsel %vm831, %v1500, %v1473
        %v1522 = vsel %vm832, %v1502, %v1474
        %v1523 = vsel %vm833, %v1504, %v1475
        %v1524 = vsel %vm834, %v1506, %v1476
        %v1525 = vsel %vm835, %v1508, %v1477
        %v1526 = vsel %vm836, %v1510, %v1478
        %1527 = vrot.lane.b32.xlu0 %v1511, 64
        %v1528 = vpop.permute.xlu0 %1527
        %1529 = vrot.lane.b32.xlu0 %v1512, 64
        %v1530 = vpop.permute.xlu0 %1529
        %1531 = vrot.lane.b32.xlu0 %v1513, 64
        %v1532 = vpop.permute.xlu0 %1531
        %1533 = vrot.lane.b32.xlu0 %v1514, 64
        %v1534 = vpop.permute.xlu0 %1533
        %1535 = vrot.lane.b32.xlu0 %v1515, 64
        %v1536 = vpop.permute.xlu0 %1535
        %1537 = vrot.lane.b32.xlu0 %v1516, 64
        %v1538 = vpop.permute.xlu0 %1537
        %1539 = vrot.lane.b32.xlu0 %v1517, 64
        %v1540 = vpop.permute.xlu0 %1539
        %1541 = vrot.lane.b32.xlu0 %v1518, 64
        %v1542 = vpop.permute.xlu0 %1541
        %1543 = vrot.lane.b32.xlu0 %v1519, 64
        %v1544 = vpop.permute.xlu0 %1543
        %1545 = vrot.lane.b32.xlu0 %v1520, 64
        %v1546 = vpop.permute.xlu0 %1545
        %1547 = vrot.lane.b32.xlu0 %v1521, 64
        %v1548 = vpop.permute.xlu0 %1547
        %1549 = vrot.lane.b32.xlu0 %v1522, 64
        %v1550 = vpop.permute.xlu0 %1549
        %1551 = vrot.lane.b32.xlu0 %v1523, 64
        %v1552 = vpop.permute.xlu0 %1551
        %1553 = vrot.lane.b32.xlu0 %v1524, 64
        %v1554 = vpop.permute.xlu0 %1553
        %1555 = vrot.lane.b32.xlu0 %v1525, 64
        %v1556 = vpop.permute.xlu0 %1555
        %1557 = vrot.lane.b32.xlu0 %v1526, 64
        %v1558 = vpop.permute.xlu0 %1557
        %v1559 = vsel %vm853, %v1528, %v1511
        %v1560 = vsel %vm854, %v1530, %v1512
        %v1561 = vsel %vm855, %v1532, %v1513
        %v1562 = vsel %vm856, %v1534, %v1514
        %v1563 = vsel %vm857, %v1536, %v1515
        %v1564 = vsel %vm858, %v1538, %v1516
        %v1565 = vsel %vm859, %v1540, %v1517
        %v1566 = vsel %vm860, %v1542, %v1518
        %v1567 = vsel %vm861, %v1544, %v1519
        %v1568 = vsel %vm862, %v1546, %v1520
        %v1569 = vsel %vm863, %v1548, %v1521
        %v1570 = vsel %vm864, %v1550, %v1522
        %v1571 = vsel %vm865, %v1552, %v1523
        %v1572 = vsel %vm866, %v1554, %v1524
        %v1573 = vsel %vm867, %v1556, %v1525
        %v1574 = vsel %vm868, %v1558, %v1526
        %v1575 = vadd.f32 %v1161, %v1559
        %v1576 = vadd.f32 %v1165, %v1560
        %v1577 = vadd.f32 %v1171, %v1561
        %v1578 = vadd.f32 %v1175, %v1562
        %v1579 = vadd.f32 %v1181, %v1563
        %v1580 = vadd.f32 %v1185, %v1564
        %v1581 = vadd.f32 %v1191, %v1565
        %v1582 = vadd.f32 %v1195, %v1566
        %v1583 = vadd.f32 %v1201, %v1567
        %v1584 = vadd.f32 %v1205, %v1568
        %v1585 = vadd.f32 %v1211, %v1569
        %v1586 = vadd.f32 %v1215, %v1570
        %v1587 = vadd.f32 %v1221, %v1571
        %v1588 = vadd.f32 %v1225, %v1572
        %v1589 = vadd.f32 %v1231, %v1573
        %v1590 = vadd.f32 %v1235, %v1574
        %v1591 = vsel %vm613, %v1575, -1e+30
        %v1592 = vsel %vm614, %v1576, -1e+30
        %v1593 = vsel %vm615, %v1577, -1e+30
        %v1594 = vsel %vm616, %v1578, -1e+30
        %v1595 = vsel %vm617, %v1579, -1e+30
        %v1596 = vsel %vm618, %v1580, -1e+30
        %v1597 = vsel %vm619, %v1581, -1e+30
        %v1598 = vsel %vm620, %v1582, -1e+30
        %v1599 = vsel %vm621, %v1583, -1e+30
        %v1600 = vsel %vm622, %v1584, -1e+30
        %v1601 = vsel %vm623, %v1585, -1e+30
        %v1602 = vsel %vm624, %v1586, -1e+30
        %v1603 = vsel %vm625, %v1587, -1e+30
        %v1604 = vsel %vm626, %v1588, -1e+30
        %v1605 = vsel %vm627, %v1589, -1e+30
        %v1606 = vsel %vm628, %v1590, -1e+30
        %1607 = vmax.xlane.f32.xlu0 %v1591
        %v1608 = vpop.xlane.xlu0 %1607
        %1609 = vmax.xlane.f32.xlu0 %v1592
        %v1610 = vpop.xlane.xlu0 %1609
        %1611 = vmax.xlane.f32.xlu0 %v1593
        %v1612 = vpop.xlane.xlu0 %1611
        %1613 = vmax.xlane.f32.xlu0 %v1594
        %v1614 = vpop.xlane.xlu0 %1613
        %1615 = vmax.xlane.f32.xlu0 %v1595
        %v1616 = vpop.xlane.xlu0 %1615
        %1617 = vmax.xlane.f32.xlu0 %v1596
        %v1618 = vpop.xlane.xlu0 %1617
        %1619 = vmax.xlane.f32.xlu0 %v1597
        %v1620 = vpop.xlane.xlu0 %1619
        %1621 = vmax.xlane.f32.xlu0 %v1598
        %v1622 = vpop.xlane.xlu0 %1621
        %1623 = vmax.xlane.f32.xlu0 %v1599
        %v1624 = vpop.xlane.xlu0 %1623
        %1625 = vmax.xlane.f32.xlu0 %v1600
        %v1626 = vpop.xlane.xlu0 %1625
        %1627 = vmax.xlane.f32.xlu0 %v1601
        %v1628 = vpop.xlane.xlu0 %1627
        %1629 = vmax.xlane.f32.xlu0 %v1602
        %v1630 = vpop.xlane.xlu0 %1629
        %1631 = vmax.xlane.f32.xlu0 %v1603
        %v1632 = vpop.xlane.xlu0 %1631
        %1633 = vmax.xlane.f32.xlu0 %v1604
        %v1634 = vpop.xlane.xlu0 %1633
        %1635 = vmax.xlane.f32.xlu0 %v1605
        %v1636 = vpop.xlane.xlu0 %1635
        %1637 = vmax.xlane.f32.xlu0 %v1606
        %v1638 = vpop.xlane.xlu0 %1637
        %v1639 = vsub.f32 %v1591, %v1608
        %v1640 = vsub.f32 %v1592, %v1610
        %v1641 = vsub.f32 %v1593, %v1612
        %v1642 = vsub.f32 %v1594, %v1614
        %v1643 = vsub.f32 %v1595, %v1616
        %v1644 = vsub.f32 %v1596, %v1618
        %v1645 = vsub.f32 %v1597, %v1620
        %v1646 = vsub.f32 %v1598, %v1622
        %v1647 = vsub.f32 %v1599, %v1624
        %v1648 = vsub.f32 %v1600, %v1626
        %v1649 = vsub.f32 %v1601, %v1628
        %v1650 = vsub.f32 %v1602, %v1630
        %v1651 = vsub.f32 %v1603, %v1632
        %v1652 = vsub.f32 %v1604, %v1634
        %v1653 = vsub.f32 %v1605, %v1636
        %v1654 = vsub.f32 %v1606, %v1638
        %v1655 = vmul.f32 %v1639, 1.442695
        %v1656 = vpow.pop %v1655
        %v1657 = vmul.f32 %v1640, 1.442695
        %v1658 = vpow.pop %v1657
        %v1659 = vmul.f32 %v1641, 1.442695
        %v1660 = vpow.pop %v1659
        %v1661 = vmul.f32 %v1642, 1.442695
        %v1662 = vpow.pop %v1661
        %v1663 = vmul.f32 %v1643, 1.442695
        %v1664 = vpow.pop %v1663
        %v1665 = vmul.f32 %v1644, 1.442695
        %v1666 = vpow.pop %v1665
        %v1667 = vmul.f32 %v1645, 1.442695
        %v1668 = vpow.pop %v1667
        %v1669 = vmul.f32 %v1646, 1.442695
        %v1670 = vpow.pop %v1669
        %v1671 = vmul.f32 %v1647, 1.442695
        %v1672 = vpow.pop %v1671
        %v1673 = vmul.f32 %v1648, 1.442695
        %v1674 = vpow.pop %v1673
        %v1675 = vmul.f32 %v1649, 1.442695
        %v1676 = vpow.pop %v1675
        %v1677 = vmul.f32 %v1650, 1.442695
        %v1678 = vpow.pop %v1677
        %v1679 = vmul.f32 %v1651, 1.442695
        %v1680 = vpow.pop %v1679
        %v1681 = vmul.f32 %v1652, 1.442695
        %v1682 = vpow.pop %v1681
        %v1683 = vmul.f32 %v1653, 1.442695
        %v1684 = vpow.pop %v1683
        %v1685 = vmul.f32 %v1654, 1.442695
        %v1686 = vpow.pop %v1685
        %1687 = vadd.xlane.f32.xlu0 %v1656
        %v1688 = vpop.xlane.xlu0 %1687
        %1689 = vadd.xlane.f32.xlu0 %v1658
        %v1690 = vpop.xlane.xlu0 %1689
        %1691 = vadd.xlane.f32.xlu0 %v1660
        %v1692 = vpop.xlane.xlu0 %1691
        %1693 = vadd.xlane.f32.xlu0 %v1662
        %v1694 = vpop.xlane.xlu0 %1693
        %1695 = vadd.xlane.f32.xlu0 %v1664
        %v1696 = vpop.xlane.xlu0 %1695
        %1697 = vadd.xlane.f32.xlu0 %v1666
        %v1698 = vpop.xlane.xlu0 %1697
        %1699 = vadd.xlane.f32.xlu0 %v1668
        %v1700 = vpop.xlane.xlu0 %1699
        %1701 = vadd.xlane.f32.xlu0 %v1670
        %v1702 = vpop.xlane.xlu0 %1701
        %1703 = vadd.xlane.f32.xlu0 %v1672
        %v1704 = vpop.xlane.xlu0 %1703
        %1705 = vadd.xlane.f32.xlu0 %v1674
        %v1706 = vpop.xlane.xlu0 %1705
        %1707 = vadd.xlane.f32.xlu0 %v1676
        %v1708 = vpop.xlane.xlu0 %1707
        %1709 = vadd.xlane.f32.xlu0 %v1678
        %v1710 = vpop.xlane.xlu0 %1709
        %1711 = vadd.xlane.f32.xlu0 %v1680
        %v1712 = vpop.xlane.xlu0 %1711
        %1713 = vadd.xlane.f32.xlu0 %v1682
        %v1714 = vpop.xlane.xlu0 %1713
        %1715 = vadd.xlane.f32.xlu0 %v1684
        %v1716 = vpop.xlane.xlu0 %1715
        %1717 = vadd.xlane.f32.xlu0 %v1686
        %v1718 = vpop.xlane.xlu0 %1717
        %v1719 = vrcp.pop %v1688
        %v1720 = vrcp.pop %v1690
        %v1721 = vrcp.pop %v1692
        %v1722 = vrcp.pop %v1694
        %v1723 = vrcp.pop %v1696
        %v1724 = vrcp.pop %v1698
        %v1725 = vrcp.pop %v1700
        %v1726 = vrcp.pop %v1702
        %v1727 = vrcp.pop %v1704
        %v1728 = vrcp.pop %v1706
        %v1729 = vrcp.pop %v1708
        %v1730 = vrcp.pop %v1710
        %v1731 = vrcp.pop %v1712
        %v1732 = vrcp.pop %v1714
        %v1733 = vrcp.pop %v1716
        %v1734 = vrcp.pop %v1718
        %v1735 = vmul.f32 %v1656, %v1719
        %v1736 = vmul.f32 %v1658, %v1720
        %v1737 = vmul.f32 %v1660, %v1721
        %v1738 = vmul.f32 %v1662, %v1722
        %v1739 = vmul.f32 %v1664, %v1723
        %v1740 = vmul.f32 %v1666, %v1724
        %v1741 = vmul.f32 %v1668, %v1725
        %v1742 = vmul.f32 %v1670, %v1726
        %v1743 = vmul.f32 %v1672, %v1727
        %v1744 = vmul.f32 %v1674, %v1728
        %v1745 = vmul.f32 %v1676, %v1729
        %v1746 = vmul.f32 %v1678, %v1730
        %v1747 = vmul.f32 %v1680, %v1731
        %v1748 = vmul.f32 %v1682, %v1732
        %v1749 = vmul.f32 %v1684, %v1733
        %v1750 = vmul.f32 %v1686, %v1734
        %v1751 = vpack.c.bf16 %v1736, %v1735
        %v1752 = vpack.c.bf16 %v1738, %v1737
        %v1753 = vpack.c.bf16 %v1740, %v1739
        %v1754 = vpack.c.bf16 %v1742, %v1741
        %v1755 = vpack.c.bf16 %v1744, %v1743
        %v1756 = vpack.c.bf16 %v1746, %v1745
        %v1757 = vpack.c.bf16 %v1748, %v1747
        %v1758 = vpack.c.bf16 %v1750, %v1749
        %v1775 = vunpack.c.l.b16 %v901
        %v1776 = vunpack.c.l.b16 %v902
        %v1777 = vunpack.c.l.b16 %v903
        %v1778 = vunpack.c.l.b16 %v904
        %v1779 = vunpack.c.l.b16 %v905
        %v1780 = vunpack.c.l.b16 %v906
        %v1781 = vunpack.c.l.b16 %v907
        %v1782 = vunpack.c.l.b16 %v908
        %v1783 = vunpack.c.l.b16 %v909
        %v1784 = vunpack.c.l.b16 %v910
        %v1785 = vunpack.c.l.b16 %v911
        %v1786 = vunpack.c.l.b16 %v912
        %v1787 = vunpack.c.l.b16 %v913
        %v1788 = vunpack.c.l.b16 %v914
        %v1789 = vunpack.c.l.b16 %v915
        %v1790 = vunpack.c.l.b16 %v916
        %v1791 = vpack.c.b16 %v1776, %v1775
        %v1792 = vpack.c.b16 %v1778, %v1777
        %v1793 = vpack.c.b16 %v1780, %v1779
        %v1794 = vpack.c.b16 %v1782, %v1781
        %v1795 = vpack.c.b16 %v1784, %v1783
        %v1796 = vpack.c.b16 %v1786, %v1785
        %v1797 = vpack.c.b16 %v1788, %v1787
        %v1798 = vpack.c.b16 %v1790, %v1789
        %1807 = vmatprep.subr.bf16.mxu0 0
        %1808 = vmatpush1.bf16.msra.mxu0 %v1791
        %1809 = vmatprep.subr.bf16.mxu0 0
        %1810 = vmatpush1.bf16.msra.mxu0 %v1792
        %1811 = vmatprep.subr.bf16.mxu0 0
        %1812 = vmatpush1.bf16.msra.mxu0 %v1793
        %1813 = vmatprep.subr.bf16.mxu0 0
        %1814 = vmatpush1.bf16.msra.mxu0 %v1794
        %1815 = vmatprep.subr.bf16.mxu0 0
        %1816 = vmatpush1.bf16.msra.mxu0 %v1795
        %1817 = vmatprep.subr.bf16.mxu0 0
        %1818 = vmatpush1.bf16.msra.mxu0 %v1796
        %1819 = vmatprep.subr.bf16.mxu0 0
        %1820 = vmatpush1.bf16.msra.mxu0 %v1797
        %1821 = vmatprep.subr.bf16.mxu0 0
        %1822 = vmatpush1.bf16.msra.mxu0 %v1798
        %1823 = vmatprep.subr.bf16.mxu0 0
        %1824 = vmatpush1.bf16.msra.mxu0 0
        %1825 = vmatprep.subr.bf16.mxu0 0
        %1826 = vmatpush1.bf16.msra.mxu0 0
        %1827 = vmatprep.subr.bf16.mxu0 0
        %1828 = vmatpush1.bf16.msra.mxu0 0
        %1829 = vmatprep.subr.bf16.mxu0 0
        %1830 = vmatpush1.bf16.msra.mxu0 0
        %1831 = vmatprep.subr.bf16.mxu0 0
        %1832 = vmatpush1.bf16.msra.mxu0 0
        %1833 = vmatprep.subr.bf16.mxu0 0
        %1834 = vmatpush1.bf16.msra.mxu0 0
        %1835 = vmatprep.subr.bf16.mxu0 0
        %1836 = vmatpush1.bf16.msra.mxu0 0
        %1837 = vmatprep.subr.bf16.mxu0 0
        %1838 = vmatpush1.bf16.msra.mxu0 0
        %1839 = vmatprep.mubr.bf16.mxu0 0
        %1840 = vmatmul.mubr.bf16.gmra.mrb[0].mxu0 %v1751
        %v1841 = vpop.f32.mrb[0].mxu0
        %v1842 = vadd.f32 0.0, %v1841
        %v1843 = vpop.f32.mrb[0].mxu0
        %v1844 = vpop.f32.mrb[0].mxu0
        %v1845 = vadd.f32 0.0, %v1844
        %v1846 = vpop.f32.mrb[0].mxu0
        %1847 = vmatprep.mubr.bf16.mxu0 0
        %1848 = vmatmul.mubr.bf16.gmra.mrb[0].mxu0 %v1752
        %v1849 = vpop.f32.mrb[0].mxu0
        %v1850 = vadd.f32 0.0, %v1849
        %v1851 = vpop.f32.mrb[0].mxu0
        %v1852 = vpop.f32.mrb[0].mxu0
        %v1853 = vadd.f32 0.0, %v1852
        %v1854 = vpop.f32.mrb[0].mxu0
        %1855 = vmatprep.mubr.bf16.mxu0 0
        %1856 = vmatmul.mubr.bf16.gmra.mrb[0].mxu0 %v1753
        %v1857 = vpop.f32.mrb[0].mxu0
        %v1858 = vadd.f32 0.0, %v1857
        %v1859 = vpop.f32.mrb[0].mxu0
        %v1860 = vpop.f32.mrb[0].mxu0
        %v1861 = vadd.f32 0.0, %v1860
        %v1862 = vpop.f32.mrb[0].mxu0
        %1863 = vmatprep.mubr.bf16.mxu0 0
        %1864 = vmatmul.mubr.bf16.gmra.mrb[0].mxu0 %v1754
        %v1865 = vpop.f32.mrb[0].mxu0
        %v1866 = vadd.f32 0.0, %v1865
        %v1867 = vpop.f32.mrb[0].mxu0
        %v1868 = vpop.f32.mrb[0].mxu0
        %v1869 = vadd.f32 0.0, %v1868
        %v1870 = vpop.f32.mrb[0].mxu0
        %1871 = vmatprep.mubr.bf16.mxu0 0
        %1872 = vmatmul.mubr.bf16.gmra.mrb[0].mxu0 %v1755
        %v1873 = vpop.f32.mrb[0].mxu0
        %v1874 = vadd.f32 0.0, %v1873
        %v1875 = vpop.f32.mrb[0].mxu0
        %v1876 = vpop.f32.mrb[0].mxu0
        %v1877 = vadd.f32 0.0, %v1876
        %v1878 = vpop.f32.mrb[0].mxu0
        %1879 = vmatprep.mubr.bf16.mxu0 0
        %1880 = vmatmul.mubr.bf16.gmra.mrb[0].mxu0 %v1756
        %v1881 = vpop.f32.mrb[0].mxu0
        %v1882 = vadd.f32 0.0, %v1881
        %v1883 = vpop.f32.mrb[0].mxu0
        %v1884 = vpop.f32.mrb[0].mxu0
        %v1885 = vadd.f32 0.0, %v1884
        %v1886 = vpop.f32.mrb[0].mxu0
        %1887 = vmatprep.mubr.bf16.mxu0 0
        %1888 = vmatmul.mubr.bf16.gmra.mrb[0].mxu0 %v1757
        %v1889 = vpop.f32.mrb[0].mxu0
        %v1890 = vadd.f32 0.0, %v1889
        %v1891 = vpop.f32.mrb[0].mxu0
        %v1892 = vpop.f32.mrb[0].mxu0
        %v1893 = vadd.f32 0.0, %v1892
        %v1894 = vpop.f32.mrb[0].mxu0
        %1895 = vmatprep.mubr.bf16.mxu0 0
        %1896 = vmatmul.mubr.bf16.gmra.mrb[0].mxu0 %v1758
        %v1897 = vpop.f32.mrb[0].mxu0
        %v1898 = vadd.f32 0.0, %v1897
        %v1899 = vpop.f32.mrb[0].mxu0
        %v1900 = vpop.f32.mrb[0].mxu0
        %v1901 = vadd.f32 0.0, %v1900
        %v1902 = vpop.f32.mrb[0].mxu0
        %1903 = vdwg.mxu0
        %s1904 = scalar_lea.vmem %s3, 128
        %v1905 = vld [vmem:[%s1904 + $0x40] sm:$0xf]
        %v1906 = vld [vmem:[%s1904 + $0x44] sm:$0xf]
        %v1907 = vld [vmem:[%s1904 + $0x48] sm:$0xf]
        %v1908 = vld [vmem:[%s1904 + $0x4c] sm:$0xf]
        %v1909 = vld [vmem:[%s1904 + $0x50] sm:$0xf]
        %v1910 = vld [vmem:[%s1904 + $0x54] sm:$0xf]
        %v1911 = vld [vmem:[%s1904 + $0x58] sm:$0xf]
        %v1912 = vld [vmem:[%s1904 + $0x5c] sm:$0xf]
        %v1913 = vld [vmem:[%s1904 + $0x60] sm:$0xf]
        %v1914 = vld [vmem:[%s1904 + $0x64] sm:$0xf]
        %v1915 = vld [vmem:[%s1904 + $0x68] sm:$0xf]
        %v1916 = vld [vmem:[%s1904 + $0x6c] sm:$0xf]
        %v1917 = vld [vmem:[%s1904 + $0x70] sm:$0xf]
        %v1918 = vld [vmem:[%s1904 + $0x74] sm:$0xf]
        %v1919 = vld [vmem:[%s1904 + $0x78] sm:$0xf]
        %v1920 = vld [vmem:[%s1904 + $0x7c] sm:$0xf]
        %v1937 = vunpack.c.l.b16 %v1905
        %v1938 = vunpack.c.l.b16 %v1906
        %v1939 = vunpack.c.l.b16 %v1907
        %v1940 = vunpack.c.l.b16 %v1908
        %v1941 = vunpack.c.l.b16 %v1909
        %v1942 = vunpack.c.l.b16 %v1910
        %v1943 = vunpack.c.l.b16 %v1911
        %v1944 = vunpack.c.l.b16 %v1912
        %v1945 = vunpack.c.l.b16 %v1913
        %v1946 = vunpack.c.l.b16 %v1914
        %v1947 = vunpack.c.l.b16 %v1915
        %v1948 = vunpack.c.l.b16 %v1916
        %v1949 = vunpack.c.l.b16 %v1917
        %v1950 = vunpack.c.l.b16 %v1918
        %v1951 = vunpack.c.l.b16 %v1919
        %v1952 = vunpack.c.l.b16 %v1920
        %v1953 = vpack.c.b16 %v1938, %v1937
        %v1954 = vpack.c.b16 %v1940, %v1939
        %v1955 = vpack.c.b16 %v1942, %v1941
        %v1956 = vpack.c.b16 %v1944, %v1943
        %v1957 = vpack.c.b16 %v1946, %v1945
        %v1958 = vpack.c.b16 %v1948, %v1947
        %v1959 = vpack.c.b16 %v1950, %v1949
        %v1960 = vpack.c.b16 %v1952, %v1951
        %1961 = vrot.lane.b32.xlu0 %v1953, 32
        %v1962 = vpop.permute.xlu0 %1961
        %1963 = vrot.lane.b32.xlu0 %v1954, 32
        %v1964 = vpop.permute.xlu0 %1963
        %1965 = vrot.lane.b32.xlu0 %v1955, 32
        %v1966 = vpop.permute.xlu0 %1965
        %1967 = vrot.lane.b32.xlu0 %v1956, 32
        %v1968 = vpop.permute.xlu0 %1967
        %1969 = vrot.lane.b32.xlu0 %v1957, 32
        %v1970 = vpop.permute.xlu0 %1969
        %1971 = vrot.lane.b32.xlu0 %v1958, 32
        %v1972 = vpop.permute.xlu0 %1971
        %1973 = vrot.lane.b32.xlu0 %v1959, 32
        %v1974 = vpop.permute.xlu0 %1973
        %1975 = vrot.lane.b32.xlu0 %v1960, 32
        %v1976 = vpop.permute.xlu0 %1975
        %1985 = vrot.lane.b32.xlu0 %v965, 96
        %v1986 = vpop.permute.xlu0 %1985
        %1987 = vrot.lane.b32.xlu0 %v966, 96
        %v1988 = vpop.permute.xlu0 %1987
        %1989 = vrot.lane.b32.xlu0 %v967, 96
        %v1990 = vpop.permute.xlu0 %1989
        %1991 = vrot.lane.b32.xlu0 %v968, 96
        %v1992 = vpop.permute.xlu0 %1991
        %1993 = vrot.lane.b32.xlu0 %v969, 96
        %v1994 = vpop.permute.xlu0 %1993
        %1995 = vrot.lane.b32.xlu0 %v970, 96
        %v1996 = vpop.permute.xlu0 %1995
        %1997 = vrot.lane.b32.xlu0 %v971, 96
        %v1998 = vpop.permute.xlu0 %1997
        %1999 = vrot.lane.b32.xlu0 %v972, 96
        %v2000 = vpop.permute.xlu0 %1999
        %2001 = vrot.lane.b32.xlu0 %v1005, 96
        %v2002 = vpop.permute.xlu0 %2001
        %2003 = vrot.lane.b32.xlu0 %v1006, 96
        %v2004 = vpop.permute.xlu0 %2003
        %2005 = vrot.lane.b32.xlu0 %v1007, 96
        %v2006 = vpop.permute.xlu0 %2005
        %2007 = vrot.lane.b32.xlu0 %v1008, 96
        %v2008 = vpop.permute.xlu0 %2007
        %2009 = vrot.lane.b32.xlu0 %v1009, 96
        %v2010 = vpop.permute.xlu0 %2009
        %2011 = vrot.lane.b32.xlu0 %v1010, 96
        %v2012 = vpop.permute.xlu0 %2011
        %2013 = vrot.lane.b32.xlu0 %v1011, 96
        %v2014 = vpop.permute.xlu0 %2013
        %2015 = vrot.lane.b32.xlu0 %v1012, 96
        %v2016 = vpop.permute.xlu0 %2015
        %2017 = vrot.lane.b32.xlu0 %v1962, 96
        %v2018 = vpop.permute.xlu0 %2017
        %2019 = vrot.lane.b32.xlu0 %v1964, 96
        %v2020 = vpop.permute.xlu0 %2019
        %2021 = vrot.lane.b32.xlu0 %v1966, 96
        %v2022 = vpop.permute.xlu0 %2021
        %2023 = vrot.lane.b32.xlu0 %v1968, 96
        %v2024 = vpop.permute.xlu0 %2023
        %2025 = vrot.lane.b32.xlu0 %v1970, 96
        %v2026 = vpop.permute.xlu0 %2025
        %2027 = vrot.lane.b32.xlu0 %v1972, 96
        %v2028 = vpop.permute.xlu0 %2027
        %2029 = vrot.lane.b32.xlu0 %v1974, 96
        %v2030 = vpop.permute.xlu0 %2029
        %2031 = vrot.lane.b32.xlu0 %v1976, 96
        %v2032 = vpop.permute.xlu0 %2031
        %v2034 = vsel %vm1053, %v1986, 0
        %v2037 = vsel %vm1053, %v1988, 0
        %v2040 = vsel %vm1053, %v1990, 0
        %v2043 = vsel %vm1053, %v1992, 0
        %v2046 = vsel %vm1053, %v1994, 0
        %v2049 = vsel %vm1053, %v1996, 0
        %v2052 = vsel %vm1053, %v1998, 0
        %v2055 = vsel %vm1053, %v2000, 0
        %v2058 = vsel %vm1053, %v2002, 0
        %v2061 = vsel %vm1053, %v2004, 0
        %v2064 = vsel %vm1053, %v2006, 0
        %v2067 = vsel %vm1053, %v2008, 0
        %v2070 = vsel %vm1053, %v2010, 0
        %v2073 = vsel %vm1053, %v2012, 0
        %v2076 = vsel %vm1053, %v2014, 0
        %v2079 = vsel %vm1053, %v2016, 0
        %v2082 = vsel %vm1053, %v2018, 0
        %v2085 = vsel %vm1053, %v2020, 0
        %v2088 = vsel %vm1053, %v2022, 0
        %v2091 = vsel %vm1053, %v2024, 0
        %v2094 = vsel %vm1053, %v2026, 0
        %v2097 = vsel %vm1053, %v2028, 0
        %v2100 = vsel %vm1053, %v2030, 0
        %v2103 = vsel %vm1053, %v2032, 0
        %2105 = vmatprep.subr.bf16.mxu0 0
        %2106 = vmatpush1.bf16.xpose.msra.mxu0 %v2058
        %2107 = vmatprep.subr.bf16.mxu0 0
        %2108 = vmatpush1.bf16.xpose.msra.mxu0 %v2061
        %2109 = vmatprep.subr.bf16.mxu0 0
        %2110 = vmatpush1.bf16.xpose.msra.mxu0 %v2064
        %2111 = vmatprep.subr.bf16.mxu0 0
        %2112 = vmatpush1.bf16.xpose.msra.mxu0 %v2067
        %2113 = vmatprep.subr.bf16.mxu0 0
        %2114 = vmatpush1.bf16.xpose.msra.mxu0 %v2070
        %2115 = vmatprep.subr.bf16.mxu0 0
        %2116 = vmatpush1.bf16.xpose.msra.mxu0 %v2073
        %2117 = vmatprep.subr.bf16.mxu0 0
        %2118 = vmatpush1.bf16.xpose.msra.mxu0 %v2076
        %2119 = vmatprep.subr.bf16.mxu0 0
        %2120 = vmatpush1.bf16.xpose.msra.mxu0 %v2079
        %2121 = vmatprep.subr.bf16.mxu0 0
        %2122 = vmatpush1.bf16.xpose.msra.mxu0 %v2082
        %2123 = vmatprep.subr.bf16.mxu0 0
        %2124 = vmatpush1.bf16.xpose.msra.mxu0 %v2085
        %2125 = vmatprep.subr.bf16.mxu0 0
        %2126 = vmatpush1.bf16.xpose.msra.mxu0 %v2088
        %2127 = vmatprep.subr.bf16.mxu0 0
        %2128 = vmatpush1.bf16.xpose.msra.mxu0 %v2091
        %2129 = vmatprep.subr.bf16.mxu0 0
        %2130 = vmatpush1.bf16.xpose.msra.mxu0 %v2094
        %2131 = vmatprep.subr.bf16.mxu0 0
        %2132 = vmatpush1.bf16.xpose.msra.mxu0 %v2097
        %2133 = vmatprep.subr.bf16.mxu0 0
        %2134 = vmatpush1.bf16.xpose.msra.mxu0 %v2100
        %2135 = vmatprep.subr.bf16.mxu0 0
        %2136 = vmatpush1.bf16.xpose.msra.mxu0 %v2103
        %2137 = vmatprep.mubr.bf16.mxu0 0
        %2138 = vmatmul.mubr.bf16.gmra.mrb[0].mxu0 %v2034
        %v2139 = vpop.f32.mrb[0].mxu0
        %v2140 = vadd.f32 0.0, %v2139
        %v2141 = vpop.f32.mrb[0].mxu0
        %v2142 = vadd.f32 0.0, %v2141
        %v2143 = vpop.f32.mrb[0].mxu0
        %v2144 = vadd.f32 0.0, %v2143
        %v2145 = vpop.f32.mrb[0].mxu0
        %v2146 = vadd.f32 0.0, %v2145
        %2147 = vmatprep.mubr.bf16.mxu0 0
        %2148 = vmatmul.mubr.bf16.gmra.mrb[0].mxu0 %v2037
        %v2149 = vpop.f32.mrb[0].mxu0
        %v2150 = vadd.f32 0.0, %v2149
        %v2151 = vpop.f32.mrb[0].mxu0
        %v2152 = vadd.f32 0.0, %v2151
        %v2153 = vpop.f32.mrb[0].mxu0
        %v2154 = vadd.f32 0.0, %v2153
        %v2155 = vpop.f32.mrb[0].mxu0
        %v2156 = vadd.f32 0.0, %v2155
        %2157 = vmatprep.mubr.bf16.mxu0 0
        %2158 = vmatmul.mubr.bf16.gmra.mrb[0].mxu0 %v2040
        %v2159 = vpop.f32.mrb[0].mxu0
        %v2160 = vadd.f32 0.0, %v2159
        %v2161 = vpop.f32.mrb[0].mxu0
        %v2162 = vadd.f32 0.0, %v2161
        %v2163 = vpop.f32.mrb[0].mxu0
        %v2164 = vadd.f32 0.0, %v2163
        %v2165 = vpop.f32.mrb[0].mxu0
        %v2166 = vadd.f32 0.0, %v2165
        %2167 = vmatprep.mubr.bf16.mxu0 0
        %2168 = vmatmul.mubr.bf16.gmra.mrb[0].mxu0 %v2043
        %v2169 = vpop.f32.mrb[0].mxu0
        %v2170 = vadd.f32 0.0, %v2169
        %v2171 = vpop.f32.mrb[0].mxu0
        %v2172 = vadd.f32 0.0, %v2171
        %v2173 = vpop.f32.mrb[0].mxu0
        %v2174 = vadd.f32 0.0, %v2173
        %v2175 = vpop.f32.mrb[0].mxu0
        %v2176 = vadd.f32 0.0, %v2175
        %2177 = vmatprep.mubr.bf16.mxu0 0
        %2178 = vmatmul.mubr.bf16.gmra.mrb[0].mxu0 %v2046
        %v2179 = vpop.f32.mrb[0].mxu0
        %v2180 = vadd.f32 0.0, %v2179
        %v2181 = vpop.f32.mrb[0].mxu0
        %v2182 = vadd.f32 0.0, %v2181
        %v2183 = vpop.f32.mrb[0].mxu0
        %v2184 = vadd.f32 0.0, %v2183
        %v2185 = vpop.f32.mrb[0].mxu0
        %v2186 = vadd.f32 0.0, %v2185
        %2187 = vmatprep.mubr.bf16.mxu0 0
        %2188 = vmatmul.mubr.bf16.gmra.mrb[0].mxu0 %v2049
        %v2189 = vpop.f32.mrb[0].mxu0
        %v2190 = vadd.f32 0.0, %v2189
        %v2191 = vpop.f32.mrb[0].mxu0
        %v2192 = vadd.f32 0.0, %v2191
        %v2193 = vpop.f32.mrb[0].mxu0
        %v2194 = vadd.f32 0.0, %v2193
        %v2195 = vpop.f32.mrb[0].mxu0
        %v2196 = vadd.f32 0.0, %v2195
        %2197 = vmatprep.mubr.bf16.mxu0 0
        %2198 = vmatmul.mubr.bf16.gmra.mrb[0].mxu0 %v2052
        %v2199 = vpop.f32.mrb[0].mxu0
        %v2200 = vadd.f32 0.0, %v2199
        %v2201 = vpop.f32.mrb[0].mxu0
        %v2202 = vadd.f32 0.0, %v2201
        %v2203 = vpop.f32.mrb[0].mxu0
        %v2204 = vadd.f32 0.0, %v2203
        %v2205 = vpop.f32.mrb[0].mxu0
        %v2206 = vadd.f32 0.0, %v2205
        %2207 = vmatprep.mubr.bf16.mxu0 0
        %2208 = vmatmul.mubr.bf16.gmra.mrb[0].mxu0 %v2055
        %v2209 = vpop.f32.mrb[0].mxu0
        %v2210 = vadd.f32 0.0, %v2209
        %v2211 = vpop.f32.mrb[0].mxu0
        %v2212 = vadd.f32 0.0, %v2211
        %v2213 = vpop.f32.mrb[0].mxu0
        %v2214 = vadd.f32 0.0, %v2213
        %v2215 = vpop.f32.mrb[0].mxu0
        %v2216 = vadd.f32 0.0, %v2215
        %2217 = vdwg.mxu0
        %2218 = vrot.lane.b32.xlu0 %v2142, 127
        %v2219 = vpop.permute.xlu0 %2218
        %2220 = vrot.lane.b32.xlu0 %v2146, 127
        %v2221 = vpop.permute.xlu0 %2220
        %2222 = vrot.lane.b32.xlu0 %v2152, 127
        %v2223 = vpop.permute.xlu0 %2222
        %2224 = vrot.lane.b32.xlu0 %v2156, 127
        %v2225 = vpop.permute.xlu0 %2224
        %2226 = vrot.lane.b32.xlu0 %v2162, 127
        %v2227 = vpop.permute.xlu0 %2226
        %2228 = vrot.lane.b32.xlu0 %v2166, 127
        %v2229 = vpop.permute.xlu0 %2228
        %2230 = vrot.lane.b32.xlu0 %v2172, 127
        %v2231 = vpop.permute.xlu0 %2230
        %2232 = vrot.lane.b32.xlu0 %v2176, 127
        %v2233 = vpop.permute.xlu0 %2232
        %2234 = vrot.lane.b32.xlu0 %v2182, 127
        %v2235 = vpop.permute.xlu0 %2234
        %2236 = vrot.lane.b32.xlu0 %v2186, 127
        %v2237 = vpop.permute.xlu0 %2236
        %2238 = vrot.lane.b32.xlu0 %v2192, 127
        %v2239 = vpop.permute.xlu0 %2238
        %2240 = vrot.lane.b32.xlu0 %v2196, 127
        %v2241 = vpop.permute.xlu0 %2240
        %2242 = vrot.lane.b32.xlu0 %v2202, 127
        %v2243 = vpop.permute.xlu0 %2242
        %2244 = vrot.lane.b32.xlu0 %v2206, 127
        %v2245 = vpop.permute.xlu0 %2244
        %2246 = vrot.lane.b32.xlu0 %v2212, 127
        %v2247 = vpop.permute.xlu0 %2246
        %2248 = vrot.lane.b32.xlu0 %v2216, 127
        %v2249 = vpop.permute.xlu0 %2248
        %v2250 = vsel %vm661, %v2219, %v2142
        %v2251 = vsel %vm662, %v2221, %v2146
        %v2252 = vsel %vm663, %v2223, %v2152
        %v2253 = vsel %vm664, %v2225, %v2156
        %v2254 = vsel %vm665, %v2227, %v2162
        %v2255 = vsel %vm666, %v2229, %v2166
        %v2256 = vsel %vm667, %v2231, %v2172
        %v2257 = vsel %vm668, %v2233, %v2176
        %v2258 = vsel %vm669, %v2235, %v2182
        %v2259 = vsel %vm670, %v2237, %v2186
        %v2260 = vsel %vm671, %v2239, %v2192
        %v2261 = vsel %vm672, %v2241, %v2196
        %v2262 = vsel %vm673, %v2243, %v2202
        %v2263 = vsel %vm674, %v2245, %v2206
        %v2264 = vsel %vm675, %v2247, %v2212
        %v2265 = vsel %vm676, %v2249, %v2216
        %2266 = vrot.lane.b32.xlu0 %v2250, 126
        %v2267 = vpop.permute.xlu0 %2266
        %2268 = vrot.lane.b32.xlu0 %v2251, 126
        %v2269 = vpop.permute.xlu0 %2268
        %2270 = vrot.lane.b32.xlu0 %v2252, 126
        %v2271 = vpop.permute.xlu0 %2270
        %2272 = vrot.lane.b32.xlu0 %v2253, 126
        %v2273 = vpop.permute.xlu0 %2272
        %2274 = vrot.lane.b32.xlu0 %v2254, 126
        %v2275 = vpop.permute.xlu0 %2274
        %2276 = vrot.lane.b32.xlu0 %v2255, 126
        %v2277 = vpop.permute.xlu0 %2276
        %2278 = vrot.lane.b32.xlu0 %v2256, 126
        %v2279 = vpop.permute.xlu0 %2278
        %2280 = vrot.lane.b32.xlu0 %v2257, 126
        %v2281 = vpop.permute.xlu0 %2280
        %2282 = vrot.lane.b32.xlu0 %v2258, 126
        %v2283 = vpop.permute.xlu0 %2282
        %2284 = vrot.lane.b32.xlu0 %v2259, 126
        %v2285 = vpop.permute.xlu0 %2284
        %2286 = vrot.lane.b32.xlu0 %v2260, 126
        %v2287 = vpop.permute.xlu0 %2286
        %2288 = vrot.lane.b32.xlu0 %v2261, 126
        %v2289 = vpop.permute.xlu0 %2288
        %2290 = vrot.lane.b32.xlu0 %v2262, 126
        %v2291 = vpop.permute.xlu0 %2290
        %2292 = vrot.lane.b32.xlu0 %v2263, 126
        %v2293 = vpop.permute.xlu0 %2292
        %2294 = vrot.lane.b32.xlu0 %v2264, 126
        %v2295 = vpop.permute.xlu0 %2294
        %2296 = vrot.lane.b32.xlu0 %v2265, 126
        %v2297 = vpop.permute.xlu0 %2296
        %v2298 = vsel %vm693, %v2267, %v2250
        %v2299 = vsel %vm694, %v2269, %v2251
        %v2300 = vsel %vm695, %v2271, %v2252
        %v2301 = vsel %vm696, %v2273, %v2253
        %v2302 = vsel %vm697, %v2275, %v2254
        %v2303 = vsel %vm698, %v2277, %v2255
        %v2304 = vsel %vm699, %v2279, %v2256
        %v2305 = vsel %vm700, %v2281, %v2257
        %v2306 = vsel %vm701, %v2283, %v2258
        %v2307 = vsel %vm702, %v2285, %v2259
        %v2308 = vsel %vm703, %v2287, %v2260
        %v2309 = vsel %vm704, %v2289, %v2261
        %v2310 = vsel %vm705, %v2291, %v2262
        %v2311 = vsel %vm706, %v2293, %v2263
        %v2312 = vsel %vm707, %v2295, %v2264
        %v2313 = vsel %vm708, %v2297, %v2265
        %2314 = vrot.lane.b32.xlu0 %v2298, 124
        %v2315 = vpop.permute.xlu0 %2314
        %2316 = vrot.lane.b32.xlu0 %v2299, 124
        %v2317 = vpop.permute.xlu0 %2316
        %2318 = vrot.lane.b32.xlu0 %v2300, 124
        %v2319 = vpop.permute.xlu0 %2318
        %2320 = vrot.lane.b32.xlu0 %v2301, 124
        %v2321 = vpop.permute.xlu0 %2320
        %2322 = vrot.lane.b32.xlu0 %v2302, 124
        %v2323 = vpop.permute.xlu0 %2322
        %2324 = vrot.lane.b32.xlu0 %v2303, 124
        %v2325 = vpop.permute.xlu0 %2324
        %2326 = vrot.lane.b32.xlu0 %v2304, 124
        %v2327 = vpop.permute.xlu0 %2326
        %2328 = vrot.lane.b32.xlu0 %v2305, 124
        %v2329 = vpop.permute.xlu0 %2328
        %2330 = vrot.lane.b32.xlu0 %v2306, 124
        %v2331 = vpop.permute.xlu0 %2330
        %2332 = vrot.lane.b32.xlu0 %v2307, 124
        %v2333 = vpop.permute.xlu0 %2332
        %2334 = vrot.lane.b32.xlu0 %v2308, 124
        %v2335 = vpop.permute.xlu0 %2334
        %2336 = vrot.lane.b32.xlu0 %v2309, 124
        %v2337 = vpop.permute.xlu0 %2336
        %2338 = vrot.lane.b32.xlu0 %v2310, 124
        %v2339 = vpop.permute.xlu0 %2338
        %2340 = vrot.lane.b32.xlu0 %v2311, 124
        %v2341 = vpop.permute.xlu0 %2340
        %2342 = vrot.lane.b32.xlu0 %v2312, 124
        %v2343 = vpop.permute.xlu0 %2342
        %2344 = vrot.lane.b32.xlu0 %v2313, 124
        %v2345 = vpop.permute.xlu0 %2344
        %v2346 = vsel %vm725, %v2315, %v2298
        %v2347 = vsel %vm726, %v2317, %v2299
        %v2348 = vsel %vm727, %v2319, %v2300
        %v2349 = vsel %vm728, %v2321, %v2301
        %v2350 = vsel %vm729, %v2323, %v2302
        %v2351 = vsel %vm730, %v2325, %v2303
        %v2352 = vsel %vm731, %v2327, %v2304
        %v2353 = vsel %vm732, %v2329, %v2305
        %v2354 = vsel %vm733, %v2331, %v2306
        %v2355 = vsel %vm734, %v2333, %v2307
        %v2356 = vsel %vm735, %v2335, %v2308
        %v2357 = vsel %vm736, %v2337, %v2309
        %v2358 = vsel %vm737, %v2339, %v2310
        %v2359 = vsel %vm738, %v2341, %v2311
        %v2360 = vsel %vm739, %v2343, %v2312
        %v2361 = vsel %vm740, %v2345, %v2313
        %2362 = vrot.lane.b32.xlu0 %v2346, 120
        %v2363 = vpop.permute.xlu0 %2362
        %2364 = vrot.lane.b32.xlu0 %v2347, 120
        %v2365 = vpop.permute.xlu0 %2364
        %2366 = vrot.lane.b32.xlu0 %v2348, 120
        %v2367 = vpop.permute.xlu0 %2366
        %2368 = vrot.lane.b32.xlu0 %v2349, 120
        %v2369 = vpop.permute.xlu0 %2368
        %2370 = vrot.lane.b32.xlu0 %v2350, 120
        %v2371 = vpop.permute.xlu0 %2370
        %2372 = vrot.lane.b32.xlu0 %v2351, 120
        %v2373 = vpop.permute.xlu0 %2372
        %2374 = vrot.lane.b32.xlu0 %v2352, 120
        %v2375 = vpop.permute.xlu0 %2374
        %2376 = vrot.lane.b32.xlu0 %v2353, 120
        %v2377 = vpop.permute.xlu0 %2376
        %2378 = vrot.lane.b32.xlu0 %v2354, 120
        %v2379 = vpop.permute.xlu0 %2378
        %2380 = vrot.lane.b32.xlu0 %v2355, 120
        %v2381 = vpop.permute.xlu0 %2380
        %2382 = vrot.lane.b32.xlu0 %v2356, 120
        %v2383 = vpop.permute.xlu0 %2382
        %2384 = vrot.lane.b32.xlu0 %v2357, 120
        %v2385 = vpop.permute.xlu0 %2384
        %2386 = vrot.lane.b32.xlu0 %v2358, 120
        %v2387 = vpop.permute.xlu0 %2386
        %2388 = vrot.lane.b32.xlu0 %v2359, 120
        %v2389 = vpop.permute.xlu0 %2388
        %2390 = vrot.lane.b32.xlu0 %v2360, 120
        %v2391 = vpop.permute.xlu0 %2390
        %2392 = vrot.lane.b32.xlu0 %v2361, 120
        %v2393 = vpop.permute.xlu0 %2392
        %v2394 = vsel %vm757, %v2363, %v2346
        %v2395 = vsel %vm758, %v2365, %v2347
        %v2396 = vsel %vm759, %v2367, %v2348
        %v2397 = vsel %vm760, %v2369, %v2349
        %v2398 = vsel %vm761, %v2371, %v2350
        %v2399 = vsel %vm762, %v2373, %v2351
        %v2400 = vsel %vm763, %v2375, %v2352
        %v2401 = vsel %vm764, %v2377, %v2353
        %v2402 = vsel %vm765, %v2379, %v2354
        %v2403 = vsel %vm766, %v2381, %v2355
        %v2404 = vsel %vm767, %v2383, %v2356
        %v2405 = vsel %vm768, %v2385, %v2357
        %v2406 = vsel %vm769, %v2387, %v2358
        %v2407 = vsel %vm770, %v2389, %v2359
        %v2408 = vsel %vm771, %v2391, %v2360
        %v2409 = vsel %vm772, %v2393, %v2361
        %2410 = vrot.lane.b32.xlu0 %v2394, 112
        %v2411 = vpop.permute.xlu0 %2410
        %2412 = vrot.lane.b32.xlu0 %v2395, 112
        %v2413 = vpop.permute.xlu0 %2412
        %2414 = vrot.lane.b32.xlu0 %v2396, 112
        %v2415 = vpop.permute.xlu0 %2414
        %2416 = vrot.lane.b32.xlu0 %v2397, 112
        %v2417 = vpop.permute.xlu0 %2416
        %2418 = vrot.lane.b32.xlu0 %v2398, 112
        %v2419 = vpop.permute.xlu0 %2418
        %2420 = vrot.lane.b32.xlu0 %v2399, 112
        %v2421 = vpop.permute.xlu0 %2420
        %2422 = vrot.lane.b32.xlu0 %v2400, 112
        %v2423 = vpop.permute.xlu0 %2422
        %2424 = vrot.lane.b32.xlu0 %v2401, 112
        %v2425 = vpop.permute.xlu0 %2424
        %2426 = vrot.lane.b32.xlu0 %v2402, 112
        %v2427 = vpop.permute.xlu0 %2426
        %2428 = vrot.lane.b32.xlu0 %v2403, 112
        %v2429 = vpop.permute.xlu0 %2428
        %2430 = vrot.lane.b32.xlu0 %v2404, 112
        %v2431 = vpop.permute.xlu0 %2430
        %2432 = vrot.lane.b32.xlu0 %v2405, 112
        %v2433 = vpop.permute.xlu0 %2432
        %2434 = vrot.lane.b32.xlu0 %v2406, 112
        %v2435 = vpop.permute.xlu0 %2434
        %2436 = vrot.lane.b32.xlu0 %v2407, 112
        %v2437 = vpop.permute.xlu0 %2436
        %2438 = vrot.lane.b32.xlu0 %v2408, 112
        %v2439 = vpop.permute.xlu0 %2438
        %2440 = vrot.lane.b32.xlu0 %v2409, 112
        %v2441 = vpop.permute.xlu0 %2440
        %v2442 = vsel %vm789, %v2411, %v2394
        %v2443 = vsel %vm790, %v2413, %v2395
        %v2444 = vsel %vm791, %v2415, %v2396
        %v2445 = vsel %vm792, %v2417, %v2397
        %v2446 = vsel %vm793, %v2419, %v2398
        %v2447 = vsel %vm794, %v2421, %v2399
        %v2448 = vsel %vm795, %v2423, %v2400
        %v2449 = vsel %vm796, %v2425, %v2401
        %v2450 = vsel %vm797, %v2427, %v2402
        %v2451 = vsel %vm798, %v2429, %v2403
        %v2452 = vsel %vm799, %v2431, %v2404
        %v2453 = vsel %vm800, %v2433, %v2405
        %v2454 = vsel %vm801, %v2435, %v2406
        %v2455 = vsel %vm802, %v2437, %v2407
        %v2456 = vsel %vm803, %v2439, %v2408
        %v2457 = vsel %vm804, %v2441, %v2409
        %2458 = vrot.lane.b32.xlu0 %v2442, 96
        %v2459 = vpop.permute.xlu0 %2458
        %2460 = vrot.lane.b32.xlu0 %v2443, 96
        %v2461 = vpop.permute.xlu0 %2460
        %2462 = vrot.lane.b32.xlu0 %v2444, 96
        %v2463 = vpop.permute.xlu0 %2462
        %2464 = vrot.lane.b32.xlu0 %v2445, 96
        %v2465 = vpop.permute.xlu0 %2464
        %2466 = vrot.lane.b32.xlu0 %v2446, 96
        %v2467 = vpop.permute.xlu0 %2466
        %2468 = vrot.lane.b32.xlu0 %v2447, 96
        %v2469 = vpop.permute.xlu0 %2468
        %2470 = vrot.lane.b32.xlu0 %v2448, 96
        %v2471 = vpop.permute.xlu0 %2470
        %2472 = vrot.lane.b32.xlu0 %v2449, 96
        %v2473 = vpop.permute.xlu0 %2472
        %2474 = vrot.lane.b32.xlu0 %v2450, 96
        %v2475 = vpop.permute.xlu0 %2474
        %2476 = vrot.lane.b32.xlu0 %v2451, 96
        %v2477 = vpop.permute.xlu0 %2476
        %2478 = vrot.lane.b32.xlu0 %v2452, 96
        %v2479 = vpop.permute.xlu0 %2478
        %2480 = vrot.lane.b32.xlu0 %v2453, 96
        %v2481 = vpop.permute.xlu0 %2480
        %2482 = vrot.lane.b32.xlu0 %v2454, 96
        %v2483 = vpop.permute.xlu0 %2482
        %2484 = vrot.lane.b32.xlu0 %v2455, 96
        %v2485 = vpop.permute.xlu0 %2484
        %2486 = vrot.lane.b32.xlu0 %v2456, 96
        %v2487 = vpop.permute.xlu0 %2486
        %2488 = vrot.lane.b32.xlu0 %v2457, 96
        %v2489 = vpop.permute.xlu0 %2488
        %v2490 = vsel %vm821, %v2459, %v2442
        %v2491 = vsel %vm822, %v2461, %v2443
        %v2492 = vsel %vm823, %v2463, %v2444
        %v2493 = vsel %vm824, %v2465, %v2445
        %v2494 = vsel %vm825, %v2467, %v2446
        %v2495 = vsel %vm826, %v2469, %v2447
        %v2496 = vsel %vm827, %v2471, %v2448
        %v2497 = vsel %vm828, %v2473, %v2449
        %v2498 = vsel %vm829, %v2475, %v2450
        %v2499 = vsel %vm830, %v2477, %v2451
        %v2500 = vsel %vm831, %v2479, %v2452
        %v2501 = vsel %vm832, %v2481, %v2453
        %v2502 = vsel %vm833, %v2483, %v2454
        %v2503 = vsel %vm834, %v2485, %v2455
        %v2504 = vsel %vm835, %v2487, %v2456
        %v2505 = vsel %vm836, %v2489, %v2457
        %2506 = vrot.lane.b32.xlu0 %v2490, 64
        %v2507 = vpop.permute.xlu0 %2506
        %2508 = vrot.lane.b32.xlu0 %v2491, 64
        %v2509 = vpop.permute.xlu0 %2508
        %2510 = vrot.lane.b32.xlu0 %v2492, 64
        %v2511 = vpop.permute.xlu0 %2510
        %2512 = vrot.lane.b32.xlu0 %v2493, 64
        %v2513 = vpop.permute.xlu0 %2512
        %2514 = vrot.lane.b32.xlu0 %v2494, 64
        %v2515 = vpop.permute.xlu0 %2514
        %2516 = vrot.lane.b32.xlu0 %v2495, 64
        %v2517 = vpop.permute.xlu0 %2516
        %2518 = vrot.lane.b32.xlu0 %v2496, 64
        %v2519 = vpop.permute.xlu0 %2518
        %2520 = vrot.lane.b32.xlu0 %v2497, 64
        %v2521 = vpop.permute.xlu0 %2520
        %2522 = vrot.lane.b32.xlu0 %v2498, 64
        %v2523 = vpop.permute.xlu0 %2522
        %2524 = vrot.lane.b32.xlu0 %v2499, 64
        %v2525 = vpop.permute.xlu0 %2524
        %2526 = vrot.lane.b32.xlu0 %v2500, 64
        %v2527 = vpop.permute.xlu0 %2526
        %2528 = vrot.lane.b32.xlu0 %v2501, 64
        %v2529 = vpop.permute.xlu0 %2528
        %2530 = vrot.lane.b32.xlu0 %v2502, 64
        %v2531 = vpop.permute.xlu0 %2530
        %2532 = vrot.lane.b32.xlu0 %v2503, 64
        %v2533 = vpop.permute.xlu0 %2532
        %2534 = vrot.lane.b32.xlu0 %v2504, 64
        %v2535 = vpop.permute.xlu0 %2534
        %2536 = vrot.lane.b32.xlu0 %v2505, 64
        %v2537 = vpop.permute.xlu0 %2536
        %v2538 = vsel %vm853, %v2507, %v2490
        %v2539 = vsel %vm854, %v2509, %v2491
        %v2540 = vsel %vm855, %v2511, %v2492
        %v2541 = vsel %vm856, %v2513, %v2493
        %v2542 = vsel %vm857, %v2515, %v2494
        %v2543 = vsel %vm858, %v2517, %v2495
        %v2544 = vsel %vm859, %v2519, %v2496
        %v2545 = vsel %vm860, %v2521, %v2497
        %v2546 = vsel %vm861, %v2523, %v2498
        %v2547 = vsel %vm862, %v2525, %v2499
        %v2548 = vsel %vm863, %v2527, %v2500
        %v2549 = vsel %vm864, %v2529, %v2501
        %v2550 = vsel %vm865, %v2531, %v2502
        %v2551 = vsel %vm866, %v2533, %v2503
        %v2552 = vsel %vm867, %v2535, %v2504
        %v2553 = vsel %vm868, %v2537, %v2505
        %v2554 = vadd.f32 %v2140, %v2538
        %v2555 = vadd.f32 %v2144, %v2539
        %v2556 = vadd.f32 %v2150, %v2540
        %v2557 = vadd.f32 %v2154, %v2541
        %v2558 = vadd.f32 %v2160, %v2542
        %v2559 = vadd.f32 %v2164, %v2543
        %v2560 = vadd.f32 %v2170, %v2544
        %v2561 = vadd.f32 %v2174, %v2545
        %v2562 = vadd.f32 %v2180, %v2546
        %v2563 = vadd.f32 %v2184, %v2547
        %v2564 = vadd.f32 %v2190, %v2548
        %v2565 = vadd.f32 %v2194, %v2549
        %v2566 = vadd.f32 %v2200, %v2550
        %v2567 = vadd.f32 %v2204, %v2551
        %v2568 = vadd.f32 %v2210, %v2552
        %v2569 = vadd.f32 %v2214, %v2553
        %v2570 = vsel %vm613, %v2554, -1e+30
        %v2571 = vsel %vm614, %v2555, -1e+30
        %v2572 = vsel %vm615, %v2556, -1e+30
        %v2573 = vsel %vm616, %v2557, -1e+30
        %v2574 = vsel %vm617, %v2558, -1e+30
        %v2575 = vsel %vm618, %v2559, -1e+30
        %v2576 = vsel %vm619, %v2560, -1e+30
        %v2577 = vsel %vm620, %v2561, -1e+30
        %v2578 = vsel %vm621, %v2562, -1e+30
        %v2579 = vsel %vm622, %v2563, -1e+30
        %v2580 = vsel %vm623, %v2564, -1e+30
        %v2581 = vsel %vm624, %v2565, -1e+30
        %v2582 = vsel %vm625, %v2566, -1e+30
        %v2583 = vsel %vm626, %v2567, -1e+30
        %v2584 = vsel %vm627, %v2568, -1e+30
        %v2585 = vsel %vm628, %v2569, -1e+30
        %2586 = vmax.xlane.f32.xlu0 %v2570
        %v2587 = vpop.xlane.xlu0 %2586
        %2588 = vmax.xlane.f32.xlu0 %v2571
        %v2589 = vpop.xlane.xlu0 %2588
        %2590 = vmax.xlane.f32.xlu0 %v2572
        %v2591 = vpop.xlane.xlu0 %2590
        %2592 = vmax.xlane.f32.xlu0 %v2573
        %v2593 = vpop.xlane.xlu0 %2592
        %2594 = vmax.xlane.f32.xlu0 %v2574
        %v2595 = vpop.xlane.xlu0 %2594
        %2596 = vmax.xlane.f32.xlu0 %v2575
        %v2597 = vpop.xlane.xlu0 %2596
        %2598 = vmax.xlane.f32.xlu0 %v2576
        %v2599 = vpop.xlane.xlu0 %2598
        %2600 = vmax.xlane.f32.xlu0 %v2577
        %v2601 = vpop.xlane.xlu0 %2600
        %2602 = vmax.xlane.f32.xlu0 %v2578
        %v2603 = vpop.xlane.xlu0 %2602
        %2604 = vmax.xlane.f32.xlu0 %v2579
        %v2605 = vpop.xlane.xlu0 %2604
        %2606 = vmax.xlane.f32.xlu0 %v2580
        %v2607 = vpop.xlane.xlu0 %2606
        %2608 = vmax.xlane.f32.xlu0 %v2581
        %v2609 = vpop.xlane.xlu0 %2608
        %2610 = vmax.xlane.f32.xlu0 %v2582
        %v2611 = vpop.xlane.xlu0 %2610
        %2612 = vmax.xlane.f32.xlu0 %v2583
        %v2613 = vpop.xlane.xlu0 %2612
        %2614 = vmax.xlane.f32.xlu0 %v2584
        %v2615 = vpop.xlane.xlu0 %2614
        %2616 = vmax.xlane.f32.xlu0 %v2585
        %v2617 = vpop.xlane.xlu0 %2616
        %v2618 = vsub.f32 %v2570, %v2587
        %v2619 = vsub.f32 %v2571, %v2589
        %v2620 = vsub.f32 %v2572, %v2591
        %v2621 = vsub.f32 %v2573, %v2593
        %v2622 = vsub.f32 %v2574, %v2595
        %v2623 = vsub.f32 %v2575, %v2597
        %v2624 = vsub.f32 %v2576, %v2599
        %v2625 = vsub.f32 %v2577, %v2601
        %v2626 = vsub.f32 %v2578, %v2603
        %v2627 = vsub.f32 %v2579, %v2605
        %v2628 = vsub.f32 %v2580, %v2607
        %v2629 = vsub.f32 %v2581, %v2609
        %v2630 = vsub.f32 %v2582, %v2611
        %v2631 = vsub.f32 %v2583, %v2613
        %v2632 = vsub.f32 %v2584, %v2615
        %v2633 = vsub.f32 %v2585, %v2617
        %v2634 = vmul.f32 %v2618, 1.442695
        %v2635 = vpow.pop %v2634
        %v2636 = vmul.f32 %v2619, 1.442695
        %v2637 = vpow.pop %v2636
        %v2638 = vmul.f32 %v2620, 1.442695
        %v2639 = vpow.pop %v2638
        %v2640 = vmul.f32 %v2621, 1.442695
        %v2641 = vpow.pop %v2640
        %v2642 = vmul.f32 %v2622, 1.442695
        %v2643 = vpow.pop %v2642
        %v2644 = vmul.f32 %v2623, 1.442695
        %v2645 = vpow.pop %v2644
        %v2646 = vmul.f32 %v2624, 1.442695
        %v2647 = vpow.pop %v2646
        %v2648 = vmul.f32 %v2625, 1.442695
        %v2649 = vpow.pop %v2648
        %v2650 = vmul.f32 %v2626, 1.442695
        %v2651 = vpow.pop %v2650
        %v2652 = vmul.f32 %v2627, 1.442695
        %v2653 = vpow.pop %v2652
        %v2654 = vmul.f32 %v2628, 1.442695
        %v2655 = vpow.pop %v2654
        %v2656 = vmul.f32 %v2629, 1.442695
        %v2657 = vpow.pop %v2656
        %v2658 = vmul.f32 %v2630, 1.442695
        %v2659 = vpow.pop %v2658
        %v2660 = vmul.f32 %v2631, 1.442695
        %v2661 = vpow.pop %v2660
        %v2662 = vmul.f32 %v2632, 1.442695
        %v2663 = vpow.pop %v2662
        %v2664 = vmul.f32 %v2633, 1.442695
        %v2665 = vpow.pop %v2664
        %2666 = vadd.xlane.f32.xlu0 %v2635
        %v2667 = vpop.xlane.xlu0 %2666
        %2668 = vadd.xlane.f32.xlu0 %v2637
        %v2669 = vpop.xlane.xlu0 %2668
        %2670 = vadd.xlane.f32.xlu0 %v2639
        %v2671 = vpop.xlane.xlu0 %2670
        %2672 = vadd.xlane.f32.xlu0 %v2641
        %v2673 = vpop.xlane.xlu0 %2672
        %2674 = vadd.xlane.f32.xlu0 %v2643
        %v2675 = vpop.xlane.xlu0 %2674
        %2676 = vadd.xlane.f32.xlu0 %v2645
        %v2677 = vpop.xlane.xlu0 %2676
        %2678 = vadd.xlane.f32.xlu0 %v2647
        %v2679 = vpop.xlane.xlu0 %2678
        %2680 = vadd.xlane.f32.xlu0 %v2649
        %v2681 = vpop.xlane.xlu0 %2680
        %2682 = vadd.xlane.f32.xlu0 %v2651
        %v2683 = vpop.xlane.xlu0 %2682
        %2684 = vadd.xlane.f32.xlu0 %v2653
        %v2685 = vpop.xlane.xlu0 %2684
        %2686 = vadd.xlane.f32.xlu0 %v2655
        %v2687 = vpop.xlane.xlu0 %2686
        %2688 = vadd.xlane.f32.xlu0 %v2657
        %v2689 = vpop.xlane.xlu0 %2688
        %2690 = vadd.xlane.f32.xlu0 %v2659
        %v2691 = vpop.xlane.xlu0 %2690
        %2692 = vadd.xlane.f32.xlu0 %v2661
        %v2693 = vpop.xlane.xlu0 %2692
        %2694 = vadd.xlane.f32.xlu0 %v2663
        %v2695 = vpop.xlane.xlu0 %2694
        %2696 = vadd.xlane.f32.xlu0 %v2665
        %v2697 = vpop.xlane.xlu0 %2696
        %v2698 = vrcp.pop %v2667
        %v2699 = vrcp.pop %v2669
        %v2700 = vrcp.pop %v2671
        %v2701 = vrcp.pop %v2673
        %v2702 = vrcp.pop %v2675
        %v2703 = vrcp.pop %v2677
        %v2704 = vrcp.pop %v2679
        %v2705 = vrcp.pop %v2681
        %v2706 = vrcp.pop %v2683
        %v2707 = vrcp.pop %v2685
        %v2708 = vrcp.pop %v2687
        %v2709 = vrcp.pop %v2689
        %v2710 = vrcp.pop %v2691
        %v2711 = vrcp.pop %v2693
        %v2712 = vrcp.pop %v2695
        %v2713 = vrcp.pop %v2697
        %v2714 = vmul.f32 %v2635, %v2698
        %v2715 = vmul.f32 %v2637, %v2699
        %v2716 = vmul.f32 %v2639, %v2700
        %v2717 = vmul.f32 %v2641, %v2701
        %v2718 = vmul.f32 %v2643, %v2702
        %v2719 = vmul.f32 %v2645, %v2703
        %v2720 = vmul.f32 %v2647, %v2704
        %v2721 = vmul.f32 %v2649, %v2705
        %v2722 = vmul.f32 %v2651, %v2706
        %v2723 = vmul.f32 %v2653, %v2707
        %v2724 = vmul.f32 %v2655, %v2708
        %v2725 = vmul.f32 %v2657, %v2709
        %v2726 = vmul.f32 %v2659, %v2710
        %v2727 = vmul.f32 %v2661, %v2711
        %v2728 = vmul.f32 %v2663, %v2712
        %v2729 = vmul.f32 %v2665, %v2713
        %v2730 = vpack.c.bf16 %v2715, %v2714
        %v2731 = vpack.c.bf16 %v2717, %v2716
        %v2732 = vpack.c.bf16 %v2719, %v2718
        %v2733 = vpack.c.bf16 %v2721, %v2720
        %v2734 = vpack.c.bf16 %v2723, %v2722
        %v2735 = vpack.c.bf16 %v2725, %v2724
        %v2736 = vpack.c.bf16 %v2727, %v2726
        %v2737 = vpack.c.bf16 %v2729, %v2728
        %2738 = vrot.lane.b32.xlu0 %v1791, 96
        %v2739 = vpop.permute.xlu0 %2738
        %2740 = vrot.lane.b32.xlu0 %v1792, 96
        %v2741 = vpop.permute.xlu0 %2740
        %2742 = vrot.lane.b32.xlu0 %v1793, 96
        %v2743 = vpop.permute.xlu0 %2742
        %2744 = vrot.lane.b32.xlu0 %v1794, 96
        %v2745 = vpop.permute.xlu0 %2744
        %2746 = vrot.lane.b32.xlu0 %v1795, 96
        %v2747 = vpop.permute.xlu0 %2746
        %2748 = vrot.lane.b32.xlu0 %v1796, 96
        %v2749 = vpop.permute.xlu0 %2748
        %2750 = vrot.lane.b32.xlu0 %v1797, 96
        %v2751 = vpop.permute.xlu0 %2750
        %2752 = vrot.lane.b32.xlu0 %v1798, 96
        %v2753 = vpop.permute.xlu0 %2752
        %2762 = vmatprep.subr.bf16.mxu0 0
        %2763 = vmatpush1.bf16.msra.mxu0 %v2739
        %2764 = vmatprep.subr.bf16.mxu0 0
        %2765 = vmatpush1.bf16.msra.mxu0 %v2741
        %2766 = vmatprep.subr.bf16.mxu0 0
        %2767 = vmatpush1.bf16.msra.mxu0 %v2743
        %2768 = vmatprep.subr.bf16.mxu0 0
        %2769 = vmatpush1.bf16.msra.mxu0 %v2745
        %2770 = vmatprep.subr.bf16.mxu0 0
        %2771 = vmatpush1.bf16.msra.mxu0 %v2747
        %2772 = vmatprep.subr.bf16.mxu0 0
        %2773 = vmatpush1.bf16.msra.mxu0 %v2749
        %2774 = vmatprep.subr.bf16.mxu0 0
        %2775 = vmatpush1.bf16.msra.mxu0 %v2751
        %2776 = vmatprep.subr.bf16.mxu0 0
        %2777 = vmatpush1.bf16.msra.mxu0 %v2753
        %2778 = vmatprep.subr.bf16.mxu0 0
        %2779 = vmatpush1.bf16.msra.mxu0 0
        %2780 = vmatprep.subr.bf16.mxu0 0
        %2781 = vmatpush1.bf16.msra.mxu0 0
        %2782 = vmatprep.subr.bf16.mxu0 0
        %2783 = vmatpush1.bf16.msra.mxu0 0
        %2784 = vmatprep.subr.bf16.mxu0 0
        %2785 = vmatpush1.bf16.msra.mxu0 0
        %2786 = vmatprep.subr.bf16.mxu0 0
        %2787 = vmatpush1.bf16.msra.mxu0 0
        %2788 = vmatprep.subr.bf16.mxu0 0
        %2789 = vmatpush1.bf16.msra.mxu0 0
        %2790 = vmatprep.subr.bf16.mxu0 0
        %2791 = vmatpush1.bf16.msra.mxu0 0
        %2792 = vmatprep.subr.bf16.mxu0 0
        %2793 = vmatpush1.bf16.msra.mxu0 0
        %2794 = vmatprep.mubr.bf16.mxu0 0
        %2795 = vmatmul.mubr.bf16.gmra.mrb[0].mxu0 %v2730
        %v2796 = vpop.f32.mrb[0].mxu0
        %v2797 = vadd.f32 0.0, %v2796
        %v2798 = vpop.f32.mrb[0].mxu0
        %v2799 = vpop.f32.mrb[0].mxu0
        %v2800 = vadd.f32 0.0, %v2799
        %v2801 = vpop.f32.mrb[0].mxu0
        %2802 = vmatprep.mubr.bf16.mxu0 0
        %2803 = vmatmul.mubr.bf16.gmra.mrb[0].mxu0 %v2731
        %v2804 = vpop.f32.mrb[0].mxu0
        %v2805 = vadd.f32 0.0, %v2804
        %v2806 = vpop.f32.mrb[0].mxu0
        %v2807 = vpop.f32.mrb[0].mxu0
        %v2808 = vadd.f32 0.0, %v2807
        %v2809 = vpop.f32.mrb[0].mxu0
        %2810 = vmatprep.mubr.bf16.mxu0 0
        %2811 = vmatmul.mubr.bf16.gmra.mrb[0].mxu0 %v2732
        %v2812 = vpop.f32.mrb[0].mxu0
        %v2813 = vadd.f32 0.0, %v2812
        %v2814 = vpop.f32.mrb[0].mxu0
        %v2815 = vpop.f32.mrb[0].mxu0
        %v2816 = vadd.f32 0.0, %v2815
        %v2817 = vpop.f32.mrb[0].mxu0
        %2818 = vmatprep.mubr.bf16.mxu0 0
        %2819 = vmatmul.mubr.bf16.gmra.mrb[0].mxu0 %v2733
        %v2820 = vpop.f32.mrb[0].mxu0
        %v2821 = vadd.f32 0.0, %v2820
        %v2822 = vpop.f32.mrb[0].mxu0
        %v2823 = vpop.f32.mrb[0].mxu0
        %v2824 = vadd.f32 0.0, %v2823
        %v2825 = vpop.f32.mrb[0].mxu0
        %2826 = vmatprep.mubr.bf16.mxu0 0
        %2827 = vmatmul.mubr.bf16.gmra.mrb[0].mxu0 %v2734
        %v2828 = vpop.f32.mrb[0].mxu0
        %v2829 = vadd.f32 0.0, %v2828
        %v2830 = vpop.f32.mrb[0].mxu0
        %v2831 = vpop.f32.mrb[0].mxu0
        %v2832 = vadd.f32 0.0, %v2831
        %v2833 = vpop.f32.mrb[0].mxu0
        %2834 = vmatprep.mubr.bf16.mxu0 0
        %2835 = vmatmul.mubr.bf16.gmra.mrb[0].mxu0 %v2735
        %v2836 = vpop.f32.mrb[0].mxu0
        %v2837 = vadd.f32 0.0, %v2836
        %v2838 = vpop.f32.mrb[0].mxu0
        %v2839 = vpop.f32.mrb[0].mxu0
        %v2840 = vadd.f32 0.0, %v2839
        %v2841 = vpop.f32.mrb[0].mxu0
        %2842 = vmatprep.mubr.bf16.mxu0 0
        %2843 = vmatmul.mubr.bf16.gmra.mrb[0].mxu0 %v2736
        %v2844 = vpop.f32.mrb[0].mxu0
        %v2845 = vadd.f32 0.0, %v2844
        %v2846 = vpop.f32.mrb[0].mxu0
        %v2847 = vpop.f32.mrb[0].mxu0
        %v2848 = vadd.f32 0.0, %v2847
        %v2849 = vpop.f32.mrb[0].mxu0
        %2850 = vmatprep.mubr.bf16.mxu0 0
        %2851 = vmatmul.mubr.bf16.gmra.mrb[0].mxu0 %v2737
        %v2852 = vpop.f32.mrb[0].mxu0
        %v2853 = vadd.f32 0.0, %v2852
        %v2854 = vpop.f32.mrb[0].mxu0
        %v2855 = vpop.f32.mrb[0].mxu0
        %v2856 = vadd.f32 0.0, %v2855
        %v2857 = vpop.f32.mrb[0].mxu0
        %2858 = vdwg.mxu0
        %s2859 = scalar_lea.vmem %s3, 256
        %v2860 = vld [vmem:[%s2859 + $0x40] sm:$0xf]
        %v2861 = vld [vmem:[%s2859 + $0x44] sm:$0xf]
        %v2862 = vld [vmem:[%s2859 + $0x48] sm:$0xf]
        %v2863 = vld [vmem:[%s2859 + $0x4c] sm:$0xf]
        %v2864 = vld [vmem:[%s2859 + $0x50] sm:$0xf]
        %v2865 = vld [vmem:[%s2859 + $0x54] sm:$0xf]
        %v2866 = vld [vmem:[%s2859 + $0x58] sm:$0xf]
        %v2867 = vld [vmem:[%s2859 + $0x5c] sm:$0xf]
        %v2868 = vld [vmem:[%s2859 + $0x60] sm:$0xf]
        %v2869 = vld [vmem:[%s2859 + $0x64] sm:$0xf]
        %v2870 = vld [vmem:[%s2859 + $0x68] sm:$0xf]
        %v2871 = vld [vmem:[%s2859 + $0x6c] sm:$0xf]
        %v2872 = vld [vmem:[%s2859 + $0x70] sm:$0xf]
        %v2873 = vld [vmem:[%s2859 + $0x74] sm:$0xf]
        %v2874 = vld [vmem:[%s2859 + $0x78] sm:$0xf]
        %v2875 = vld [vmem:[%s2859 + $0x7c] sm:$0xf]
        %v2892 = vunpack.c.l.b16 %v2860
        %v2893 = vunpack.c.l.b16 %v2861
        %v2894 = vunpack.c.l.b16 %v2862
        %v2895 = vunpack.c.l.b16 %v2863
        %v2896 = vunpack.c.l.b16 %v2864
        %v2897 = vunpack.c.l.b16 %v2865
        %v2898 = vunpack.c.l.b16 %v2866
        %v2899 = vunpack.c.l.b16 %v2867
        %v2900 = vunpack.c.l.b16 %v2868
        %v2901 = vunpack.c.l.b16 %v2869
        %v2902 = vunpack.c.l.b16 %v2870
        %v2903 = vunpack.c.l.b16 %v2871
        %v2904 = vunpack.c.l.b16 %v2872
        %v2905 = vunpack.c.l.b16 %v2873
        %v2906 = vunpack.c.l.b16 %v2874
        %v2907 = vunpack.c.l.b16 %v2875
        %v2908 = vpack.c.b16 %v2893, %v2892
        %v2909 = vpack.c.b16 %v2895, %v2894
        %v2910 = vpack.c.b16 %v2897, %v2896
        %v2911 = vpack.c.b16 %v2899, %v2898
        %v2912 = vpack.c.b16 %v2901, %v2900
        %v2913 = vpack.c.b16 %v2903, %v2902
        %v2914 = vpack.c.b16 %v2905, %v2904
        %v2915 = vpack.c.b16 %v2907, %v2906
        %2916 = vrot.lane.b32.xlu0 %v2908, 64
        %v2917 = vpop.permute.xlu0 %2916
        %2918 = vrot.lane.b32.xlu0 %v2909, 64
        %v2919 = vpop.permute.xlu0 %2918
        %2920 = vrot.lane.b32.xlu0 %v2910, 64
        %v2921 = vpop.permute.xlu0 %2920
        %2922 = vrot.lane.b32.xlu0 %v2911, 64
        %v2923 = vpop.permute.xlu0 %2922
        %2924 = vrot.lane.b32.xlu0 %v2912, 64
        %v2925 = vpop.permute.xlu0 %2924
        %2926 = vrot.lane.b32.xlu0 %v2913, 64
        %v2927 = vpop.permute.xlu0 %2926
        %2928 = vrot.lane.b32.xlu0 %v2914, 64
        %v2929 = vpop.permute.xlu0 %2928
        %2930 = vrot.lane.b32.xlu0 %v2915, 64
        %v2931 = vpop.permute.xlu0 %2930
        %2932 = vrot.lane.b32.xlu0 %v965, 64
        %v2933 = vpop.permute.xlu0 %2932
        %2934 = vrot.lane.b32.xlu0 %v966, 64
        %v2935 = vpop.permute.xlu0 %2934
        %2936 = vrot.lane.b32.xlu0 %v967, 64
        %v2937 = vpop.permute.xlu0 %2936
        %2938 = vrot.lane.b32.xlu0 %v968, 64
        %v2939 = vpop.permute.xlu0 %2938
        %2940 = vrot.lane.b32.xlu0 %v969, 64
        %v2941 = vpop.permute.xlu0 %2940
        %2942 = vrot.lane.b32.xlu0 %v970, 64
        %v2943 = vpop.permute.xlu0 %2942
        %2944 = vrot.lane.b32.xlu0 %v971, 64
        %v2945 = vpop.permute.xlu0 %2944
        %2946 = vrot.lane.b32.xlu0 %v972, 64
        %v2947 = vpop.permute.xlu0 %2946
        %2948 = vrot.lane.b32.xlu0 %v1005, 64
        %v2949 = vpop.permute.xlu0 %2948
        %2950 = vrot.lane.b32.xlu0 %v1006, 64
        %v2951 = vpop.permute.xlu0 %2950
        %2952 = vrot.lane.b32.xlu0 %v1007, 64
        %v2953 = vpop.permute.xlu0 %2952
        %2954 = vrot.lane.b32.xlu0 %v1008, 64
        %v2955 = vpop.permute.xlu0 %2954
        %2956 = vrot.lane.b32.xlu0 %v1009, 64
        %v2957 = vpop.permute.xlu0 %2956
        %2958 = vrot.lane.b32.xlu0 %v1010, 64
        %v2959 = vpop.permute.xlu0 %2958
        %2960 = vrot.lane.b32.xlu0 %v1011, 64
        %v2961 = vpop.permute.xlu0 %2960
        %2962 = vrot.lane.b32.xlu0 %v1012, 64
        %v2963 = vpop.permute.xlu0 %2962
        %2964 = vrot.lane.b32.xlu0 %v2917, 64
        %v2965 = vpop.permute.xlu0 %2964
        %2966 = vrot.lane.b32.xlu0 %v2919, 64
        %v2967 = vpop.permute.xlu0 %2966
        %2968 = vrot.lane.b32.xlu0 %v2921, 64
        %v2969 = vpop.permute.xlu0 %2968
        %2970 = vrot.lane.b32.xlu0 %v2923, 64
        %v2971 = vpop.permute.xlu0 %2970
        %2972 = vrot.lane.b32.xlu0 %v2925, 64
        %v2973 = vpop.permute.xlu0 %2972
        %2974 = vrot.lane.b32.xlu0 %v2927, 64
        %v2975 = vpop.permute.xlu0 %2974
        %2976 = vrot.lane.b32.xlu0 %v2929, 64
        %v2977 = vpop.permute.xlu0 %2976
        %2978 = vrot.lane.b32.xlu0 %v2931, 64
        %v2979 = vpop.permute.xlu0 %2978
        %v2981 = vsel %vm1053, %v2933, 0
        %v2984 = vsel %vm1053, %v2935, 0
        %v2987 = vsel %vm1053, %v2937, 0
        %v2990 = vsel %vm1053, %v2939, 0
        %v2993 = vsel %vm1053, %v2941, 0
        %v2996 = vsel %vm1053, %v2943, 0
        %v2999 = vsel %vm1053, %v2945, 0
        %v3002 = vsel %vm1053, %v2947, 0
        %v3005 = vsel %vm1053, %v2949, 0
        %v3008 = vsel %vm1053, %v2951, 0
        %v3011 = vsel %vm1053, %v2953, 0
        %v3014 = vsel %vm1053, %v2955, 0
        %v3017 = vsel %vm1053, %v2957, 0
        %v3020 = vsel %vm1053, %v2959, 0
        %v3023 = vsel %vm1053, %v2961, 0
        %v3026 = vsel %vm1053, %v2963, 0
        %v3029 = vsel %vm1053, %v2965, 0
        %v3032 = vsel %vm1053, %v2967, 0
        %v3035 = vsel %vm1053, %v2969, 0
        %v3038 = vsel %vm1053, %v2971, 0
        %v3041 = vsel %vm1053, %v2973, 0
        %v3044 = vsel %vm1053, %v2975, 0
        %v3047 = vsel %vm1053, %v2977, 0
        %v3050 = vsel %vm1053, %v2979, 0
        %3052 = vmatprep.subr.bf16.mxu0 0
        %3053 = vmatpush1.bf16.xpose.msra.mxu0 %v3005
        %3054 = vmatprep.subr.bf16.mxu0 0
        %3055 = vmatpush1.bf16.xpose.msra.mxu0 %v3008
        %3056 = vmatprep.subr.bf16.mxu0 0
        %3057 = vmatpush1.bf16.xpose.msra.mxu0 %v3011
        %3058 = vmatprep.subr.bf16.mxu0 0
        %3059 = vmatpush1.bf16.xpose.msra.mxu0 %v3014
        %3060 = vmatprep.subr.bf16.mxu0 0
        %3061 = vmatpush1.bf16.xpose.msra.mxu0 %v3017
        %3062 = vmatprep.subr.bf16.mxu0 0
        %3063 = vmatpush1.bf16.xpose.msra.mxu0 %v3020
        %3064 = vmatprep.subr.bf16.mxu0 0
        %3065 = vmatpush1.bf16.xpose.msra.mxu0 %v3023
        %3066 = vmatprep.subr.bf16.mxu0 0
        %3067 = vmatpush1.bf16.xpose.msra.mxu0 %v3026
        %3068 = vmatprep.subr.bf16.mxu0 0
        %3069 = vmatpush1.bf16.xpose.msra.mxu0 %v3029
        %3070 = vmatprep.subr.bf16.mxu0 0
        %3071 = vmatpush1.bf16.xpose.msra.mxu0 %v3032
        %3072 = vmatprep.subr.bf16.mxu0 0
        %3073 = vmatpush1.bf16.xpose.msra.mxu0 %v3035
        %3074 = vmatprep.subr.bf16.mxu0 0
        %3075 = vmatpush1.bf16.xpose.msra.mxu0 %v3038
        %3076 = vmatprep.subr.bf16.mxu0 0
        %3077 = vmatpush1.bf16.xpose.msra.mxu0 %v3041
        %3078 = vmatprep.subr.bf16.mxu0 0
        %3079 = vmatpush1.bf16.xpose.msra.mxu0 %v3044
        %3080 = vmatprep.subr.bf16.mxu0 0
        %3081 = vmatpush1.bf16.xpose.msra.mxu0 %v3047
        %3082 = vmatprep.subr.bf16.mxu0 0
        %3083 = vmatpush1.bf16.xpose.msra.mxu0 %v3050
        %3084 = vmatprep.mubr.bf16.mxu0 0
        %3085 = vmatmul.mubr.bf16.gmra.mrb[0].mxu0 %v2981
        %v3086 = vpop.f32.mrb[0].mxu0
        %v3087 = vadd.f32 0.0, %v3086
        %v3088 = vpop.f32.mrb[0].mxu0
        %v3089 = vadd.f32 0.0, %v3088
        %v3090 = vpop.f32.mrb[0].mxu0
        %v3091 = vadd.f32 0.0, %v3090
        %v3092 = vpop.f32.mrb[0].mxu0
        %v3093 = vadd.f32 0.0, %v3092
        %3094 = vmatprep.mubr.bf16.mxu0 0
        %3095 = vmatmul.mubr.bf16.gmra.mrb[0].mxu0 %v2984
        %v3096 = vpop.f32.mrb[0].mxu0
        %v3097 = vadd.f32 0.0, %v3096
        %v3098 = vpop.f32.mrb[0].mxu0
        %v3099 = vadd.f32 0.0, %v3098
        %v3100 = vpop.f32.mrb[0].mxu0
        %v3101 = vadd.f32 0.0, %v3100
        %v3102 = vpop.f32.mrb[0].mxu0
        %v3103 = vadd.f32 0.0, %v3102
        %3104 = vmatprep.mubr.bf16.mxu0 0
        %3105 = vmatmul.mubr.bf16.gmra.mrb[0].mxu0 %v2987
        %v3106 = vpop.f32.mrb[0].mxu0
        %v3107 = vadd.f32 0.0, %v3106
        %v3108 = vpop.f32.mrb[0].mxu0
        %v3109 = vadd.f32 0.0, %v3108
        %v3110 = vpop.f32.mrb[0].mxu0
        %v3111 = vadd.f32 0.0, %v3110
        %v3112 = vpop.f32.mrb[0].mxu0
        %v3113 = vadd.f32 0.0, %v3112
        %3114 = vmatprep.mubr.bf16.mxu0 0
        %3115 = vmatmul.mubr.bf16.gmra.mrb[0].mxu0 %v2990
        %v3116 = vpop.f32.mrb[0].mxu0
        %v3117 = vadd.f32 0.0, %v3116
        %v3118 = vpop.f32.mrb[0].mxu0
        %v3119 = vadd.f32 0.0, %v3118
        %v3120 = vpop.f32.mrb[0].mxu0
        %v3121 = vadd.f32 0.0, %v3120
        %v3122 = vpop.f32.mrb[0].mxu0
        %v3123 = vadd.f32 0.0, %v3122
        %3124 = vmatprep.mubr.bf16.mxu0 0
        %3125 = vmatmul.mubr.bf16.gmra.mrb[0].mxu0 %v2993
        %v3126 = vpop.f32.mrb[0].mxu0
        %v3127 = vadd.f32 0.0, %v3126
        %v3128 = vpop.f32.mrb[0].mxu0
        %v3129 = vadd.f32 0.0, %v3128
        %v3130 = vpop.f32.mrb[0].mxu0
        %v3131 = vadd.f32 0.0, %v3130
        %v3132 = vpop.f32.mrb[0].mxu0
        %v3133 = vadd.f32 0.0, %v3132
        %3134 = vmatprep.mubr.bf16.mxu0 0
        %3135 = vmatmul.mubr.bf16.gmra.mrb[0].mxu0 %v2996
        %v3136 = vpop.f32.mrb[0].mxu0
        %v3137 = vadd.f32 0.0, %v3136
        %v3138 = vpop.f32.mrb[0].mxu0
        %v3139 = vadd.f32 0.0, %v3138
        %v3140 = vpop.f32.mrb[0].mxu0
        %v3141 = vadd.f32 0.0, %v3140
        %v3142 = vpop.f32.mrb[0].mxu0
        %v3143 = vadd.f32 0.0, %v3142
        %3144 = vmatprep.mubr.bf16.mxu0 0
        %3145 = vmatmul.mubr.bf16.gmra.mrb[0].mxu0 %v2999
        %v3146 = vpop.f32.mrb[0].mxu0
        %v3147 = vadd.f32 0.0, %v3146
        %v3148 = vpop.f32.mrb[0].mxu0
        %v3149 = vadd.f32 0.0, %v3148
        %v3150 = vpop.f32.mrb[0].mxu0
        %v3151 = vadd.f32 0.0, %v3150
        %v3152 = vpop.f32.mrb[0].mxu0
        %v3153 = vadd.f32 0.0, %v3152
        %3154 = vmatprep.mubr.bf16.mxu0 0
        %3155 = vmatmul.mubr.bf16.gmra.mrb[0].mxu0 %v3002
        %v3156 = vpop.f32.mrb[0].mxu0
        %v3157 = vadd.f32 0.0, %v3156
        %v3158 = vpop.f32.mrb[0].mxu0
        %v3159 = vadd.f32 0.0, %v3158
        %v3160 = vpop.f32.mrb[0].mxu0
        %v3161 = vadd.f32 0.0, %v3160
        %v3162 = vpop.f32.mrb[0].mxu0
        %v3163 = vadd.f32 0.0, %v3162
        %3164 = vdwg.mxu0
        %3165 = vrot.lane.b32.xlu0 %v3089, 127
        %v3166 = vpop.permute.xlu0 %3165
        %3167 = vrot.lane.b32.xlu0 %v3093, 127
        %v3168 = vpop.permute.xlu0 %3167
        %3169 = vrot.lane.b32.xlu0 %v3099, 127
        %v3170 = vpop.permute.xlu0 %3169
        %3171 = vrot.lane.b32.xlu0 %v3103, 127
        %v3172 = vpop.permute.xlu0 %3171
        %3173 = vrot.lane.b32.xlu0 %v3109, 127
        %v3174 = vpop.permute.xlu0 %3173
        %3175 = vrot.lane.b32.xlu0 %v3113, 127
        %v3176 = vpop.permute.xlu0 %3175
        %3177 = vrot.lane.b32.xlu0 %v3119, 127
        %v3178 = vpop.permute.xlu0 %3177
        %3179 = vrot.lane.b32.xlu0 %v3123, 127
        %v3180 = vpop.permute.xlu0 %3179
        %3181 = vrot.lane.b32.xlu0 %v3129, 127
        %v3182 = vpop.permute.xlu0 %3181
        %3183 = vrot.lane.b32.xlu0 %v3133, 127
        %v3184 = vpop.permute.xlu0 %3183
        %3185 = vrot.lane.b32.xlu0 %v3139, 127
        %v3186 = vpop.permute.xlu0 %3185
        %3187 = vrot.lane.b32.xlu0 %v3143, 127
        %v3188 = vpop.permute.xlu0 %3187
        %3189 = vrot.lane.b32.xlu0 %v3149, 127
        %v3190 = vpop.permute.xlu0 %3189
        %3191 = vrot.lane.b32.xlu0 %v3153, 127
        %v3192 = vpop.permute.xlu0 %3191
        %3193 = vrot.lane.b32.xlu0 %v3159, 127
        %v3194 = vpop.permute.xlu0 %3193
        %3195 = vrot.lane.b32.xlu0 %v3163, 127
        %v3196 = vpop.permute.xlu0 %3195
        %v3197 = vsel %vm661, %v3166, %v3089
        %v3198 = vsel %vm662, %v3168, %v3093
        %v3199 = vsel %vm663, %v3170, %v3099
        %v3200 = vsel %vm664, %v3172, %v3103
        %v3201 = vsel %vm665, %v3174, %v3109
        %v3202 = vsel %vm666, %v3176, %v3113
        %v3203 = vsel %vm667, %v3178, %v3119
        %v3204 = vsel %vm668, %v3180, %v3123
        %v3205 = vsel %vm669, %v3182, %v3129
        %v3206 = vsel %vm670, %v3184, %v3133
        %v3207 = vsel %vm671, %v3186, %v3139
        %v3208 = vsel %vm672, %v3188, %v3143
        %v3209 = vsel %vm673, %v3190, %v3149
        %v3210 = vsel %vm674, %v3192, %v3153
        %v3211 = vsel %vm675, %v3194, %v3159
        %v3212 = vsel %vm676, %v3196, %v3163
        %3213 = vrot.lane.b32.xlu0 %v3197, 126
        %v3214 = vpop.permute.xlu0 %3213
        %3215 = vrot.lane.b32.xlu0 %v3198, 126
        %v3216 = vpop.permute.xlu0 %3215
        %3217 = vrot.lane.b32.xlu0 %v3199, 126
        %v3218 = vpop.permute.xlu0 %3217
        %3219 = vrot.lane.b32.xlu0 %v3200, 126
        %v3220 = vpop.permute.xlu0 %3219
        %3221 = vrot.lane.b32.xlu0 %v3201, 126
        %v3222 = vpop.permute.xlu0 %3221
        %3223 = vrot.lane.b32.xlu0 %v3202, 126
        %v3224 = vpop.permute.xlu0 %3223
        %3225 = vrot.lane.b32.xlu0 %v3203, 126
        %v3226 = vpop.permute.xlu0 %3225
        %3227 = vrot.lane.b32.xlu0 %v3204, 126
        %v3228 = vpop.permute.xlu0 %3227
        %3229 = vrot.lane.b32.xlu0 %v3205, 126
        %v3230 = vpop.permute.xlu0 %3229
        %3231 = vrot.lane.b32.xlu0 %v3206, 126
        %v3232 = vpop.permute.xlu0 %3231
        %3233 = vrot.lane.b32.xlu0 %v3207, 126
        %v3234 = vpop.permute.xlu0 %3233
        %3235 = vrot.lane.b32.xlu0 %v3208, 126
        %v3236 = vpop.permute.xlu0 %3235
        %3237 = vrot.lane.b32.xlu0 %v3209, 126
        %v3238 = vpop.permute.xlu0 %3237
        %3239 = vrot.lane.b32.xlu0 %v3210, 126
        %v3240 = vpop.permute.xlu0 %3239
        %3241 = vrot.lane.b32.xlu0 %v3211, 126
        %v3242 = vpop.permute.xlu0 %3241
        %3243 = vrot.lane.b32.xlu0 %v3212, 126
        %v3244 = vpop.permute.xlu0 %3243
        %v3245 = vsel %vm693, %v3214, %v3197
        %v3246 = vsel %vm694, %v3216, %v3198
        %v3247 = vsel %vm695, %v3218, %v3199
        %v3248 = vsel %vm696, %v3220, %v3200
        %v3249 = vsel %vm697, %v3222, %v3201
        %v3250 = vsel %vm698, %v3224, %v3202
        %v3251 = vsel %vm699, %v3226, %v3203
        %v3252 = vsel %vm700, %v3228, %v3204
        %v3253 = vsel %vm701, %v3230, %v3205
        %v3254 = vsel %vm702, %v3232, %v3206
        %v3255 = vsel %vm703, %v3234, %v3207
        %v3256 = vsel %vm704, %v3236, %v3208
        %v3257 = vsel %vm705, %v3238, %v3209
        %v3258 = vsel %vm706, %v3240, %v3210
        %v3259 = vsel %vm707, %v3242, %v3211
        %v3260 = vsel %vm708, %v3244, %v3212
        %3261 = vrot.lane.b32.xlu0 %v3245, 124
        %v3262 = vpop.permute.xlu0 %3261
        %3263 = vrot.lane.b32.xlu0 %v3246, 124
        %v3264 = vpop.permute.xlu0 %3263
        %3265 = vrot.lane.b32.xlu0 %v3247, 124
        %v3266 = vpop.permute.xlu0 %3265
        %3267 = vrot.lane.b32.xlu0 %v3248, 124
        %v3268 = vpop.permute.xlu0 %3267
        %3269 = vrot.lane.b32.xlu0 %v3249, 124
        %v3270 = vpop.permute.xlu0 %3269
        %3271 = vrot.lane.b32.xlu0 %v3250, 124
        %v3272 = vpop.permute.xlu0 %3271
        %3273 = vrot.lane.b32.xlu0 %v3251, 124
        %v3274 = vpop.permute.xlu0 %3273
        %3275 = vrot.lane.b32.xlu0 %v3252, 124
        %v3276 = vpop.permute.xlu0 %3275
        %3277 = vrot.lane.b32.xlu0 %v3253, 124
        %v3278 = vpop.permute.xlu0 %3277
        %3279 = vrot.lane.b32.xlu0 %v3254, 124
        %v3280 = vpop.permute.xlu0 %3279
        %3281 = vrot.lane.b32.xlu0 %v3255, 124
        %v3282 = vpop.permute.xlu0 %3281
        %3283 = vrot.lane.b32.xlu0 %v3256, 124
        %v3284 = vpop.permute.xlu0 %3283
        %3285 = vrot.lane.b32.xlu0 %v3257, 124
        %v3286 = vpop.permute.xlu0 %3285
        %3287 = vrot.lane.b32.xlu0 %v3258, 124
        %v3288 = vpop.permute.xlu0 %3287
        %3289 = vrot.lane.b32.xlu0 %v3259, 124
        %v3290 = vpop.permute.xlu0 %3289
        %3291 = vrot.lane.b32.xlu0 %v3260, 124
        %v3292 = vpop.permute.xlu0 %3291
        %v3293 = vsel %vm725, %v3262, %v3245
        %v3294 = vsel %vm726, %v3264, %v3246
        %v3295 = vsel %vm727, %v3266, %v3247
        %v3296 = vsel %vm728, %v3268, %v3248
        %v3297 = vsel %vm729, %v3270, %v3249
        %v3298 = vsel %vm730, %v3272, %v3250
        %v3299 = vsel %vm731, %v3274, %v3251
        %v3300 = vsel %vm732, %v3276, %v3252
        %v3301 = vsel %vm733, %v3278, %v3253
        %v3302 = vsel %vm734, %v3280, %v3254
        %v3303 = vsel %vm735, %v3282, %v3255
        %v3304 = vsel %vm736, %v3284, %v3256
        %v3305 = vsel %vm737, %v3286, %v3257
        %v3306 = vsel %vm738, %v3288, %v3258
        %v3307 = vsel %vm739, %v3290, %v3259
        %v3308 = vsel %vm740, %v3292, %v3260
        %3309 = vrot.lane.b32.xlu0 %v3293, 120
        %v3310 = vpop.permute.xlu0 %3309
        %3311 = vrot.lane.b32.xlu0 %v3294, 120
        %v3312 = vpop.permute.xlu0 %3311
        %3313 = vrot.lane.b32.xlu0 %v3295, 120
        %v3314 = vpop.permute.xlu0 %3313
        %3315 = vrot.lane.b32.xlu0 %v3296, 120
        %v3316 = vpop.permute.xlu0 %3315
        %3317 = vrot.lane.b32.xlu0 %v3297, 120
        %v3318 = vpop.permute.xlu0 %3317
        %3319 = vrot.lane.b32.xlu0 %v3298, 120
        %v3320 = vpop.permute.xlu0 %3319
        %3321 = vrot.lane.b32.xlu0 %v3299, 120
        %v3322 = vpop.permute.xlu0 %3321
        %3323 = vrot.lane.b32.xlu0 %v3300, 120
        %v3324 = vpop.permute.xlu0 %3323
        %3325 = vrot.lane.b32.xlu0 %v3301, 120
        %v3326 = vpop.permute.xlu0 %3325
        %3327 = vrot.lane.b32.xlu0 %v3302, 120
        %v3328 = vpop.permute.xlu0 %3327
        %3329 = vrot.lane.b32.xlu0 %v3303, 120
        %v3330 = vpop.permute.xlu0 %3329
        %3331 = vrot.lane.b32.xlu0 %v3304, 120
        %v3332 = vpop.permute.xlu0 %3331
        %3333 = vrot.lane.b32.xlu0 %v3305, 120
        %v3334 = vpop.permute.xlu0 %3333
        %3335 = vrot.lane.b32.xlu0 %v3306, 120
        %v3336 = vpop.permute.xlu0 %3335
        %3337 = vrot.lane.b32.xlu0 %v3307, 120
        %v3338 = vpop.permute.xlu0 %3337
        %3339 = vrot.lane.b32.xlu0 %v3308, 120
        %v3340 = vpop.permute.xlu0 %3339
        %v3341 = vsel %vm757, %v3310, %v3293
        %v3342 = vsel %vm758, %v3312, %v3294
        %v3343 = vsel %vm759, %v3314, %v3295
        %v3344 = vsel %vm760, %v3316, %v3296
        %v3345 = vsel %vm761, %v3318, %v3297
        %v3346 = vsel %vm762, %v3320, %v3298
        %v3347 = vsel %vm763, %v3322, %v3299
        %v3348 = vsel %vm764, %v3324, %v3300
        %v3349 = vsel %vm765, %v3326, %v3301
        %v3350 = vsel %vm766, %v3328, %v3302
        %v3351 = vsel %vm767, %v3330, %v3303
        %v3352 = vsel %vm768, %v3332, %v3304
        %v3353 = vsel %vm769, %v3334, %v3305
        %v3354 = vsel %vm770, %v3336, %v3306
        %v3355 = vsel %vm771, %v3338, %v3307
        %v3356 = vsel %vm772, %v3340, %v3308
        %3357 = vrot.lane.b32.xlu0 %v3341, 112
        %v3358 = vpop.permute.xlu0 %3357
        %3359 = vrot.lane.b32.xlu0 %v3342, 112
        %v3360 = vpop.permute.xlu0 %3359
        %3361 = vrot.lane.b32.xlu0 %v3343, 112
        %v3362 = vpop.permute.xlu0 %3361
        %3363 = vrot.lane.b32.xlu0 %v3344, 112
        %v3364 = vpop.permute.xlu0 %3363
        %3365 = vrot.lane.b32.xlu0 %v3345, 112
        %v3366 = vpop.permute.xlu0 %3365
        %3367 = vrot.lane.b32.xlu0 %v3346, 112
        %v3368 = vpop.permute.xlu0 %3367
        %3369 = vrot.lane.b32.xlu0 %v3347, 112
        %v3370 = vpop.permute.xlu0 %3369
        %3371 = vrot.lane.b32.xlu0 %v3348, 112
        %v3372 = vpop.permute.xlu0 %3371
        %3373 = vrot.lane.b32.xlu0 %v3349, 112
        %v3374 = vpop.permute.xlu0 %3373
        %3375 = vrot.lane.b32.xlu0 %v3350, 112
        %v3376 = vpop.permute.xlu0 %3375
        %3377 = vrot.lane.b32.xlu0 %v3351, 112
        %v3378 = vpop.permute.xlu0 %3377
        %3379 = vrot.lane.b32.xlu0 %v3352, 112
        %v3380 = vpop.permute.xlu0 %3379
        %3381 = vrot.lane.b32.xlu0 %v3353, 112
        %v3382 = vpop.permute.xlu0 %3381
        %3383 = vrot.lane.b32.xlu0 %v3354, 112
        %v3384 = vpop.permute.xlu0 %3383
        %3385 = vrot.lane.b32.xlu0 %v3355, 112
        %v3386 = vpop.permute.xlu0 %3385
        %3387 = vrot.lane.b32.xlu0 %v3356, 112
        %v3388 = vpop.permute.xlu0 %3387
        %v3389 = vsel %vm789, %v3358, %v3341
        %v3390 = vsel %vm790, %v3360, %v3342
        %v3391 = vsel %vm791, %v3362, %v3343
        %v3392 = vsel %vm792, %v3364, %v3344
        %v3393 = vsel %vm793, %v3366, %v3345
        %v3394 = vsel %vm794, %v3368, %v3346
        %v3395 = vsel %vm795, %v3370, %v3347
        %v3396 = vsel %vm796, %v3372, %v3348
        %v3397 = vsel %vm797, %v3374, %v3349
        %v3398 = vsel %vm798, %v3376, %v3350
        %v3399 = vsel %vm799, %v3378, %v3351
        %v3400 = vsel %vm800, %v3380, %v3352
        %v3401 = vsel %vm801, %v3382, %v3353
        %v3402 = vsel %vm802, %v3384, %v3354
        %v3403 = vsel %vm803, %v3386, %v3355
        %v3404 = vsel %vm804, %v3388, %v3356
        %3405 = vrot.lane.b32.xlu0 %v3389, 96
        %v3406 = vpop.permute.xlu0 %3405
        %3407 = vrot.lane.b32.xlu0 %v3390, 96
        %v3408 = vpop.permute.xlu0 %3407
        %3409 = vrot.lane.b32.xlu0 %v3391, 96
        %v3410 = vpop.permute.xlu0 %3409
        %3411 = vrot.lane.b32.xlu0 %v3392, 96
        %v3412 = vpop.permute.xlu0 %3411
        %3413 = vrot.lane.b32.xlu0 %v3393, 96
        %v3414 = vpop.permute.xlu0 %3413
        %3415 = vrot.lane.b32.xlu0 %v3394, 96
        %v3416 = vpop.permute.xlu0 %3415
        %3417 = vrot.lane.b32.xlu0 %v3395, 96
        %v3418 = vpop.permute.xlu0 %3417
        %3419 = vrot.lane.b32.xlu0 %v3396, 96
        %v3420 = vpop.permute.xlu0 %3419
        %3421 = vrot.lane.b32.xlu0 %v3397, 96
        %v3422 = vpop.permute.xlu0 %3421
        %3423 = vrot.lane.b32.xlu0 %v3398, 96
        %v3424 = vpop.permute.xlu0 %3423
        %3425 = vrot.lane.b32.xlu0 %v3399, 96
        %v3426 = vpop.permute.xlu0 %3425
        %3427 = vrot.lane.b32.xlu0 %v3400, 96
        %v3428 = vpop.permute.xlu0 %3427
        %3429 = vrot.lane.b32.xlu0 %v3401, 96
        %v3430 = vpop.permute.xlu0 %3429
        %3431 = vrot.lane.b32.xlu0 %v3402, 96
        %v3432 = vpop.permute.xlu0 %3431
        %3433 = vrot.lane.b32.xlu0 %v3403, 96
        %v3434 = vpop.permute.xlu0 %3433
        %3435 = vrot.lane.b32.xlu0 %v3404, 96
        %v3436 = vpop.permute.xlu0 %3435
        %v3437 = vsel %vm821, %v3406, %v3389
        %v3438 = vsel %vm822, %v3408, %v3390
        %v3439 = vsel %vm823, %v3410, %v3391
        %v3440 = vsel %vm824, %v3412, %v3392
        %v3441 = vsel %vm825, %v3414, %v3393
        %v3442 = vsel %vm826, %v3416, %v3394
        %v3443 = vsel %vm827, %v3418, %v3395
        %v3444 = vsel %vm828, %v3420, %v3396
        %v3445 = vsel %vm829, %v3422, %v3397
        %v3446 = vsel %vm830, %v3424, %v3398
        %v3447 = vsel %vm831, %v3426, %v3399
        %v3448 = vsel %vm832, %v3428, %v3400
        %v3449 = vsel %vm833, %v3430, %v3401
        %v3450 = vsel %vm834, %v3432, %v3402
        %v3451 = vsel %vm835, %v3434, %v3403
        %v3452 = vsel %vm836, %v3436, %v3404
        %3453 = vrot.lane.b32.xlu0 %v3437, 64
        %v3454 = vpop.permute.xlu0 %3453
        %3455 = vrot.lane.b32.xlu0 %v3438, 64
        %v3456 = vpop.permute.xlu0 %3455
        %3457 = vrot.lane.b32.xlu0 %v3439, 64
        %v3458 = vpop.permute.xlu0 %3457
        %3459 = vrot.lane.b32.xlu0 %v3440, 64
        %v3460 = vpop.permute.xlu0 %3459
        %3461 = vrot.lane.b32.xlu0 %v3441, 64
        %v3462 = vpop.permute.xlu0 %3461
        %3463 = vrot.lane.b32.xlu0 %v3442, 64
        %v3464 = vpop.permute.xlu0 %3463
        %3465 = vrot.lane.b32.xlu0 %v3443, 64
        %v3466 = vpop.permute.xlu0 %3465
        %3467 = vrot.lane.b32.xlu0 %v3444, 64
        %v3468 = vpop.permute.xlu0 %3467
        %3469 = vrot.lane.b32.xlu0 %v3445, 64
        %v3470 = vpop.permute.xlu0 %3469
        %3471 = vrot.lane.b32.xlu0 %v3446, 64
        %v3472 = vpop.permute.xlu0 %3471
        %3473 = vrot.lane.b32.xlu0 %v3447, 64
        %v3474 = vpop.permute.xlu0 %3473
        %3475 = vrot.lane.b32.xlu0 %v3448, 64
        %v3476 = vpop.permute.xlu0 %3475
        %3477 = vrot.lane.b32.xlu0 %v3449, 64
        %v3478 = vpop.permute.xlu0 %3477
        %3479 = vrot.lane.b32.xlu0 %v3450, 64
        %v3480 = vpop.permute.xlu0 %3479
        %3481 = vrot.lane.b32.xlu0 %v3451, 64
        %v3482 = vpop.permute.xlu0 %3481
        %3483 = vrot.lane.b32.xlu0 %v3452, 64
        %v3484 = vpop.permute.xlu0 %3483
        %v3485 = vsel %vm853, %v3454, %v3437
        %v3486 = vsel %vm854, %v3456, %v3438
        %v3487 = vsel %vm855, %v3458, %v3439
        %v3488 = vsel %vm856, %v3460, %v3440
        %v3489 = vsel %vm857, %v3462, %v3441
        %v3490 = vsel %vm858, %v3464, %v3442
        %v3491 = vsel %vm859, %v3466, %v3443
        %v3492 = vsel %vm860, %v3468, %v3444
        %v3493 = vsel %vm861, %v3470, %v3445
        %v3494 = vsel %vm862, %v3472, %v3446
        %v3495 = vsel %vm863, %v3474, %v3447
        %v3496 = vsel %vm864, %v3476, %v3448
        %v3497 = vsel %vm865, %v3478, %v3449
        %v3498 = vsel %vm866, %v3480, %v3450
        %v3499 = vsel %vm867, %v3482, %v3451
        %v3500 = vsel %vm868, %v3484, %v3452
        %v3501 = vadd.f32 %v3087, %v3485
        %v3502 = vadd.f32 %v3091, %v3486
        %v3503 = vadd.f32 %v3097, %v3487
        %v3504 = vadd.f32 %v3101, %v3488
        %v3505 = vadd.f32 %v3107, %v3489
        %v3506 = vadd.f32 %v3111, %v3490
        %v3507 = vadd.f32 %v3117, %v3491
        %v3508 = vadd.f32 %v3121, %v3492
        %v3509 = vadd.f32 %v3127, %v3493
        %v3510 = vadd.f32 %v3131, %v3494
        %v3511 = vadd.f32 %v3137, %v3495
        %v3512 = vadd.f32 %v3141, %v3496
        %v3513 = vadd.f32 %v3147, %v3497
        %v3514 = vadd.f32 %v3151, %v3498
        %v3515 = vadd.f32 %v3157, %v3499
        %v3516 = vadd.f32 %v3161, %v3500
        %v3517 = vsel %vm613, %v3501, -1e+30
        %v3518 = vsel %vm614, %v3502, -1e+30
        %v3519 = vsel %vm615, %v3503, -1e+30
        %v3520 = vsel %vm616, %v3504, -1e+30
        %v3521 = vsel %vm617, %v3505, -1e+30
        %v3522 = vsel %vm618, %v3506, -1e+30
        %v3523 = vsel %vm619, %v3507, -1e+30
        %v3524 = vsel %vm620, %v3508, -1e+30
        %v3525 = vsel %vm621, %v3509, -1e+30
        %v3526 = vsel %vm622, %v3510, -1e+30
        %v3527 = vsel %vm623, %v3511, -1e+30
        %v3528 = vsel %vm624, %v3512, -1e+30
        %v3529 = vsel %vm625, %v3513, -1e+30
        %v3530 = vsel %vm626, %v3514, -1e+30
        %v3531 = vsel %vm627, %v3515, -1e+30
        %v3532 = vsel %vm628, %v3516, -1e+30
        %3533 = vmax.xlane.f32.xlu0 %v3517
        %v3534 = vpop.xlane.xlu0 %3533
        %3535 = vmax.xlane.f32.xlu0 %v3518
        %v3536 = vpop.xlane.xlu0 %3535
        %3537 = vmax.xlane.f32.xlu0 %v3519
        %v3538 = vpop.xlane.xlu0 %3537
        %3539 = vmax.xlane.f32.xlu0 %v3520
        %v3540 = vpop.xlane.xlu0 %3539
        %3541 = vmax.xlane.f32.xlu0 %v3521
        %v3542 = vpop.xlane.xlu0 %3541
        %3543 = vmax.xlane.f32.xlu0 %v3522
        %v3544 = vpop.xlane.xlu0 %3543
        %3545 = vmax.xlane.f32.xlu0 %v3523
        %v3546 = vpop.xlane.xlu0 %3545
        %3547 = vmax.xlane.f32.xlu0 %v3524
        %v3548 = vpop.xlane.xlu0 %3547
        %3549 = vmax.xlane.f32.xlu0 %v3525
        %v3550 = vpop.xlane.xlu0 %3549
        %3551 = vmax.xlane.f32.xlu0 %v3526
        %v3552 = vpop.xlane.xlu0 %3551
        %3553 = vmax.xlane.f32.xlu0 %v3527
        %v3554 = vpop.xlane.xlu0 %3553
        %3555 = vmax.xlane.f32.xlu0 %v3528
        %v3556 = vpop.xlane.xlu0 %3555
        %3557 = vmax.xlane.f32.xlu0 %v3529
        %v3558 = vpop.xlane.xlu0 %3557
        %3559 = vmax.xlane.f32.xlu0 %v3530
        %v3560 = vpop.xlane.xlu0 %3559
        %3561 = vmax.xlane.f32.xlu0 %v3531
        %v3562 = vpop.xlane.xlu0 %3561
        %3563 = vmax.xlane.f32.xlu0 %v3532
        %v3564 = vpop.xlane.xlu0 %3563
        %v3565 = vsub.f32 %v3517, %v3534
        %v3566 = vsub.f32 %v3518, %v3536
        %v3567 = vsub.f32 %v3519, %v3538
        %v3568 = vsub.f32 %v3520, %v3540
        %v3569 = vsub.f32 %v3521, %v3542
        %v3570 = vsub.f32 %v3522, %v3544
        %v3571 = vsub.f32 %v3523, %v3546
        %v3572 = vsub.f32 %v3524, %v3548
        %v3573 = vsub.f32 %v3525, %v3550
        %v3574 = vsub.f32 %v3526, %v3552
        %v3575 = vsub.f32 %v3527, %v3554
        %v3576 = vsub.f32 %v3528, %v3556
        %v3577 = vsub.f32 %v3529, %v3558
        %v3578 = vsub.f32 %v3530, %v3560
        %v3579 = vsub.f32 %v3531, %v3562
        %v3580 = vsub.f32 %v3532, %v3564
        %v3581 = vmul.f32 %v3565, 1.442695
        %v3582 = vpow.pop %v3581
        %v3583 = vmul.f32 %v3566, 1.442695
        %v3584 = vpow.pop %v3583
        %v3585 = vmul.f32 %v3567, 1.442695
        %v3586 = vpow.pop %v3585
        %v3587 = vmul.f32 %v3568, 1.442695
        %v3588 = vpow.pop %v3587
        %v3589 = vmul.f32 %v3569, 1.442695
        %v3590 = vpow.pop %v3589
        %v3591 = vmul.f32 %v3570, 1.442695
        %v3592 = vpow.pop %v3591
        %v3593 = vmul.f32 %v3571, 1.442695
        %v3594 = vpow.pop %v3593
        %v3595 = vmul.f32 %v3572, 1.442695
        %v3596 = vpow.pop %v3595
        %v3597 = vmul.f32 %v3573, 1.442695
        %v3598 = vpow.pop %v3597
        %v3599 = vmul.f32 %v3574, 1.442695
        %v3600 = vpow.pop %v3599
        %v3601 = vmul.f32 %v3575, 1.442695
        %v3602 = vpow.pop %v3601
        %v3603 = vmul.f32 %v3576, 1.442695
        %v3604 = vpow.pop %v3603
        %v3605 = vmul.f32 %v3577, 1.442695
        %v3606 = vpow.pop %v3605
        %v3607 = vmul.f32 %v3578, 1.442695
        %v3608 = vpow.pop %v3607
        %v3609 = vmul.f32 %v3579, 1.442695
        %v3610 = vpow.pop %v3609
        %v3611 = vmul.f32 %v3580, 1.442695
        %v3612 = vpow.pop %v3611
        %3613 = vadd.xlane.f32.xlu0 %v3582
        %v3614 = vpop.xlane.xlu0 %3613
        %3615 = vadd.xlane.f32.xlu0 %v3584
        %v3616 = vpop.xlane.xlu0 %3615
        %3617 = vadd.xlane.f32.xlu0 %v3586
        %v3618 = vpop.xlane.xlu0 %3617
        %3619 = vadd.xlane.f32.xlu0 %v3588
        %v3620 = vpop.xlane.xlu0 %3619
        %3621 = vadd.xlane.f32.xlu0 %v3590
        %v3622 = vpop.xlane.xlu0 %3621
        %3623 = vadd.xlane.f32.xlu0 %v3592
        %v3624 = vpop.xlane.xlu0 %3623
        %3625 = vadd.xlane.f32.xlu0 %v3594
        %v3626 = vpop.xlane.xlu0 %3625
        %3627 = vadd.xlane.f32.xlu0 %v3596
        %v3628 = vpop.xlane.xlu0 %3627
        %3629 = vadd.xlane.f32.xlu0 %v3598
        %v3630 = vpop.xlane.xlu0 %3629
        %3631 = vadd.xlane.f32.xlu0 %v3600
        %v3632 = vpop.xlane.xlu0 %3631
        %3633 = vadd.xlane.f32.xlu0 %v3602
        %v3634 = vpop.xlane.xlu0 %3633
        %3635 = vadd.xlane.f32.xlu0 %v3604
        %v3636 = vpop.xlane.xlu0 %3635
        %3637 = vadd.xlane.f32.xlu0 %v3606
        %v3638 = vpop.xlane.xlu0 %3637
        %3639 = vadd.xlane.f32.xlu0 %v3608
        %v3640 = vpop.xlane.xlu0 %3639
        %3641 = vadd.xlane.f32.xlu0 %v3610
        %v3642 = vpop.xlane.xlu0 %3641
        %3643 = vadd.xlane.f32.xlu0 %v3612
        %v3644 = vpop.xlane.xlu0 %3643
        %v3645 = vrcp.pop %v3614
        %v3646 = vrcp.pop %v3616
        %v3647 = vrcp.pop %v3618
        %v3648 = vrcp.pop %v3620
        %v3649 = vrcp.pop %v3622
        %v3650 = vrcp.pop %v3624
        %v3651 = vrcp.pop %v3626
        %v3652 = vrcp.pop %v3628
        %v3653 = vrcp.pop %v3630
        %v3654 = vrcp.pop %v3632
        %v3655 = vrcp.pop %v3634
        %v3656 = vrcp.pop %v3636
        %v3657 = vrcp.pop %v3638
        %v3658 = vrcp.pop %v3640
        %v3659 = vrcp.pop %v3642
        %v3660 = vrcp.pop %v3644
        %v3661 = vmul.f32 %v3582, %v3645
        %v3662 = vmul.f32 %v3584, %v3646
        %v3663 = vmul.f32 %v3586, %v3647
        %v3664 = vmul.f32 %v3588, %v3648
        %v3665 = vmul.f32 %v3590, %v3649
        %v3666 = vmul.f32 %v3592, %v3650
        %v3667 = vmul.f32 %v3594, %v3651
        %v3668 = vmul.f32 %v3596, %v3652
        %v3669 = vmul.f32 %v3598, %v3653
        %v3670 = vmul.f32 %v3600, %v3654
        %v3671 = vmul.f32 %v3602, %v3655
        %v3672 = vmul.f32 %v3604, %v3656
        %v3673 = vmul.f32 %v3606, %v3657
        %v3674 = vmul.f32 %v3608, %v3658
        %v3675 = vmul.f32 %v3610, %v3659
        %v3676 = vmul.f32 %v3612, %v3660
        %v3677 = vpack.c.bf16 %v3662, %v3661
        %v3678 = vpack.c.bf16 %v3664, %v3663
        %v3679 = vpack.c.bf16 %v3666, %v3665
        %v3680 = vpack.c.bf16 %v3668, %v3667
        %v3681 = vpack.c.bf16 %v3670, %v3669
        %v3682 = vpack.c.bf16 %v3672, %v3671
        %v3683 = vpack.c.bf16 %v3674, %v3673
        %v3684 = vpack.c.bf16 %v3676, %v3675
        %3685 = vrot.lane.b32.xlu0 %v1791, 64
        %v3686 = vpop.permute.xlu0 %3685
        %3687 = vrot.lane.b32.xlu0 %v1792, 64
        %v3688 = vpop.permute.xlu0 %3687
        %3689 = vrot.lane.b32.xlu0 %v1793, 64
        %v3690 = vpop.permute.xlu0 %3689
        %3691 = vrot.lane.b32.xlu0 %v1794, 64
        %v3692 = vpop.permute.xlu0 %3691
        %3693 = vrot.lane.b32.xlu0 %v1795, 64
        %v3694 = vpop.permute.xlu0 %3693
        %3695 = vrot.lane.b32.xlu0 %v1796, 64
        %v3696 = vpop.permute.xlu0 %3695
        %3697 = vrot.lane.b32.xlu0 %v1797, 64
        %v3698 = vpop.permute.xlu0 %3697
        %3699 = vrot.lane.b32.xlu0 %v1798, 64
        %v3700 = vpop.permute.xlu0 %3699
        %3709 = vmatprep.subr.bf16.mxu0 0
        %3710 = vmatpush1.bf16.msra.mxu0 %v3686
        %3711 = vmatprep.subr.bf16.mxu0 0
        %3712 = vmatpush1.bf16.msra.mxu0 %v3688
        %3713 = vmatprep.subr.bf16.mxu0 0
        %3714 = vmatpush1.bf16.msra.mxu0 %v3690
        %3715 = vmatprep.subr.bf16.mxu0 0
        %3716 = vmatpush1.bf16.msra.mxu0 %v3692
        %3717 = vmatprep.subr.bf16.mxu0 0
        %3718 = vmatpush1.bf16.msra.mxu0 %v3694
        %3719 = vmatprep.subr.bf16.mxu0 0
        %3720 = vmatpush1.bf16.msra.mxu0 %v3696
        %3721 = vmatprep.subr.bf16.mxu0 0
        %3722 = vmatpush1.bf16.msra.mxu0 %v3698
        %3723 = vmatprep.subr.bf16.mxu0 0
        %3724 = vmatpush1.bf16.msra.mxu0 %v3700
        %3725 = vmatprep.subr.bf16.mxu0 0
        %3726 = vmatpush1.bf16.msra.mxu0 0
        %3727 = vmatprep.subr.bf16.mxu0 0
        %3728 = vmatpush1.bf16.msra.mxu0 0
        %3729 = vmatprep.subr.bf16.mxu0 0
        %3730 = vmatpush1.bf16.msra.mxu0 0
        %3731 = vmatprep.subr.bf16.mxu0 0
        %3732 = vmatpush1.bf16.msra.mxu0 0
        %3733 = vmatprep.subr.bf16.mxu0 0
        %3734 = vmatpush1.bf16.msra.mxu0 0
        %3735 = vmatprep.subr.bf16.mxu0 0
        %3736 = vmatpush1.bf16.msra.mxu0 0
        %3737 = vmatprep.subr.bf16.mxu0 0
        %3738 = vmatpush1.bf16.msra.mxu0 0
        %3739 = vmatprep.subr.bf16.mxu0 0
        %3740 = vmatpush1.bf16.msra.mxu0 0
        %3741 = vmatprep.mubr.bf16.mxu0 0
        %3742 = vmatmul.mubr.bf16.gmra.mrb[0].mxu0 %v3677
        %v3743 = vpop.f32.mrb[0].mxu0
        %v3744 = vadd.f32 0.0, %v3743
        %v3745 = vpop.f32.mrb[0].mxu0
        %v3746 = vpop.f32.mrb[0].mxu0
        %v3747 = vadd.f32 0.0, %v3746
        %v3748 = vpop.f32.mrb[0].mxu0
        %3749 = vmatprep.mubr.bf16.mxu0 0
        %3750 = vmatmul.mubr.bf16.gmra.mrb[0].mxu0 %v3678
        %v3751 = vpop.f32.mrb[0].mxu0
        %v3752 = vadd.f32 0.0, %v3751
        %v3753 = vpop.f32.mrb[0].mxu0
        %v3754 = vpop.f32.mrb[0].mxu0
        %v3755 = vadd.f32 0.0, %v3754
        %v3756 = vpop.f32.mrb[0].mxu0
        %3757 = vmatprep.mubr.bf16.mxu0 0
        %3758 = vmatmul.mubr.bf16.gmra.mrb[0].mxu0 %v3679
        %v3759 = vpop.f32.mrb[0].mxu0
        %v3760 = vadd.f32 0.0, %v3759
        %v3761 = vpop.f32.mrb[0].mxu0
        %v3762 = vpop.f32.mrb[0].mxu0
        %v3763 = vadd.f32 0.0, %v3762
        %v3764 = vpop.f32.mrb[0].mxu0
        %3765 = vmatprep.mubr.bf16.mxu0 0
        %3766 = vmatmul.mubr.bf16.gmra.mrb[0].mxu0 %v3680
        %v3767 = vpop.f32.mrb[0].mxu0
        %v3768 = vadd.f32 0.0, %v3767
        %v3769 = vpop.f32.mrb[0].mxu0
        %v3770 = vpop.f32.mrb[0].mxu0
        %v3771 = vadd.f32 0.0, %v3770
        %v3772 = vpop.f32.mrb[0].mxu0
        %3773 = vmatprep.mubr.bf16.mxu0 0
        %3774 = vmatmul.mubr.bf16.gmra.mrb[0].mxu0 %v3681
        %v3775 = vpop.f32.mrb[0].mxu0
        %v3776 = vadd.f32 0.0, %v3775
        %v3777 = vpop.f32.mrb[0].mxu0
        %v3778 = vpop.f32.mrb[0].mxu0
        %v3779 = vadd.f32 0.0, %v3778
        %v3780 = vpop.f32.mrb[0].mxu0
        %3781 = vmatprep.mubr.bf16.mxu0 0
        %3782 = vmatmul.mubr.bf16.gmra.mrb[0].mxu0 %v3682
        %v3783 = vpop.f32.mrb[0].mxu0
        %v3784 = vadd.f32 0.0, %v3783
        %v3785 = vpop.f32.mrb[0].mxu0
        %v3786 = vpop.f32.mrb[0].mxu0
        %v3787 = vadd.f32 0.0, %v3786
        %v3788 = vpop.f32.mrb[0].mxu0
        %3789 = vmatprep.mubr.bf16.mxu0 0
        %3790 = vmatmul.mubr.bf16.gmra.mrb[0].mxu0 %v3683
        %v3791 = vpop.f32.mrb[0].mxu0
        %v3792 = vadd.f32 0.0, %v3791
        %v3793 = vpop.f32.mrb[0].mxu0
        %v3794 = vpop.f32.mrb[0].mxu0
        %v3795 = vadd.f32 0.0, %v3794
        %v3796 = vpop.f32.mrb[0].mxu0
        %3797 = vmatprep.mubr.bf16.mxu0 0
        %3798 = vmatmul.mubr.bf16.gmra.mrb[0].mxu0 %v3684
        %v3799 = vpop.f32.mrb[0].mxu0
        %v3800 = vadd.f32 0.0, %v3799
        %v3801 = vpop.f32.mrb[0].mxu0
        %v3802 = vpop.f32.mrb[0].mxu0
        %v3803 = vadd.f32 0.0, %v3802
        %v3804 = vpop.f32.mrb[0].mxu0
        %3805 = vdwg.mxu0
        %s3806 = scalar_lea.vmem %s3, 384
        %v3807 = vld [vmem:[%s3806 + $0x40] sm:$0xf]
        %v3808 = vld [vmem:[%s3806 + $0x44] sm:$0xf]
        %v3809 = vld [vmem:[%s3806 + $0x48] sm:$0xf]
        %v3810 = vld [vmem:[%s3806 + $0x4c] sm:$0xf]
        %v3811 = vld [vmem:[%s3806 + $0x50] sm:$0xf]
        %v3812 = vld [vmem:[%s3806 + $0x54] sm:$0xf]
        %v3813 = vld [vmem:[%s3806 + $0x58] sm:$0xf]
        %v3814 = vld [vmem:[%s3806 + $0x5c] sm:$0xf]
        %v3815 = vld [vmem:[%s3806 + $0x60] sm:$0xf]
        %v3816 = vld [vmem:[%s3806 + $0x64] sm:$0xf]
        %v3817 = vld [vmem:[%s3806 + $0x68] sm:$0xf]
        %v3818 = vld [vmem:[%s3806 + $0x6c] sm:$0xf]
        %v3819 = vld [vmem:[%s3806 + $0x70] sm:$0xf]
        %v3820 = vld [vmem:[%s3806 + $0x74] sm:$0xf]
        %v3821 = vld [vmem:[%s3806 + $0x78] sm:$0xf]
        %v3822 = vld [vmem:[%s3806 + $0x7c] sm:$0xf]
        %v3839 = vunpack.c.l.b16 %v3807
        %v3840 = vunpack.c.l.b16 %v3808
        %v3841 = vunpack.c.l.b16 %v3809
        %v3842 = vunpack.c.l.b16 %v3810
        %v3843 = vunpack.c.l.b16 %v3811
        %v3844 = vunpack.c.l.b16 %v3812
        %v3845 = vunpack.c.l.b16 %v3813
        %v3846 = vunpack.c.l.b16 %v3814
        %v3847 = vunpack.c.l.b16 %v3815
        %v3848 = vunpack.c.l.b16 %v3816
        %v3849 = vunpack.c.l.b16 %v3817
        %v3850 = vunpack.c.l.b16 %v3818
        %v3851 = vunpack.c.l.b16 %v3819
        %v3852 = vunpack.c.l.b16 %v3820
        %v3853 = vunpack.c.l.b16 %v3821
        %v3854 = vunpack.c.l.b16 %v3822
        %v3855 = vpack.c.b16 %v3840, %v3839
        %v3856 = vpack.c.b16 %v3842, %v3841
        %v3857 = vpack.c.b16 %v3844, %v3843
        %v3858 = vpack.c.b16 %v3846, %v3845
        %v3859 = vpack.c.b16 %v3848, %v3847
        %v3860 = vpack.c.b16 %v3850, %v3849
        %v3861 = vpack.c.b16 %v3852, %v3851
        %v3862 = vpack.c.b16 %v3854, %v3853
        %3863 = vrot.lane.b32.xlu0 %v3855, 96
        %v3864 = vpop.permute.xlu0 %3863
        %3865 = vrot.lane.b32.xlu0 %v3856, 96
        %v3866 = vpop.permute.xlu0 %3865
        %3867 = vrot.lane.b32.xlu0 %v3857, 96
        %v3868 = vpop.permute.xlu0 %3867
        %3869 = vrot.lane.b32.xlu0 %v3858, 96
        %v3870 = vpop.permute.xlu0 %3869
        %3871 = vrot.lane.b32.xlu0 %v3859, 96
        %v3872 = vpop.permute.xlu0 %3871
        %3873 = vrot.lane.b32.xlu0 %v3860, 96
        %v3874 = vpop.permute.xlu0 %3873
        %3875 = vrot.lane.b32.xlu0 %v3861, 96
        %v3876 = vpop.permute.xlu0 %3875
        %3877 = vrot.lane.b32.xlu0 %v3862, 96
        %v3878 = vpop.permute.xlu0 %3877
        %3879 = vrot.lane.b32.xlu0 %v965, 32
        %v3880 = vpop.permute.xlu0 %3879
        %3881 = vrot.lane.b32.xlu0 %v966, 32
        %v3882 = vpop.permute.xlu0 %3881
        %3883 = vrot.lane.b32.xlu0 %v967, 32
        %v3884 = vpop.permute.xlu0 %3883
        %3885 = vrot.lane.b32.xlu0 %v968, 32
        %v3886 = vpop.permute.xlu0 %3885
        %3887 = vrot.lane.b32.xlu0 %v969, 32
        %v3888 = vpop.permute.xlu0 %3887
        %3889 = vrot.lane.b32.xlu0 %v970, 32
        %v3890 = vpop.permute.xlu0 %3889
        %3891 = vrot.lane.b32.xlu0 %v971, 32
        %v3892 = vpop.permute.xlu0 %3891
        %3893 = vrot.lane.b32.xlu0 %v972, 32
        %v3894 = vpop.permute.xlu0 %3893
        %3895 = vrot.lane.b32.xlu0 %v1005, 32
        %v3896 = vpop.permute.xlu0 %3895
        %3897 = vrot.lane.b32.xlu0 %v1006, 32
        %v3898 = vpop.permute.xlu0 %3897
        %3899 = vrot.lane.b32.xlu0 %v1007, 32
        %v3900 = vpop.permute.xlu0 %3899
        %3901 = vrot.lane.b32.xlu0 %v1008, 32
        %v3902 = vpop.permute.xlu0 %3901
        %3903 = vrot.lane.b32.xlu0 %v1009, 32
        %v3904 = vpop.permute.xlu0 %3903
        %3905 = vrot.lane.b32.xlu0 %v1010, 32
        %v3906 = vpop.permute.xlu0 %3905
        %3907 = vrot.lane.b32.xlu0 %v1011, 32
        %v3908 = vpop.permute.xlu0 %3907
        %3909 = vrot.lane.b32.xlu0 %v1012, 32
        %v3910 = vpop.permute.xlu0 %3909
        %3911 = vrot.lane.b32.xlu0 %v3864, 32
        %v3912 = vpop.permute.xlu0 %3911
        %3913 = vrot.lane.b32.xlu0 %v3866, 32
        %v3914 = vpop.permute.xlu0 %3913
        %3915 = vrot.lane.b32.xlu0 %v3868, 32
        %v3916 = vpop.permute.xlu0 %3915
        %3917 = vrot.lane.b32.xlu0 %v3870, 32
        %v3918 = vpop.permute.xlu0 %3917
        %3919 = vrot.lane.b32.xlu0 %v3872, 32
        %v3920 = vpop.permute.xlu0 %3919
        %3921 = vrot.lane.b32.xlu0 %v3874, 32
        %v3922 = vpop.permute.xlu0 %3921
        %3923 = vrot.lane.b32.xlu0 %v3876, 32
        %v3924 = vpop.permute.xlu0 %3923
        %3925 = vrot.lane.b32.xlu0 %v3878, 32
        %v3926 = vpop.permute.xlu0 %3925
        %v3928 = vsel %vm1053, %v3880, 0
        %v3931 = vsel %vm1053, %v3882, 0
        %v3934 = vsel %vm1053, %v3884, 0
        %v3937 = vsel %vm1053, %v3886, 0
        %v3940 = vsel %vm1053, %v3888, 0
        %v3943 = vsel %vm1053, %v3890, 0
        %v3946 = vsel %vm1053, %v3892, 0
        %v3949 = vsel %vm1053, %v3894, 0
        %v3952 = vsel %vm1053, %v3896, 0
        %v3955 = vsel %vm1053, %v3898, 0
        %v3958 = vsel %vm1053, %v3900, 0
        %v3961 = vsel %vm1053, %v3902, 0
        %v3964 = vsel %vm1053, %v3904, 0
        %v3967 = vsel %vm1053, %v3906, 0
        %v3970 = vsel %vm1053, %v3908, 0
        %v3973 = vsel %vm1053, %v3910, 0
        %v3976 = vsel %vm1053, %v3912, 0
        %v3979 = vsel %vm1053, %v3914, 0
        %v3982 = vsel %vm1053, %v3916, 0
        %v3985 = vsel %vm1053, %v3918, 0
        %v3988 = vsel %vm1053, %v3920, 0
        %v3991 = vsel %vm1053, %v3922, 0
        %v3994 = vsel %vm1053, %v3924, 0
        %v3997 = vsel %vm1053, %v3926, 0
        %3999 = vmatprep.subr.bf16.mxu0 0
        %4000 = vmatpush1.bf16.xpose.msra.mxu0 %v3952
        %4001 = vmatprep.subr.bf16.mxu0 0
        %4002 = vmatpush1.bf16.xpose.msra.mxu0 %v3955
        %4003 = vmatprep.subr.bf16.mxu0 0
        %4004 = vmatpush1.bf16.xpose.msra.mxu0 %v3958
        %4005 = vmatprep.subr.bf16.mxu0 0
        %4006 = vmatpush1.bf16.xpose.msra.mxu0 %v3961
        %4007 = vmatprep.subr.bf16.mxu0 0
        %4008 = vmatpush1.bf16.xpose.msra.mxu0 %v3964
        %4009 = vmatprep.subr.bf16.mxu0 0
        %4010 = vmatpush1.bf16.xpose.msra.mxu0 %v3967
        %4011 = vmatprep.subr.bf16.mxu0 0
        %4012 = vmatpush1.bf16.xpose.msra.mxu0 %v3970
        %4013 = vmatprep.subr.bf16.mxu0 0
        %4014 = vmatpush1.bf16.xpose.msra.mxu0 %v3973
        %4015 = vmatprep.subr.bf16.mxu0 0
        %4016 = vmatpush1.bf16.xpose.msra.mxu0 %v3976
        %4017 = vmatprep.subr.bf16.mxu0 0
        %4018 = vmatpush1.bf16.xpose.msra.mxu0 %v3979
        %4019 = vmatprep.subr.bf16.mxu0 0
        %4020 = vmatpush1.bf16.xpose.msra.mxu0 %v3982
        %4021 = vmatprep.subr.bf16.mxu0 0
        %4022 = vmatpush1.bf16.xpose.msra.mxu0 %v3985
        %4023 = vmatprep.subr.bf16.mxu0 0
        %4024 = vmatpush1.bf16.xpose.msra.mxu0 %v3988
        %4025 = vmatprep.subr.bf16.mxu0 0
        %4026 = vmatpush1.bf16.xpose.msra.mxu0 %v3991
        %4027 = vmatprep.subr.bf16.mxu0 0
        %4028 = vmatpush1.bf16.xpose.msra.mxu0 %v3994
        %4029 = vmatprep.subr.bf16.mxu0 0
        %4030 = vmatpush1.bf16.xpose.msra.mxu0 %v3997
        %4031 = vmatprep.mubr.bf16.mxu0 0
        %4032 = vmatmul.mubr.bf16.gmra.mrb[0].mxu0 %v3928
        %v4033 = vpop.f32.mrb[0].mxu0
        %v4034 = vadd.f32 0.0, %v4033
        %v4035 = vpop.f32.mrb[0].mxu0
        %v4036 = vadd.f32 0.0, %v4035
        %v4037 = vpop.f32.mrb[0].mxu0
        %v4038 = vadd.f32 0.0, %v4037
        %v4039 = vpop.f32.mrb[0].mxu0
        %v4040 = vadd.f32 0.0, %v4039
        %4041 = vmatprep.mubr.bf16.mxu0 0
        %4042 = vmatmul.mubr.bf16.gmra.mrb[0].mxu0 %v3931
        %v4043 = vpop.f32.mrb[0].mxu0
        %v4044 = vadd.f32 0.0, %v4043
        %v4045 = vpop.f32.mrb[0].mxu0
        %v4046 = vadd.f32 0.0, %v4045
        %v4047 = vpop.f32.mrb[0].mxu0
        %v4048 = vadd.f32 0.0, %v4047
        %v4049 = vpop.f32.mrb[0].mxu0
        %v4050 = vadd.f32 0.0, %v4049
        %4051 = vmatprep.mubr.bf16.mxu0 0
        %4052 = vmatmul.mubr.bf16.gmra.mrb[0].mxu0 %v3934
        %v4053 = vpop.f32.mrb[0].mxu0
        %v4054 = vadd.f32 0.0, %v4053
        %v4055 = vpop.f32.mrb[0].mxu0
        %v4056 = vadd.f32 0.0, %v4055
        %v4057 = vpop.f32.mrb[0].mxu0
        %v4058 = vadd.f32 0.0, %v4057
        %v4059 = vpop.f32.mrb[0].mxu0
        %v4060 = vadd.f32 0.0, %v4059
        %4061 = vmatprep.mubr.bf16.mxu0 0
        %4062 = vmatmul.mubr.bf16.gmra.mrb[0].mxu0 %v3937
        %v4063 = vpop.f32.mrb[0].mxu0
        %v4064 = vadd.f32 0.0, %v4063
        %v4065 = vpop.f32.mrb[0].mxu0
        %v4066 = vadd.f32 0.0, %v4065
        %v4067 = vpop.f32.mrb[0].mxu0
        %v4068 = vadd.f32 0.0, %v4067
        %v4069 = vpop.f32.mrb[0].mxu0
        %v4070 = vadd.f32 0.0, %v4069
        %4071 = vmatprep.mubr.bf16.mxu0 0
        %4072 = vmatmul.mubr.bf16.gmra.mrb[0].mxu0 %v3940
        %v4073 = vpop.f32.mrb[0].mxu0
        %v4074 = vadd.f32 0.0, %v4073
        %v4075 = vpop.f32.mrb[0].mxu0
        %v4076 = vadd.f32 0.0, %v4075
        %v4077 = vpop.f32.mrb[0].mxu0
        %v4078 = vadd.f32 0.0, %v4077
        %v4079 = vpop.f32.mrb[0].mxu0
        %v4080 = vadd.f32 0.0, %v4079
        %4081 = vmatprep.mubr.bf16.mxu0 0
        %4082 = vmatmul.mubr.bf16.gmra.mrb[0].mxu0 %v3943
        %v4083 = vpop.f32.mrb[0].mxu0
        %v4084 = vadd.f32 0.0, %v4083
        %v4085 = vpop.f32.mrb[0].mxu0
        %v4086 = vadd.f32 0.0, %v4085
        %v4087 = vpop.f32.mrb[0].mxu0
        %v4088 = vadd.f32 0.0, %v4087
        %v4089 = vpop.f32.mrb[0].mxu0
        %v4090 = vadd.f32 0.0, %v4089
        %4091 = vmatprep.mubr.bf16.mxu0 0
        %4092 = vmatmul.mubr.bf16.gmra.mrb[0].mxu0 %v3946
        %v4093 = vpop.f32.mrb[0].mxu0
        %v4094 = vadd.f32 0.0, %v4093
        %v4095 = vpop.f32.mrb[0].mxu0
        %v4096 = vadd.f32 0.0, %v4095
        %v4097 = vpop.f32.mrb[0].mxu0
        %v4098 = vadd.f32 0.0, %v4097
        %v4099 = vpop.f32.mrb[0].mxu0
        %v4100 = vadd.f32 0.0, %v4099
        %4101 = vmatprep.mubr.bf16.mxu0 0
        %4102 = vmatmul.mubr.bf16.gmra.mrb[0].mxu0 %v3949
        %v4103 = vpop.f32.mrb[0].mxu0
        %v4104 = vadd.f32 0.0, %v4103
        %v4105 = vpop.f32.mrb[0].mxu0
        %v4106 = vadd.f32 0.0, %v4105
        %v4107 = vpop.f32.mrb[0].mxu0
        %v4108 = vadd.f32 0.0, %v4107
        %v4109 = vpop.f32.mrb[0].mxu0
        %v4110 = vadd.f32 0.0, %v4109
        %4111 = vdwg.mxu0
        %4112 = vrot.lane.b32.xlu0 %v4036, 127
        %v4113 = vpop.permute.xlu0 %4112
        %4114 = vrot.lane.b32.xlu0 %v4040, 127
        %v4115 = vpop.permute.xlu0 %4114
        %4116 = vrot.lane.b32.xlu0 %v4046, 127
        %v4117 = vpop.permute.xlu0 %4116
        %4118 = vrot.lane.b32.xlu0 %v4050, 127
        %v4119 = vpop.permute.xlu0 %4118
        %4120 = vrot.lane.b32.xlu0 %v4056, 127
        %v4121 = vpop.permute.xlu0 %4120
        %4122 = vrot.lane.b32.xlu0 %v4060, 127
        %v4123 = vpop.permute.xlu0 %4122
        %4124 = vrot.lane.b32.xlu0 %v4066, 127
        %v4125 = vpop.permute.xlu0 %4124
        %4126 = vrot.lane.b32.xlu0 %v4070, 127
        %v4127 = vpop.permute.xlu0 %4126
        %4128 = vrot.lane.b32.xlu0 %v4076, 127
        %v4129 = vpop.permute.xlu0 %4128
        %4130 = vrot.lane.b32.xlu0 %v4080, 127
        %v4131 = vpop.permute.xlu0 %4130
        %4132 = vrot.lane.b32.xlu0 %v4086, 127
        %v4133 = vpop.permute.xlu0 %4132
        %4134 = vrot.lane.b32.xlu0 %v4090, 127
        %v4135 = vpop.permute.xlu0 %4134
        %4136 = vrot.lane.b32.xlu0 %v4096, 127
        %v4137 = vpop.permute.xlu0 %4136
        %4138 = vrot.lane.b32.xlu0 %v4100, 127
        %v4139 = vpop.permute.xlu0 %4138
        %4140 = vrot.lane.b32.xlu0 %v4106, 127
        %v4141 = vpop.permute.xlu0 %4140
        %4142 = vrot.lane.b32.xlu0 %v4110, 127
        %v4143 = vpop.permute.xlu0 %4142
        %v4144 = vsel %vm661, %v4113, %v4036
        %v4145 = vsel %vm662, %v4115, %v4040
        %v4146 = vsel %vm663, %v4117, %v4046
        %v4147 = vsel %vm664, %v4119, %v4050
        %v4148 = vsel %vm665, %v4121, %v4056
        %v4149 = vsel %vm666, %v4123, %v4060
        %v4150 = vsel %vm667, %v4125, %v4066
        %v4151 = vsel %vm668, %v4127, %v4070
        %v4152 = vsel %vm669, %v4129, %v4076
        %v4153 = vsel %vm670, %v4131, %v4080
        %v4154 = vsel %vm671, %v4133, %v4086
        %v4155 = vsel %vm672, %v4135, %v4090
        %v4156 = vsel %vm673, %v4137, %v4096
        %v4157 = vsel %vm674, %v4139, %v4100
        %v4158 = vsel %vm675, %v4141, %v4106
        %v4159 = vsel %vm676, %v4143, %v4110
        %4160 = vrot.lane.b32.xlu0 %v4144, 126
        %v4161 = vpop.permute.xlu0 %4160
        %4162 = vrot.lane.b32.xlu0 %v4145, 126
        %v4163 = vpop.permute.xlu0 %4162
        %4164 = vrot.lane.b32.xlu0 %v4146, 126
        %v4165 = vpop.permute.xlu0 %4164
        %4166 = vrot.lane.b32.xlu0 %v4147, 126
        %v4167 = vpop.permute.xlu0 %4166
        %4168 = vrot.lane.b32.xlu0 %v4148, 126
        %v4169 = vpop.permute.xlu0 %4168
        %4170 = vrot.lane.b32.xlu0 %v4149, 126
        %v4171 = vpop.permute.xlu0 %4170
        %4172 = vrot.lane.b32.xlu0 %v4150, 126
        %v4173 = vpop.permute.xlu0 %4172
        %4174 = vrot.lane.b32.xlu0 %v4151, 126
        %v4175 = vpop.permute.xlu0 %4174
        %4176 = vrot.lane.b32.xlu0 %v4152, 126
        %v4177 = vpop.permute.xlu0 %4176
        %4178 = vrot.lane.b32.xlu0 %v4153, 126
        %v4179 = vpop.permute.xlu0 %4178
        %4180 = vrot.lane.b32.xlu0 %v4154, 126
        %v4181 = vpop.permute.xlu0 %4180
        %4182 = vrot.lane.b32.xlu0 %v4155, 126
        %v4183 = vpop.permute.xlu0 %4182
        %4184 = vrot.lane.b32.xlu0 %v4156, 126
        %v4185 = vpop.permute.xlu0 %4184
        %4186 = vrot.lane.b32.xlu0 %v4157, 126
        %v4187 = vpop.permute.xlu0 %4186
        %4188 = vrot.lane.b32.xlu0 %v4158, 126
        %v4189 = vpop.permute.xlu0 %4188
        %4190 = vrot.lane.b32.xlu0 %v4159, 126
        %v4191 = vpop.permute.xlu0 %4190
        %v4192 = vsel %vm693, %v4161, %v4144
        %v4193 = vsel %vm694, %v4163, %v4145
        %v4194 = vsel %vm695, %v4165, %v4146
        %v4195 = vsel %vm696, %v4167, %v4147
        %v4196 = vsel %vm697, %v4169, %v4148
        %v4197 = vsel %vm698, %v4171, %v4149
        %v4198 = vsel %vm699, %v4173, %v4150
        %v4199 = vsel %vm700, %v4175, %v4151
        %v4200 = vsel %vm701, %v4177, %v4152
        %v4201 = vsel %vm702, %v4179, %v4153
        %v4202 = vsel %vm703, %v4181, %v4154
        %v4203 = vsel %vm704, %v4183, %v4155
        %v4204 = vsel %vm705, %v4185, %v4156
        %v4205 = vsel %vm706, %v4187, %v4157
        %v4206 = vsel %vm707, %v4189, %v4158
        %v4207 = vsel %vm708, %v4191, %v4159
        %4208 = vrot.lane.b32.xlu0 %v4192, 124
        %v4209 = vpop.permute.xlu0 %4208
        %4210 = vrot.lane.b32.xlu0 %v4193, 124
        %v4211 = vpop.permute.xlu0 %4210
        %4212 = vrot.lane.b32.xlu0 %v4194, 124
        %v4213 = vpop.permute.xlu0 %4212
        %4214 = vrot.lane.b32.xlu0 %v4195, 124
        %v4215 = vpop.permute.xlu0 %4214
        %4216 = vrot.lane.b32.xlu0 %v4196, 124
        %v4217 = vpop.permute.xlu0 %4216
        %4218 = vrot.lane.b32.xlu0 %v4197, 124
        %v4219 = vpop.permute.xlu0 %4218
        %4220 = vrot.lane.b32.xlu0 %v4198, 124
        %v4221 = vpop.permute.xlu0 %4220
        %4222 = vrot.lane.b32.xlu0 %v4199, 124
        %v4223 = vpop.permute.xlu0 %4222
        %4224 = vrot.lane.b32.xlu0 %v4200, 124
        %v4225 = vpop.permute.xlu0 %4224
        %4226 = vrot.lane.b32.xlu0 %v4201, 124
        %v4227 = vpop.permute.xlu0 %4226
        %4228 = vrot.lane.b32.xlu0 %v4202, 124
        %v4229 = vpop.permute.xlu0 %4228
        %4230 = vrot.lane.b32.xlu0 %v4203, 124
        %v4231 = vpop.permute.xlu0 %4230
        %4232 = vrot.lane.b32.xlu0 %v4204, 124
        %v4233 = vpop.permute.xlu0 %4232
        %4234 = vrot.lane.b32.xlu0 %v4205, 124
        %v4235 = vpop.permute.xlu0 %4234
        %4236 = vrot.lane.b32.xlu0 %v4206, 124
        %v4237 = vpop.permute.xlu0 %4236
        %4238 = vrot.lane.b32.xlu0 %v4207, 124
        %v4239 = vpop.permute.xlu0 %4238
        %v4240 = vsel %vm725, %v4209, %v4192
        %v4241 = vsel %vm726, %v4211, %v4193
        %v4242 = vsel %vm727, %v4213, %v4194
        %v4243 = vsel %vm728, %v4215, %v4195
        %v4244 = vsel %vm729, %v4217, %v4196
        %v4245 = vsel %vm730, %v4219, %v4197
        %v4246 = vsel %vm731, %v4221, %v4198
        %v4247 = vsel %vm732, %v4223, %v4199
        %v4248 = vsel %vm733, %v4225, %v4200
        %v4249 = vsel %vm734, %v4227, %v4201
        %v4250 = vsel %vm735, %v4229, %v4202
        %v4251 = vsel %vm736, %v4231, %v4203
        %v4252 = vsel %vm737, %v4233, %v4204
        %v4253 = vsel %vm738, %v4235, %v4205
        %v4254 = vsel %vm739, %v4237, %v4206
        %v4255 = vsel %vm740, %v4239, %v4207
        %4256 = vrot.lane.b32.xlu0 %v4240, 120
        %v4257 = vpop.permute.xlu0 %4256
        %4258 = vrot.lane.b32.xlu0 %v4241, 120
        %v4259 = vpop.permute.xlu0 %4258
        %4260 = vrot.lane.b32.xlu0 %v4242, 120
        %v4261 = vpop.permute.xlu0 %4260
        %4262 = vrot.lane.b32.xlu0 %v4243, 120
        %v4263 = vpop.permute.xlu0 %4262
        %4264 = vrot.lane.b32.xlu0 %v4244, 120
        %v4265 = vpop.permute.xlu0 %4264
        %4266 = vrot.lane.b32.xlu0 %v4245, 120
        %v4267 = vpop.permute.xlu0 %4266
        %4268 = vrot.lane.b32.xlu0 %v4246, 120
        %v4269 = vpop.permute.xlu0 %4268
        %4270 = vrot.lane.b32.xlu0 %v4247, 120
        %v4271 = vpop.permute.xlu0 %4270
        %4272 = vrot.lane.b32.xlu0 %v4248, 120
        %v4273 = vpop.permute.xlu0 %4272
        %4274 = vrot.lane.b32.xlu0 %v4249, 120
        %v4275 = vpop.permute.xlu0 %4274
        %4276 = vrot.lane.b32.xlu0 %v4250, 120
        %v4277 = vpop.permute.xlu0 %4276
        %4278 = vrot.lane.b32.xlu0 %v4251, 120
        %v4279 = vpop.permute.xlu0 %4278
        %4280 = vrot.lane.b32.xlu0 %v4252, 120
        %v4281 = vpop.permute.xlu0 %4280
        %4282 = vrot.lane.b32.xlu0 %v4253, 120
        %v4283 = vpop.permute.xlu0 %4282
        %4284 = vrot.lane.b32.xlu0 %v4254, 120
        %v4285 = vpop.permute.xlu0 %4284
        %4286 = vrot.lane.b32.xlu0 %v4255, 120
        %v4287 = vpop.permute.xlu0 %4286
        %v4288 = vsel %vm757, %v4257, %v4240
        %v4289 = vsel %vm758, %v4259, %v4241
        %v4290 = vsel %vm759, %v4261, %v4242
        %v4291 = vsel %vm760, %v4263, %v4243
        %v4292 = vsel %vm761, %v4265, %v4244
        %v4293 = vsel %vm762, %v4267, %v4245
        %v4294 = vsel %vm763, %v4269, %v4246
        %v4295 = vsel %vm764, %v4271, %v4247
        %v4296 = vsel %vm765, %v4273, %v4248
        %v4297 = vsel %vm766, %v4275, %v4249
        %v4298 = vsel %vm767, %v4277, %v4250
        %v4299 = vsel %vm768, %v4279, %v4251
        %v4300 = vsel %vm769, %v4281, %v4252
        %v4301 = vsel %vm770, %v4283, %v4253
        %v4302 = vsel %vm771, %v4285, %v4254
        %v4303 = vsel %vm772, %v4287, %v4255
        %4304 = vrot.lane.b32.xlu0 %v4288, 112
        %v4305 = vpop.permute.xlu0 %4304
        %4306 = vrot.lane.b32.xlu0 %v4289, 112
        %v4307 = vpop.permute.xlu0 %4306
        %4308 = vrot.lane.b32.xlu0 %v4290, 112
        %v4309 = vpop.permute.xlu0 %4308
        %4310 = vrot.lane.b32.xlu0 %v4291, 112
        %v4311 = vpop.permute.xlu0 %4310
        %4312 = vrot.lane.b32.xlu0 %v4292, 112
        %v4313 = vpop.permute.xlu0 %4312
        %4314 = vrot.lane.b32.xlu0 %v4293, 112
        %v4315 = vpop.permute.xlu0 %4314
        %4316 = vrot.lane.b32.xlu0 %v4294, 112
        %v4317 = vpop.permute.xlu0 %4316
        %4318 = vrot.lane.b32.xlu0 %v4295, 112
        %v4319 = vpop.permute.xlu0 %4318
        %4320 = vrot.lane.b32.xlu0 %v4296, 112
        %v4321 = vpop.permute.xlu0 %4320
        %4322 = vrot.lane.b32.xlu0 %v4297, 112
        %v4323 = vpop.permute.xlu0 %4322
        %4324 = vrot.lane.b32.xlu0 %v4298, 112
        %v4325 = vpop.permute.xlu0 %4324
        %4326 = vrot.lane.b32.xlu0 %v4299, 112
        %v4327 = vpop.permute.xlu0 %4326
        %4328 = vrot.lane.b32.xlu0 %v4300, 112
        %v4329 = vpop.permute.xlu0 %4328
        %4330 = vrot.lane.b32.xlu0 %v4301, 112
        %v4331 = vpop.permute.xlu0 %4330
        %4332 = vrot.lane.b32.xlu0 %v4302, 112
        %v4333 = vpop.permute.xlu0 %4332
        %4334 = vrot.lane.b32.xlu0 %v4303, 112
        %v4335 = vpop.permute.xlu0 %4334
        %v4336 = vsel %vm789, %v4305, %v4288
        %v4337 = vsel %vm790, %v4307, %v4289
        %v4338 = vsel %vm791, %v4309, %v4290
        %v4339 = vsel %vm792, %v4311, %v4291
        %v4340 = vsel %vm793, %v4313, %v4292
        %v4341 = vsel %vm794, %v4315, %v4293
        %v4342 = vsel %vm795, %v4317, %v4294
        %v4343 = vsel %vm796, %v4319, %v4295
        %v4344 = vsel %vm797, %v4321, %v4296
        %v4345 = vsel %vm798, %v4323, %v4297
        %v4346 = vsel %vm799, %v4325, %v4298
        %v4347 = vsel %vm800, %v4327, %v4299
        %v4348 = vsel %vm801, %v4329, %v4300
        %v4349 = vsel %vm802, %v4331, %v4301
        %v4350 = vsel %vm803, %v4333, %v4302
        %v4351 = vsel %vm804, %v4335, %v4303
        %4352 = vrot.lane.b32.xlu0 %v4336, 96
        %v4353 = vpop.permute.xlu0 %4352
        %4354 = vrot.lane.b32.xlu0 %v4337, 96
        %v4355 = vpop.permute.xlu0 %4354
        %4356 = vrot.lane.b32.xlu0 %v4338, 96
        %v4357 = vpop.permute.xlu0 %4356
        %4358 = vrot.lane.b32.xlu0 %v4339, 96
        %v4359 = vpop.permute.xlu0 %4358
        %4360 = vrot.lane.b32.xlu0 %v4340, 96
        %v4361 = vpop.permute.xlu0 %4360
        %4362 = vrot.lane.b32.xlu0 %v4341, 96
        %v4363 = vpop.permute.xlu0 %4362
        %4364 = vrot.lane.b32.xlu0 %v4342, 96
        %v4365 = vpop.permute.xlu0 %4364
        %4366 = vrot.lane.b32.xlu0 %v4343, 96
        %v4367 = vpop.permute.xlu0 %4366
        %4368 = vrot.lane.b32.xlu0 %v4344, 96
        %v4369 = vpop.permute.xlu0 %4368
        %4370 = vrot.lane.b32.xlu0 %v4345, 96
        %v4371 = vpop.permute.xlu0 %4370
        %4372 = vrot.lane.b32.xlu0 %v4346, 96
        %v4373 = vpop.permute.xlu0 %4372
        %4374 = vrot.lane.b32.xlu0 %v4347, 96
        %v4375 = vpop.permute.xlu0 %4374
        %4376 = vrot.lane.b32.xlu0 %v4348, 96
        %v4377 = vpop.permute.xlu0 %4376
        %4378 = vrot.lane.b32.xlu0 %v4349, 96
        %v4379 = vpop.permute.xlu0 %4378
        %4380 = vrot.lane.b32.xlu0 %v4350, 96
        %v4381 = vpop.permute.xlu0 %4380
        %4382 = vrot.lane.b32.xlu0 %v4351, 96
        %v4383 = vpop.permute.xlu0 %4382
        %v4384 = vsel %vm821, %v4353, %v4336
        %v4385 = vsel %vm822, %v4355, %v4337
        %v4386 = vsel %vm823, %v4357, %v4338
        %v4387 = vsel %vm824, %v4359, %v4339
        %v4388 = vsel %vm825, %v4361, %v4340
        %v4389 = vsel %vm826, %v4363, %v4341
        %v4390 = vsel %vm827, %v4365, %v4342
        %v4391 = vsel %vm828, %v4367, %v4343
        %v4392 = vsel %vm829, %v4369, %v4344
        %v4393 = vsel %vm830, %v4371, %v4345
        %v4394 = vsel %vm831, %v4373, %v4346
        %v4395 = vsel %vm832, %v4375, %v4347
        %v4396 = vsel %vm833, %v4377, %v4348
        %v4397 = vsel %vm834, %v4379, %v4349
        %v4398 = vsel %vm835, %v4381, %v4350
        %v4399 = vsel %vm836, %v4383, %v4351
        %4400 = vrot.lane.b32.xlu0 %v4384, 64
        %v4401 = vpop.permute.xlu0 %4400
        %4402 = vrot.lane.b32.xlu0 %v4385, 64
        %v4403 = vpop.permute.xlu0 %4402
        %4404 = vrot.lane.b32.xlu0 %v4386, 64
        %v4405 = vpop.permute.xlu0 %4404
        %4406 = vrot.lane.b32.xlu0 %v4387, 64
        %v4407 = vpop.permute.xlu0 %4406
        %4408 = vrot.lane.b32.xlu0 %v4388, 64
        %v4409 = vpop.permute.xlu0 %4408
        %4410 = vrot.lane.b32.xlu0 %v4389, 64
        %v4411 = vpop.permute.xlu0 %4410
        %4412 = vrot.lane.b32.xlu0 %v4390, 64
        %v4413 = vpop.permute.xlu0 %4412
        %4414 = vrot.lane.b32.xlu0 %v4391, 64
        %v4415 = vpop.permute.xlu0 %4414
        %4416 = vrot.lane.b32.xlu0 %v4392, 64
        %v4417 = vpop.permute.xlu0 %4416
        %4418 = vrot.lane.b32.xlu0 %v4393, 64
        %v4419 = vpop.permute.xlu0 %4418
        %4420 = vrot.lane.b32.xlu0 %v4394, 64
        %v4421 = vpop.permute.xlu0 %4420
        %4422 = vrot.lane.b32.xlu0 %v4395, 64
        %v4423 = vpop.permute.xlu0 %4422
        %4424 = vrot.lane.b32.xlu0 %v4396, 64
        %v4425 = vpop.permute.xlu0 %4424
        %4426 = vrot.lane.b32.xlu0 %v4397, 64
        %v4427 = vpop.permute.xlu0 %4426
        %4428 = vrot.lane.b32.xlu0 %v4398, 64
        %v4429 = vpop.permute.xlu0 %4428
        %4430 = vrot.lane.b32.xlu0 %v4399, 64
        %v4431 = vpop.permute.xlu0 %4430
        %v4432 = vsel %vm853, %v4401, %v4384
        %v4433 = vsel %vm854, %v4403, %v4385
        %v4434 = vsel %vm855, %v4405, %v4386
        %v4435 = vsel %vm856, %v4407, %v4387
        %v4436 = vsel %vm857, %v4409, %v4388
        %v4437 = vsel %vm858, %v4411, %v4389
        %v4438 = vsel %vm859, %v4413, %v4390
        %v4439 = vsel %vm860, %v4415, %v4391
        %v4440 = vsel %vm861, %v4417, %v4392
        %v4441 = vsel %vm862, %v4419, %v4393
        %v4442 = vsel %vm863, %v4421, %v4394
        %v4443 = vsel %vm864, %v4423, %v4395
        %v4444 = vsel %vm865, %v4425, %v4396
        %v4445 = vsel %vm866, %v4427, %v4397
        %v4446 = vsel %vm867, %v4429, %v4398
        %v4447 = vsel %vm868, %v4431, %v4399
        %v4448 = vadd.f32 %v4034, %v4432
        %v4449 = vadd.f32 %v4038, %v4433
        %v4450 = vadd.f32 %v4044, %v4434
        %v4451 = vadd.f32 %v4048, %v4435
        %v4452 = vadd.f32 %v4054, %v4436
        %v4453 = vadd.f32 %v4058, %v4437
        %v4454 = vadd.f32 %v4064, %v4438
        %v4455 = vadd.f32 %v4068, %v4439
        %v4456 = vadd.f32 %v4074, %v4440
        %v4457 = vadd.f32 %v4078, %v4441
        %v4458 = vadd.f32 %v4084, %v4442
        %v4459 = vadd.f32 %v4088, %v4443
        %v4460 = vadd.f32 %v4094, %v4444
        %v4461 = vadd.f32 %v4098, %v4445
        %v4462 = vadd.f32 %v4104, %v4446
        %v4463 = vadd.f32 %v4108, %v4447
        %v4464 = vsel %vm613, %v4448, -1e+30
        %v4465 = vsel %vm614, %v4449, -1e+30
        %v4466 = vsel %vm615, %v4450, -1e+30
        %v4467 = vsel %vm616, %v4451, -1e+30
        %v4468 = vsel %vm617, %v4452, -1e+30
        %v4469 = vsel %vm618, %v4453, -1e+30
        %v4470 = vsel %vm619, %v4454, -1e+30
        %v4471 = vsel %vm620, %v4455, -1e+30
        %v4472 = vsel %vm621, %v4456, -1e+30
        %v4473 = vsel %vm622, %v4457, -1e+30
        %v4474 = vsel %vm623, %v4458, -1e+30
        %v4475 = vsel %vm624, %v4459, -1e+30
        %v4476 = vsel %vm625, %v4460, -1e+30
        %v4477 = vsel %vm626, %v4461, -1e+30
        %v4478 = vsel %vm627, %v4462, -1e+30
        %v4479 = vsel %vm628, %v4463, -1e+30
        %4480 = vmax.xlane.f32.xlu0 %v4464
        %v4481 = vpop.xlane.xlu0 %4480
        %4482 = vmax.xlane.f32.xlu0 %v4465
        %v4483 = vpop.xlane.xlu0 %4482
        %4484 = vmax.xlane.f32.xlu0 %v4466
        %v4485 = vpop.xlane.xlu0 %4484
        %4486 = vmax.xlane.f32.xlu0 %v4467
        %v4487 = vpop.xlane.xlu0 %4486
        %4488 = vmax.xlane.f32.xlu0 %v4468
        %v4489 = vpop.xlane.xlu0 %4488
        %4490 = vmax.xlane.f32.xlu0 %v4469
        %v4491 = vpop.xlane.xlu0 %4490
        %4492 = vmax.xlane.f32.xlu0 %v4470
        %v4493 = vpop.xlane.xlu0 %4492
        %4494 = vmax.xlane.f32.xlu0 %v4471
        %v4495 = vpop.xlane.xlu0 %4494
        %4496 = vmax.xlane.f32.xlu0 %v4472
        %v4497 = vpop.xlane.xlu0 %4496
        %4498 = vmax.xlane.f32.xlu0 %v4473
        %v4499 = vpop.xlane.xlu0 %4498
        %4500 = vmax.xlane.f32.xlu0 %v4474
        %v4501 = vpop.xlane.xlu0 %4500
        %4502 = vmax.xlane.f32.xlu0 %v4475
        %v4503 = vpop.xlane.xlu0 %4502
        %4504 = vmax.xlane.f32.xlu0 %v4476
        %v4505 = vpop.xlane.xlu0 %4504
        %4506 = vmax.xlane.f32.xlu0 %v4477
        %v4507 = vpop.xlane.xlu0 %4506
        %4508 = vmax.xlane.f32.xlu0 %v4478
        %v4509 = vpop.xlane.xlu0 %4508
        %4510 = vmax.xlane.f32.xlu0 %v4479
        %v4511 = vpop.xlane.xlu0 %4510
        %v4512 = vsub.f32 %v4464, %v4481
        %v4513 = vsub.f32 %v4465, %v4483
        %v4514 = vsub.f32 %v4466, %v4485
        %v4515 = vsub.f32 %v4467, %v4487
        %v4516 = vsub.f32 %v4468, %v4489
        %v4517 = vsub.f32 %v4469, %v4491
        %v4518 = vsub.f32 %v4470, %v4493
        %v4519 = vsub.f32 %v4471, %v4495
        %v4520 = vsub.f32 %v4472, %v4497
        %v4521 = vsub.f32 %v4473, %v4499
        %v4522 = vsub.f32 %v4474, %v4501
        %v4523 = vsub.f32 %v4475, %v4503
        %v4524 = vsub.f32 %v4476, %v4505
        %v4525 = vsub.f32 %v4477, %v4507
        %v4526 = vsub.f32 %v4478, %v4509
        %v4527 = vsub.f32 %v4479, %v4511
        %v4528 = vmul.f32 %v4512, 1.442695
        %v4529 = vpow.pop %v4528
        %v4530 = vmul.f32 %v4513, 1.442695
        %v4531 = vpow.pop %v4530
        %v4532 = vmul.f32 %v4514, 1.442695
        %v4533 = vpow.pop %v4532
        %v4534 = vmul.f32 %v4515, 1.442695
        %v4535 = vpow.pop %v4534
        %v4536 = vmul.f32 %v4516, 1.442695
        %v4537 = vpow.pop %v4536
        %v4538 = vmul.f32 %v4517, 1.442695
        %v4539 = vpow.pop %v4538
        %v4540 = vmul.f32 %v4518, 1.442695
        %v4541 = vpow.pop %v4540
        %v4542 = vmul.f32 %v4519, 1.442695
        %v4543 = vpow.pop %v4542
        %v4544 = vmul.f32 %v4520, 1.442695
        %v4545 = vpow.pop %v4544
        %v4546 = vmul.f32 %v4521, 1.442695
        %v4547 = vpow.pop %v4546
        %v4548 = vmul.f32 %v4522, 1.442695
        %v4549 = vpow.pop %v4548
        %v4550 = vmul.f32 %v4523, 1.442695
        %v4551 = vpow.pop %v4550
        %v4552 = vmul.f32 %v4524, 1.442695
        %v4553 = vpow.pop %v4552
        %v4554 = vmul.f32 %v4525, 1.442695
        %v4555 = vpow.pop %v4554
        %v4556 = vmul.f32 %v4526, 1.442695
        %v4557 = vpow.pop %v4556
        %v4558 = vmul.f32 %v4527, 1.442695
        %v4559 = vpow.pop %v4558
        %4560 = vadd.xlane.f32.xlu0 %v4529
        %v4561 = vpop.xlane.xlu0 %4560
        %4562 = vadd.xlane.f32.xlu0 %v4531
        %v4563 = vpop.xlane.xlu0 %4562
        %4564 = vadd.xlane.f32.xlu0 %v4533
        %v4565 = vpop.xlane.xlu0 %4564
        %4566 = vadd.xlane.f32.xlu0 %v4535
        %v4567 = vpop.xlane.xlu0 %4566
        %4568 = vadd.xlane.f32.xlu0 %v4537
        %v4569 = vpop.xlane.xlu0 %4568
        %4570 = vadd.xlane.f32.xlu0 %v4539
        %v4571 = vpop.xlane.xlu0 %4570
        %4572 = vadd.xlane.f32.xlu0 %v4541
        %v4573 = vpop.xlane.xlu0 %4572
        %4574 = vadd.xlane.f32.xlu0 %v4543
        %v4575 = vpop.xlane.xlu0 %4574
        %4576 = vadd.xlane.f32.xlu0 %v4545
        %v4577 = vpop.xlane.xlu0 %4576
        %4578 = vadd.xlane.f32.xlu0 %v4547
        %v4579 = vpop.xlane.xlu0 %4578
        %4580 = vadd.xlane.f32.xlu0 %v4549
        %v4581 = vpop.xlane.xlu0 %4580
        %4582 = vadd.xlane.f32.xlu0 %v4551
        %v4583 = vpop.xlane.xlu0 %4582
        %4584 = vadd.xlane.f32.xlu0 %v4553
        %v4585 = vpop.xlane.xlu0 %4584
        %4586 = vadd.xlane.f32.xlu0 %v4555
        %v4587 = vpop.xlane.xlu0 %4586
        %4588 = vadd.xlane.f32.xlu0 %v4557
        %v4589 = vpop.xlane.xlu0 %4588
        %4590 = vadd.xlane.f32.xlu0 %v4559
        %v4591 = vpop.xlane.xlu0 %4590
        %v4592 = vrcp.pop %v4561
        %v4593 = vrcp.pop %v4563
        %v4594 = vrcp.pop %v4565
        %v4595 = vrcp.pop %v4567
        %v4596 = vrcp.pop %v4569
        %v4597 = vrcp.pop %v4571
        %v4598 = vrcp.pop %v4573
        %v4599 = vrcp.pop %v4575
        %v4600 = vrcp.pop %v4577
        %v4601 = vrcp.pop %v4579
        %v4602 = vrcp.pop %v4581
        %v4603 = vrcp.pop %v4583
        %v4604 = vrcp.pop %v4585
        %v4605 = vrcp.pop %v4587
        %v4606 = vrcp.pop %v4589
        %v4607 = vrcp.pop %v4591
        %v4608 = vmul.f32 %v4529, %v4592
        %v4609 = vmul.f32 %v4531, %v4593
        %v4610 = vmul.f32 %v4533, %v4594
        %v4611 = vmul.f32 %v4535, %v4595
        %v4612 = vmul.f32 %v4537, %v4596
        %v4613 = vmul.f32 %v4539, %v4597
        %v4614 = vmul.f32 %v4541, %v4598
        %v4615 = vmul.f32 %v4543, %v4599
        %v4616 = vmul.f32 %v4545, %v4600
        %v4617 = vmul.f32 %v4547, %v4601
        %v4618 = vmul.f32 %v4549, %v4602
        %v4619 = vmul.f32 %v4551, %v4603
        %v4620 = vmul.f32 %v4553, %v4604
        %v4621 = vmul.f32 %v4555, %v4605
        %v4622 = vmul.f32 %v4557, %v4606
        %v4623 = vmul.f32 %v4559, %v4607
        %v4624 = vpack.c.bf16 %v4609, %v4608
        %v4625 = vpack.c.bf16 %v4611, %v4610
        %v4626 = vpack.c.bf16 %v4613, %v4612
        %v4627 = vpack.c.bf16 %v4615, %v4614
        %v4628 = vpack.c.bf16 %v4617, %v4616
        %v4629 = vpack.c.bf16 %v4619, %v4618
        %v4630 = vpack.c.bf16 %v4621, %v4620
        %v4631 = vpack.c.bf16 %v4623, %v4622
        %4632 = vrot.lane.b32.xlu0 %v1791, 32
        %v4633 = vpop.permute.xlu0 %4632
        %4634 = vrot.lane.b32.xlu0 %v1792, 32
        %v4635 = vpop.permute.xlu0 %4634
        %4636 = vrot.lane.b32.xlu0 %v1793, 32
        %v4637 = vpop.permute.xlu0 %4636
        %4638 = vrot.lane.b32.xlu0 %v1794, 32
        %v4639 = vpop.permute.xlu0 %4638
        %4640 = vrot.lane.b32.xlu0 %v1795, 32
        %v4641 = vpop.permute.xlu0 %4640
        %4642 = vrot.lane.b32.xlu0 %v1796, 32
        %v4643 = vpop.permute.xlu0 %4642
        %4644 = vrot.lane.b32.xlu0 %v1797, 32
        %v4645 = vpop.permute.xlu0 %4644
        %4646 = vrot.lane.b32.xlu0 %v1798, 32
        %v4647 = vpop.permute.xlu0 %4646
        %4656 = vmatprep.subr.bf16.mxu0 0
        %4657 = vmatpush1.bf16.msra.mxu0 %v4633
        %4658 = vmatprep.subr.bf16.mxu0 0
        %4659 = vmatpush1.bf16.msra.mxu0 %v4635
        %4660 = vmatprep.subr.bf16.mxu0 0
        %4661 = vmatpush1.bf16.msra.mxu0 %v4637
        %4662 = vmatprep.subr.bf16.mxu0 0
        %4663 = vmatpush1.bf16.msra.mxu0 %v4639
        %4664 = vmatprep.subr.bf16.mxu0 0
        %4665 = vmatpush1.bf16.msra.mxu0 %v4641
        %4666 = vmatprep.subr.bf16.mxu0 0
        %4667 = vmatpush1.bf16.msra.mxu0 %v4643
        %4668 = vmatprep.subr.bf16.mxu0 0
        %4669 = vmatpush1.bf16.msra.mxu0 %v4645
        %4670 = vmatprep.subr.bf16.mxu0 0
        %4671 = vmatpush1.bf16.msra.mxu0 %v4647
        %4672 = vmatprep.subr.bf16.mxu0 0
        %4673 = vmatpush1.bf16.msra.mxu0 0
        %4674 = vmatprep.subr.bf16.mxu0 0
        %4675 = vmatpush1.bf16.msra.mxu0 0
        %4676 = vmatprep.subr.bf16.mxu0 0
        %4677 = vmatpush1.bf16.msra.mxu0 0
        %4678 = vmatprep.subr.bf16.mxu0 0
        %4679 = vmatpush1.bf16.msra.mxu0 0
        %4680 = vmatprep.subr.bf16.mxu0 0
        %4681 = vmatpush1.bf16.msra.mxu0 0
        %4682 = vmatprep.subr.bf16.mxu0 0
        %4683 = vmatpush1.bf16.msra.mxu0 0
        %4684 = vmatprep.subr.bf16.mxu0 0
        %4685 = vmatpush1.bf16.msra.mxu0 0
        %4686 = vmatprep.subr.bf16.mxu0 0
        %4687 = vmatpush1.bf16.msra.mxu0 0
        %4688 = vmatprep.mubr.bf16.mxu0 0
        %4689 = vmatmul.mubr.bf16.gmra.mrb[0].mxu0 %v4624
        %v4690 = vpop.f32.mrb[0].mxu0
        %v4691 = vadd.f32 0.0, %v4690
        %v4692 = vpop.f32.mrb[0].mxu0
        %v4693 = vpop.f32.mrb[0].mxu0
        %v4694 = vadd.f32 0.0, %v4693
        %v4695 = vpop.f32.mrb[0].mxu0
        %4696 = vmatprep.mubr.bf16.mxu0 0
        %4697 = vmatmul.mubr.bf16.gmra.mrb[0].mxu0 %v4625
        %v4698 = vpop.f32.mrb[0].mxu0
        %v4699 = vadd.f32 0.0, %v4698
        %v4700 = vpop.f32.mrb[0].mxu0
        %v4701 = vpop.f32.mrb[0].mxu0
        %v4702 = vadd.f32 0.0, %v4701
        %v4703 = vpop.f32.mrb[0].mxu0
        %4704 = vmatprep.mubr.bf16.mxu0 0
        %4705 = vmatmul.mubr.bf16.gmra.mrb[0].mxu0 %v4626
        %v4706 = vpop.f32.mrb[0].mxu0
        %v4707 = vadd.f32 0.0, %v4706
        %v4708 = vpop.f32.mrb[0].mxu0
        %v4709 = vpop.f32.mrb[0].mxu0
        %v4710 = vadd.f32 0.0, %v4709
        %v4711 = vpop.f32.mrb[0].mxu0
        %4712 = vmatprep.mubr.bf16.mxu0 0
        %4713 = vmatmul.mubr.bf16.gmra.mrb[0].mxu0 %v4627
        %v4714 = vpop.f32.mrb[0].mxu0
        %v4715 = vadd.f32 0.0, %v4714
        %v4716 = vpop.f32.mrb[0].mxu0
        %v4717 = vpop.f32.mrb[0].mxu0
        %v4718 = vadd.f32 0.0, %v4717
        %v4719 = vpop.f32.mrb[0].mxu0
        %4720 = vmatprep.mubr.bf16.mxu0 0
        %4721 = vmatmul.mubr.bf16.gmra.mrb[0].mxu0 %v4628
        %v4722 = vpop.f32.mrb[0].mxu0
        %v4723 = vadd.f32 0.0, %v4722
        %v4724 = vpop.f32.mrb[0].mxu0
        %v4725 = vpop.f32.mrb[0].mxu0
        %v4726 = vadd.f32 0.0, %v4725
        %v4727 = vpop.f32.mrb[0].mxu0
        %4728 = vmatprep.mubr.bf16.mxu0 0
        %4729 = vmatmul.mubr.bf16.gmra.mrb[0].mxu0 %v4629
        %v4730 = vpop.f32.mrb[0].mxu0
        %v4731 = vadd.f32 0.0, %v4730
        %v4732 = vpop.f32.mrb[0].mxu0
        %v4733 = vpop.f32.mrb[0].mxu0
        %v4734 = vadd.f32 0.0, %v4733
        %v4735 = vpop.f32.mrb[0].mxu0
        %4736 = vmatprep.mubr.bf16.mxu0 0
        %4737 = vmatmul.mubr.bf16.gmra.mrb[0].mxu0 %v4630
        %v4738 = vpop.f32.mrb[0].mxu0
        %v4739 = vadd.f32 0.0, %v4738
        %v4740 = vpop.f32.mrb[0].mxu0
        %v4741 = vpop.f32.mrb[0].mxu0
        %v4742 = vadd.f32 0.0, %v4741
        %v4743 = vpop.f32.mrb[0].mxu0
        %4744 = vmatprep.mubr.bf16.mxu0 0
        %4745 = vmatmul.mubr.bf16.gmra.mrb[0].mxu0 %v4631
        %v4746 = vpop.f32.mrb[0].mxu0
        %v4747 = vadd.f32 0.0, %v4746
        %v4748 = vpop.f32.mrb[0].mxu0
        %v4749 = vpop.f32.mrb[0].mxu0
        %v4750 = vadd.f32 0.0, %v4749
        %v4751 = vpop.f32.mrb[0].mxu0
        %4752 = vdwg.mxu0
        %4769 = vrot.lane.b32.xlu0 %v2797, 32
        %v4770 = vpop.permute.xlu0 %4769
        %4771 = vrot.lane.b32.xlu0 %v2800, 32
        %v4772 = vpop.permute.xlu0 %4771
        %4773 = vrot.lane.b32.xlu0 %v2805, 32
        %v4774 = vpop.permute.xlu0 %4773
        %4775 = vrot.lane.b32.xlu0 %v2808, 32
        %v4776 = vpop.permute.xlu0 %4775
        %4777 = vrot.lane.b32.xlu0 %v2813, 32
        %v4778 = vpop.permute.xlu0 %4777
        %4779 = vrot.lane.b32.xlu0 %v2816, 32
        %v4780 = vpop.permute.xlu0 %4779
        %4781 = vrot.lane.b32.xlu0 %v2821, 32
        %v4782 = vpop.permute.xlu0 %4781
        %4783 = vrot.lane.b32.xlu0 %v2824, 32
        %v4784 = vpop.permute.xlu0 %4783
        %4785 = vrot.lane.b32.xlu0 %v2829, 32
        %v4786 = vpop.permute.xlu0 %4785
        %4787 = vrot.lane.b32.xlu0 %v2832, 32
        %v4788 = vpop.permute.xlu0 %4787
        %4789 = vrot.lane.b32.xlu0 %v2837, 32
        %v4790 = vpop.permute.xlu0 %4789
        %4791 = vrot.lane.b32.xlu0 %v2840, 32
        %v4792 = vpop.permute.xlu0 %4791
        %4793 = vrot.lane.b32.xlu0 %v2845, 32
        %v4794 = vpop.permute.xlu0 %4793
        %4795 = vrot.lane.b32.xlu0 %v2848, 32
        %v4796 = vpop.permute.xlu0 %4795
        %4797 = vrot.lane.b32.xlu0 %v2853, 32
        %v4798 = vpop.permute.xlu0 %4797
        %4799 = vrot.lane.b32.xlu0 %v2856, 32
        %v4800 = vpop.permute.xlu0 %4799
        %4833 = vrot.lane.b32.xlu0 %v3744, 64
        %v4834 = vpop.permute.xlu0 %4833
        %4835 = vrot.lane.b32.xlu0 %v3747, 64
        %v4836 = vpop.permute.xlu0 %4835
        %4837 = vrot.lane.b32.xlu0 %v3752, 64
        %v4838 = vpop.permute.xlu0 %4837
        %4839 = vrot.lane.b32.xlu0 %v3755, 64
        %v4840 = vpop.permute.xlu0 %4839
        %4841 = vrot.lane.b32.xlu0 %v3760, 64
        %v4842 = vpop.permute.xlu0 %4841
        %4843 = vrot.lane.b32.xlu0 %v3763, 64
        %v4844 = vpop.permute.xlu0 %4843
        %4845 = vrot.lane.b32.xlu0 %v3768, 64
        %v4846 = vpop.permute.xlu0 %4845
        %4847 = vrot.lane.b32.xlu0 %v3771, 64
        %v4848 = vpop.permute.xlu0 %4847
        %4849 = vrot.lane.b32.xlu0 %v3776, 64
        %v4850 = vpop.permute.xlu0 %4849
        %4851 = vrot.lane.b32.xlu0 %v3779, 64
        %v4852 = vpop.permute.xlu0 %4851
        %4853 = vrot.lane.b32.xlu0 %v3784, 64
        %v4854 = vpop.permute.xlu0 %4853
        %4855 = vrot.lane.b32.xlu0 %v3787, 64
        %v4856 = vpop.permute.xlu0 %4855
        %4857 = vrot.lane.b32.xlu0 %v3792, 64
        %v4858 = vpop.permute.xlu0 %4857
        %4859 = vrot.lane.b32.xlu0 %v3795, 64
        %v4860 = vpop.permute.xlu0 %4859
        %4861 = vrot.lane.b32.xlu0 %v3800, 64
        %v4862 = vpop.permute.xlu0 %4861
        %4863 = vrot.lane.b32.xlu0 %v3803, 64
        %v4864 = vpop.permute.xlu0 %4863
        %4897 = vrot.lane.b32.xlu0 %v4691, 96
        %v4898 = vpop.permute.xlu0 %4897
        %4899 = vrot.lane.b32.xlu0 %v4694, 96
        %v4900 = vpop.permute.xlu0 %4899
        %4901 = vrot.lane.b32.xlu0 %v4699, 96
        %v4902 = vpop.permute.xlu0 %4901
        %4903 = vrot.lane.b32.xlu0 %v4702, 96
        %v4904 = vpop.permute.xlu0 %4903
        %4905 = vrot.lane.b32.xlu0 %v4707, 96
        %v4906 = vpop.permute.xlu0 %4905
        %4907 = vrot.lane.b32.xlu0 %v4710, 96
        %v4908 = vpop.permute.xlu0 %4907
        %4909 = vrot.lane.b32.xlu0 %v4715, 96
        %v4910 = vpop.permute.xlu0 %4909
        %4911 = vrot.lane.b32.xlu0 %v4718, 96
        %v4912 = vpop.permute.xlu0 %4911
        %4913 = vrot.lane.b32.xlu0 %v4723, 96
        %v4914 = vpop.permute.xlu0 %4913
        %4915 = vrot.lane.b32.xlu0 %v4726, 96
        %v4916 = vpop.permute.xlu0 %4915
        %4917 = vrot.lane.b32.xlu0 %v4731, 96
        %v4918 = vpop.permute.xlu0 %4917
        %4919 = vrot.lane.b32.xlu0 %v4734, 96
        %v4920 = vpop.permute.xlu0 %4919
        %4921 = vrot.lane.b32.xlu0 %v4739, 96
        %v4922 = vpop.permute.xlu0 %4921
        %4923 = vrot.lane.b32.xlu0 %v4742, 96
        %v4924 = vpop.permute.xlu0 %4923
        %4925 = vrot.lane.b32.xlu0 %v4747, 96
        %v4926 = vpop.permute.xlu0 %4925
        %4927 = vrot.lane.b32.xlu0 %v4750, 96
        %v4928 = vpop.permute.xlu0 %4927
        %v4945 = vsel %vm1053, %v1842, %v4770
        %v4946 = vsel %vm1053, %v1845, %v4772
        %v4947 = vsel %vm1053, %v1850, %v4774
        %v4948 = vsel %vm1053, %v1853, %v4776
        %v4949 = vsel %vm1053, %v1858, %v4778
        %v4950 = vsel %vm1053, %v1861, %v4780
        %v4951 = vsel %vm1053, %v1866, %v4782
        %v4952 = vsel %vm1053, %v1869, %v4784
        %v4953 = vsel %vm1053, %v1874, %v4786
        %v4954 = vsel %vm1053, %v1877, %v4788
        %v4955 = vsel %vm1053, %v1882, %v4790
        %v4956 = vsel %vm1053, %v1885, %v4792
        %v4957 = vsel %vm1053, %v1890, %v4794
        %v4958 = vsel %vm1053, %v1893, %v4796
        %v4959 = vsel %vm1053, %v1898, %v4798
        %v4960 = vsel %vm1053, %v1901, %v4800
        %vm4961 = vcmask 523264
        %v4962 = vsel %vm4961, %v4945, %v4834
        %v4963 = vsel %vm4961, %v4946, %v4836
        %v4964 = vsel %vm4961, %v4947, %v4838
        %v4965 = vsel %vm4961, %v4948, %v4840
        %v4966 = vsel %vm4961, %v4949, %v4842
        %v4967 = vsel %vm4961, %v4950, %v4844
        %v4968 = vsel %vm4961, %v4951, %v4846
        %v4969 = vsel %vm4961, %v4952, %v4848
        %v4970 = vsel %vm4961, %v4953, %v4850
        %v4971 = vsel %vm4961, %v4954, %v4852
        %v4972 = vsel %vm4961, %v4955, %v4854
        %v4973 = vsel %vm4961, %v4956, %v4856
        %v4974 = vsel %vm4961, %v4957, %v4858
        %v4975 = vsel %vm4961, %v4958, %v4860
        %v4976 = vsel %vm4961, %v4959, %v4862
        %v4977 = vsel %vm4961, %v4960, %v4864
        %vm4978 = vcmask 785408
        %v4979 = vsel %vm4978, %v4962, %v4898
        %v4980 = vsel %vm4978, %v4963, %v4900
        %v4981 = vsel %vm4978, %v4964, %v4902
        %v4982 = vsel %vm4978, %v4965, %v4904
        %v4983 = vsel %vm4978, %v4966, %v4906
        %v4984 = vsel %vm4978, %v4967, %v4908
        %v4985 = vsel %vm4978, %v4968, %v4910
        %v4986 = vsel %vm4978, %v4969, %v4912
        %v4987 = vsel %vm4978, %v4970, %v4914
        %v4988 = vsel %vm4978, %v4971, %v4916
        %v4989 = vsel %vm4978, %v4972, %v4918
        %v4990 = vsel %vm4978, %v4973, %v4920
        %v4991 = vsel %vm4978, %v4974, %v4922
        %v4992 = vsel %vm4978, %v4975, %v4924
        %v4993 = vsel %vm4978, %v4976, %v4926
        %v4994 = vsel %vm4978, %v4977, %v4928
        %v4995 = vpack.c.bf16 %v4980, %v4979
        %v4996 = vpack.c.bf16 %v4982, %v4981
        %v4997 = vpack.c.bf16 %v4984, %v4983
        %v4998 = vpack.c.bf16 %v4986, %v4985
        %v4999 = vpack.c.bf16 %v4988, %v4987
        %v5000 = vpack.c.bf16 %v4990, %v4989
        %v5001 = vpack.c.bf16 %v4992, %v4991
        %v5002 = vpack.c.bf16 %v4994, %v4993
        %v5011 = vunpack.c.l.b16 %v4995
        %v5012 = vunpack.c.h.b16 %v4995
        %v5013 = vunpack.c.l.b16 %v4996
        %v5014 = vunpack.c.h.b16 %v4996
        %v5015 = vunpack.c.l.b16 %v4997
        %v5016 = vunpack.c.h.b16 %v4997
        %v5017 = vunpack.c.l.b16 %v4998
        %v5018 = vunpack.c.h.b16 %v4998
        %v5019 = vunpack.c.l.b16 %v4999
        %v5020 = vunpack.c.h.b16 %v4999
        %v5021 = vunpack.c.l.b16 %v5000
        %v5022 = vunpack.c.h.b16 %v5000
        %v5023 = vunpack.c.l.b16 %v5001
        %v5024 = vunpack.c.h.b16 %v5001
        %v5025 = vunpack.c.l.b16 %v5002
        %v5026 = vunpack.c.h.b16 %v5002
        %v5027 = vpack.c.b16 %v5011, %v5011
        %v5028 = vpack.c.b16 %v5012, %v5012
        %v5029 = vpack.c.b16 %v5013, %v5013
        %v5030 = vpack.c.b16 %v5014, %v5014
        %v5031 = vpack.c.b16 %v5015, %v5015
        %v5032 = vpack.c.b16 %v5016, %v5016
        %v5033 = vpack.c.b16 %v5017, %v5017
        %v5034 = vpack.c.b16 %v5018, %v5018
        %v5035 = vpack.c.b16 %v5019, %v5019
        %v5036 = vpack.c.b16 %v5020, %v5020
        %v5037 = vpack.c.b16 %v5021, %v5021
        %v5038 = vpack.c.b16 %v5022, %v5022
        %v5039 = vpack.c.b16 %v5023, %v5023
        %v5040 = vpack.c.b16 %v5024, %v5024
        %v5041 = vpack.c.b16 %v5025, %v5025
        %v5042 = vpack.c.b16 %v5026, %v5026
        %5059 = vst [vmem:[%s573] sm:$0xf] %v5027
        %5060 = vst [vmem:[%s573 + $0x4] sm:$0xf] %v5028
        %5061 = vst [vmem:[%s573 + $0x8] sm:$0xf] %v5029
        %5062 = vst [vmem:[%s573 + $0xc] sm:$0xf] %v5030
        %5063 = vst [vmem:[%s573 + $0x10] sm:$0xf] %v5031
        %5064 = vst [vmem:[%s573 + $0x14] sm:$0xf] %v5032
        %5065 = vst [vmem:[%s573 + $0x18] sm:$0xf] %v5033
        %5066 = vst [vmem:[%s573 + $0x1c] sm:$0xf] %v5034
        %5067 = vst [vmem:[%s573 + $0x20] sm:$0xf] %v5035
        %5068 = vst [vmem:[%s573 + $0x24] sm:$0xf] %v5036
        %5069 = vst [vmem:[%s573 + $0x28] sm:$0xf] %v5037
        %5070 = vst [vmem:[%s573 + $0x2c] sm:$0xf] %v5038
        %5071 = vst [vmem:[%s573 + $0x30] sm:$0xf] %v5039
        %5072 = vst [vmem:[%s573 + $0x34] sm:$0xf] %v5040
        %5073 = vst [vmem:[%s573 + $0x38] sm:$0xf] %v5041
        %5074 = vst [vmem:[%s573 + $0x3c] sm:$0xf] %v5042
        %s5075 = smul.u32 16, %s20
        %p5076 = scmp.lt.s32.totalorder %s19, 1
        %s5077 = scalar_select %p5076, %s19, 1
        %p5078 = scmp.lt.s32.totalorder %s5075, 15
        %s5079 = scalar_select %p5078, %s5075, 15
        %s5080 = smul.addr %s5077, 16
        %s5081 = sadd.s32 %s5079, %s5080
        %s5082 = smul.addr %s5081, 4
        %s5083 = scalar_lea.vmem %s4, %s5082
        // Predicated region
        $region160: #{relative_transformer.13} parent=146 // pred_check
          %p5084 = pneg %p148
        $region161: #{relative_transformer.13} parent=146 // pred_check_branch
          %5086 = sbr.rel (%p5084) target = $region163
        $region162: #{relative_transformer.13} parent=146 // pred_region
          %s5087 = smul.u32 16, %s20
        $region163: #{relative_transformer.13} parent=146 // pred_fallthru
          _
      $region147: #{relative_transformer.13} parent=5 // pred_fallthru
        _
      %p5088 = scmp.le.s32.totalorder 2, %s10
      // Predicated region
      $region164: #{relative_transformer.13} parent=5 // pred_check
        %p5089 = pneg %p5088
      $region165: #{relative_transformer.13} parent=5 // pred_check_branch
        %5091 = sbr.rel (%p5089) target = $region167
      $region166: #{relative_transformer.13} parent=5 // pred_region
        %s5092 = ssub.s32 %s10, 2
        // Predicated region
        $region168: #{relative_transformer.13} parent=166 // pred_check
          %p5093 = pneg %p154
        $region169: #{relative_transformer.13} parent=166 // pred_check_branch
          %5095 = sbr.rel (%p5093) target = $region171
        $region170: #{relative_transformer.13} parent=166 // pred_region
          %s5096 = smul.u32 16, %s22
          %p5097 = scmp.lt.s32.totalorder %s21, 1
          %s5098 = scalar_select %p5097, %s21, 1
          %p5099 = scmp.lt.s32.totalorder %s5096, 15
          %s5100 = scalar_select %p5099, %s5096, 15
          %s5101 = smul.addr %s5098, 16
          %s5102 = sadd.s32 %s5100, %s5101
          %s5103 = smul.addr %s5102, 4
          %s5104 = scalar_lea.vmem %s4, %s5103
        $region171: #{relative_transformer.13} parent=166 // pred_fallthru
          _
      $region167: #{relative_transformer.13} parent=5 // pred_fallthru
        _
    $region6: #{relative_transformer.13} parent=1 // loop_footer
      %s14 = sadd.s32 1, %s10
    $region7: #{relative_transformer.13} parent=1 // loop_footer_branch
      %9 = sbr.rel target = $region3
    $region8: #{relative_transformer.13} parent=1 // loop_exit
      _

// kernel: relative_transformer.23
$region0: #{relative_transformer.23}
  #allocation0 [shape = 'u32[]', space=smem, size = 0x4, offset = 0x4, fixed_abs, tag = 'smem constant byte address 0x4 - core index']
  #allocation1 [shape = 'u32[144,128]{1,0:T(1,128)}', space=vmem, size = 0x12000, scoped, tag = 'internal scratch']
  %s0 = inlined_call_operand.vmem [shape: bf16[256,128], index: 0, kind: input, shape index: {}]
  %s1 = inlined_call_operand.vmem [shape: bf16[128,256], index: 1, kind: input, shape index: {}]
  %s2 = inlined_call_operand.hbm [shape: f32[256,256], index: 2, kind: output, shape index: {}]
  %s3 = sld [smem:[#allocation0]]
  $region18: #{relative_transformer.23} parent=0
    _
  %s5 = ssub.s32 1, %s3
  %s6 = scalar_select 0, %s5, %s3
  $region1: #{relative_transformer.23} parent=0
    #allocation2 [shape = 'u8[262144]{0}', space=vmem, size = 0x40000, scoped, tag = 'output window, operand 0, single buffered']
    #allocation3 [shape = 's32[1]{0}', space=sflag, size = 0x4, scoped, tag = 'scoped memory for relative_transformer.23']
    %7 = vsyncpa [#allocation3], 0
    // Predicated region
    $region2: #{relative_transformer.23} parent=1 // pred_check
      _
    $region3: #{relative_transformer.23} parent=1 // pred_check_branch
      %9 = sbr.rel (0) target = $region5
    $region4: #{relative_transformer.23} parent=1 // pred_region
      _
    $region5: #{relative_transformer.23} parent=1 // pred_fallthru
      _
    // Predicated region
    $region6: #{relative_transformer.23} parent=1 // pred_check
      _
    $region7: #{relative_transformer.23} parent=1 // pred_check_branch
      %11 = sbr.rel (0) target = $region9
    $region8: #{relative_transformer.23} parent=1 // pred_region
      _
    $region9: #{relative_transformer.23} parent=1 // pred_fallthru
      _
    %v13 = vld [vmem:[%s0] sm:$0xf]
    %v14 = vld [vmem:[%s0 + $0x4] sm:$0xf]
    %v15 = vld [vmem:[%s0 + $0x8] sm:$0xf]
    %v16 = vld [vmem:[%s0 + $0xc] sm:$0xf]
    %v17 = vld [vmem:[%s0 + $0x10] sm:$0xf]
    %v18 = vld [vmem:[%s0 + $0x14] sm:$0xf]
    %v19 = vld [vmem:[%s0 + $0x18] sm:$0xf]
    %v20 = vld [vmem:[%s0 + $0x1c] sm:$0xf]
    %v21 = vld [vmem:[%s0 + $0x20] sm:$0xf]
    %v22 = vld [vmem:[%s0 + $0x24] sm:$0xf]
    %v23 = vld [vmem:[%s0 + $0x28] sm:$0xf]
    %v24 = vld [vmem:[%s0 + $0x2c] sm:$0xf]
    %v25 = vld [vmem:[%s0 + $0x30] sm:$0xf]
    %v26 = vld [vmem:[%s0 + $0x34] sm:$0xf]
    %v27 = vld [vmem:[%s0 + $0x38] sm:$0xf]
    %v28 = vld [vmem:[%s0 + $0x3c] sm:$0xf]
    %v29 = vld [vmem:[%s0 + $0x40] sm:$0xf]
    %v30 = vld [vmem:[%s0 + $0x44] sm:$0xf]
    %v31 = vld [vmem:[%s0 + $0x48] sm:$0xf]
    %v32 = vld [vmem:[%s0 + $0x4c] sm:$0xf]
    %v33 = vld [vmem:[%s0 + $0x50] sm:$0xf]
    %v34 = vld [vmem:[%s0 + $0x54] sm:$0xf]
    %v35 = vld [vmem:[%s0 + $0x58] sm:$0xf]
    %v36 = vld [vmem:[%s0 + $0x5c] sm:$0xf]
    %v37 = vld [vmem:[%s0 + $0x60] sm:$0xf]
    %v38 = vld [vmem:[%s0 + $0x64] sm:$0xf]
    %v39 = vld [vmem:[%s0 + $0x68] sm:$0xf]
    %v40 = vld [vmem:[%s0 + $0x6c] sm:$0xf]
    %v41 = vld [vmem:[%s0 + $0x70] sm:$0xf]
    %v42 = vld [vmem:[%s0 + $0x74] sm:$0xf]
    %v43 = vld [vmem:[%s0 + $0x78] sm:$0xf]
    %v44 = vld [vmem:[%s0 + $0x7c] sm:$0xf]
    %v45 = vld [vmem:[%s1] sm:$0xff]
    %v46 = vld [vmem:[%s1 + $0x8] sm:$0xff]
    %v47 = vld [vmem:[%s1 + $0x10] sm:$0xff]
    %v48 = vld [vmem:[%s1 + $0x18] sm:$0xff]
    %v49 = vld [vmem:[%s1 + $0x20] sm:$0xff]
    %v50 = vld [vmem:[%s1 + $0x28] sm:$0xff]
    %v51 = vld [vmem:[%s1 + $0x30] sm:$0xff]
    %v52 = vld [vmem:[%s1 + $0x38] sm:$0xff]
    %v53 = vld [vmem:[%s1 + $0x40] sm:$0xff]
    %v54 = vld [vmem:[%s1 + $0x48] sm:$0xff]
    %v55 = vld [vmem:[%s1 + $0x50] sm:$0xff]
    %v56 = vld [vmem:[%s1 + $0x58] sm:$0xff]
    %v57 = vld [vmem:[%s1 + $0x60] sm:$0xff]
    %v58 = vld [vmem:[%s1 + $0x68] sm:$0xff]
    %v59 = vld [vmem:[%s1 + $0x70] sm:$0xff]
    %v60 = vld [vmem:[%s1 + $0x78] sm:$0xff]
    %v93 = vunpack.c.l.b16 %v13
    %v94 = vunpack.c.l.b16 %v14
    %v95 = vunpack.c.l.b16 %v15
    %v96 = vunpack.c.l.b16 %v16
    %v97 = vunpack.c.l.b16 %v17
    %v98 = vunpack.c.l.b16 %v18
    %v99 = vunpack.c.l.b16 %v19
    %v100 = vunpack.c.l.b16 %v20
    %v101 = vunpack.c.l.b16 %v21
    %v102 = vunpack.c.l.b16 %v22
    %v103 = vunpack.c.l.b16 %v23
    %v104 = vunpack.c.l.b16 %v24
    %v105 = vunpack.c.l.b16 %v25
    %v106 = vunpack.c.l.b16 %v26
    %v107 = vunpack.c.l.b16 %v27
    %v108 = vunpack.c.l.b16 %v28
    %v109 = vunpack.c.l.b16 %v29
    %v110 = vunpack.c.l.b16 %v30
    %v111 = vunpack.c.l.b16 %v31
    %v112 = vunpack.c.l.b16 %v32
    %v113 = vunpack.c.l.b16 %v33
    %v114 = vunpack.c.l.b16 %v34
    %v115 = vunpack.c.l.b16 %v35
    %v116 = vunpack.c.l.b16 %v36
    %v117 = vunpack.c.l.b16 %v37
    %v118 = vunpack.c.l.b16 %v38
    %v119 = vunpack.c.l.b16 %v39
    %v120 = vunpack.c.l.b16 %v40
    %v121 = vunpack.c.l.b16 %v41
    %v122 = vunpack.c.l.b16 %v42
    %v123 = vunpack.c.l.b16 %v43
    %v124 = vunpack.c.l.b16 %v44
    %v125 = vpack.c.b16 %v94, %v93
    %v126 = vpack.c.b16 %v96, %v95
    %v127 = vpack.c.b16 %v98, %v97
    %v128 = vpack.c.b16 %v100, %v99
    %v129 = vpack.c.b16 %v102, %v101
    %v130 = vpack.c.b16 %v104, %v103
    %v131 = vpack.c.b16 %v106, %v105
    %v132 = vpack.c.b16 %v108, %v107
    %v133 = vpack.c.b16 %v110, %v109
    %v134 = vpack.c.b16 %v112, %v111
    %v135 = vpack.c.b16 %v114, %v113
    %v136 = vpack.c.b16 %v116, %v115
    %v137 = vpack.c.b16 %v118, %v117
    %v138 = vpack.c.b16 %v120, %v119
    %v139 = vpack.c.b16 %v122, %v121
    %v140 = vpack.c.b16 %v124, %v123
    %v173 = vunpack.c.l.b16 %v45
    %v174 = vunpack.c.h.b16 %v45
    %v175 = vunpack.c.l.b16 %v46
    %v176 = vunpack.c.h.b16 %v46
    %v177 = vunpack.c.l.b16 %v47
    %v178 = vunpack.c.h.b16 %v47
    %v179 = vunpack.c.l.b16 %v48
    %v180 = vunpack.c.h.b16 %v48
    %v181 = vunpack.c.l.b16 %v49
    %v182 = vunpack.c.h.b16 %v49
    %v183 = vunpack.c.l.b16 %v50
    %v184 = vunpack.c.h.b16 %v50
    %v185 = vunpack.c.l.b16 %v51
    %v186 = vunpack.c.h.b16 %v51
    %v187 = vunpack.c.l.b16 %v52
    %v188 = vunpack.c.h.b16 %v52
    %v189 = vunpack.c.l.b16 %v53
    %v190 = vunpack.c.h.b16 %v53
    %v191 = vunpack.c.l.b16 %v54
    %v192 = vunpack.c.h.b16 %v54
    %v193 = vunpack.c.l.b16 %v55
    %v194 = vunpack.c.h.b16 %v55
    %v195 = vunpack.c.l.b16 %v56
    %v196 = vunpack.c.h.b16 %v56
    %v197 = vunpack.c.l.b16 %v57
    %v198 = vunpack.c.h.b16 %v57
    %v199 = vunpack.c.l.b16 %v58
    %v200 = vunpack.c.h.b16 %v58
    %v201 = vunpack.c.l.b16 %v59
    %v202 = vunpack.c.h.b16 %v59
    %v203 = vunpack.c.l.b16 %v60
    %v204 = vunpack.c.h.b16 %v60
    %v205 = vpack.c.b16 %v175, %v173
    %v206 = vpack.c.b16 %v176, %v174
    %v207 = vpack.c.b16 %v179, %v177
    %v208 = vpack.c.b16 %v180, %v178
    %v209 = vpack.c.b16 %v183, %v181
    %v210 = vpack.c.b16 %v184, %v182
    %v211 = vpack.c.b16 %v187, %v185
    %v212 = vpack.c.b16 %v188, %v186
    %v213 = vpack.c.b16 %v191, %v189
    %v214 = vpack.c.b16 %v192, %v190
    %v215 = vpack.c.b16 %v195, %v193
    %v216 = vpack.c.b16 %v196, %v194
    %v217 = vpack.c.b16 %v199, %v197
    %v218 = vpack.c.b16 %v200, %v198
    %v219 = vpack.c.b16 %v203, %v201
    %v220 = vpack.c.b16 %v204, %v202
    %237 = vmatprep.subr.bf16.mxu0 %v206
    %238 = vmatpush1.bf16.msra.mxu0 %v205
    %239 = vmatprep.subr.bf16.mxu0 %v208
    %240 = vmatpush1.bf16.msra.mxu0 %v207
    %241 = vmatprep.subr.bf16.mxu0 %v210
    %242 = vmatpush1.bf16.msra.mxu0 %v209
    %243 = vmatprep.subr.bf16.mxu0 %v212
    %244 = vmatpush1.bf16.msra.mxu0 %v211
    %245 = vmatprep.subr.bf16.mxu0 %v214
    %246 = vmatpush1.bf16.msra.mxu0 %v213
    %247 = vmatprep.subr.bf16.mxu0 %v216
    %248 = vmatpush1.bf16.msra.mxu0 %v215
    %249 = vmatprep.subr.bf16.mxu0 %v218
    %250 = vmatpush1.bf16.msra.mxu0 %v217
    %251 = vmatprep.subr.bf16.mxu0 %v220
    %252 = vmatpush1.bf16.msra.mxu0 %v219
    %253 = vmatprep.subr.bf16.mxu0 0
    %254 = vmatpush1.bf16.msra.mxu0 0
    %255 = vmatprep.subr.bf16.mxu0 0
    %256 = vmatpush1.bf16.msra.mxu0 0
    %257 = vmatprep.subr.bf16.mxu0 0
    %258 = vmatpush1.bf16.msra.mxu0 0
    %259 = vmatprep.subr.bf16.mxu0 0
    %260 = vmatpush1.bf16.msra.mxu0 0
    %261 = vmatprep.subr.bf16.mxu0 0
    %262 = vmatpush1.bf16.msra.mxu0 0
    %263 = vmatprep.subr.bf16.mxu0 0
    %264 = vmatpush1.bf16.msra.mxu0 0
    %265 = vmatprep.subr.bf16.mxu0 0
    %266 = vmatpush1.bf16.msra.mxu0 0
    %267 = vmatprep.subr.bf16.mxu0 0
    %268 = vmatpush1.bf16.msra.mxu0 0
    %269 = vmatprep.mubr.bf16.mxu0 0
    %270 = vmatmul.mubr.bf16.gmra.mrb[0].mxu0 %v125
    %v271 = vpop.f32.mrb[0].mxu0
    %v272 = vadd.f32 0.0, %v271
    %v273 = vpop.f32.mrb[0].mxu0
    %v274 = vadd.f32 0.0, %v273
    %v275 = vpop.f32.mrb[0].mxu0
    %v276 = vadd.f32 0.0, %v275
    %v277 = vpop.f32.mrb[0].mxu0
    %v278 = vadd.f32 0.0, %v277
    %279 = vmatprep.mubr.bf16.mxu0 0
    %280 = vmatmul.mubr.bf16.gmra.mrb[0].mxu0 %v126
    %v281 = vpop.f32.mrb[0].mxu0
    %v282 = vadd.f32 0.0, %v281
    %v283 = vpop.f32.mrb[0].mxu0
    %v284 = vadd.f32 0.0, %v283
    %v285 = vpop.f32.mrb[0].mxu0
    %v286 = vadd.f32 0.0, %v285
    %v287 = vpop.f32.mrb[0].mxu0
    %v288 = vadd.f32 0.0, %v287
    %289 = vmatprep.mubr.bf16.mxu0 0
    %290 = vmatmul.mubr.bf16.gmra.mrb[0].mxu0 %v127
    %v291 = vpop.f32.mrb[0].mxu0
    %v292 = vadd.f32 0.0, %v291
    %v293 = vpop.f32.mrb[0].mxu0
    %v294 = vadd.f32 0.0, %v293
    %v295 = vpop.f32.mrb[0].mxu0
    %v296 = vadd.f32 0.0, %v295
    %v297 = vpop.f32.mrb[0].mxu0
    %v298 = vadd.f32 0.0, %v297
    %299 = vmatprep.mubr.bf16.mxu0 0
    %300 = vmatmul.mubr.bf16.gmra.mrb[0].mxu0 %v128
    %v301 = vpop.f32.mrb[0].mxu0
    %v302 = vadd.f32 0.0, %v301
    %v303 = vpop.f32.mrb[0].mxu0
    %v304 = vadd.f32 0.0, %v303
    %v305 = vpop.f32.mrb[0].mxu0
    %v306 = vadd.f32 0.0, %v305
    %v307 = vpop.f32.mrb[0].mxu0
    %v308 = vadd.f32 0.0, %v307
    %309 = vmatprep.mubr.bf16.mxu0 0
    %310 = vmatmul.mubr.bf16.gmra.mrb[0].mxu0 %v129
    %v311 = vpop.f32.mrb[0].mxu0
    %v312 = vadd.f32 0.0, %v311
    %v313 = vpop.f32.mrb[0].mxu0
    %v314 = vadd.f32 0.0, %v313
    %v315 = vpop.f32.mrb[0].mxu0
    %v316 = vadd.f32 0.0, %v315
    %v317 = vpop.f32.mrb[0].mxu0
    %v318 = vadd.f32 0.0, %v317
    %319 = vmatprep.mubr.bf16.mxu0 0
    %320 = vmatmul.mubr.bf16.gmra.mrb[0].mxu0 %v130
    %v321 = vpop.f32.mrb[0].mxu0
    %v322 = vadd.f32 0.0, %v321
    %v323 = vpop.f32.mrb[0].mxu0
    %v324 = vadd.f32 0.0, %v323
    %v325 = vpop.f32.mrb[0].mxu0
    %v326 = vadd.f32 0.0, %v325
    %v327 = vpop.f32.mrb[0].mxu0
    %v328 = vadd.f32 0.0, %v327
    %329 = vmatprep.mubr.bf16.mxu0 0
    %330 = vmatmul.mubr.bf16.gmra.mrb[0].mxu0 %v131
    %v331 = vpop.f32.mrb[0].mxu0
    %v332 = vadd.f32 0.0, %v331
    %v333 = vpop.f32.mrb[0].mxu0
    %v334 = vadd.f32 0.0, %v333
    %v335 = vpop.f32.mrb[0].mxu0
    %v336 = vadd.f32 0.0, %v335
    %v337 = vpop.f32.mrb[0].mxu0
    %v338 = vadd.f32 0.0, %v337
    %339 = vmatprep.mubr.bf16.mxu0 0
    %340 = vmatmul.mubr.bf16.gmra.mrb[0].mxu0 %v132
    %v341 = vpop.f32.mrb[0].mxu0
    %v342 = vadd.f32 0.0, %v341
    %v343 = vpop.f32.mrb[0].mxu0
    %v344 = vadd.f32 0.0, %v343
    %v345 = vpop.f32.mrb[0].mxu0
    %v346 = vadd.f32 0.0, %v345
    %v347 = vpop.f32.mrb[0].mxu0
    %v348 = vadd.f32 0.0, %v347
    %349 = vmatprep.mubr.bf16.mxu0 0
    %350 = vmatmul.mubr.bf16.gmra.mrb[0].mxu0 %v133
    %v351 = vpop.f32.mrb[0].mxu0
    %v352 = vadd.f32 0.0, %v351
    %v353 = vpop.f32.mrb[0].mxu0
    %v354 = vadd.f32 0.0, %v353
    %v355 = vpop.f32.mrb[0].mxu0
    %v356 = vadd.f32 0.0, %v355
    %v357 = vpop.f32.mrb[0].mxu0
    %v358 = vadd.f32 0.0, %v357
    %359 = vmatprep.mubr.bf16.mxu0 0
    %360 = vmatmul.mubr.bf16.gmra.mrb[0].mxu0 %v134
    %v361 = vpop.f32.mrb[0].mxu0
    %v362 = vadd.f32 0.0, %v361
    %v363 = vpop.f32.mrb[0].mxu0
    %v364 = vadd.f32 0.0, %v363
    %v365 = vpop.f32.mrb[0].mxu0
    %v366 = vadd.f32 0.0, %v365
    %v367 = vpop.f32.mrb[0].mxu0
    %v368 = vadd.f32 0.0, %v367
    %369 = vmatprep.mubr.bf16.mxu0 0
    %370 = vmatmul.mubr.bf16.gmra.mrb[0].mxu0 %v135
    %v371 = vpop.f32.mrb[0].mxu0
    %v372 = vadd.f32 0.0, %v371
    %v373 = vpop.f32.mrb[0].mxu0
    %v374 = vadd.f32 0.0, %v373
    %v375 = vpop.f32.mrb[0].mxu0
    %v376 = vadd.f32 0.0, %v375
    %v377 = vpop.f32.mrb[0].mxu0
    %v378 = vadd.f32 0.0, %v377
    %379 = vmatprep.mubr.bf16.mxu0 0
    %380 = vmatmul.mubr.bf16.gmra.mrb[0].mxu0 %v136
    %v381 = vpop.f32.mrb[0].mxu0
    %v382 = vadd.f32 0.0, %v381
    %v383 = vpop.f32.mrb[0].mxu0
    %v384 = vadd.f32 0.0, %v383
    %v385 = vpop.f32.mrb[0].mxu0
    %v386 = vadd.f32 0.0, %v385
    %v387 = vpop.f32.mrb[0].mxu0
    %v388 = vadd.f32 0.0, %v387
    %389 = vmatprep.mubr.bf16.mxu0 0
    %390 = vmatmul.mubr.bf16.gmra.mrb[0].mxu0 %v137
    %v391 = vpop.f32.mrb[0].mxu0
    %v392 = vadd.f32 0.0, %v391
    %v393 = vpop.f32.mrb[0].mxu0
    %v394 = vadd.f32 0.0, %v393
    %v395 = vpop.f32.mrb[0].mxu0
    %v396 = vadd.f32 0.0, %v395
    %v397 = vpop.f32.mrb[0].mxu0
    %v398 = vadd.f32 0.0, %v397
    %399 = vmatprep.mubr.bf16.mxu0 0
    %400 = vmatmul.mubr.bf16.gmra.mrb[0].mxu0 %v138
    %v401 = vpop.f32.mrb[0].mxu0
    %v402 = vadd.f32 0.0, %v401
    %v403 = vpop.f32.mrb[0].mxu0
    %v404 = vadd.f32 0.0, %v403
    %v405 = vpop.f32.mrb[0].mxu0
    %v406 = vadd.f32 0.0, %v405
    %v407 = vpop.f32.mrb[0].mxu0
    %v408 = vadd.f32 0.0, %v407
    %409 = vmatprep.mubr.bf16.mxu0 0
    %410 = vmatmul.mubr.bf16.gmra.mrb[0].mxu0 %v139
    %v411 = vpop.f32.mrb[0].mxu0
    %v412 = vadd.f32 0.0, %v411
    %v413 = vpop.f32.mrb[0].mxu0
    %v414 = vadd.f32 0.0, %v413
    %v415 = vpop.f32.mrb[0].mxu0
    %v416 = vadd.f32 0.0, %v415
    %v417 = vpop.f32.mrb[0].mxu0
    %v418 = vadd.f32 0.0, %v417
    %419 = vmatprep.mubr.bf16.mxu0 0
    %420 = vmatmul.mubr.bf16.gmra.mrb[0].mxu0 %v140
    %v421 = vpop.f32.mrb[0].mxu0
    %v422 = vadd.f32 0.0, %v421
    %v423 = vpop.f32.mrb[0].mxu0
    %v424 = vadd.f32 0.0, %v423
    %v425 = vpop.f32.mrb[0].mxu0
    %v426 = vadd.f32 0.0, %v425
    %v427 = vpop.f32.mrb[0].mxu0
    %v428 = vadd.f32 0.0, %v427
    %429 = vdwg.mxu0
    %430 = vst [vmem:[#allocation2] sm:$0xff] %v272
    %431 = vst [vmem:[#allocation2 + $0x8] sm:$0xff] %v274
    %432 = vst [vmem:[#allocation2 + $0x10] sm:$0xff] %v276
    %433 = vst [vmem:[#allocation2 + $0x18] sm:$0xff] %v278
    %434 = vst [vmem:[#allocation2 + $0x20] sm:$0xff] %v282
    %435 = vst [vmem:[#allocation2 + $0x28] sm:$0xff] %v284
    %436 = vst [vmem:[#allocation2 + $0x30] sm:$0xff] %v286
    %437 = vst [vmem:[#allocation2 + $0x38] sm:$0xff] %v288
    %438 = vst [vmem:[#allocation2 + $0x40] sm:$0xff] %v292
    %439 = vst [vmem:[#allocation2 + $0x48] sm:$0xff] %v294
    %440 = vst [vmem:[#allocation2 + $0x50] sm:$0xff] %v296
    %441 = vst [vmem:[#allocation2 + $0x58] sm:$0xff] %v298
    %442 = vst [vmem:[#allocation2 + $0x60] sm:$0xff] %v302
    %443 = vst [vmem:[#allocation2 + $0x68] sm:$0xff] %v304
    %444 = vst [vmem:[#allocation2 + $0x70] sm:$0xff] %v306
    %445 = vst [vmem:[#allocation2 + $0x78] sm:$0xff] %v308
    %446 = vst [vmem:[#allocation2 + $0x80] sm:$0xff] %v312
    %447 = vst [vmem:[#allocation2 + $0x88] sm:$0xff] %v314
    %448 = vst [vmem:[#allocation2 + $0x90] sm:$0xff] %v316
    %449 = vst [vmem:[#allocation2 + $0x98] sm:$0xff] %v318
    %450 = vst [vmem:[#allocation2 + $0xa0] sm:$0xff] %v322
    %451 = vst [vmem:[#allocation2 + $0xa8] sm:$0xff] %v324
    %452 = vst [vmem:[#allocation2 + $0xb0] sm:$0xff] %v326
    %453 = vst [vmem:[#allocation2 + $0xb8] sm:$0xff] %v328
    %454 = vst [vmem:[#allocation2 + $0xc0] sm:$0xff] %v332
    %455 = vst [vmem:[#allocation2 + $0xc8] sm:$0xff] %v334
    %456 = vst [vmem:[#allocation2 + $0xd0] sm:$0xff] %v336
    %457 = vst [vmem:[#allocation2 + $0xd8] sm:$0xff] %v338
    %458 = vst [vmem:[#allocation2 + $0xe0] sm:$0xff] %v342
    %459 = vst [vmem:[#allocation2 + $0xe8] sm:$0xff] %v344
    %460 = vst [vmem:[#allocation2 + $0xf0] sm:$0xff] %v346
    %461 = vst [vmem:[#allocation2 + $0xf8] sm:$0xff] %v348
    %462 = vst [vmem:[#allocation2 + $0x100] sm:$0xff] %v352
    %463 = vst [vmem:[#allocation2 + $0x108] sm:$0xff] %v354
    %464 = vst [vmem:[#allocation2 + $0x110] sm:$0xff] %v356
    %465 = vst [vmem:[#allocation2 + $0x118] sm:$0xff] %v358
    %466 = vst [vmem:[#allocation2 + $0x120] sm:$0xff] %v362
    %467 = vst [vmem:[#allocation2 + $0x128] sm:$0xff] %v364
    %468 = vst [vmem:[#allocation2 + $0x130] sm:$0xff] %v366
    %469 = vst [vmem:[#allocation2 + $0x138] sm:$0xff] %v368
    %470 = vst [vmem:[#allocation2 + $0x140] sm:$0xff] %v372
    %471 = vst [vmem:[#allocation2 + $0x148] sm:$0xff] %v374
    %472 = vst [vmem:[#allocation2 + $0x150] sm:$0xff] %v376
    %473 = vst [vmem:[#allocation2 + $0x158] sm:$0xff] %v378
    %474 = vst [vmem:[#allocation2 + $0x160] sm:$0xff] %v382
    %475 = vst [vmem:[#allocation2 + $0x168] sm:$0xff] %v384
    %476 = vst [vmem:[#allocation2 + $0x170] sm:$0xff] %v386
    %477 = vst [vmem:[#allocation2 + $0x178] sm:$0xff] %v388
    %478 = vst [vmem:[#allocation2 + $0x180] sm:$0xff] %v392
    %479 = vst [vmem:[#allocation2 + $0x188] sm:$0xff] %v394
    %480 = vst [vmem:[#allocation2 + $0x190] sm:$0xff] %v396
    %481 = vst [vmem:[#allocation2 + $0x198] sm:$0xff] %v398
    %482 = vst [vmem:[#allocation2 + $0x1a0] sm:$0xff] %v402
    %483 = vst [vmem:[#allocation2 + $0x1a8] sm:$0xff] %v404
    %484 = vst [vmem:[#allocation2 + $0x1b0] sm:$0xff] %v406
    %485 = vst [vmem:[#allocation2 + $0x1b8] sm:$0xff] %v408
    %486 = vst [vmem:[#allocation2 + $0x1c0] sm:$0xff] %v412
    %487 = vst [vmem:[#allocation2 + $0x1c8] sm:$0xff] %v414
    %488 = vst [vmem:[#allocation2 + $0x1d0] sm:$0xff] %v416
    %489 = vst [vmem:[#allocation2 + $0x1d8] sm:$0xff] %v418
    %490 = vst [vmem:[#allocation2 + $0x1e0] sm:$0xff] %v422
    %491 = vst [vmem:[#allocation2 + $0x1e8] sm:$0xff] %v424
    %492 = vst [vmem:[#allocation2 + $0x1f0] sm:$0xff] %v426
    %493 = vst [vmem:[#allocation2 + $0x1f8] sm:$0xff] %v428
    // Predicated region
    $region10: #{relative_transformer.23} parent=1 // pred_check
      _
    $region11: #{relative_transformer.23} parent=1 // pred_check_branch
      %495 = sbr.rel (0) target = $region13
    $region12: #{relative_transformer.23} parent=1 // pred_region
      %s497 = ssub.s32 8192, 8192
      %498 = vsyncadd [#allocation3], %s497
      %s499 = sshll.u32 [#allocation2], 4
      %s500 = int_to_ptr.vmem [resolvable:$true] %s499
      %505 = dma.vmem_to_hbm [thread:$0]  %s500, 8192, %s2, [#allocation3], 256, 256, 16
    $region13: #{relative_transformer.23} parent=1 // pred_fallthru
      _
    // Predicated region
    $region14: #{relative_transformer.23} parent=1 // pred_check
      _
    $region15: #{relative_transformer.23} parent=1 // pred_check_branch
      %507 = sbr.rel (0) target = $region17
    $region16: #{relative_transformer.23} parent=1 // pred_region
      %508 = dma.done [#allocation3], 8192
    $region17: #{relative_transformer.23} parent=1 // pred_fallthru
      _
    %509 = vsyncpa [#allocation3], 1

</llo_original>
